<compile_context>
chip_gen: v7x
topology: tpu7x:2x2x1
jax: 0.10.0
libtpu: 0.0.40
codegen_flags: <defaults>
</compile_context>

<pallas_src>
import math

import numpy as np
import jax
import jax.numpy as jnp
from jax.experimental import pallas as pl
from jax.experimental.pallas import tpu as pltpu


def _gaussian_1d(window_size: int, sigma: float):
    g = [math.exp(-((x - window_size // 2) ** 2) / float(2 * sigma ** 2))
         for x in range(window_size)]
    s = sum(g)
    return [v / s for v in g]


def _round_up(x: int, m: int) -> int:
    return (x + m - 1) // m * m


def ssim_loss(img1, img2, *, window_size=11, size_average=True, weight=1.0,
              sigma=1.5):
    """(1 - SSIM(img1, img2)) * weight, matching utils/losses.py::SSIM."""
    assert size_average, "size_average=False path not needed for this module"
    assert img1.shape == img2.shape
    B, C, H, W = img1.shape
    pad = window_size // 2
    Hp, Wp = H + 2 * pad, W + 2 * pad

    # Alignment padding: lane (last) dim -> multiple of 128, sublane -> of 8.
    Hp_a = _round_up(Hp, 8)
    Wp_a = _round_up(Wp, 128)
    H_a = _round_up(H, 8)
    W_a = _round_up(W, 128)

    gauss = np.asarray(_gaussian_1d(window_size, sigma), np.float32)
    C1 = 0.01 ** 2
    C2 = 0.03 ** 2

    # Zero padding (== F.conv2d(padding=window_size//2)) plus alignment pad.
    pad_cfg = ((0, 0), (0, 0),
               (pad, pad + (Hp_a - Hp)),
               (pad, pad + (Wp_a - Wp)))
    p1 = jnp.pad(img1.astype(jnp.float32), pad_cfg)
    p2 = jnp.pad(img2.astype(jnp.float32), pad_cfg)

    # Banded matrices implementing the separable Gaussian on the MXU:
    #   row pass:    (x @ Gw)[r, j] = sum_b g[b] * x[r, j + b]
    #   column pass: (Gh @ t)[i, j] = sum_a g[a] * t[i + a, j]
    # Columns j >= W of Gw and rows i >= H of Gh are zero, so the alignment
    # padding contributes nothing to the blurred maps.
    gw_np = np.zeros((Wp_a, W_a), np.float32)
    gh_np = np.zeros((H_a, Hp_a), np.float32)
    for j in range(W):
        gw_np[j:j + window_size, j] = gauss
    for i in range(H):
        gh_np[i, i:i + window_size] = gauss
    gw_mat = jnp.asarray(gw_np)
    gh_mat = jnp.asarray(gh_np)

    def kernel(p1_ref, p2_ref, gh_ref, gw_ref, out_ref):
        x1 = p1_ref[0, 0]            # (Hp_a, Wp_a) float32
        x2 = p2_ref[0, 0]
        gh = gh_ref[...]             # (H_a, Hp_a)
        gw = gw_ref[...]             # (Wp_a, W_a)

        def blur(x):
            # Separable Gaussian as two MXU matmuls, f32 accumulation.
            t = jnp.dot(x, gw, preferred_element_type=jnp.float32,
                        precision=jax.lax.Precision.HIGHEST)      # (Hp_a, W_a)
            return jnp.dot(gh, t, preferred_element_type=jnp.float32,
                           precision=jax.lax.Precision.HIGHEST)   # (H_a, W_a)

        mu1 = blur(x1)
        mu2 = blur(x2)
        s11 = blur(x1 * x1)
        s22 = blur(x2 * x2)
        s12 = blur(x1 * x2)

        mu1_sq = mu1 * mu1
        mu2_sq = mu2 * mu2
        mu1_mu2 = mu1 * mu2
        sigma1_sq = s11 - mu1_sq
        sigma2_sq = s22 - mu2_sq
        sigma12 = s12 - mu1_mu2

        ssim_map = ((2.0 * mu1_mu2 + C1) * (2.0 * sigma12 + C2)) / (
            (mu1_sq + mu2_sq + C1) * (sigma1_sq + sigma2_sq + C2))

        # Exclude the alignment-padding region from the per-(b,c) partial sum.
        rows = jax.lax.broadcasted_iota(jnp.int32, (H_a, W_a), 0)
        cols = jax.lax.broadcasted_iota(jnp.int32, (H_a, W_a), 1)
        valid = jnp.logical_and(rows < H, cols < W)
        out_ref[...] = jnp.sum(
            jnp.where(valid, ssim_map, 0.0)).reshape(1, 1, 1, 1)

    # Per-step working-set estimate (bytes): double-buffered inputs + blur
    # intermediates + band matrices.  Raise the scoped VMEM limit only when
    # the defaults (16/32 MiB) would be exceeded, clamped to 64 MiB (v7x).
    f32b = 4
    in_block = Hp_a * Wp_a * f32b
    interm = (3 * Hp_a * Wp_a + 5 * Hp_a * W_a + 9 * H_a * W_a) * f32b
    consts = (H_a * Hp_a + Wp_a * W_a) * f32b
    est = 2 * 2 * in_block + interm + consts
    vmem_limit = None
    if est > 16 * 1024 * 1024:
        vmem_limit = int(min(max(2 * est, 32 * 1024 * 1024), 64 * 1024 * 1024))
    # TODO(synk): for very large images, add an H-tile grid axis with a 2*pad
    # halo (and tile the Gw band) so the working set fits v7x's 64 MiB VMEM.

    partial = pl.pallas_call(
        kernel,
        out_shape=jax.ShapeDtypeStruct((B, C, 1, 1), jnp.float32),
        grid_spec=pltpu.PrefetchScalarGridSpec(
            num_scalar_prefetch=0,
            grid=(B, C),
            in_specs=[
                pl.BlockSpec((1, 1, Hp_a, Wp_a), lambda b, c: (b, c, 0, 0)),
                pl.BlockSpec((1, 1, Hp_a, Wp_a), lambda b, c: (b, c, 0, 0)),
                pl.BlockSpec((H_a, Hp_a), lambda b, c: (0, 0)),
                pl.BlockSpec((Wp_a, W_a), lambda b, c: (0, 0)),
            ],
            out_specs=pl.BlockSpec((1, 1, 1, 1), lambda b, c: (b, c, 0, 0)),
        ),
        compiler_params=pltpu.CompilerParams(
            dimension_semantics=("parallel", "parallel"),
            vmem_limit_bytes=vmem_limit),
    )(p1, p2, gh_mat, gw_mat)

    n_total = float(B * C * H * W)
    mean_ssim = jnp.sum(partial) / n_total
    return (1.0 - mean_ssim) * weight


def _ssim_loss_ref(img1, img2, *, window_size=11, sigma=1.5, weight=1.0):
    """Pure-JAX reference matching the PyTorch module (for validation)."""
    B, C, H, W = img1.shape
    g = jnp.asarray(_gaussian_1d(window_size, sigma), jnp.float32)
    w2d = jnp.outer(g, g)
    kern = jnp.broadcast_to(w2d[None, None], (C, 1, window_size, window_size))
    pad = window_size // 2

    def conv(x):
        return jax.lax.conv_general_dilated(
            x.astype(jnp.float32), kern, (1, 1), [(pad, pad), (pad, pad)],
            dimension_numbers=("NCHW", "OIHW", "NCHW"),
            feature_group_count=C,
            precision=jax.lax.Precision.HIGHEST)

    mu1, mu2 = conv(img1), conv(img2)
    mu1_sq, mu2_sq, mu1_mu2 = mu1 * mu1, mu2 * mu2, mu1 * mu2
    sigma1_sq = conv(img1 * img1) - mu1_sq
    sigma2_sq = conv(img2 * img2) - mu2_sq
    sigma12 = conv(img1 * img2) - mu1_mu2
    C1, C2 = 0.01 ** 2, 0.03 ** 2
    ssim_map = ((2.0 * mu1_mu2 + C1) * (2.0 * sigma12 + C2)) / (
        (mu1_sq + mu2_sq + C1) * (sigma1_sq + sigma2_sq + C2))
    return (1.0 - jnp.mean(ssim_map)) * weight


if __name__ == "__main__":
    key = jax.random.PRNGKey(0)
    k1, k2 = jax.random.split(key)
    B, C, H, W = 2, 4, 16, 16
    img1 = jax.random.uniform(k1, (B, C, H, W), dtype=jnp.float32)
    img2 = jax.random.uniform(k2, (B, C, H, W), dtype=jnp.float32)

    loss = ssim_loss(img1, img2, window_size=11, size_average=True, weight=1.0)
    loss = jax.block_until_ready(loss)

    ref = _ssim_loss_ref(img1, img2, window_size=11, weight=1.0)
    ref = jax.block_until_ready(ref)

    assert jnp.isfinite(loss), "SSIM loss is not finite"
    assert abs(float(loss) - float(ref)) < 2e-2, (float(loss), float(ref))
    print("KERNEL_OK")
</pallas_src>

<mosaic_0001>
module attributes {stable_mosaic.version = 11 : i64} {
  func.func @kernel(%arg0: i32, %arg1: i32, %arg2: memref<1x1x32x128xf32, #tpu.memory_space<vmem>>, %arg3: memref<1x1x32x128xf32, #tpu.memory_space<vmem>>, %arg4: memref<16x32xf32, #tpu.memory_space<vmem>>, %arg5: memref<128x128xf32, #tpu.memory_space<vmem>>, %arg6: memref<1x1x1x1xf32, #tpu.memory_space<vmem>>) attributes {dimension_semantics = [#tpu.dimension_semantics<parallel>, #tpu.dimension_semantics<parallel>], iteration_bounds = array<i64: 2, 4>, scalar_prefetch = 0 : i64, scratch_operands = 0 : i64, tpu.core_type = #tpu.core_type<tc>, window_params = [{transform_indices = @transform_0, window_bounds = array<i64: 1, 1, 32, 128>}, {transform_indices = @transform_1, window_bounds = array<i64: 1, 1, 32, 128>}, {pipeline_mode = #tpu.pipeline_mode<synchronous>, transform_indices = @transform_2, window_bounds = array<i64: 16, 32>}, {pipeline_mode = #tpu.pipeline_mode<synchronous>, transform_indices = @transform_3, window_bounds = array<i64: 128, 128>}, {transform_indices = @transform_4, window_bounds = array<i64: 1, 1, 1, 1>}]} {
    %c0 = arith.constant 0 : index
    %c0_0 = arith.constant 0 : index
    %c0_1 = arith.constant 0 : index
    %c0_2 = arith.constant 0 : index
    %0 = vector.load %arg2[%c0, %c0_0, %c0_1, %c0_2] : memref<1x1x32x128xf32, #tpu.memory_space<vmem>>, vector<1x1x32x128xf32>
    %1 = vector.shape_cast %0 : vector<1x1x32x128xf32> to vector<32x128xf32>
    %c0_3 = arith.constant 0 : index
    %c0_4 = arith.constant 0 : index
    %c0_5 = arith.constant 0 : index
    %c0_6 = arith.constant 0 : index
    %2 = vector.load %arg3[%c0_3, %c0_4, %c0_5, %c0_6] : memref<1x1x32x128xf32, #tpu.memory_space<vmem>>, vector<1x1x32x128xf32>
    %3 = vector.shape_cast %2 : vector<1x1x32x128xf32> to vector<32x128xf32>
    %c0_7 = arith.constant 0 : index
    %c0_8 = arith.constant 0 : index
    %4 = vector.load %arg4[%c0_7, %c0_8] : memref<16x32xf32, #tpu.memory_space<vmem>>, vector<16x32xf32>
    %c0_9 = arith.constant 0 : index
    %c0_10 = arith.constant 0 : index
    %5 = vector.load %arg5[%c0_9, %c0_10] : memref<128x128xf32, #tpu.memory_space<vmem>>, vector<128x128xf32>
    %cst = arith.constant dense<0.000000e+00> : vector<32x128xf32>
    %6 = tpu.matmul %1, %5, %cst {dimension_numbers = #tpu.dot_dimension_numbers<[1], [0], [0], [1], [0, 0, 1, 1], [], []>, precision = #tpu.contract_precision<fp32>} : vector<32x128xf32>, vector<128x128xf32>, vector<32x128xf32> -> vector<32x128xf32>
    %cst_11 = arith.constant dense<0.000000e+00> : vector<16x128xf32>
    %7 = tpu.matmul %4, %6, %cst_11 {dimension_numbers = #tpu.dot_dimension_numbers<[1], [0], [0], [1], [0, 0, 1, 1], [], []>, precision = #tpu.contract_precision<fp32>} : vector<16x32xf32>, vector<32x128xf32>, vector<16x128xf32> -> vector<16x128xf32>
    %cst_12 = arith.constant dense<0.000000e+00> : vector<32x128xf32>
    %8 = tpu.matmul %3, %5, %cst_12 {dimension_numbers = #tpu.dot_dimension_numbers<[1], [0], [0], [1], [0, 0, 1, 1], [], []>, precision = #tpu.contract_precision<fp32>} : vector<32x128xf32>, vector<128x128xf32>, vector<32x128xf32> -> vector<32x128xf32>
    %cst_13 = arith.constant dense<0.000000e+00> : vector<16x128xf32>
    %9 = tpu.matmul %4, %8, %cst_13 {dimension_numbers = #tpu.dot_dimension_numbers<[1], [0], [0], [1], [0, 0, 1, 1], [], []>, precision = #tpu.contract_precision<fp32>} : vector<16x32xf32>, vector<32x128xf32>, vector<16x128xf32> -> vector<16x128xf32>
    %10 = arith.mulf %1, %1 : vector<32x128xf32>
    %cst_14 = arith.constant dense<0.000000e+00> : vector<32x128xf32>
    %11 = tpu.matmul %10, %5, %cst_14 {dimension_numbers = #tpu.dot_dimension_numbers<[1], [0], [0], [1], [0, 0, 1, 1], [], []>, precision = #tpu.contract_precision<fp32>} : vector<32x128xf32>, vector<128x128xf32>, vector<32x128xf32> -> vector<32x128xf32>
    %cst_15 = arith.constant dense<0.000000e+00> : vector<16x128xf32>
    %12 = tpu.matmul %4, %11, %cst_15 {dimension_numbers = #tpu.dot_dimension_numbers<[1], [0], [0], [1], [0, 0, 1, 1], [], []>, precision = #tpu.contract_precision<fp32>} : vector<16x32xf32>, vector<32x128xf32>, vector<16x128xf32> -> vector<16x128xf32>
    %13 = arith.mulf %3, %3 : vector<32x128xf32>
    %cst_16 = arith.constant dense<0.000000e+00> : vector<32x128xf32>
    %14 = tpu.matmul %13, %5, %cst_16 {dimension_numbers = #tpu.dot_dimension_numbers<[1], [0], [0], [1], [0, 0, 1, 1], [], []>, precision = #tpu.contract_precision<fp32>} : vector<32x128xf32>, vector<128x128xf32>, vector<32x128xf32> -> vector<32x128xf32>
    %cst_17 = arith.constant dense<0.000000e+00> : vector<16x128xf32>
    %15 = tpu.matmul %4, %14, %cst_17 {dimension_numbers = #tpu.dot_dimension_numbers<[1], [0], [0], [1], [0, 0, 1, 1], [], []>, precision = #tpu.contract_precision<fp32>} : vector<16x32xf32>, vector<32x128xf32>, vector<16x128xf32> -> vector<16x128xf32>
    %16 = arith.mulf %1, %3 : vector<32x128xf32>
    %cst_18 = arith.constant dense<0.000000e+00> : vector<32x128xf32>
    %17 = tpu.matmul %16, %5, %cst_18 {dimension_numbers = #tpu.dot_dimension_numbers<[1], [0], [0], [1], [0, 0, 1, 1], [], []>, precision = #tpu.contract_precision<fp32>} : vector<32x128xf32>, vector<128x128xf32>, vector<32x128xf32> -> vector<32x128xf32>
    %cst_19 = arith.constant dense<0.000000e+00> : vector<16x128xf32>
    %18 = tpu.matmul %4, %17, %cst_19 {dimension_numbers = #tpu.dot_dimension_numbers<[1], [0], [0], [1], [0, 0, 1, 1], [], []>, precision = #tpu.contract_precision<fp32>} : vector<16x32xf32>, vector<32x128xf32>, vector<16x128xf32> -> vector<16x128xf32>
    %19 = arith.mulf %7, %7 : vector<16x128xf32>
    %20 = arith.mulf %9, %9 : vector<16x128xf32>
    %21 = arith.mulf %7, %9 : vector<16x128xf32>
    %22 = arith.subf %12, %19 : vector<16x128xf32>
    %23 = arith.subf %15, %20 : vector<16x128xf32>
    %24 = arith.subf %18, %21 : vector<16x128xf32>
    %cst_20 = arith.constant 2.000000e+00 : f32
    %25 = vector.broadcast %cst_20 : f32 to vector<16x128xf32>
    %26 = arith.mulf %25, %21 : vector<16x128xf32>
    %cst_21 = arith.constant 9.99999974E-5 : f32
    %27 = vector.broadcast %cst_21 : f32 to vector<16x128xf32>
    %28 = arith.addf %26, %27 : vector<16x128xf32>
    %cst_22 = arith.constant 2.000000e+00 : f32
    %29 = vector.broadcast %cst_22 : f32 to vector<16x128xf32>
    %30 = arith.mulf %29, %24 : vector<16x128xf32>
    %cst_23 = arith.constant 8.99999984E-4 : f32
    %31 = vector.broadcast %cst_23 : f32 to vector<16x128xf32>
    %32 = arith.addf %30, %31 : vector<16x128xf32>
    %33 = arith.mulf %28, %32 : vector<16x128xf32>
    %34 = arith.addf %19, %20 : vector<16x128xf32>
    %cst_24 = arith.constant 9.99999974E-5 : f32
    %35 = vector.broadcast %cst_24 : f32 to vector<16x128xf32>
    %36 = arith.addf %34, %35 : vector<16x128xf32>
    %37 = arith.addf %22, %23 : vector<16x128xf32>
    %cst_25 = arith.constant 8.99999984E-4 : f32
    %38 = vector.broadcast %cst_25 : f32 to vector<16x128xf32>
    %39 = arith.addf %37, %38 : vector<16x128xf32>
    %40 = arith.mulf %36, %39 : vector<16x128xf32>
    %41 = arith.divf %33, %40 : vector<16x128xf32>
    %42 = tpu.iota {dimensions = array<i32: 0>} : vector<16x128xi32>
    %43 = tpu.iota {dimensions = array<i32: 1>} : vector<16x128xi32>
    %c16_i32 = arith.constant 16 : i32
    %44 = vector.broadcast %c16_i32 : i32 to vector<16x128xi32>
    %45 = arith.cmpi slt, %42, %44 : vector<16x128xi32>
    %c16_i32_26 = arith.constant 16 : i32
    %46 = vector.broadcast %c16_i32_26 : i32 to vector<16x128xi32>
    %47 = arith.cmpi slt, %43, %46 : vector<16x128xi32>
    %48 = arith.andi %45, %47 : vector<16x128xi1>
    %cst_27 = arith.constant 0.000000e+00 : f32
    %49 = vector.broadcast %cst_27 : f32 to vector<16x128xf32>
    %50 = arith.select %48, %41, %49 : vector<16x128xi1>, vector<16x128xf32>
    %51 = vector.shape_cast %50 : vector<16x128xf32> to vector<1x16x128xf32>
    %cst_28 = arith.constant dense<0.000000e+00> : vector<1xf32>
    %52 = vector.multi_reduction <add>, %51, %cst_28 [1, 2] : vector<1x16x128xf32> to vector<1xf32>
    %53 = vector.shape_cast %52 : vector<1xf32> to vector<1x1x1xf32>
    %54 = vector.extract %53[0, 0, 0] : f32 from vector<1x1x1xf32>
    %55 = vector.broadcast %54 : f32 to vector<1x1x1x1xf32>
    %c0_29 = arith.constant 0 : index
    %c0_30 = arith.constant 0 : index
    %c0_31 = arith.constant 0 : index
    %c0_32 = arith.constant 0 : index
    %56 = vector.load %arg6[%c0_29, %c0_30, %c0_31, %c0_32] : memref<1x1x1x1xf32, #tpu.memory_space<vmem>>, vector<1x1x1x1xf32>
    tpu.vector_store %arg6[%c0_29, %c0_30, %c0_31, %c0_32], %55 {strides = array<i32>} : memref<1x1x1x1xf32, #tpu.memory_space<vmem>>, vector<1x1x1x1xf32>,
    return
  }
  func.func @transform_0(%arg0: i32, %arg1: i32) -> (i32, i32, i32, i32) {
    %c0_i32 = arith.constant 0 : i32
    %c0_i32_0 = arith.constant 0 : i32
    %c0_i32_1 = arith.constant 0 : i32
    return %arg0, %arg1, %c0_i32, %c0_i32_0 : i32, i32, i32, i32
  }
  func.func @transform_1(%arg0: i32, %arg1: i32) -> (i32, i32, i32, i32) {
    %c0_i32 = arith.constant 0 : i32
    %c0_i32_0 = arith.constant 0 : i32
    %c0_i32_1 = arith.constant 0 : i32
    return %arg0, %arg1, %c0_i32, %c0_i32_0 : i32, i32, i32, i32
  }
  func.func @transform_2(%arg0: i32, %arg1: i32) -> (i32, i32) {
    %c0_i32 = arith.constant 0 : i32
    %c0_i32_0 = arith.constant 0 : i32
    %c0_i32_1 = arith.constant 0 : i32
    return %c0_i32, %c0_i32_0 : i32, i32
  }
  func.func @transform_3(%arg0: i32, %arg1: i32) -> (i32, i32) {
    %c0_i32 = arith.constant 0 : i32
    %c0_i32_0 = arith.constant 0 : i32
    %c0_i32_1 = arith.constant 0 : i32
    return %c0_i32, %c0_i32_0 : i32, i32
  }
  func.func @transform_4(%arg0: i32, %arg1: i32) -> (i32, i32, i32, i32) {
    %c0_i32 = arith.constant 0 : i32
    %c0_i32_0 = arith.constant 0 : i32
    %c0_i32_1 = arith.constant 0 : i32
    return %arg0, %arg1, %c0_i32, %c0_i32_0 : i32, i32, i32, i32
  }
}

</mosaic_0001>

<llo_original>
// kernel: tpu_custom_call.1
$region0: #{tpu_custom_call.1}
  #allocation0 [shape = 'u32[]', space=smem, size = 0x4, offset = 0x4, fixed_abs, tag = 'smem constant byte address 0x4 - core index']
  #allocation1 [shape = 'u32[144,128]{1,0:T(1,128)}', space=vmem, size = 0x12000, scoped, tag = 'internal scratch']
  %s0 = inlined_call_operand.hbm [shape: f32[2,4,32,128], index: 0, kind: input, shape index: {}]
  %s1 = inlined_call_operand.hbm [shape: f32[2,4,32,128], index: 1, kind: input, shape index: {}]
  %s2 = inlined_call_operand.hbm [shape: f32[16,32], index: 2, kind: input, shape index: {}]
  %s3 = inlined_call_operand.hbm [shape: f32[128,128], index: 3, kind: input, shape index: {}]
  %s4 = inlined_call_operand.vmem [shape: f32[2,4,1,1], index: 4, kind: output, shape index: {}]
  %s5 = sld [smem:[#allocation0]]
  $region65: #{tpu_custom_call.1} parent=0
    _
  %s7 = ssub.s32 1, %s5
  %s8 = scalar_select 0, %s7, %s5
  $region1: #{tpu_custom_call.1} parent=0
    #allocation2 [shape = 'u8[32768]{0}', space=vmem, size = 0x8000, scoped, tag = 'input window, operand 0']
    #allocation3 [shape = 's32[2]{0}', space=sflag, size = 0x8, scoped, tag = 'scoped memory for tpu_custom_call.1']
    #allocation4 [shape = 'u8[32768]{0}', space=vmem, size = 0x8000, scoped, tag = 'input window, operand 1']
    #allocation5 [shape = 's32[2]{0}', space=sflag, size = 0x8, scoped, tag = 'scoped memory for tpu_custom_call.1']
    #allocation6 [shape = 'u8[8192]{0}', space=vmem, size = 0x2000, scoped, tag = 'input window, operand 2, single buffered']
    #allocation7 [shape = 'u8[65536]{0}', space=vmem, size = 0x10000, scoped, tag = 'input window, operand 3, single buffered']
    #allocation8 [shape = 's32[1]{0}', space=sflag, size = 0x4, scoped, tag = 'scoped memory for tpu_custom_call.1']
    %9 = vsyncpa [#allocation3], 0
    %s10 = scalar_lea.sflag [#allocation3], 1
    %11 = vsyncpa %s10, 0
    %12 = vsyncpa [#allocation5], 0
    %s13 = scalar_lea.sflag [#allocation5], 1
    %14 = vsyncpa %s13, 0
    %15 = vsyncpa [#allocation8], 0
    loop: start=0, step=1, limit=10
    $region2: #{tpu_custom_call.1} parent=1 // loop_pre_header
      _
    $region3: #{tpu_custom_call.1} parent=1 // loop_header
      %s17 = sphi 0, %s21
      %p18 = scmp.ge.s32.totalorder %s17, 10
      %s24 = sphi 0, %s36
      %s25 = sphi 0, %s32
      %s26 = sphi 0, %s24
      %s27 = sphi 0, %s25
      %s28 = sphi 0, %s26
      %s29 = sphi 0, %s27
      %s41 = sphi 0, %s43
      %s44 = sphi 0, %s41
      %s45 = sphi 0, %s44
      %s61 = sphi 0, %s45
      %s69 = sphi 0, %s71
      %s72 = sphi 0, %s69
      %s73 = sphi 0, %s72
      %s89 = sphi 0, %s73
      %s93 = sphi 0, %s93
      %s95 = sphi 0, %s93
      %s96 = sphi 0, %s95
      %s110 = sphi 0, %s96
      %s114 = sphi 0, %s114
      %s116 = sphi 0, %s114
      %s117 = sphi 0, %s116
      %s131 = sphi 0, %s117
      %s139 = sphi 0, %s141
      %s142 = sphi 0, %s139
      %s143 = sphi 0, %s142
      %s159 = sphi 0, %s143
    $region4: #{tpu_custom_call.1} parent=1 // loop_header_branch
      %20 = sbr.rel (%p18) target = $region8
    $region5: #{tpu_custom_call.1} parent=1 // loop_body
      %s22 = ssub.s32 %s17, 1
      %s23 = ssub.s32 %s17, 2
      %s30 = sadd.s32 1, %s25
      %p31 = scmp.ge.s32.totalorder %s30, 4
      %s32 = scalar_select %p31, 0, %s30
      %s33 = sadd.s32 1, %s24
      %s34 = scalar_select %p31, %s33, %s24
      %p35 = scmp.ge.s32.totalorder %s34, 2
      %s36 = scalar_select %p35, 0, %s34
      %s37 = ssub.s32 %s24, %s36
      %s38 = ssub.s32 %s25, %s32
      %s39 = sor.u32 %s37, %s38
      %p40 = scmp.eq.s32.totalorder %s39, 0
      %s42 = sadd.s32 %s41, 1
      %s43 = scalar_select %p40, %s41, %s42
      %p46 = pneg %p40
      %p47 = scmp.eq.s32.totalorder %s17, 7
      %p48 = por %p46, %p47
      %p49 = scmp.ne.s32.totalorder %s41, %s44
      %p50 = scmp.eq.s32.totalorder %s17, 0
      %p51 = por %p49, %p50
      %p52 = scmp.ne.s32.totalorder %s41, %s44
      %p53 = scmp.eq.s32.totalorder %s22, 7
      %p54 = por %p52, %p53
      %p55 = scmp.ne.s32.totalorder %s44, %s45
      %p56 = scmp.eq.s32.totalorder %s22, 0
      %p57 = por %p55, %p56
      %p58 = scmp.ne.s32.totalorder %s44, %s45
      %p59 = scmp.eq.s32.totalorder %s23, 7
      %p60 = por %p58, %p59
      %p62 = scmp.ne.s32.totalorder %s45, %s61
      %p63 = scmp.eq.s32.totalorder %s23, 0
      %p64 = por %p62, %p63
      %s65 = ssub.s32 %s24, %s36
      %s66 = ssub.s32 %s25, %s32
      %s67 = sor.u32 %s65, %s66
      %p68 = scmp.eq.s32.totalorder %s67, 0
      %s70 = sadd.s32 %s69, 1
      %s71 = scalar_select %p68, %s69, %s70
      %p74 = pneg %p68
      %p75 = scmp.eq.s32.totalorder %s17, 7
      %p76 = por %p74, %p75
      %p77 = scmp.ne.s32.totalorder %s69, %s72
      %p78 = scmp.eq.s32.totalorder %s17, 0
      %p79 = por %p77, %p78
      %p80 = scmp.ne.s32.totalorder %s69, %s72
      %p81 = scmp.eq.s32.totalorder %s22, 7
      %p82 = por %p80, %p81
      %p83 = scmp.ne.s32.totalorder %s72, %s73
      %p84 = scmp.eq.s32.totalorder %s22, 0
      %p85 = por %p83, %p84
      %p86 = scmp.ne.s32.totalorder %s72, %s73
      %p87 = scmp.eq.s32.totalorder %s23, 7
      %p88 = por %p86, %p87
      %p90 = scmp.ne.s32.totalorder %s73, %s89
      %p91 = scmp.eq.s32.totalorder %s23, 0
      %p92 = por %p90, %p91
      %s94 = sadd.s32 %s93, 1
      %p97 = scmp.eq.s32.totalorder %s17, 7
      %p98 = scmp.ne.s32.totalorder %s93, %s95
      %p99 = scmp.eq.s32.totalorder %s17, 0
      %p100 = por %p98, %p99
      %p101 = scmp.ne.s32.totalorder %s93, %s95
      %p102 = scmp.eq.s32.totalorder %s22, 7
      %p103 = por %p101, %p102
      %p104 = scmp.ne.s32.totalorder %s95, %s96
      %p105 = scmp.eq.s32.totalorder %s22, 0
      %p106 = por %p104, %p105
      %p107 = scmp.ne.s32.totalorder %s95, %s96
      %p108 = scmp.eq.s32.totalorder %s23, 7
      %p109 = por %p107, %p108
      %p111 = scmp.ne.s32.totalorder %s96, %s110
      %p112 = scmp.eq.s32.totalorder %s23, 0
      %p113 = por %p111, %p112
      %s115 = sadd.s32 %s114, 1
      %p118 = scmp.eq.s32.totalorder %s17, 7
      %p119 = scmp.ne.s32.totalorder %s114, %s116
      %p120 = scmp.eq.s32.totalorder %s17, 0
      %p121 = por %p119, %p120
      %p122 = scmp.ne.s32.totalorder %s114, %s116
      %p123 = scmp.eq.s32.totalorder %s22, 7
      %p124 = por %p122, %p123
      %p125 = scmp.ne.s32.totalorder %s116, %s117
      %p126 = scmp.eq.s32.totalorder %s22, 0
      %p127 = por %p125, %p126
      %p128 = scmp.ne.s32.totalorder %s116, %s117
      %p129 = scmp.eq.s32.totalorder %s23, 7
      %p130 = por %p128, %p129
      %p132 = scmp.ne.s32.totalorder %s117, %s131
      %p133 = scmp.eq.s32.totalorder %s23, 0
      %p134 = por %p132, %p133
      %s135 = ssub.s32 %s24, %s36
      %s136 = ssub.s32 %s25, %s32
      %s137 = sor.u32 %s135, %s136
      %p138 = scmp.eq.s32.totalorder %s137, 0
      %s140 = sadd.s32 %s139, 1
      %s141 = scalar_select %p138, %s139, %s140
      %p144 = pneg %p138
      %p145 = scmp.eq.s32.totalorder %s17, 7
      %p146 = por %p144, %p145
      %p147 = scmp.ne.s32.totalorder %s139, %s142
      %p148 = scmp.eq.s32.totalorder %s17, 0
      %p149 = por %p147, %p148
      %p150 = scmp.ne.s32.totalorder %s139, %s142
      %p151 = scmp.eq.s32.totalorder %s22, 7
      %p152 = por %p150, %p151
      %p153 = scmp.ne.s32.totalorder %s142, %s143
      %p154 = scmp.eq.s32.totalorder %s22, 0
      %p155 = por %p153, %p154
      %p156 = scmp.ne.s32.totalorder %s142, %s143
      %p157 = scmp.eq.s32.totalorder %s23, 7
      %p158 = por %p156, %p157
      %p160 = scmp.ne.s32.totalorder %s143, %s159
      %p161 = scmp.eq.s32.totalorder %s23, 0
      %p162 = por %p160, %p161
      %p163 = scmp.le.s32.totalorder 1, %s17
      %p164 = scmp.lt.s32.totalorder %s17, 9
      %p165 = pnand %p163, %p164
      %p166 = pneg %p165
      // Predicated region
      $region9: #{tpu_custom_call.1} parent=5 // pred_check
        _
      $region10: #{tpu_custom_call.1} parent=5 // pred_check_branch
        %168 = sbr.rel (%p165) target = $region12
      $region11: #{tpu_custom_call.1} parent=5 // pred_region
        %s169 = ssub.s32 %s17, 1
        // Predicated region
        $region13: #{tpu_custom_call.1} parent=11 // pred_check
          %p170 = pneg %p106
        $region14: #{tpu_custom_call.1} parent=11 // pred_check_branch
          %172 = sbr.rel (%p170) target = $region16
        $region15: #{tpu_custom_call.1} parent=11 // pred_region
          %s174 = ssub.s32 256, 256
          %175 = vsyncadd [#allocation5], %s174
          %s176 = sshll.u32 [#allocation6], 4
          %s177 = int_to_ptr.vmem [resolvable:$true] %s176
          %182 = dma.hbm_to_vmem [thread:$0]  %s2, 256, %s177, [#allocation5], 128, 128, 8
        $region16: #{tpu_custom_call.1} parent=11 // pred_fallthru
          _
        // Predicated region
        $region17: #{tpu_custom_call.1} parent=11 // pred_check
          %p183 = pneg %p127
        $region18: #{tpu_custom_call.1} parent=11 // pred_check_branch
          %185 = sbr.rel (%p183) target = $region20
        $region19: #{tpu_custom_call.1} parent=11 // pred_region
          %s187 = ssub.s32 2048, 2048
          %188 = vsyncadd [#allocation8], %s187
          %s189 = sshll.u32 [#allocation7], 4
          %s190 = int_to_ptr.vmem [resolvable:$true] %s189
          %195 = dma.hbm_to_vmem [thread:$0]  %s3, 2048, %s190, [#allocation8], 128, 128, 8
        $region20: #{tpu_custom_call.1} parent=11 // pred_fallthru
          _
      $region12: #{tpu_custom_call.1} parent=5 // pred_fallthru
        _
      %p196 = scmp.lt.s32.totalorder %s17, 8
      // Predicated region
      $region21: #{tpu_custom_call.1} parent=5 // pred_check
        %p197 = pneg %p196
      $region22: #{tpu_custom_call.1} parent=5 // pred_check_branch
        %199 = sbr.rel (%p197) target = $region24
      $region23: #{tpu_custom_call.1} parent=5 // pred_region
        // Predicated region
        $region25: #{tpu_custom_call.1} parent=23 // pred_check
          %p200 = pneg %p51
        $region26: #{tpu_custom_call.1} parent=23 // pred_check_branch
          %202 = sbr.rel (%p200) target = $region28
        $region27: #{tpu_custom_call.1} parent=23 // pred_region
          %s203 = sand.u32 %s41, 1
          %s204 = scalar_lea.sflag [#allocation3], %s203
          %s205 = sand.u32 %s41, 1
          %s206 = smul.addr %s205, 32
          %s207 = scalar_lea.vmem [#allocation2], %s206
          %s209 = ssub.s32 512, 512
          %210 = vsyncadd %s204, %s209
          %s211 = smul.addr %s25, 4
          %s212 = smul.addr %s24, 16
          %s213 = sadd.s32 %s211, %s212
          %s214 = smul.addr %s213, 128
          %s215 = scalar_lea.hbm %s0, %s214
          %s216 = sshll.u32 %s207, 4
          %s217 = int_to_ptr.vmem [resolvable:$true] %s216
          %222 = dma.hbm_to_vmem [thread:$0]  %s215, 512, %s217, %s204, 128, 128, 8
        $region28: #{tpu_custom_call.1} parent=23 // pred_fallthru
          _
        // Predicated region
        $region29: #{tpu_custom_call.1} parent=23 // pred_check
          %p223 = pneg %p79
        $region30: #{tpu_custom_call.1} parent=23 // pred_check_branch
          %225 = sbr.rel (%p223) target = $region32
        $region31: #{tpu_custom_call.1} parent=23 // pred_region
          %s226 = sand.u32 %s17, 1
          %s227 = scalar_lea.sflag [#allocation5], %s226
          %s228 = sand.u32 %s69, 1
          %s229 = smul.addr %s228, 32
          %s230 = scalar_lea.vmem [#allocation4], %s229
          %s232 = ssub.s32 512, 512
          %233 = vsyncadd %s227, %s232
          %s234 = smul.addr %s25, 4
          %s235 = smul.addr %s24, 16
          %s236 = sadd.s32 %s234, %s235
          %s237 = smul.addr %s236, 128
          %s238 = scalar_lea.hbm %s1, %s237
          %s239 = sshll.u32 %s230, 4
          %s240 = int_to_ptr.vmem [resolvable:$true] %s239
          %245 = dma.hbm_to_vmem [thread:$0]  %s238, 512, %s240, %s227, 128, 128, 8
        $region32: #{tpu_custom_call.1} parent=23 // pred_fallthru
          _
      $region24: #{tpu_custom_call.1} parent=5 // pred_fallthru
        _
      %p246 = scmp.le.s32.totalorder 1, %s17
      %p247 = scmp.lt.s32.totalorder %s17, 9
      %p248 = pnand %p246, %p247
      %p249 = pneg %p248
      // Predicated region
      $region33: #{tpu_custom_call.1} parent=5 // pred_check
        _
      $region34: #{tpu_custom_call.1} parent=5 // pred_check_branch
        %251 = sbr.rel (%p248) target = $region36
      $region35: #{tpu_custom_call.1} parent=5 // pred_region
        %s252 = ssub.s32 %s17, 1
        %s253 = sand.u32 %s44, 1
        %s254 = scalar_lea.sflag [#allocation3], %s253
        %s255 = sand.u32 %s44, 1
        %s256 = smul.addr %s255, 32
        %s257 = scalar_lea.vmem [#allocation2], %s256
        // Predicated region
        $region37: #{tpu_custom_call.1} parent=35 // pred_check
          %p258 = pneg %p57
        $region38: #{tpu_custom_call.1} parent=35 // pred_check_branch
          %260 = sbr.rel (%p258) target = $region40
        $region39: #{tpu_custom_call.1} parent=35 // pred_region
          %261 = dma.done %s254, 512
        $region40: #{tpu_custom_call.1} parent=35 // pred_fallthru
          _
        %s262 = sand.u32 %s22, 1
        %s263 = scalar_lea.sflag [#allocation5], %s262
        %s264 = sand.u32 %s72, 1
        %s265 = smul.addr %s264, 32
        %s266 = scalar_lea.vmem [#allocation4], %s265
        // Predicated region
        $region41: #{tpu_custom_call.1} parent=35 // pred_check
          %p267 = pneg %p85
        $region42: #{tpu_custom_call.1} parent=35 // pred_check_branch
          %269 = sbr.rel (%p267) target = $region44
        $region43: #{tpu_custom_call.1} parent=35 // pred_region
          %270 = dma.done %s263, 512
        $region44: #{tpu_custom_call.1} parent=35 // pred_fallthru
          _
        // Predicated region
        $region45: #{tpu_custom_call.1} parent=35 // pred_check
          %p271 = pneg %p106
        $region46: #{tpu_custom_call.1} parent=35 // pred_check_branch
          %273 = sbr.rel (%p271) target = $region48
        $region47: #{tpu_custom_call.1} parent=35 // pred_region
          %274 = dma.done [#allocation5], 256
        $region48: #{tpu_custom_call.1} parent=35 // pred_fallthru
          _
        // Predicated region
        $region49: #{tpu_custom_call.1} parent=35 // pred_check
          %p275 = pneg %p127
        $region50: #{tpu_custom_call.1} parent=35 // pred_check_branch
          %277 = sbr.rel (%p275) target = $region52
        $region51: #{tpu_custom_call.1} parent=35 // pred_region
          %278 = dma.done [#allocation8], 2048
        $region52: #{tpu_custom_call.1} parent=35 // pred_fallthru
          _
        %s279 = sand.u32 %s44, 1
        %s280 = scalar_lea.sflag [#allocation3], %s279
        %s281 = sand.u32 %s44, 1
        %s282 = smul.addr %s281, 32
        %s283 = scalar_lea.vmem [#allocation2], %s282
        %p284 = pneg %p57
        %p285 = pneg %p54
        %s286 = sand.u32 %s22, 1
        %s287 = scalar_lea.sflag [#allocation5], %s286
        %s288 = sand.u32 %s72, 1
        %s289 = smul.addr %s288, 32
        %s290 = scalar_lea.vmem [#allocation4], %s289
        %p291 = pneg %p85
        %p292 = pneg %p82
        %p293 = pneg %p106
        %p294 = pneg %p103
        %p295 = pneg %p127
        %p296 = pneg %p124
        %p297 = pneg %p155
        %p298 = pneg %p152
        %p299 = scmp.lt.s32.totalorder %s26, 1
        %s300 = scalar_select %p299, %s26, 1
        %p301 = scmp.lt.s32.totalorder %s27, 3
        %s302 = scalar_select %p301, %s27, 3
        %s303 = smul.addr %s300, 4
        %s304 = sadd.s32 %s302, %s303
        %s305 = scalar_lea.vmem %s4, %s304
        %p306 = scmp.lt.s32.totalorder %s26, 1
        %s307 = scalar_select %p306, %s26, 1
        %p308 = scmp.lt.s32.totalorder %s27, 3
        %s309 = scalar_select %p308, %s27, 3
        %s310 = smul.addr %s307, 4
        %s311 = sadd.s32 %s309, %s310
        %s312 = scalar_lea.vmem %s4, %s311
        %v313 = vld [vmem:[%s257] sm:$0xff]
        %v314 = vld [vmem:[%s257 + $0x8] sm:$0xff]
        %v315 = vld [vmem:[%s257 + $0x10] sm:$0xff]
        %v316 = vld [vmem:[%s257 + $0x18] sm:$0xff]
        %v317 = vld [vmem:[%s266] sm:$0xff]
        %v318 = vld [vmem:[%s266 + $0x8] sm:$0xff]
        %v319 = vld [vmem:[%s266 + $0x10] sm:$0xff]
        %v320 = vld [vmem:[%s266 + $0x18] sm:$0xff]
        %v321 = vld [vmem:[#allocation6] sm:$0xff]
        %v322 = vld [vmem:[#allocation6 + $0x8] sm:$0xff]
        %v323 = vld [vmem:[#allocation7] sm:$0xff]
        %v324 = vld [vmem:[#allocation7 + $0x8] sm:$0xff]
        %v325 = vld [vmem:[#allocation7 + $0x10] sm:$0xff]
        %v326 = vld [vmem:[#allocation7 + $0x18] sm:$0xff]
        %v327 = vld [vmem:[#allocation7 + $0x20] sm:$0xff]
        %v328 = vld [vmem:[#allocation7 + $0x28] sm:$0xff]
        %v329 = vld [vmem:[#allocation7 + $0x30] sm:$0xff]
        %v330 = vld [vmem:[#allocation7 + $0x38] sm:$0xff]
        %v331 = vld [vmem:[#allocation7 + $0x40] sm:$0xff]
        %v332 = vld [vmem:[#allocation7 + $0x48] sm:$0xff]
        %v333 = vld [vmem:[#allocation7 + $0x50] sm:$0xff]
        %v334 = vld [vmem:[#allocation7 + $0x58] sm:$0xff]
        %v335 = vld [vmem:[#allocation7 + $0x60] sm:$0xff]
        %v336 = vld [vmem:[#allocation7 + $0x68] sm:$0xff]
        %v337 = vld [vmem:[#allocation7 + $0x70] sm:$0xff]
        %v338 = vld [vmem:[#allocation7 + $0x78] sm:$0xff]
        %339 = vmatprep.subr.mxu0 0.0
        %v340 = vand.u32 %v323, 4294901760
        %341 = vmatpush1.msra.mxu0 %v340
        %342 = vmatprep.subr.mxu0 0.0
        %v343 = vand.u32 %v324, 4294901760
        %344 = vmatpush1.msra.mxu0 %v343
        %345 = vmatprep.subr.mxu0 0.0
        %v346 = vand.u32 %v325, 4294901760
        %347 = vmatpush1.msra.mxu0 %v346
        %348 = vmatprep.subr.mxu0 0.0
        %v349 = vand.u32 %v326, 4294901760
        %350 = vmatpush1.msra.mxu0 %v349
        %351 = vmatprep.subr.mxu0 0.0
        %v352 = vand.u32 %v327, 4294901760
        %353 = vmatpush1.msra.mxu0 %v352
        %354 = vmatprep.subr.mxu0 0.0
        %v355 = vand.u32 %v328, 4294901760
        %356 = vmatpush1.msra.mxu0 %v355
        %357 = vmatprep.subr.mxu0 0.0
        %v358 = vand.u32 %v329, 4294901760
        %359 = vmatpush1.msra.mxu0 %v358
        %360 = vmatprep.subr.mxu0 0.0
        %v361 = vand.u32 %v330, 4294901760
        %362 = vmatpush1.msra.mxu0 %v361
        %363 = vmatprep.subr.mxu0 0.0
        %v364 = vand.u32 %v331, 4294901760
        %365 = vmatpush1.msra.mxu0 %v364
        %366 = vmatprep.subr.mxu0 0.0
        %v367 = vand.u32 %v332, 4294901760
        %368 = vmatpush1.msra.mxu0 %v367
        %369 = vmatprep.subr.mxu0 0.0
        %v370 = vand.u32 %v333, 4294901760
        %371 = vmatpush1.msra.mxu0 %v370
        %372 = vmatprep.subr.mxu0 0.0
        %v373 = vand.u32 %v334, 4294901760
        %374 = vmatpush1.msra.mxu0 %v373
        %375 = vmatprep.subr.mxu0 0.0
        %v376 = vand.u32 %v335, 4294901760
        %377 = vmatpush1.msra.mxu0 %v376
        %378 = vmatprep.subr.mxu0 0.0
        %v379 = vand.u32 %v336, 4294901760
        %380 = vmatpush1.msra.mxu0 %v379
        %381 = vmatprep.subr.mxu0 0.0
        %v382 = vand.u32 %v337, 4294901760
        %383 = vmatpush1.msra.mxu0 %v382
        %384 = vmatprep.subr.mxu0 0.0
        %v385 = vand.u32 %v338, 4294901760
        %386 = vmatpush1.msra.mxu0 %v385
        %387 = vmatprep.subr.mxu0 0.0
        %388 = vmatpush1.msra.mxu0 0.0
        %389 = vmatprep.subr.mxu0 0.0
        %390 = vmatpush1.msra.mxu0 0.0
        %391 = vmatprep.subr.mxu0 0.0
        %392 = vmatpush1.msra.mxu0 0.0
        %393 = vmatprep.subr.mxu0 0.0
        %394 = vmatpush1.msra.mxu0 0.0
        %395 = vmatprep.subr.mxu0 0.0
        %396 = vmatpush1.msra.mxu0 0.0
        %397 = vmatprep.subr.mxu0 0.0
        %398 = vmatpush1.msra.mxu0 0.0
        %399 = vmatprep.subr.mxu0 0.0
        %400 = vmatpush1.msra.mxu0 0.0
        %401 = vmatprep.subr.mxu0 0.0
        %402 = vmatpush1.msra.mxu0 0.0
        %403 = vmatprep.subr.mxu0 0.0
        %404 = vmatpush1.msra.mxu0 0.0
        %405 = vmatprep.subr.mxu0 0.0
        %406 = vmatpush1.msra.mxu0 0.0
        %407 = vmatprep.subr.mxu0 0.0
        %408 = vmatpush1.msra.mxu0 0.0
        %409 = vmatprep.subr.mxu0 0.0
        %410 = vmatpush1.msra.mxu0 0.0
        %411 = vmatprep.subr.mxu0 0.0
        %412 = vmatpush1.msra.mxu0 0.0
        %413 = vmatprep.subr.mxu0 0.0
        %414 = vmatpush1.msra.mxu0 0.0
        %415 = vmatprep.subr.mxu0 0.0
        %416 = vmatpush1.msra.mxu0 0.0
        %417 = vmatprep.subr.mxu0 0.0
        %418 = vmatpush1.msra.mxu0 0.0
        %419 = vmatprep.mubr.f32.mxu0 0.0
        %v420 = vand.u32 %v313, 4294901760
        %v421 = vsub.f32 %v313, %v420
        %v422 = vand.u32 %v421, 4294901760
        %v423 = vsub.f32 %v421, %v422
        %v424 = vand.u32 %v423, 4294901760
        %425 = vmatmul.mubr.f32.gmra.mrb[0].mxu0 %v424
        %v426 = vpop.f32.mrb[0].mxu0
        %v427 = vadd.f32 0.0, %v426
        %v428 = vpop.f32.mrb[0].mxu0
        %429 = vmatprep.mubr.f32.mxu0 0.0
        %v430 = vand.u32 %v314, 4294901760
        %v431 = vsub.f32 %v314, %v430
        %v432 = vand.u32 %v431, 4294901760
        %v433 = vsub.f32 %v431, %v432
        %v434 = vand.u32 %v433, 4294901760
        %435 = vmatmul.mubr.f32.gmra.mrb[0].mxu0 %v434
        %v436 = vpop.f32.mrb[0].mxu0
        %v437 = vadd.f32 0.0, %v436
        %v438 = vpop.f32.mrb[0].mxu0
        %439 = vmatprep.mubr.f32.mxu0 0.0
        %v440 = vand.u32 %v315, 4294901760
        %v441 = vsub.f32 %v315, %v440
        %v442 = vand.u32 %v441, 4294901760
        %v443 = vsub.f32 %v441, %v442
        %v444 = vand.u32 %v443, 4294901760
        %445 = vmatmul.mubr.f32.gmra.mrb[0].mxu0 %v444
        %v446 = vpop.f32.mrb[0].mxu0
        %v447 = vadd.f32 0.0, %v446
        %v448 = vpop.f32.mrb[0].mxu0
        %449 = vmatprep.mubr.f32.mxu0 0.0
        %v450 = vand.u32 %v316, 4294901760
        %v451 = vsub.f32 %v316, %v450
        %v452 = vand.u32 %v451, 4294901760
        %v453 = vsub.f32 %v451, %v452
        %v454 = vand.u32 %v453, 4294901760
        %455 = vmatmul.mubr.f32.gmra.mrb[0].mxu0 %v454
        %v456 = vpop.f32.mrb[0].mxu0
        %v457 = vadd.f32 0.0, %v456
        %v458 = vpop.f32.mrb[0].mxu0
        %459 = vdwg.mxu0
        %460 = vmatprep.subr.mxu0 0.0
        %v461 = vand.u32 %v323, 4294901760
        %v462 = vsub.f32 %v323, %v461
        %v463 = vand.u32 %v462, 4294901760
        %v464 = vsub.f32 %v462, %v463
        %v465 = vand.u32 %v464, 4294901760
        %466 = vmatpush1.msra.mxu0 %v465
        %467 = vmatprep.subr.mxu0 0.0
        %v468 = vand.u32 %v324, 4294901760
        %v469 = vsub.f32 %v324, %v468
        %v470 = vand.u32 %v469, 4294901760
        %v471 = vsub.f32 %v469, %v470
        %v472 = vand.u32 %v471, 4294901760
        %473 = vmatpush1.msra.mxu0 %v472
        %474 = vmatprep.subr.mxu0 0.0
        %v475 = vand.u32 %v325, 4294901760
        %v476 = vsub.f32 %v325, %v475
        %v477 = vand.u32 %v476, 4294901760
        %v478 = vsub.f32 %v476, %v477
        %v479 = vand.u32 %v478, 4294901760
        %480 = vmatpush1.msra.mxu0 %v479
        %481 = vmatprep.subr.mxu0 0.0
        %v482 = vand.u32 %v326, 4294901760
        %v483 = vsub.f32 %v326, %v482
        %v484 = vand.u32 %v483, 4294901760
        %v485 = vsub.f32 %v483, %v484
        %v486 = vand.u32 %v485, 4294901760
        %487 = vmatpush1.msra.mxu0 %v486
        %488 = vmatprep.subr.mxu0 0.0
        %v489 = vand.u32 %v327, 4294901760
        %v490 = vsub.f32 %v327, %v489
        %v491 = vand.u32 %v490, 4294901760
        %v492 = vsub.f32 %v490, %v491
        %v493 = vand.u32 %v492, 4294901760
        %494 = vmatpush1.msra.mxu0 %v493
        %495 = vmatprep.subr.mxu0 0.0
        %v496 = vand.u32 %v328, 4294901760
        %v497 = vsub.f32 %v328, %v496
        %v498 = vand.u32 %v497, 4294901760
        %v499 = vsub.f32 %v497, %v498
        %v500 = vand.u32 %v499, 4294901760
        %501 = vmatpush1.msra.mxu0 %v500
        %502 = vmatprep.subr.mxu0 0.0
        %v503 = vand.u32 %v329, 4294901760
        %v504 = vsub.f32 %v329, %v503
        %v505 = vand.u32 %v504, 4294901760
        %v506 = vsub.f32 %v504, %v505
        %v507 = vand.u32 %v506, 4294901760
        %508 = vmatpush1.msra.mxu0 %v507
        %509 = vmatprep.subr.mxu0 0.0
        %v510 = vand.u32 %v330, 4294901760
        %v511 = vsub.f32 %v330, %v510
        %v512 = vand.u32 %v511, 4294901760
        %v513 = vsub.f32 %v511, %v512
        %v514 = vand.u32 %v513, 4294901760
        %515 = vmatpush1.msra.mxu0 %v514
        %516 = vmatprep.subr.mxu0 0.0
        %v517 = vand.u32 %v331, 4294901760
        %v518 = vsub.f32 %v331, %v517
        %v519 = vand.u32 %v518, 4294901760
        %v520 = vsub.f32 %v518, %v519
        %v521 = vand.u32 %v520, 4294901760
        %522 = vmatpush1.msra.mxu0 %v521
        %523 = vmatprep.subr.mxu0 0.0
        %v524 = vand.u32 %v332, 4294901760
        %v525 = vsub.f32 %v332, %v524
        %v526 = vand.u32 %v525, 4294901760
        %v527 = vsub.f32 %v525, %v526
        %v528 = vand.u32 %v527, 4294901760
        %529 = vmatpush1.msra.mxu0 %v528
        %530 = vmatprep.subr.mxu0 0.0
        %v531 = vand.u32 %v333, 4294901760
        %v532 = vsub.f32 %v333, %v531
        %v533 = vand.u32 %v532, 4294901760
        %v534 = vsub.f32 %v532, %v533
        %v535 = vand.u32 %v534, 4294901760
        %536 = vmatpush1.msra.mxu0 %v535
        %537 = vmatprep.subr.mxu0 0.0
        %v538 = vand.u32 %v334, 4294901760
        %v539 = vsub.f32 %v334, %v538
        %v540 = vand.u32 %v539, 4294901760
        %v541 = vsub.f32 %v539, %v540
        %v542 = vand.u32 %v541, 4294901760
        %543 = vmatpush1.msra.mxu0 %v542
        %544 = vmatprep.subr.mxu0 0.0
        %v545 = vand.u32 %v335, 4294901760
        %v546 = vsub.f32 %v335, %v545
        %v547 = vand.u32 %v546, 4294901760
        %v548 = vsub.f32 %v546, %v547
        %v549 = vand.u32 %v548, 4294901760
        %550 = vmatpush1.msra.mxu0 %v549
        %551 = vmatprep.subr.mxu0 0.0
        %v552 = vand.u32 %v336, 4294901760
        %v553 = vsub.f32 %v336, %v552
        %v554 = vand.u32 %v553, 4294901760
        %v555 = vsub.f32 %v553, %v554
        %v556 = vand.u32 %v555, 4294901760
        %557 = vmatpush1.msra.mxu0 %v556
        %558 = vmatprep.subr.mxu0 0.0
        %v559 = vand.u32 %v337, 4294901760
        %v560 = vsub.f32 %v337, %v559
        %v561 = vand.u32 %v560, 4294901760
        %v562 = vsub.f32 %v560, %v561
        %v563 = vand.u32 %v562, 4294901760
        %564 = vmatpush1.msra.mxu0 %v563
        %565 = vmatprep.subr.mxu0 0.0
        %v566 = vand.u32 %v338, 4294901760
        %v567 = vsub.f32 %v338, %v566
        %v568 = vand.u32 %v567, 4294901760
        %v569 = vsub.f32 %v567, %v568
        %v570 = vand.u32 %v569, 4294901760
        %571 = vmatpush1.msra.mxu0 %v570
        %572 = vmatprep.subr.mxu0 0.0
        %573 = vmatpush1.msra.mxu0 0.0
        %574 = vmatprep.subr.mxu0 0.0
        %575 = vmatpush1.msra.mxu0 0.0
        %576 = vmatprep.subr.mxu0 0.0
        %577 = vmatpush1.msra.mxu0 0.0
        %578 = vmatprep.subr.mxu0 0.0
        %579 = vmatpush1.msra.mxu0 0.0
        %580 = vmatprep.subr.mxu0 0.0
        %581 = vmatpush1.msra.mxu0 0.0
        %582 = vmatprep.subr.mxu0 0.0
        %583 = vmatpush1.msra.mxu0 0.0
        %584 = vmatprep.subr.mxu0 0.0
        %585 = vmatpush1.msra.mxu0 0.0
        %586 = vmatprep.subr.mxu0 0.0
        %587 = vmatpush1.msra.mxu0 0.0
        %588 = vmatprep.subr.mxu0 0.0
        %589 = vmatpush1.msra.mxu0 0.0
        %590 = vmatprep.subr.mxu0 0.0
        %591 = vmatpush1.msra.mxu0 0.0
        %592 = vmatprep.subr.mxu0 0.0
        %593 = vmatpush1.msra.mxu0 0.0
        %594 = vmatprep.subr.mxu0 0.0
        %595 = vmatpush1.msra.mxu0 0.0
        %596 = vmatprep.subr.mxu0 0.0
        %597 = vmatpush1.msra.mxu0 0.0
        %598 = vmatprep.subr.mxu0 0.0
        %599 = vmatpush1.msra.mxu0 0.0
        %600 = vmatprep.subr.mxu0 0.0
        %601 = vmatpush1.msra.mxu0 0.0
        %602 = vmatprep.subr.mxu0 0.0
        %603 = vmatpush1.msra.mxu0 0.0
        %604 = vmatprep.mubr.f32.mxu0 0.0
        %v605 = vand.u32 %v313, 4294901760
        %606 = vmatmul.mubr.f32.gmra.mrb[0].mxu0 %v605
        %v607 = vpop.f32.mrb[0].mxu0
        %v608 = vadd.f32 %v427, %v607
        %v609 = vpop.f32.mrb[0].mxu0
        %610 = vmatprep.mubr.f32.mxu0 0.0
        %v611 = vand.u32 %v314, 4294901760
        %612 = vmatmul.mubr.f32.gmra.mrb[0].mxu0 %v611
        %v613 = vpop.f32.mrb[0].mxu0
        %v614 = vadd.f32 %v437, %v613
        %v615 = vpop.f32.mrb[0].mxu0
        %616 = vmatprep.mubr.f32.mxu0 0.0
        %v617 = vand.u32 %v315, 4294901760
        %618 = vmatmul.mubr.f32.gmra.mrb[0].mxu0 %v617
        %v619 = vpop.f32.mrb[0].mxu0
        %v620 = vadd.f32 %v447, %v619
        %v621 = vpop.f32.mrb[0].mxu0
        %622 = vmatprep.mubr.f32.mxu0 0.0
        %v623 = vand.u32 %v316, 4294901760
        %624 = vmatmul.mubr.f32.gmra.mrb[0].mxu0 %v623
        %v625 = vpop.f32.mrb[0].mxu0
        %v626 = vadd.f32 %v457, %v625
        %v627 = vpop.f32.mrb[0].mxu0
        %628 = vdwg.mxu0
        %629 = vmatprep.subr.mxu0 0.0
        %v630 = vand.u32 %v323, 4294901760
        %v631 = vsub.f32 %v323, %v630
        %632 = vmatpush1.msra.mxu0 %v631
        %633 = vmatprep.subr.mxu0 0.0
        %v634 = vand.u32 %v324, 4294901760
        %v635 = vsub.f32 %v324, %v634
        %636 = vmatpush1.msra.mxu0 %v635
        %637 = vmatprep.subr.mxu0 0.0
        %v638 = vand.u32 %v325, 4294901760
        %v639 = vsub.f32 %v325, %v638
        %640 = vmatpush1.msra.mxu0 %v639
        %641 = vmatprep.subr.mxu0 0.0
        %v642 = vand.u32 %v326, 4294901760
        %v643 = vsub.f32 %v326, %v642
        %644 = vmatpush1.msra.mxu0 %v643
        %645 = vmatprep.subr.mxu0 0.0
        %v646 = vand.u32 %v327, 4294901760
        %v647 = vsub.f32 %v327, %v646
        %648 = vmatpush1.msra.mxu0 %v647
        %649 = vmatprep.subr.mxu0 0.0
        %v650 = vand.u32 %v328, 4294901760
        %v651 = vsub.f32 %v328, %v650
        %652 = vmatpush1.msra.mxu0 %v651
        %653 = vmatprep.subr.mxu0 0.0
        %v654 = vand.u32 %v329, 4294901760
        %v655 = vsub.f32 %v329, %v654
        %656 = vmatpush1.msra.mxu0 %v655
        %657 = vmatprep.subr.mxu0 0.0
        %v658 = vand.u32 %v330, 4294901760
        %v659 = vsub.f32 %v330, %v658
        %660 = vmatpush1.msra.mxu0 %v659
        %661 = vmatprep.subr.mxu0 0.0
        %v662 = vand.u32 %v331, 4294901760
        %v663 = vsub.f32 %v331, %v662
        %664 = vmatpush1.msra.mxu0 %v663
        %665 = vmatprep.subr.mxu0 0.0
        %v666 = vand.u32 %v332, 4294901760
        %v667 = vsub.f32 %v332, %v666
        %668 = vmatpush1.msra.mxu0 %v667
        %669 = vmatprep.subr.mxu0 0.0
        %v670 = vand.u32 %v333, 4294901760
        %v671 = vsub.f32 %v333, %v670
        %672 = vmatpush1.msra.mxu0 %v671
        %673 = vmatprep.subr.mxu0 0.0
        %v674 = vand.u32 %v334, 4294901760
        %v675 = vsub.f32 %v334, %v674
        %676 = vmatpush1.msra.mxu0 %v675
        %677 = vmatprep.subr.mxu0 0.0
        %v678 = vand.u32 %v335, 4294901760
        %v679 = vsub.f32 %v335, %v678
        %680 = vmatpush1.msra.mxu0 %v679
        %681 = vmatprep.subr.mxu0 0.0
        %v682 = vand.u32 %v336, 4294901760
        %v683 = vsub.f32 %v336, %v682
        %684 = vmatpush1.msra.mxu0 %v683
        %685 = vmatprep.subr.mxu0 0.0
        %v686 = vand.u32 %v337, 4294901760
        %v687 = vsub.f32 %v337, %v686
        %688 = vmatpush1.msra.mxu0 %v687
        %689 = vmatprep.subr.mxu0 0.0
        %v690 = vand.u32 %v338, 4294901760
        %v691 = vsub.f32 %v338, %v690
        %692 = vmatpush1.msra.mxu0 %v691
        %693 = vmatprep.subr.mxu0 0.0
        %694 = vmatpush1.msra.mxu0 0.0
        %695 = vmatprep.subr.mxu0 0.0
        %696 = vmatpush1.msra.mxu0 0.0
        %697 = vmatprep.subr.mxu0 0.0
        %698 = vmatpush1.msra.mxu0 0.0
        %699 = vmatprep.subr.mxu0 0.0
        %700 = vmatpush1.msra.mxu0 0.0
        %701 = vmatprep.subr.mxu0 0.0
        %702 = vmatpush1.msra.mxu0 0.0
        %703 = vmatprep.subr.mxu0 0.0
        %704 = vmatpush1.msra.mxu0 0.0
        %705 = vmatprep.subr.mxu0 0.0
        %706 = vmatpush1.msra.mxu0 0.0
        %707 = vmatprep.subr.mxu0 0.0
        %708 = vmatpush1.msra.mxu0 0.0
        %709 = vmatprep.subr.mxu0 0.0
        %710 = vmatpush1.msra.mxu0 0.0
        %711 = vmatprep.subr.mxu0 0.0
        %712 = vmatpush1.msra.mxu0 0.0
        %713 = vmatprep.subr.mxu0 0.0
        %714 = vmatpush1.msra.mxu0 0.0
        %715 = vmatprep.subr.mxu0 0.0
        %716 = vmatpush1.msra.mxu0 0.0
        %717 = vmatprep.subr.mxu0 0.0
        %718 = vmatpush1.msra.mxu0 0.0
        %719 = vmatprep.subr.mxu0 0.0
        %720 = vmatpush1.msra.mxu0 0.0
        %721 = vmatprep.subr.mxu0 0.0
        %722 = vmatpush1.msra.mxu0 0.0
        %723 = vmatprep.subr.mxu0 0.0
        %724 = vmatpush1.msra.mxu0 0.0
        %725 = vmatprep.mubr.f32.mxu0 0.0
        %v726 = vand.u32 %v313, 4294901760
        %v727 = vsub.f32 %v313, %v726
        %728 = vmatmul.mubr.f32.gmra.mrb[0].mxu0 %v727
        %v729 = vpop.f32.mrb[0].mxu0
        %v730 = vadd.f32 %v608, %v729
        %v731 = vpop.f32.mrb[0].mxu0
        %732 = vmatprep.mubr.f32.mxu0 0.0
        %v733 = vand.u32 %v314, 4294901760
        %v734 = vsub.f32 %v314, %v733
        %735 = vmatmul.mubr.f32.gmra.mrb[0].mxu0 %v734
        %v736 = vpop.f32.mrb[0].mxu0
        %v737 = vadd.f32 %v614, %v736
        %v738 = vpop.f32.mrb[0].mxu0
        %739 = vmatprep.mubr.f32.mxu0 0.0
        %v740 = vand.u32 %v315, 4294901760
        %v741 = vsub.f32 %v315, %v740
        %742 = vmatmul.mubr.f32.gmra.mrb[0].mxu0 %v741
        %v743 = vpop.f32.mrb[0].mxu0
        %v744 = vadd.f32 %v620, %v743
        %v745 = vpop.f32.mrb[0].mxu0
        %746 = vmatprep.mubr.f32.mxu0 0.0
        %v747 = vand.u32 %v316, 4294901760
        %v748 = vsub.f32 %v316, %v747
        %749 = vmatmul.mubr.f32.gmra.mrb[0].mxu0 %v748
        %v750 = vpop.f32.mrb[0].mxu0
        %v751 = vadd.f32 %v626, %v750
        %v752 = vpop.f32.mrb[0].mxu0
        %753 = vdwg.mxu0
        %754 = vmatprep.subr.mxu0 0.0
        %v755 = vand.u32 %v323, 4294901760
        %756 = vmatpush1.msra.mxu0 %v755
        %757 = vmatprep.subr.mxu0 0.0
        %v758 = vand.u32 %v324, 4294901760
        %759 = vmatpush1.msra.mxu0 %v758
        %760 = vmatprep.subr.mxu0 0.0
        %v761 = vand.u32 %v325, 4294901760
        %762 = vmatpush1.msra.mxu0 %v761
        %763 = vmatprep.subr.mxu0 0.0
        %v764 = vand.u32 %v326, 4294901760
        %765 = vmatpush1.msra.mxu0 %v764
        %766 = vmatprep.subr.mxu0 0.0
        %v767 = vand.u32 %v327, 4294901760
        %768 = vmatpush1.msra.mxu0 %v767
        %769 = vmatprep.subr.mxu0 0.0
        %v770 = vand.u32 %v328, 4294901760
        %771 = vmatpush1.msra.mxu0 %v770
        %772 = vmatprep.subr.mxu0 0.0
        %v773 = vand.u32 %v329, 4294901760
        %774 = vmatpush1.msra.mxu0 %v773
        %775 = vmatprep.subr.mxu0 0.0
        %v776 = vand.u32 %v330, 4294901760
        %777 = vmatpush1.msra.mxu0 %v776
        %778 = vmatprep.subr.mxu0 0.0
        %v779 = vand.u32 %v331, 4294901760
        %780 = vmatpush1.msra.mxu0 %v779
        %781 = vmatprep.subr.mxu0 0.0
        %v782 = vand.u32 %v332, 4294901760
        %783 = vmatpush1.msra.mxu0 %v782
        %784 = vmatprep.subr.mxu0 0.0
        %v785 = vand.u32 %v333, 4294901760
        %786 = vmatpush1.msra.mxu0 %v785
        %787 = vmatprep.subr.mxu0 0.0
        %v788 = vand.u32 %v334, 4294901760
        %789 = vmatpush1.msra.mxu0 %v788
        %790 = vmatprep.subr.mxu0 0.0
        %v791 = vand.u32 %v335, 4294901760
        %792 = vmatpush1.msra.mxu0 %v791
        %793 = vmatprep.subr.mxu0 0.0
        %v794 = vand.u32 %v336, 4294901760
        %795 = vmatpush1.msra.mxu0 %v794
        %796 = vmatprep.subr.mxu0 0.0
        %v797 = vand.u32 %v337, 4294901760
        %798 = vmatpush1.msra.mxu0 %v797
        %799 = vmatprep.subr.mxu0 0.0
        %v800 = vand.u32 %v338, 4294901760
        %801 = vmatpush1.msra.mxu0 %v800
        %802 = vmatprep.subr.mxu0 0.0
        %803 = vmatpush1.msra.mxu0 0.0
        %804 = vmatprep.subr.mxu0 0.0
        %805 = vmatpush1.msra.mxu0 0.0
        %806 = vmatprep.subr.mxu0 0.0
        %807 = vmatpush1.msra.mxu0 0.0
        %808 = vmatprep.subr.mxu0 0.0
        %809 = vmatpush1.msra.mxu0 0.0
        %810 = vmatprep.subr.mxu0 0.0
        %811 = vmatpush1.msra.mxu0 0.0
        %812 = vmatprep.subr.mxu0 0.0
        %813 = vmatpush1.msra.mxu0 0.0
        %814 = vmatprep.subr.mxu0 0.0
        %815 = vmatpush1.msra.mxu0 0.0
        %816 = vmatprep.subr.mxu0 0.0
        %817 = vmatpush1.msra.mxu0 0.0
        %818 = vmatprep.subr.mxu0 0.0
        %819 = vmatpush1.msra.mxu0 0.0
        %820 = vmatprep.subr.mxu0 0.0
        %821 = vmatpush1.msra.mxu0 0.0
        %822 = vmatprep.subr.mxu0 0.0
        %823 = vmatpush1.msra.mxu0 0.0
        %824 = vmatprep.subr.mxu0 0.0
        %825 = vmatpush1.msra.mxu0 0.0
        %826 = vmatprep.subr.mxu0 0.0
        %827 = vmatpush1.msra.mxu0 0.0
        %828 = vmatprep.subr.mxu0 0.0
        %829 = vmatpush1.msra.mxu0 0.0
        %830 = vmatprep.subr.mxu0 0.0
        %831 = vmatpush1.msra.mxu0 0.0
        %832 = vmatprep.subr.mxu0 0.0
        %833 = vmatpush1.msra.mxu0 0.0
        %834 = vmatprep.mubr.f32.mxu0 0.0
        %v835 = vand.u32 %v313, 4294901760
        %v836 = vsub.f32 %v313, %v835
        %v837 = vand.u32 %v836, 4294901760
        %838 = vmatmul.mubr.f32.gmra.mrb[0].mxu0 %v837
        %v839 = vpop.f32.mrb[0].mxu0
        %v840 = vadd.f32 %v730, %v839
        %v841 = vpop.f32.mrb[0].mxu0
        %842 = vmatprep.mubr.f32.mxu0 0.0
        %v843 = vand.u32 %v314, 4294901760
        %v844 = vsub.f32 %v314, %v843
        %v845 = vand.u32 %v844, 4294901760
        %846 = vmatmul.mubr.f32.gmra.mrb[0].mxu0 %v845
        %v847 = vpop.f32.mrb[0].mxu0
        %v848 = vadd.f32 %v737, %v847
        %v849 = vpop.f32.mrb[0].mxu0
        %850 = vmatprep.mubr.f32.mxu0 0.0
        %v851 = vand.u32 %v315, 4294901760
        %v852 = vsub.f32 %v315, %v851
        %v853 = vand.u32 %v852, 4294901760
        %854 = vmatmul.mubr.f32.gmra.mrb[0].mxu0 %v853
        %v855 = vpop.f32.mrb[0].mxu0
        %v856 = vadd.f32 %v744, %v855
        %v857 = vpop.f32.mrb[0].mxu0
        %858 = vmatprep.mubr.f32.mxu0 0.0
        %v859 = vand.u32 %v316, 4294901760
        %v860 = vsub.f32 %v316, %v859
        %v861 = vand.u32 %v860, 4294901760
        %862 = vmatmul.mubr.f32.gmra.mrb[0].mxu0 %v861
        %v863 = vpop.f32.mrb[0].mxu0
        %v864 = vadd.f32 %v751, %v863
        %v865 = vpop.f32.mrb[0].mxu0
        %866 = vdwg.mxu0
        %867 = vmatprep.subr.mxu0 0.0
        %v868 = vand.u32 %v323, 4294901760
        %v869 = vsub.f32 %v323, %v868
        %v870 = vand.u32 %v869, 4294901760
        %871 = vmatpush1.msra.mxu0 %v870
        %872 = vmatprep.subr.mxu0 0.0
        %v873 = vand.u32 %v324, 4294901760
        %v874 = vsub.f32 %v324, %v873
        %v875 = vand.u32 %v874, 4294901760
        %876 = vmatpush1.msra.mxu0 %v875
        %877 = vmatprep.subr.mxu0 0.0
        %v878 = vand.u32 %v325, 4294901760
        %v879 = vsub.f32 %v325, %v878
        %v880 = vand.u32 %v879, 4294901760
        %881 = vmatpush1.msra.mxu0 %v880
        %882 = vmatprep.subr.mxu0 0.0
        %v883 = vand.u32 %v326, 4294901760
        %v884 = vsub.f32 %v326, %v883
        %v885 = vand.u32 %v884, 4294901760
        %886 = vmatpush1.msra.mxu0 %v885
        %887 = vmatprep.subr.mxu0 0.0
        %v888 = vand.u32 %v327, 4294901760
        %v889 = vsub.f32 %v327, %v888
        %v890 = vand.u32 %v889, 4294901760
        %891 = vmatpush1.msra.mxu0 %v890
        %892 = vmatprep.subr.mxu0 0.0
        %v893 = vand.u32 %v328, 4294901760
        %v894 = vsub.f32 %v328, %v893
        %v895 = vand.u32 %v894, 4294901760
        %896 = vmatpush1.msra.mxu0 %v895
        %897 = vmatprep.subr.mxu0 0.0
        %v898 = vand.u32 %v329, 4294901760
        %v899 = vsub.f32 %v329, %v898
        %v900 = vand.u32 %v899, 4294901760
        %901 = vmatpush1.msra.mxu0 %v900
        %902 = vmatprep.subr.mxu0 0.0
        %v903 = vand.u32 %v330, 4294901760
        %v904 = vsub.f32 %v330, %v903
        %v905 = vand.u32 %v904, 4294901760
        %906 = vmatpush1.msra.mxu0 %v905
        %907 = vmatprep.subr.mxu0 0.0
        %v908 = vand.u32 %v331, 4294901760
        %v909 = vsub.f32 %v331, %v908
        %v910 = vand.u32 %v909, 4294901760
        %911 = vmatpush1.msra.mxu0 %v910
        %912 = vmatprep.subr.mxu0 0.0
        %v913 = vand.u32 %v332, 4294901760
        %v914 = vsub.f32 %v332, %v913
        %v915 = vand.u32 %v914, 4294901760
        %916 = vmatpush1.msra.mxu0 %v915
        %917 = vmatprep.subr.mxu0 0.0
        %v918 = vand.u32 %v333, 4294901760
        %v919 = vsub.f32 %v333, %v918
        %v920 = vand.u32 %v919, 4294901760
        %921 = vmatpush1.msra.mxu0 %v920
        %922 = vmatprep.subr.mxu0 0.0
        %v923 = vand.u32 %v334, 4294901760
        %v924 = vsub.f32 %v334, %v923
        %v925 = vand.u32 %v924, 4294901760
        %926 = vmatpush1.msra.mxu0 %v925
        %927 = vmatprep.subr.mxu0 0.0
        %v928 = vand.u32 %v335, 4294901760
        %v929 = vsub.f32 %v335, %v928
        %v930 = vand.u32 %v929, 4294901760
        %931 = vmatpush1.msra.mxu0 %v930
        %932 = vmatprep.subr.mxu0 0.0
        %v933 = vand.u32 %v336, 4294901760
        %v934 = vsub.f32 %v336, %v933
        %v935 = vand.u32 %v934, 4294901760
        %936 = vmatpush1.msra.mxu0 %v935
        %937 = vmatprep.subr.mxu0 0.0
        %v938 = vand.u32 %v337, 4294901760
        %v939 = vsub.f32 %v337, %v938
        %v940 = vand.u32 %v939, 4294901760
        %941 = vmatpush1.msra.mxu0 %v940
        %942 = vmatprep.subr.mxu0 0.0
        %v943 = vand.u32 %v338, 4294901760
        %v944 = vsub.f32 %v338, %v943
        %v945 = vand.u32 %v944, 4294901760
        %946 = vmatpush1.msra.mxu0 %v945
        %947 = vmatprep.subr.mxu0 0.0
        %948 = vmatpush1.msra.mxu0 0.0
        %949 = vmatprep.subr.mxu0 0.0
        %950 = vmatpush1.msra.mxu0 0.0
        %951 = vmatprep.subr.mxu0 0.0
        %952 = vmatpush1.msra.mxu0 0.0
        %953 = vmatprep.subr.mxu0 0.0
        %954 = vmatpush1.msra.mxu0 0.0
        %955 = vmatprep.subr.mxu0 0.0
        %956 = vmatpush1.msra.mxu0 0.0
        %957 = vmatprep.subr.mxu0 0.0
        %958 = vmatpush1.msra.mxu0 0.0
        %959 = vmatprep.subr.mxu0 0.0
        %960 = vmatpush1.msra.mxu0 0.0
        %961 = vmatprep.subr.mxu0 0.0
        %962 = vmatpush1.msra.mxu0 0.0
        %963 = vmatprep.subr.mxu0 0.0
        %964 = vmatpush1.msra.mxu0 0.0
        %965 = vmatprep.subr.mxu0 0.0
        %966 = vmatpush1.msra.mxu0 0.0
        %967 = vmatprep.subr.mxu0 0.0
        %968 = vmatpush1.msra.mxu0 0.0
        %969 = vmatprep.subr.mxu0 0.0
        %970 = vmatpush1.msra.mxu0 0.0
        %971 = vmatprep.subr.mxu0 0.0
        %972 = vmatpush1.msra.mxu0 0.0
        %973 = vmatprep.subr.mxu0 0.0
        %974 = vmatpush1.msra.mxu0 0.0
        %975 = vmatprep.subr.mxu0 0.0
        %976 = vmatpush1.msra.mxu0 0.0
        %977 = vmatprep.subr.mxu0 0.0
        %978 = vmatpush1.msra.mxu0 0.0
        %979 = vmatprep.mubr.f32.mxu0 0.0
        %v980 = vand.u32 %v313, 4294901760
        %981 = vmatmul.mubr.f32.gmra.mrb[0].mxu0 %v980
        %v982 = vpop.f32.mrb[0].mxu0
        %v983 = vadd.f32 %v840, %v982
        %v984 = vpop.f32.mrb[0].mxu0
        %985 = vmatprep.mubr.f32.mxu0 0.0
        %v986 = vand.u32 %v314, 4294901760
        %987 = vmatmul.mubr.f32.gmra.mrb[0].mxu0 %v986
        %v988 = vpop.f32.mrb[0].mxu0
        %v989 = vadd.f32 %v848, %v988
        %v990 = vpop.f32.mrb[0].mxu0
        %991 = vmatprep.mubr.f32.mxu0 0.0
        %v992 = vand.u32 %v315, 4294901760
        %993 = vmatmul.mubr.f32.gmra.mrb[0].mxu0 %v992
        %v994 = vpop.f32.mrb[0].mxu0
        %v995 = vadd.f32 %v856, %v994
        %v996 = vpop.f32.mrb[0].mxu0
        %997 = vmatprep.mubr.f32.mxu0 0.0
        %v998 = vand.u32 %v316, 4294901760
        %999 = vmatmul.mubr.f32.gmra.mrb[0].mxu0 %v998
        %v1000 = vpop.f32.mrb[0].mxu0
        %v1001 = vadd.f32 %v864, %v1000
        %v1002 = vpop.f32.mrb[0].mxu0
        %1003 = vdwg.mxu0
        %1004 = vmatprep.subr.mxu0 0.0
        %v1005 = vand.u32 %v323, 4294901760
        %1006 = vmatpush1.msra.mxu0 %v1005
        %1007 = vmatprep.subr.mxu0 0.0
        %v1008 = vand.u32 %v324, 4294901760
        %1009 = vmatpush1.msra.mxu0 %v1008
        %1010 = vmatprep.subr.mxu0 0.0
        %v1011 = vand.u32 %v325, 4294901760
        %1012 = vmatpush1.msra.mxu0 %v1011
        %1013 = vmatprep.subr.mxu0 0.0
        %v1014 = vand.u32 %v326, 4294901760
        %1015 = vmatpush1.msra.mxu0 %v1014
        %1016 = vmatprep.subr.mxu0 0.0
        %v1017 = vand.u32 %v327, 4294901760
        %1018 = vmatpush1.msra.mxu0 %v1017
        %1019 = vmatprep.subr.mxu0 0.0
        %v1020 = vand.u32 %v328, 4294901760
        %1021 = vmatpush1.msra.mxu0 %v1020
        %1022 = vmatprep.subr.mxu0 0.0
        %v1023 = vand.u32 %v329, 4294901760
        %1024 = vmatpush1.msra.mxu0 %v1023
        %1025 = vmatprep.subr.mxu0 0.0
        %v1026 = vand.u32 %v330, 4294901760
        %1027 = vmatpush1.msra.mxu0 %v1026
        %1028 = vmatprep.subr.mxu0 0.0
        %v1029 = vand.u32 %v331, 4294901760
        %1030 = vmatpush1.msra.mxu0 %v1029
        %1031 = vmatprep.subr.mxu0 0.0
        %v1032 = vand.u32 %v332, 4294901760
        %1033 = vmatpush1.msra.mxu0 %v1032
        %1034 = vmatprep.subr.mxu0 0.0
        %v1035 = vand.u32 %v333, 4294901760
        %1036 = vmatpush1.msra.mxu0 %v1035
        %1037 = vmatprep.subr.mxu0 0.0
        %v1038 = vand.u32 %v334, 4294901760
        %1039 = vmatpush1.msra.mxu0 %v1038
        %1040 = vmatprep.subr.mxu0 0.0
        %v1041 = vand.u32 %v335, 4294901760
        %1042 = vmatpush1.msra.mxu0 %v1041
        %1043 = vmatprep.subr.mxu0 0.0
        %v1044 = vand.u32 %v336, 4294901760
        %1045 = vmatpush1.msra.mxu0 %v1044
        %1046 = vmatprep.subr.mxu0 0.0
        %v1047 = vand.u32 %v337, 4294901760
        %1048 = vmatpush1.msra.mxu0 %v1047
        %1049 = vmatprep.subr.mxu0 0.0
        %v1050 = vand.u32 %v338, 4294901760
        %1051 = vmatpush1.msra.mxu0 %v1050
        %1052 = vmatprep.subr.mxu0 0.0
        %1053 = vmatpush1.msra.mxu0 0.0
        %1054 = vmatprep.subr.mxu0 0.0
        %1055 = vmatpush1.msra.mxu0 0.0
        %1056 = vmatprep.subr.mxu0 0.0
        %1057 = vmatpush1.msra.mxu0 0.0
        %1058 = vmatprep.subr.mxu0 0.0
        %1059 = vmatpush1.msra.mxu0 0.0
        %1060 = vmatprep.subr.mxu0 0.0
        %1061 = vmatpush1.msra.mxu0 0.0
        %1062 = vmatprep.subr.mxu0 0.0
        %1063 = vmatpush1.msra.mxu0 0.0
        %1064 = vmatprep.subr.mxu0 0.0
        %1065 = vmatpush1.msra.mxu0 0.0
        %1066 = vmatprep.subr.mxu0 0.0
        %1067 = vmatpush1.msra.mxu0 0.0
        %1068 = vmatprep.subr.mxu0 0.0
        %1069 = vmatpush1.msra.mxu0 0.0
        %1070 = vmatprep.subr.mxu0 0.0
        %1071 = vmatpush1.msra.mxu0 0.0
        %1072 = vmatprep.subr.mxu0 0.0
        %1073 = vmatpush1.msra.mxu0 0.0
        %1074 = vmatprep.subr.mxu0 0.0
        %1075 = vmatpush1.msra.mxu0 0.0
        %1076 = vmatprep.subr.mxu0 0.0
        %1077 = vmatpush1.msra.mxu0 0.0
        %1078 = vmatprep.subr.mxu0 0.0
        %1079 = vmatpush1.msra.mxu0 0.0
        %1080 = vmatprep.subr.mxu0 0.0
        %1081 = vmatpush1.msra.mxu0 0.0
        %1082 = vmatprep.subr.mxu0 0.0
        %1083 = vmatpush1.msra.mxu0 0.0
        %1084 = vmatprep.mubr.f32.mxu0 0.0
        %v1085 = vand.u32 %v313, 4294901760
        %1086 = vmatmul.mubr.f32.gmra.mrb[0].mxu0 %v1085
        %v1087 = vpop.f32.mrb[0].mxu0
        %v1088 = vadd.f32 %v983, %v1087
        %v1089 = vpop.f32.mrb[0].mxu0
        %1090 = vmatprep.mubr.f32.mxu0 0.0
        %v1091 = vand.u32 %v314, 4294901760
        %1092 = vmatmul.mubr.f32.gmra.mrb[0].mxu0 %v1091
        %v1093 = vpop.f32.mrb[0].mxu0
        %v1094 = vadd.f32 %v989, %v1093
        %v1095 = vpop.f32.mrb[0].mxu0
        %1096 = vmatprep.mubr.f32.mxu0 0.0
        %v1097 = vand.u32 %v315, 4294901760
        %1098 = vmatmul.mubr.f32.gmra.mrb[0].mxu0 %v1097
        %v1099 = vpop.f32.mrb[0].mxu0
        %v1100 = vadd.f32 %v995, %v1099
        %v1101 = vpop.f32.mrb[0].mxu0
        %1102 = vmatprep.mubr.f32.mxu0 0.0
        %v1103 = vand.u32 %v316, 4294901760
        %1104 = vmatmul.mubr.f32.gmra.mrb[0].mxu0 %v1103
        %v1105 = vpop.f32.mrb[0].mxu0
        %v1106 = vadd.f32 %v1001, %v1105
        %v1107 = vpop.f32.mrb[0].mxu0
        %1108 = vdwg.mxu0
        %vm1109 = vcmask 261120
        %v1111 = vsel %vm1109, %v321, 0
        %v1114 = vsel %vm1109, %v322, 0
        %1116 = vmatprep.subr.mxu0 0.0
        %v1117 = vand.u32 %v1088, 4294901760
        %1118 = vmatpush1.msra.mxu0 %v1117
        %1119 = vmatprep.subr.mxu0 0.0
        %v1120 = vand.u32 %v1094, 4294901760
        %1121 = vmatpush1.msra.mxu0 %v1120
        %1122 = vmatprep.subr.mxu0 0.0
        %v1123 = vand.u32 %v1100, 4294901760
        %1124 = vmatpush1.msra.mxu0 %v1123
        %1125 = vmatprep.subr.mxu0 0.0
        %v1126 = vand.u32 %v1106, 4294901760
        %1127 = vmatpush1.msra.mxu0 %v1126
        %1128 = vmatprep.subr.mxu0 0.0
        %1129 = vmatpush1.msra.mxu0 0.0
        %1130 = vmatprep.subr.mxu0 0.0
        %1131 = vmatpush1.msra.mxu0 0.0
        %1132 = vmatprep.subr.mxu0 0.0
        %1133 = vmatpush1.msra.mxu0 0.0
        %1134 = vmatprep.subr.mxu0 0.0
        %1135 = vmatpush1.msra.mxu0 0.0
        %1136 = vmatprep.subr.mxu0 0.0
        %1137 = vmatpush1.msra.mxu0 0.0
        %1138 = vmatprep.subr.mxu0 0.0
        %1139 = vmatpush1.msra.mxu0 0.0
        %1140 = vmatprep.subr.mxu0 0.0
        %1141 = vmatpush1.msra.mxu0 0.0
        %1142 = vmatprep.subr.mxu0 0.0
        %1143 = vmatpush1.msra.mxu0 0.0
        %1144 = vmatprep.subr.mxu0 0.0
        %1145 = vmatpush1.msra.mxu0 0.0
        %1146 = vmatprep.subr.mxu0 0.0
        %1147 = vmatpush1.msra.mxu0 0.0
        %1148 = vmatprep.subr.mxu0 0.0
        %1149 = vmatpush1.msra.mxu0 0.0
        %1150 = vmatprep.subr.mxu0 0.0
        %1151 = vmatpush1.msra.mxu0 0.0
        %1152 = vmatprep.subr.mxu0 0.0
        %1153 = vmatpush1.msra.mxu0 0.0
        %1154 = vmatprep.subr.mxu0 0.0
        %1155 = vmatpush1.msra.mxu0 0.0
        %1156 = vmatprep.subr.mxu0 0.0
        %1157 = vmatpush1.msra.mxu0 0.0
        %1158 = vmatprep.subr.mxu0 0.0
        %1159 = vmatpush1.msra.mxu0 0.0
        %1160 = vmatprep.subr.mxu0 0.0
        %1161 = vmatpush1.msra.mxu0 0.0
        %1162 = vmatprep.subr.mxu0 0.0
        %1163 = vmatpush1.msra.mxu0 0.0
        %1164 = vmatprep.subr.mxu0 0.0
        %1165 = vmatpush1.msra.mxu0 0.0
        %1166 = vmatprep.subr.mxu0 0.0
        %1167 = vmatpush1.msra.mxu0 0.0
        %1168 = vmatprep.subr.mxu0 0.0
        %1169 = vmatpush1.msra.mxu0 0.0
        %1170 = vmatprep.subr.mxu0 0.0
        %1171 = vmatpush1.msra.mxu0 0.0
        %1172 = vmatprep.subr.mxu0 0.0
        %1173 = vmatpush1.msra.mxu0 0.0
        %1174 = vmatprep.subr.mxu0 0.0
        %1175 = vmatpush1.msra.mxu0 0.0
        %1176 = vmatprep.subr.mxu0 0.0
        %1177 = vmatpush1.msra.mxu0 0.0
        %1178 = vmatprep.subr.mxu0 0.0
        %1179 = vmatpush1.msra.mxu0 0.0
        %1180 = vmatprep.subr.mxu0 0.0
        %1181 = vmatpush1.msra.mxu0 0.0
        %1182 = vmatprep.subr.mxu0 0.0
        %1183 = vmatpush1.msra.mxu0 0.0
        %1184 = vmatprep.mubr.f32.mxu0 0.0
        %v1185 = vand.u32 %v1111, 4294901760
        %v1186 = vsub.f32 %v1111, %v1185
        %v1187 = vand.u32 %v1186, 4294901760
        %v1188 = vsub.f32 %v1186, %v1187
        %v1189 = vand.u32 %v1188, 4294901760
        %1190 = vmatmul.mubr.f32.gmra.mrb[0].mxu0 %v1189
        %v1191 = vpop.f32.mrb[0].mxu0
        %v1192 = vadd.f32 0.0, %v1191
        %v1193 = vpop.f32.mrb[0].mxu0
        %1194 = vmatprep.mubr.f32.mxu0 0.0
        %v1195 = vand.u32 %v1114, 4294901760
        %v1196 = vsub.f32 %v1114, %v1195
        %v1197 = vand.u32 %v1196, 4294901760
        %v1198 = vsub.f32 %v1196, %v1197
        %v1199 = vand.u32 %v1198, 4294901760
        %1200 = vmatmul.mubr.f32.gmra.mrb[0].mxu0 %v1199
        %v1201 = vpop.f32.mrb[0].mxu0
        %v1202 = vadd.f32 0.0, %v1201
        %v1203 = vpop.f32.mrb[0].mxu0
        %1204 = vdwg.mxu0
        %1205 = vmatprep.subr.mxu0 0.0
        %v1206 = vand.u32 %v1088, 4294901760
        %v1207 = vsub.f32 %v1088, %v1206
        %v1208 = vand.u32 %v1207, 4294901760
        %v1209 = vsub.f32 %v1207, %v1208
        %v1210 = vand.u32 %v1209, 4294901760
        %1211 = vmatpush1.msra.mxu0 %v1210
        %1212 = vmatprep.subr.mxu0 0.0
        %v1213 = vand.u32 %v1094, 4294901760
        %v1214 = vsub.f32 %v1094, %v1213
        %v1215 = vand.u32 %v1214, 4294901760
        %v1216 = vsub.f32 %v1214, %v1215
        %v1217 = vand.u32 %v1216, 4294901760
        %1218 = vmatpush1.msra.mxu0 %v1217
        %1219 = vmatprep.subr.mxu0 0.0
        %v1220 = vand.u32 %v1100, 4294901760
        %v1221 = vsub.f32 %v1100, %v1220
        %v1222 = vand.u32 %v1221, 4294901760
        %v1223 = vsub.f32 %v1221, %v1222
        %v1224 = vand.u32 %v1223, 4294901760
        %1225 = vmatpush1.msra.mxu0 %v1224
        %1226 = vmatprep.subr.mxu0 0.0
        %v1227 = vand.u32 %v1106, 4294901760
        %v1228 = vsub.f32 %v1106, %v1227
        %v1229 = vand.u32 %v1228, 4294901760
        %v1230 = vsub.f32 %v1228, %v1229
        %v1231 = vand.u32 %v1230, 4294901760
        %1232 = vmatpush1.msra.mxu0 %v1231
        %1233 = vmatprep.subr.mxu0 0.0
        %1234 = vmatpush1.msra.mxu0 0.0
        %1235 = vmatprep.subr.mxu0 0.0
        %1236 = vmatpush1.msra.mxu0 0.0
        %1237 = vmatprep.subr.mxu0 0.0
        %1238 = vmatpush1.msra.mxu0 0.0
        %1239 = vmatprep.subr.mxu0 0.0
        %1240 = vmatpush1.msra.mxu0 0.0
        %1241 = vmatprep.subr.mxu0 0.0
        %1242 = vmatpush1.msra.mxu0 0.0
        %1243 = vmatprep.subr.mxu0 0.0
        %1244 = vmatpush1.msra.mxu0 0.0
        %1245 = vmatprep.subr.mxu0 0.0
        %1246 = vmatpush1.msra.mxu0 0.0
        %1247 = vmatprep.subr.mxu0 0.0
        %1248 = vmatpush1.msra.mxu0 0.0
        %1249 = vmatprep.subr.mxu0 0.0
        %1250 = vmatpush1.msra.mxu0 0.0
        %1251 = vmatprep.subr.mxu0 0.0
        %1252 = vmatpush1.msra.mxu0 0.0
        %1253 = vmatprep.subr.mxu0 0.0
        %1254 = vmatpush1.msra.mxu0 0.0
        %1255 = vmatprep.subr.mxu0 0.0
        %1256 = vmatpush1.msra.mxu0 0.0
        %1257 = vmatprep.subr.mxu0 0.0
        %1258 = vmatpush1.msra.mxu0 0.0
        %1259 = vmatprep.subr.mxu0 0.0
        %1260 = vmatpush1.msra.mxu0 0.0
        %1261 = vmatprep.subr.mxu0 0.0
        %1262 = vmatpush1.msra.mxu0 0.0
        %1263 = vmatprep.subr.mxu0 0.0
        %1264 = vmatpush1.msra.mxu0 0.0
        %1265 = vmatprep.subr.mxu0 0.0
        %1266 = vmatpush1.msra.mxu0 0.0
        %1267 = vmatprep.subr.mxu0 0.0
        %1268 = vmatpush1.msra.mxu0 0.0
        %1269 = vmatprep.subr.mxu0 0.0
        %1270 = vmatpush1.msra.mxu0 0.0
        %1271 = vmatprep.subr.mxu0 0.0
        %1272 = vmatpush1.msra.mxu0 0.0
        %1273 = vmatprep.subr.mxu0 0.0
        %1274 = vmatpush1.msra.mxu0 0.0
        %1275 = vmatprep.subr.mxu0 0.0
        %1276 = vmatpush1.msra.mxu0 0.0
        %1277 = vmatprep.subr.mxu0 0.0
        %1278 = vmatpush1.msra.mxu0 0.0
        %1279 = vmatprep.subr.mxu0 0.0
        %1280 = vmatpush1.msra.mxu0 0.0
        %1281 = vmatprep.subr.mxu0 0.0
        %1282 = vmatpush1.msra.mxu0 0.0
        %1283 = vmatprep.subr.mxu0 0.0
        %1284 = vmatpush1.msra.mxu0 0.0
        %1285 = vmatprep.subr.mxu0 0.0
        %1286 = vmatpush1.msra.mxu0 0.0
        %1287 = vmatprep.subr.mxu0 0.0
        %1288 = vmatpush1.msra.mxu0 0.0
        %1289 = vmatprep.mubr.f32.mxu0 0.0
        %v1290 = vand.u32 %v1111, 4294901760
        %1291 = vmatmul.mubr.f32.gmra.mrb[0].mxu0 %v1290
        %v1292 = vpop.f32.mrb[0].mxu0
        %v1293 = vadd.f32 %v1192, %v1292
        %v1294 = vpop.f32.mrb[0].mxu0
        %1295 = vmatprep.mubr.f32.mxu0 0.0
        %v1296 = vand.u32 %v1114, 4294901760
        %1297 = vmatmul.mubr.f32.gmra.mrb[0].mxu0 %v1296
        %v1298 = vpop.f32.mrb[0].mxu0
        %v1299 = vadd.f32 %v1202, %v1298
        %v1300 = vpop.f32.mrb[0].mxu0
        %1301 = vdwg.mxu0
        %1302 = vmatprep.subr.mxu0 0.0
        %v1303 = vand.u32 %v1088, 4294901760
        %v1304 = vsub.f32 %v1088, %v1303
        %1305 = vmatpush1.msra.mxu0 %v1304
        %1306 = vmatprep.subr.mxu0 0.0
        %v1307 = vand.u32 %v1094, 4294901760
        %v1308 = vsub.f32 %v1094, %v1307
        %1309 = vmatpush1.msra.mxu0 %v1308
        %1310 = vmatprep.subr.mxu0 0.0
        %v1311 = vand.u32 %v1100, 4294901760
        %v1312 = vsub.f32 %v1100, %v1311
        %1313 = vmatpush1.msra.mxu0 %v1312
        %1314 = vmatprep.subr.mxu0 0.0
        %v1315 = vand.u32 %v1106, 4294901760
        %v1316 = vsub.f32 %v1106, %v1315
        %1317 = vmatpush1.msra.mxu0 %v1316
        %1318 = vmatprep.subr.mxu0 0.0
        %1319 = vmatpush1.msra.mxu0 0.0
        %1320 = vmatprep.subr.mxu0 0.0
        %1321 = vmatpush1.msra.mxu0 0.0
        %1322 = vmatprep.subr.mxu0 0.0
        %1323 = vmatpush1.msra.mxu0 0.0
        %1324 = vmatprep.subr.mxu0 0.0
        %1325 = vmatpush1.msra.mxu0 0.0
        %1326 = vmatprep.subr.mxu0 0.0
        %1327 = vmatpush1.msra.mxu0 0.0
        %1328 = vmatprep.subr.mxu0 0.0
        %1329 = vmatpush1.msra.mxu0 0.0
        %1330 = vmatprep.subr.mxu0 0.0
        %1331 = vmatpush1.msra.mxu0 0.0
        %1332 = vmatprep.subr.mxu0 0.0
        %1333 = vmatpush1.msra.mxu0 0.0
        %1334 = vmatprep.subr.mxu0 0.0
        %1335 = vmatpush1.msra.mxu0 0.0
        %1336 = vmatprep.subr.mxu0 0.0
        %1337 = vmatpush1.msra.mxu0 0.0
        %1338 = vmatprep.subr.mxu0 0.0
        %1339 = vmatpush1.msra.mxu0 0.0
        %1340 = vmatprep.subr.mxu0 0.0
        %1341 = vmatpush1.msra.mxu0 0.0
        %1342 = vmatprep.subr.mxu0 0.0
        %1343 = vmatpush1.msra.mxu0 0.0
        %1344 = vmatprep.subr.mxu0 0.0
        %1345 = vmatpush1.msra.mxu0 0.0
        %1346 = vmatprep.subr.mxu0 0.0
        %1347 = vmatpush1.msra.mxu0 0.0
        %1348 = vmatprep.subr.mxu0 0.0
        %1349 = vmatpush1.msra.mxu0 0.0
        %1350 = vmatprep.subr.mxu0 0.0
        %1351 = vmatpush1.msra.mxu0 0.0
        %1352 = vmatprep.subr.mxu0 0.0
        %1353 = vmatpush1.msra.mxu0 0.0
        %1354 = vmatprep.subr.mxu0 0.0
        %1355 = vmatpush1.msra.mxu0 0.0
        %1356 = vmatprep.subr.mxu0 0.0
        %1357 = vmatpush1.msra.mxu0 0.0
        %1358 = vmatprep.subr.mxu0 0.0
        %1359 = vmatpush1.msra.mxu0 0.0
        %1360 = vmatprep.subr.mxu0 0.0
        %1361 = vmatpush1.msra.mxu0 0.0
        %1362 = vmatprep.subr.mxu0 0.0
        %1363 = vmatpush1.msra.mxu0 0.0
        %1364 = vmatprep.subr.mxu0 0.0
        %1365 = vmatpush1.msra.mxu0 0.0
        %1366 = vmatprep.subr.mxu0 0.0
        %1367 = vmatpush1.msra.mxu0 0.0
        %1368 = vmatprep.subr.mxu0 0.0
        %1369 = vmatpush1.msra.mxu0 0.0
        %1370 = vmatprep.subr.mxu0 0.0
        %1371 = vmatpush1.msra.mxu0 0.0
        %1372 = vmatprep.subr.mxu0 0.0
        %1373 = vmatpush1.msra.mxu0 0.0
        %1374 = vmatprep.mubr.f32.mxu0 0.0
        %v1375 = vand.u32 %v1111, 4294901760
        %v1376 = vsub.f32 %v1111, %v1375
        %1377 = vmatmul.mubr.f32.gmra.mrb[0].mxu0 %v1376
        %v1378 = vpop.f32.mrb[0].mxu0
        %v1379 = vadd.f32 %v1293, %v1378
        %v1380 = vpop.f32.mrb[0].mxu0
        %1381 = vmatprep.mubr.f32.mxu0 0.0
        %v1382 = vand.u32 %v1114, 4294901760
        %v1383 = vsub.f32 %v1114, %v1382
        %1384 = vmatmul.mubr.f32.gmra.mrb[0].mxu0 %v1383
        %v1385 = vpop.f32.mrb[0].mxu0
        %v1386 = vadd.f32 %v1299, %v1385
        %v1387 = vpop.f32.mrb[0].mxu0
        %1388 = vdwg.mxu0
        %1389 = vmatprep.subr.mxu0 0.0
        %v1390 = vand.u32 %v1088, 4294901760
        %1391 = vmatpush1.msra.mxu0 %v1390
        %1392 = vmatprep.subr.mxu0 0.0
        %v1393 = vand.u32 %v1094, 4294901760
        %1394 = vmatpush1.msra.mxu0 %v1393
        %1395 = vmatprep.subr.mxu0 0.0
        %v1396 = vand.u32 %v1100, 4294901760
        %1397 = vmatpush1.msra.mxu0 %v1396
        %1398 = vmatprep.subr.mxu0 0.0
        %v1399 = vand.u32 %v1106, 4294901760
        %1400 = vmatpush1.msra.mxu0 %v1399
        %1401 = vmatprep.subr.mxu0 0.0
        %1402 = vmatpush1.msra.mxu0 0.0
        %1403 = vmatprep.subr.mxu0 0.0
        %1404 = vmatpush1.msra.mxu0 0.0
        %1405 = vmatprep.subr.mxu0 0.0
        %1406 = vmatpush1.msra.mxu0 0.0
        %1407 = vmatprep.subr.mxu0 0.0
        %1408 = vmatpush1.msra.mxu0 0.0
        %1409 = vmatprep.subr.mxu0 0.0
        %1410 = vmatpush1.msra.mxu0 0.0
        %1411 = vmatprep.subr.mxu0 0.0
        %1412 = vmatpush1.msra.mxu0 0.0
        %1413 = vmatprep.subr.mxu0 0.0
        %1414 = vmatpush1.msra.mxu0 0.0
        %1415 = vmatprep.subr.mxu0 0.0
        %1416 = vmatpush1.msra.mxu0 0.0
        %1417 = vmatprep.subr.mxu0 0.0
        %1418 = vmatpush1.msra.mxu0 0.0
        %1419 = vmatprep.subr.mxu0 0.0
        %1420 = vmatpush1.msra.mxu0 0.0
        %1421 = vmatprep.subr.mxu0 0.0
        %1422 = vmatpush1.msra.mxu0 0.0
        %1423 = vmatprep.subr.mxu0 0.0
        %1424 = vmatpush1.msra.mxu0 0.0
        %1425 = vmatprep.subr.mxu0 0.0
        %1426 = vmatpush1.msra.mxu0 0.0
        %1427 = vmatprep.subr.mxu0 0.0
        %1428 = vmatpush1.msra.mxu0 0.0
        %1429 = vmatprep.subr.mxu0 0.0
        %1430 = vmatpush1.msra.mxu0 0.0
        %1431 = vmatprep.subr.mxu0 0.0
        %1432 = vmatpush1.msra.mxu0 0.0
        %1433 = vmatprep.subr.mxu0 0.0
        %1434 = vmatpush1.msra.mxu0 0.0
        %1435 = vmatprep.subr.mxu0 0.0
        %1436 = vmatpush1.msra.mxu0 0.0
        %1437 = vmatprep.subr.mxu0 0.0
        %1438 = vmatpush1.msra.mxu0 0.0
        %1439 = vmatprep.subr.mxu0 0.0
        %1440 = vmatpush1.msra.mxu0 0.0
        %1441 = vmatprep.subr.mxu0 0.0
        %1442 = vmatpush1.msra.mxu0 0.0
        %1443 = vmatprep.subr.mxu0 0.0
        %1444 = vmatpush1.msra.mxu0 0.0
        %1445 = vmatprep.subr.mxu0 0.0
        %1446 = vmatpush1.msra.mxu0 0.0
        %1447 = vmatprep.subr.mxu0 0.0
        %1448 = vmatpush1.msra.mxu0 0.0
        %1449 = vmatprep.subr.mxu0 0.0
        %1450 = vmatpush1.msra.mxu0 0.0
        %1451 = vmatprep.subr.mxu0 0.0
        %1452 = vmatpush1.msra.mxu0 0.0
        %1453 = vmatprep.subr.mxu0 0.0
        %1454 = vmatpush1.msra.mxu0 0.0
        %1455 = vmatprep.subr.mxu0 0.0
        %1456 = vmatpush1.msra.mxu0 0.0
        %1457 = vmatprep.mubr.f32.mxu0 0.0
        %v1458 = vand.u32 %v1111, 4294901760
        %v1459 = vsub.f32 %v1111, %v1458
        %v1460 = vand.u32 %v1459, 4294901760
        %1461 = vmatmul.mubr.f32.gmra.mrb[0].mxu0 %v1460
        %v1462 = vpop.f32.mrb[0].mxu0
        %v1463 = vadd.f32 %v1379, %v1462
        %v1464 = vpop.f32.mrb[0].mxu0
        %1465 = vmatprep.mubr.f32.mxu0 0.0
        %v1466 = vand.u32 %v1114, 4294901760
        %v1467 = vsub.f32 %v1114, %v1466
        %v1468 = vand.u32 %v1467, 4294901760
        %1469 = vmatmul.mubr.f32.gmra.mrb[0].mxu0 %v1468
        %v1470 = vpop.f32.mrb[0].mxu0
        %v1471 = vadd.f32 %v1386, %v1470
        %v1472 = vpop.f32.mrb[0].mxu0
        %1473 = vdwg.mxu0
        %1474 = vmatprep.subr.mxu0 0.0
        %v1475 = vand.u32 %v1088, 4294901760
        %v1476 = vsub.f32 %v1088, %v1475
        %v1477 = vand.u32 %v1476, 4294901760
        %1478 = vmatpush1.msra.mxu0 %v1477
        %1479 = vmatprep.subr.mxu0 0.0
        %v1480 = vand.u32 %v1094, 4294901760
        %v1481 = vsub.f32 %v1094, %v1480
        %v1482 = vand.u32 %v1481, 4294901760
        %1483 = vmatpush1.msra.mxu0 %v1482
        %1484 = vmatprep.subr.mxu0 0.0
        %v1485 = vand.u32 %v1100, 4294901760
        %v1486 = vsub.f32 %v1100, %v1485
        %v1487 = vand.u32 %v1486, 4294901760
        %1488 = vmatpush1.msra.mxu0 %v1487
        %1489 = vmatprep.subr.mxu0 0.0
        %v1490 = vand.u32 %v1106, 4294901760
        %v1491 = vsub.f32 %v1106, %v1490
        %v1492 = vand.u32 %v1491, 4294901760
        %1493 = vmatpush1.msra.mxu0 %v1492
        %1494 = vmatprep.subr.mxu0 0.0
        %1495 = vmatpush1.msra.mxu0 0.0
        %1496 = vmatprep.subr.mxu0 0.0
        %1497 = vmatpush1.msra.mxu0 0.0
        %1498 = vmatprep.subr.mxu0 0.0
        %1499 = vmatpush1.msra.mxu0 0.0
        %1500 = vmatprep.subr.mxu0 0.0
        %1501 = vmatpush1.msra.mxu0 0.0
        %1502 = vmatprep.subr.mxu0 0.0
        %1503 = vmatpush1.msra.mxu0 0.0
        %1504 = vmatprep.subr.mxu0 0.0
        %1505 = vmatpush1.msra.mxu0 0.0
        %1506 = vmatprep.subr.mxu0 0.0
        %1507 = vmatpush1.msra.mxu0 0.0
        %1508 = vmatprep.subr.mxu0 0.0
        %1509 = vmatpush1.msra.mxu0 0.0
        %1510 = vmatprep.subr.mxu0 0.0
        %1511 = vmatpush1.msra.mxu0 0.0
        %1512 = vmatprep.subr.mxu0 0.0
        %1513 = vmatpush1.msra.mxu0 0.0
        %1514 = vmatprep.subr.mxu0 0.0
        %1515 = vmatpush1.msra.mxu0 0.0
        %1516 = vmatprep.subr.mxu0 0.0
        %1517 = vmatpush1.msra.mxu0 0.0
        %1518 = vmatprep.subr.mxu0 0.0
        %1519 = vmatpush1.msra.mxu0 0.0
        %1520 = vmatprep.subr.mxu0 0.0
        %1521 = vmatpush1.msra.mxu0 0.0
        %1522 = vmatprep.subr.mxu0 0.0
        %1523 = vmatpush1.msra.mxu0 0.0
        %1524 = vmatprep.subr.mxu0 0.0
        %1525 = vmatpush1.msra.mxu0 0.0
        %1526 = vmatprep.subr.mxu0 0.0
        %1527 = vmatpush1.msra.mxu0 0.0
        %1528 = vmatprep.subr.mxu0 0.0
        %1529 = vmatpush1.msra.mxu0 0.0
        %1530 = vmatprep.subr.mxu0 0.0
        %1531 = vmatpush1.msra.mxu0 0.0
        %1532 = vmatprep.subr.mxu0 0.0
        %1533 = vmatpush1.msra.mxu0 0.0
        %1534 = vmatprep.subr.mxu0 0.0
        %1535 = vmatpush1.msra.mxu0 0.0
        %1536 = vmatprep.subr.mxu0 0.0
        %1537 = vmatpush1.msra.mxu0 0.0
        %1538 = vmatprep.subr.mxu0 0.0
        %1539 = vmatpush1.msra.mxu0 0.0
        %1540 = vmatprep.subr.mxu0 0.0
        %1541 = vmatpush1.msra.mxu0 0.0
        %1542 = vmatprep.subr.mxu0 0.0
        %1543 = vmatpush1.msra.mxu0 0.0
        %1544 = vmatprep.subr.mxu0 0.0
        %1545 = vmatpush1.msra.mxu0 0.0
        %1546 = vmatprep.subr.mxu0 0.0
        %1547 = vmatpush1.msra.mxu0 0.0
        %1548 = vmatprep.subr.mxu0 0.0
        %1549 = vmatpush1.msra.mxu0 0.0
        %1550 = vmatprep.mubr.f32.mxu0 0.0
        %v1551 = vand.u32 %v1111, 4294901760
        %1552 = vmatmul.mubr.f32.gmra.mrb[0].mxu0 %v1551
        %v1553 = vpop.f32.mrb[0].mxu0
        %v1554 = vadd.f32 %v1463, %v1553
        %v1555 = vpop.f32.mrb[0].mxu0
        %1556 = vmatprep.mubr.f32.mxu0 0.0
        %v1557 = vand.u32 %v1114, 4294901760
        %1558 = vmatmul.mubr.f32.gmra.mrb[0].mxu0 %v1557
        %v1559 = vpop.f32.mrb[0].mxu0
        %v1560 = vadd.f32 %v1471, %v1559
        %v1561 = vpop.f32.mrb[0].mxu0
        %1562 = vdwg.mxu0
        %1563 = vmatprep.subr.mxu0 0.0
        %v1564 = vand.u32 %v1088, 4294901760
        %1565 = vmatpush1.msra.mxu0 %v1564
        %1566 = vmatprep.subr.mxu0 0.0
        %v1567 = vand.u32 %v1094, 4294901760
        %1568 = vmatpush1.msra.mxu0 %v1567
        %1569 = vmatprep.subr.mxu0 0.0
        %v1570 = vand.u32 %v1100, 4294901760
        %1571 = vmatpush1.msra.mxu0 %v1570
        %1572 = vmatprep.subr.mxu0 0.0
        %v1573 = vand.u32 %v1106, 4294901760
        %1574 = vmatpush1.msra.mxu0 %v1573
        %1575 = vmatprep.subr.mxu0 0.0
        %1576 = vmatpush1.msra.mxu0 0.0
        %1577 = vmatprep.subr.mxu0 0.0
        %1578 = vmatpush1.msra.mxu0 0.0
        %1579 = vmatprep.subr.mxu0 0.0
        %1580 = vmatpush1.msra.mxu0 0.0
        %1581 = vmatprep.subr.mxu0 0.0
        %1582 = vmatpush1.msra.mxu0 0.0
        %1583 = vmatprep.subr.mxu0 0.0
        %1584 = vmatpush1.msra.mxu0 0.0
        %1585 = vmatprep.subr.mxu0 0.0
        %1586 = vmatpush1.msra.mxu0 0.0
        %1587 = vmatprep.subr.mxu0 0.0
        %1588 = vmatpush1.msra.mxu0 0.0
        %1589 = vmatprep.subr.mxu0 0.0
        %1590 = vmatpush1.msra.mxu0 0.0
        %1591 = vmatprep.subr.mxu0 0.0
        %1592 = vmatpush1.msra.mxu0 0.0
        %1593 = vmatprep.subr.mxu0 0.0
        %1594 = vmatpush1.msra.mxu0 0.0
        %1595 = vmatprep.subr.mxu0 0.0
        %1596 = vmatpush1.msra.mxu0 0.0
        %1597 = vmatprep.subr.mxu0 0.0
        %1598 = vmatpush1.msra.mxu0 0.0
        %1599 = vmatprep.subr.mxu0 0.0
        %1600 = vmatpush1.msra.mxu0 0.0
        %1601 = vmatprep.subr.mxu0 0.0
        %1602 = vmatpush1.msra.mxu0 0.0
        %1603 = vmatprep.subr.mxu0 0.0
        %1604 = vmatpush1.msra.mxu0 0.0
        %1605 = vmatprep.subr.mxu0 0.0
        %1606 = vmatpush1.msra.mxu0 0.0
        %1607 = vmatprep.subr.mxu0 0.0
        %1608 = vmatpush1.msra.mxu0 0.0
        %1609 = vmatprep.subr.mxu0 0.0
        %1610 = vmatpush1.msra.mxu0 0.0
        %1611 = vmatprep.subr.mxu0 0.0
        %1612 = vmatpush1.msra.mxu0 0.0
        %1613 = vmatprep.subr.mxu0 0.0
        %1614 = vmatpush1.msra.mxu0 0.0
        %1615 = vmatprep.subr.mxu0 0.0
        %1616 = vmatpush1.msra.mxu0 0.0
        %1617 = vmatprep.subr.mxu0 0.0
        %1618 = vmatpush1.msra.mxu0 0.0
        %1619 = vmatprep.subr.mxu0 0.0
        %1620 = vmatpush1.msra.mxu0 0.0
        %1621 = vmatprep.subr.mxu0 0.0
        %1622 = vmatpush1.msra.mxu0 0.0
        %1623 = vmatprep.subr.mxu0 0.0
        %1624 = vmatpush1.msra.mxu0 0.0
        %1625 = vmatprep.subr.mxu0 0.0
        %1626 = vmatpush1.msra.mxu0 0.0
        %1627 = vmatprep.subr.mxu0 0.0
        %1628 = vmatpush1.msra.mxu0 0.0
        %1629 = vmatprep.subr.mxu0 0.0
        %1630 = vmatpush1.msra.mxu0 0.0
        %1631 = vmatprep.mubr.f32.mxu0 0.0
        %v1632 = vand.u32 %v1111, 4294901760
        %1633 = vmatmul.mubr.f32.gmra.mrb[0].mxu0 %v1632
        %v1634 = vpop.f32.mrb[0].mxu0
        %v1635 = vadd.f32 %v1554, %v1634
        %v1636 = vpop.f32.mrb[0].mxu0
        %1637 = vmatprep.mubr.f32.mxu0 0.0
        %v1638 = vand.u32 %v1114, 4294901760
        %1639 = vmatmul.mubr.f32.gmra.mrb[0].mxu0 %v1638
        %v1640 = vpop.f32.mrb[0].mxu0
        %v1641 = vadd.f32 %v1560, %v1640
        %v1642 = vpop.f32.mrb[0].mxu0
        %1643 = vdwg.mxu0
        %1644 = vmatprep.subr.mxu0 0.0
        %v1645 = vand.u32 %v323, 4294901760
        %1646 = vmatpush1.msra.mxu0 %v1645
        %1647 = vmatprep.subr.mxu0 0.0
        %v1648 = vand.u32 %v324, 4294901760
        %1649 = vmatpush1.msra.mxu0 %v1648
        %1650 = vmatprep.subr.mxu0 0.0
        %v1651 = vand.u32 %v325, 4294901760
        %1652 = vmatpush1.msra.mxu0 %v1651
        %1653 = vmatprep.subr.mxu0 0.0
        %v1654 = vand.u32 %v326, 4294901760
        %1655 = vmatpush1.msra.mxu0 %v1654
        %1656 = vmatprep.subr.mxu0 0.0
        %v1657 = vand.u32 %v327, 4294901760
        %1658 = vmatpush1.msra.mxu0 %v1657
        %1659 = vmatprep.subr.mxu0 0.0
        %v1660 = vand.u32 %v328, 4294901760
        %1661 = vmatpush1.msra.mxu0 %v1660
        %1662 = vmatprep.subr.mxu0 0.0
        %v1663 = vand.u32 %v329, 4294901760
        %1664 = vmatpush1.msra.mxu0 %v1663
        %1665 = vmatprep.subr.mxu0 0.0
        %v1666 = vand.u32 %v330, 4294901760
        %1667 = vmatpush1.msra.mxu0 %v1666
        %1668 = vmatprep.subr.mxu0 0.0
        %v1669 = vand.u32 %v331, 4294901760
        %1670 = vmatpush1.msra.mxu0 %v1669
        %1671 = vmatprep.subr.mxu0 0.0
        %v1672 = vand.u32 %v332, 4294901760
        %1673 = vmatpush1.msra.mxu0 %v1672
        %1674 = vmatprep.subr.mxu0 0.0
        %v1675 = vand.u32 %v333, 4294901760
        %1676 = vmatpush1.msra.mxu0 %v1675
        %1677 = vmatprep.subr.mxu0 0.0
        %v1678 = vand.u32 %v334, 4294901760
        %1679 = vmatpush1.msra.mxu0 %v1678
        %1680 = vmatprep.subr.mxu0 0.0
        %v1681 = vand.u32 %v335, 4294901760
        %1682 = vmatpush1.msra.mxu0 %v1681
        %1683 = vmatprep.subr.mxu0 0.0
        %v1684 = vand.u32 %v336, 4294901760
        %1685 = vmatpush1.msra.mxu0 %v1684
        %1686 = vmatprep.subr.mxu0 0.0
        %v1687 = vand.u32 %v337, 4294901760
        %1688 = vmatpush1.msra.mxu0 %v1687
        %1689 = vmatprep.subr.mxu0 0.0
        %v1690 = vand.u32 %v338, 4294901760
        %1691 = vmatpush1.msra.mxu0 %v1690
        %1692 = vmatprep.subr.mxu0 0.0
        %1693 = vmatpush1.msra.mxu0 0.0
        %1694 = vmatprep.subr.mxu0 0.0
        %1695 = vmatpush1.msra.mxu0 0.0
        %1696 = vmatprep.subr.mxu0 0.0
        %1697 = vmatpush1.msra.mxu0 0.0
        %1698 = vmatprep.subr.mxu0 0.0
        %1699 = vmatpush1.msra.mxu0 0.0
        %1700 = vmatprep.subr.mxu0 0.0
        %1701 = vmatpush1.msra.mxu0 0.0
        %1702 = vmatprep.subr.mxu0 0.0
        %1703 = vmatpush1.msra.mxu0 0.0
        %1704 = vmatprep.subr.mxu0 0.0
        %1705 = vmatpush1.msra.mxu0 0.0
        %1706 = vmatprep.subr.mxu0 0.0
        %1707 = vmatpush1.msra.mxu0 0.0
        %1708 = vmatprep.subr.mxu0 0.0
        %1709 = vmatpush1.msra.mxu0 0.0
        %1710 = vmatprep.subr.mxu0 0.0
        %1711 = vmatpush1.msra.mxu0 0.0
        %1712 = vmatprep.subr.mxu0 0.0
        %1713 = vmatpush1.msra.mxu0 0.0
        %1714 = vmatprep.subr.mxu0 0.0
        %1715 = vmatpush1.msra.mxu0 0.0
        %1716 = vmatprep.subr.mxu0 0.0
        %1717 = vmatpush1.msra.mxu0 0.0
        %1718 = vmatprep.subr.mxu0 0.0
        %1719 = vmatpush1.msra.mxu0 0.0
        %1720 = vmatprep.subr.mxu0 0.0
        %1721 = vmatpush1.msra.mxu0 0.0
        %1722 = vmatprep.subr.mxu0 0.0
        %1723 = vmatpush1.msra.mxu0 0.0
        %1724 = vmatprep.mubr.f32.mxu0 0.0
        %v1725 = vand.u32 %v317, 4294901760
        %v1726 = vsub.f32 %v317, %v1725
        %v1727 = vand.u32 %v1726, 4294901760
        %v1728 = vsub.f32 %v1726, %v1727
        %v1729 = vand.u32 %v1728, 4294901760
        %1730 = vmatmul.mubr.f32.gmra.mrb[0].mxu0 %v1729
        %v1731 = vpop.f32.mrb[0].mxu0
        %v1732 = vadd.f32 0.0, %v1731
        %v1733 = vpop.f32.mrb[0].mxu0
        %1734 = vmatprep.mubr.f32.mxu0 0.0
        %v1735 = vand.u32 %v318, 4294901760
        %v1736 = vsub.f32 %v318, %v1735
        %v1737 = vand.u32 %v1736, 4294901760
        %v1738 = vsub.f32 %v1736, %v1737
        %v1739 = vand.u32 %v1738, 4294901760
        %1740 = vmatmul.mubr.f32.gmra.mrb[0].mxu0 %v1739
        %v1741 = vpop.f32.mrb[0].mxu0
        %v1742 = vadd.f32 0.0, %v1741
        %v1743 = vpop.f32.mrb[0].mxu0
        %1744 = vmatprep.mubr.f32.mxu0 0.0
        %v1745 = vand.u32 %v319, 4294901760
        %v1746 = vsub.f32 %v319, %v1745
        %v1747 = vand.u32 %v1746, 4294901760
        %v1748 = vsub.f32 %v1746, %v1747
        %v1749 = vand.u32 %v1748, 4294901760
        %1750 = vmatmul.mubr.f32.gmra.mrb[0].mxu0 %v1749
        %v1751 = vpop.f32.mrb[0].mxu0
        %v1752 = vadd.f32 0.0, %v1751
        %v1753 = vpop.f32.mrb[0].mxu0
        %1754 = vmatprep.mubr.f32.mxu0 0.0
        %v1755 = vand.u32 %v320, 4294901760
        %v1756 = vsub.f32 %v320, %v1755
        %v1757 = vand.u32 %v1756, 4294901760
        %v1758 = vsub.f32 %v1756, %v1757
        %v1759 = vand.u32 %v1758, 4294901760
        %1760 = vmatmul.mubr.f32.gmra.mrb[0].mxu0 %v1759
        %v1761 = vpop.f32.mrb[0].mxu0
        %v1762 = vadd.f32 0.0, %v1761
        %v1763 = vpop.f32.mrb[0].mxu0
        %1764 = vdwg.mxu0
        %1765 = vmatprep.subr.mxu0 0.0
        %v1766 = vand.u32 %v323, 4294901760
        %v1767 = vsub.f32 %v323, %v1766
        %v1768 = vand.u32 %v1767, 4294901760
        %v1769 = vsub.f32 %v1767, %v1768
        %v1770 = vand.u32 %v1769, 4294901760
        %1771 = vmatpush1.msra.mxu0 %v1770
        %1772 = vmatprep.subr.mxu0 0.0
        %v1773 = vand.u32 %v324, 4294901760
        %v1774 = vsub.f32 %v324, %v1773
        %v1775 = vand.u32 %v1774, 4294901760
        %v1776 = vsub.f32 %v1774, %v1775
        %v1777 = vand.u32 %v1776, 4294901760
        %1778 = vmatpush1.msra.mxu0 %v1777
        %1779 = vmatprep.subr.mxu0 0.0
        %v1780 = vand.u32 %v325, 4294901760
        %v1781 = vsub.f32 %v325, %v1780
        %v1782 = vand.u32 %v1781, 4294901760
        %v1783 = vsub.f32 %v1781, %v1782
        %v1784 = vand.u32 %v1783, 4294901760
        %1785 = vmatpush1.msra.mxu0 %v1784
        %1786 = vmatprep.subr.mxu0 0.0
        %v1787 = vand.u32 %v326, 4294901760
        %v1788 = vsub.f32 %v326, %v1787
        %v1789 = vand.u32 %v1788, 4294901760
        %v1790 = vsub.f32 %v1788, %v1789
        %v1791 = vand.u32 %v1790, 4294901760
        %1792 = vmatpush1.msra.mxu0 %v1791
        %1793 = vmatprep.subr.mxu0 0.0
        %v1794 = vand.u32 %v327, 4294901760
        %v1795 = vsub.f32 %v327, %v1794
        %v1796 = vand.u32 %v1795, 4294901760
        %v1797 = vsub.f32 %v1795, %v1796
        %v1798 = vand.u32 %v1797, 4294901760
        %1799 = vmatpush1.msra.mxu0 %v1798
        %1800 = vmatprep.subr.mxu0 0.0
        %v1801 = vand.u32 %v328, 4294901760
        %v1802 = vsub.f32 %v328, %v1801
        %v1803 = vand.u32 %v1802, 4294901760
        %v1804 = vsub.f32 %v1802, %v1803
        %v1805 = vand.u32 %v1804, 4294901760
        %1806 = vmatpush1.msra.mxu0 %v1805
        %1807 = vmatprep.subr.mxu0 0.0
        %v1808 = vand.u32 %v329, 4294901760
        %v1809 = vsub.f32 %v329, %v1808
        %v1810 = vand.u32 %v1809, 4294901760
        %v1811 = vsub.f32 %v1809, %v1810
        %v1812 = vand.u32 %v1811, 4294901760
        %1813 = vmatpush1.msra.mxu0 %v1812
        %1814 = vmatprep.subr.mxu0 0.0
        %v1815 = vand.u32 %v330, 4294901760
        %v1816 = vsub.f32 %v330, %v1815
        %v1817 = vand.u32 %v1816, 4294901760
        %v1818 = vsub.f32 %v1816, %v1817
        %v1819 = vand.u32 %v1818, 4294901760
        %1820 = vmatpush1.msra.mxu0 %v1819
        %1821 = vmatprep.subr.mxu0 0.0
        %v1822 = vand.u32 %v331, 4294901760
        %v1823 = vsub.f32 %v331, %v1822
        %v1824 = vand.u32 %v1823, 4294901760
        %v1825 = vsub.f32 %v1823, %v1824
        %v1826 = vand.u32 %v1825, 4294901760
        %1827 = vmatpush1.msra.mxu0 %v1826
        %1828 = vmatprep.subr.mxu0 0.0
        %v1829 = vand.u32 %v332, 4294901760
        %v1830 = vsub.f32 %v332, %v1829
        %v1831 = vand.u32 %v1830, 4294901760
        %v1832 = vsub.f32 %v1830, %v1831
        %v1833 = vand.u32 %v1832, 4294901760
        %1834 = vmatpush1.msra.mxu0 %v1833
        %1835 = vmatprep.subr.mxu0 0.0
        %v1836 = vand.u32 %v333, 4294901760
        %v1837 = vsub.f32 %v333, %v1836
        %v1838 = vand.u32 %v1837, 4294901760
        %v1839 = vsub.f32 %v1837, %v1838
        %v1840 = vand.u32 %v1839, 4294901760
        %1841 = vmatpush1.msra.mxu0 %v1840
        %1842 = vmatprep.subr.mxu0 0.0
        %v1843 = vand.u32 %v334, 4294901760
        %v1844 = vsub.f32 %v334, %v1843
        %v1845 = vand.u32 %v1844, 4294901760
        %v1846 = vsub.f32 %v1844, %v1845
        %v1847 = vand.u32 %v1846, 4294901760
        %1848 = vmatpush1.msra.mxu0 %v1847
        %1849 = vmatprep.subr.mxu0 0.0
        %v1850 = vand.u32 %v335, 4294901760
        %v1851 = vsub.f32 %v335, %v1850
        %v1852 = vand.u32 %v1851, 4294901760
        %v1853 = vsub.f32 %v1851, %v1852
        %v1854 = vand.u32 %v1853, 4294901760
        %1855 = vmatpush1.msra.mxu0 %v1854
        %1856 = vmatprep.subr.mxu0 0.0
        %v1857 = vand.u32 %v336, 4294901760
        %v1858 = vsub.f32 %v336, %v1857
        %v1859 = vand.u32 %v1858, 4294901760
        %v1860 = vsub.f32 %v1858, %v1859
        %v1861 = vand.u32 %v1860, 4294901760
        %1862 = vmatpush1.msra.mxu0 %v1861
        %1863 = vmatprep.subr.mxu0 0.0
        %v1864 = vand.u32 %v337, 4294901760
        %v1865 = vsub.f32 %v337, %v1864
        %v1866 = vand.u32 %v1865, 4294901760
        %v1867 = vsub.f32 %v1865, %v1866
        %v1868 = vand.u32 %v1867, 4294901760
        %1869 = vmatpush1.msra.mxu0 %v1868
        %1870 = vmatprep.subr.mxu0 0.0
        %v1871 = vand.u32 %v338, 4294901760
        %v1872 = vsub.f32 %v338, %v1871
        %v1873 = vand.u32 %v1872, 4294901760
        %v1874 = vsub.f32 %v1872, %v1873
        %v1875 = vand.u32 %v1874, 4294901760
        %1876 = vmatpush1.msra.mxu0 %v1875
        %1877 = vmatprep.subr.mxu0 0.0
        %1878 = vmatpush1.msra.mxu0 0.0
        %1879 = vmatprep.subr.mxu0 0.0
        %1880 = vmatpush1.msra.mxu0 0.0
        %1881 = vmatprep.subr.mxu0 0.0
        %1882 = vmatpush1.msra.mxu0 0.0
        %1883 = vmatprep.subr.mxu0 0.0
        %1884 = vmatpush1.msra.mxu0 0.0
        %1885 = vmatprep.subr.mxu0 0.0
        %1886 = vmatpush1.msra.mxu0 0.0
        %1887 = vmatprep.subr.mxu0 0.0
        %1888 = vmatpush1.msra.mxu0 0.0
        %1889 = vmatprep.subr.mxu0 0.0
        %1890 = vmatpush1.msra.mxu0 0.0
        %1891 = vmatprep.subr.mxu0 0.0
        %1892 = vmatpush1.msra.mxu0 0.0
        %1893 = vmatprep.subr.mxu0 0.0
        %1894 = vmatpush1.msra.mxu0 0.0
        %1895 = vmatprep.subr.mxu0 0.0
        %1896 = vmatpush1.msra.mxu0 0.0
        %1897 = vmatprep.subr.mxu0 0.0
        %1898 = vmatpush1.msra.mxu0 0.0
        %1899 = vmatprep.subr.mxu0 0.0
        %1900 = vmatpush1.msra.mxu0 0.0
        %1901 = vmatprep.subr.mxu0 0.0
        %1902 = vmatpush1.msra.mxu0 0.0
        %1903 = vmatprep.subr.mxu0 0.0
        %1904 = vmatpush1.msra.mxu0 0.0
        %1905 = vmatprep.subr.mxu0 0.0
        %1906 = vmatpush1.msra.mxu0 0.0
        %1907 = vmatprep.subr.mxu0 0.0
        %1908 = vmatpush1.msra.mxu0 0.0
        %1909 = vmatprep.mubr.f32.mxu0 0.0
        %v1910 = vand.u32 %v317, 4294901760
        %1911 = vmatmul.mubr.f32.gmra.mrb[0].mxu0 %v1910
        %v1912 = vpop.f32.mrb[0].mxu0
        %v1913 = vadd.f32 %v1732, %v1912
        %v1914 = vpop.f32.mrb[0].mxu0
        %1915 = vmatprep.mubr.f32.mxu0 0.0
        %v1916 = vand.u32 %v318, 4294901760
        %1917 = vmatmul.mubr.f32.gmra.mrb[0].mxu0 %v1916
        %v1918 = vpop.f32.mrb[0].mxu0
        %v1919 = vadd.f32 %v1742, %v1918
        %v1920 = vpop.f32.mrb[0].mxu0
        %1921 = vmatprep.mubr.f32.mxu0 0.0
        %v1922 = vand.u32 %v319, 4294901760
        %1923 = vmatmul.mubr.f32.gmra.mrb[0].mxu0 %v1922
        %v1924 = vpop.f32.mrb[0].mxu0
        %v1925 = vadd.f32 %v1752, %v1924
        %v1926 = vpop.f32.mrb[0].mxu0
        %1927 = vmatprep.mubr.f32.mxu0 0.0
        %v1928 = vand.u32 %v320, 4294901760
        %1929 = vmatmul.mubr.f32.gmra.mrb[0].mxu0 %v1928
        %v1930 = vpop.f32.mrb[0].mxu0
        %v1931 = vadd.f32 %v1762, %v1930
        %v1932 = vpop.f32.mrb[0].mxu0
        %1933 = vdwg.mxu0
        %1934 = vmatprep.subr.mxu0 0.0
        %v1935 = vand.u32 %v323, 4294901760
        %v1936 = vsub.f32 %v323, %v1935
        %1937 = vmatpush1.msra.mxu0 %v1936
        %1938 = vmatprep.subr.mxu0 0.0
        %v1939 = vand.u32 %v324, 4294901760
        %v1940 = vsub.f32 %v324, %v1939
        %1941 = vmatpush1.msra.mxu0 %v1940
        %1942 = vmatprep.subr.mxu0 0.0
        %v1943 = vand.u32 %v325, 4294901760
        %v1944 = vsub.f32 %v325, %v1943
        %1945 = vmatpush1.msra.mxu0 %v1944
        %1946 = vmatprep.subr.mxu0 0.0
        %v1947 = vand.u32 %v326, 4294901760
        %v1948 = vsub.f32 %v326, %v1947
        %1949 = vmatpush1.msra.mxu0 %v1948
        %1950 = vmatprep.subr.mxu0 0.0
        %v1951 = vand.u32 %v327, 4294901760
        %v1952 = vsub.f32 %v327, %v1951
        %1953 = vmatpush1.msra.mxu0 %v1952
        %1954 = vmatprep.subr.mxu0 0.0
        %v1955 = vand.u32 %v328, 4294901760
        %v1956 = vsub.f32 %v328, %v1955
        %1957 = vmatpush1.msra.mxu0 %v1956
        %1958 = vmatprep.subr.mxu0 0.0
        %v1959 = vand.u32 %v329, 4294901760
        %v1960 = vsub.f32 %v329, %v1959
        %1961 = vmatpush1.msra.mxu0 %v1960
        %1962 = vmatprep.subr.mxu0 0.0
        %v1963 = vand.u32 %v330, 4294901760
        %v1964 = vsub.f32 %v330, %v1963
        %1965 = vmatpush1.msra.mxu0 %v1964
        %1966 = vmatprep.subr.mxu0 0.0
        %v1967 = vand.u32 %v331, 4294901760
        %v1968 = vsub.f32 %v331, %v1967
        %1969 = vmatpush1.msra.mxu0 %v1968
        %1970 = vmatprep.subr.mxu0 0.0
        %v1971 = vand.u32 %v332, 4294901760
        %v1972 = vsub.f32 %v332, %v1971
        %1973 = vmatpush1.msra.mxu0 %v1972
        %1974 = vmatprep.subr.mxu0 0.0
        %v1975 = vand.u32 %v333, 4294901760
        %v1976 = vsub.f32 %v333, %v1975
        %1977 = vmatpush1.msra.mxu0 %v1976
        %1978 = vmatprep.subr.mxu0 0.0
        %v1979 = vand.u32 %v334, 4294901760
        %v1980 = vsub.f32 %v334, %v1979
        %1981 = vmatpush1.msra.mxu0 %v1980
        %1982 = vmatprep.subr.mxu0 0.0
        %v1983 = vand.u32 %v335, 4294901760
        %v1984 = vsub.f32 %v335, %v1983
        %1985 = vmatpush1.msra.mxu0 %v1984
        %1986 = vmatprep.subr.mxu0 0.0
        %v1987 = vand.u32 %v336, 4294901760
        %v1988 = vsub.f32 %v336, %v1987
        %1989 = vmatpush1.msra.mxu0 %v1988
        %1990 = vmatprep.subr.mxu0 0.0
        %v1991 = vand.u32 %v337, 4294901760
        %v1992 = vsub.f32 %v337, %v1991
        %1993 = vmatpush1.msra.mxu0 %v1992
        %1994 = vmatprep.subr.mxu0 0.0
        %v1995 = vand.u32 %v338, 4294901760
        %v1996 = vsub.f32 %v338, %v1995
        %1997 = vmatpush1.msra.mxu0 %v1996
        %1998 = vmatprep.subr.mxu0 0.0
        %1999 = vmatpush1.msra.mxu0 0.0
        %2000 = vmatprep.subr.mxu0 0.0
        %2001 = vmatpush1.msra.mxu0 0.0
        %2002 = vmatprep.subr.mxu0 0.0
        %2003 = vmatpush1.msra.mxu0 0.0
        %2004 = vmatprep.subr.mxu0 0.0
        %2005 = vmatpush1.msra.mxu0 0.0
        %2006 = vmatprep.subr.mxu0 0.0
        %2007 = vmatpush1.msra.mxu0 0.0
        %2008 = vmatprep.subr.mxu0 0.0
        %2009 = vmatpush1.msra.mxu0 0.0
        %2010 = vmatprep.subr.mxu0 0.0
        %2011 = vmatpush1.msra.mxu0 0.0
        %2012 = vmatprep.subr.mxu0 0.0
        %2013 = vmatpush1.msra.mxu0 0.0
        %2014 = vmatprep.subr.mxu0 0.0
        %2015 = vmatpush1.msra.mxu0 0.0
        %2016 = vmatprep.subr.mxu0 0.0
        %2017 = vmatpush1.msra.mxu0 0.0
        %2018 = vmatprep.subr.mxu0 0.0
        %2019 = vmatpush1.msra.mxu0 0.0
        %2020 = vmatprep.subr.mxu0 0.0
        %2021 = vmatpush1.msra.mxu0 0.0
        %2022 = vmatprep.subr.mxu0 0.0
        %2023 = vmatpush1.msra.mxu0 0.0
        %2024 = vmatprep.subr.mxu0 0.0
        %2025 = vmatpush1.msra.mxu0 0.0
        %2026 = vmatprep.subr.mxu0 0.0
        %2027 = vmatpush1.msra.mxu0 0.0
        %2028 = vmatprep.subr.mxu0 0.0
        %2029 = vmatpush1.msra.mxu0 0.0
        %2030 = vmatprep.mubr.f32.mxu0 0.0
        %v2031 = vand.u32 %v317, 4294901760
        %v2032 = vsub.f32 %v317, %v2031
        %2033 = vmatmul.mubr.f32.gmra.mrb[0].mxu0 %v2032
        %v2034 = vpop.f32.mrb[0].mxu0
        %v2035 = vadd.f32 %v1913, %v2034
        %v2036 = vpop.f32.mrb[0].mxu0
        %2037 = vmatprep.mubr.f32.mxu0 0.0
        %v2038 = vand.u32 %v318, 4294901760
        %v2039 = vsub.f32 %v318, %v2038
        %2040 = vmatmul.mubr.f32.gmra.mrb[0].mxu0 %v2039
        %v2041 = vpop.f32.mrb[0].mxu0
        %v2042 = vadd.f32 %v1919, %v2041
        %v2043 = vpop.f32.mrb[0].mxu0
        %2044 = vmatprep.mubr.f32.mxu0 0.0
        %v2045 = vand.u32 %v319, 4294901760
        %v2046 = vsub.f32 %v319, %v2045
        %2047 = vmatmul.mubr.f32.gmra.mrb[0].mxu0 %v2046
        %v2048 = vpop.f32.mrb[0].mxu0
        %v2049 = vadd.f32 %v1925, %v2048
        %v2050 = vpop.f32.mrb[0].mxu0
        %2051 = vmatprep.mubr.f32.mxu0 0.0
        %v2052 = vand.u32 %v320, 4294901760
        %v2053 = vsub.f32 %v320, %v2052
        %2054 = vmatmul.mubr.f32.gmra.mrb[0].mxu0 %v2053
        %v2055 = vpop.f32.mrb[0].mxu0
        %v2056 = vadd.f32 %v1931, %v2055
        %v2057 = vpop.f32.mrb[0].mxu0
        %2058 = vdwg.mxu0
        %2059 = vmatprep.subr.mxu0 0.0
        %v2060 = vand.u32 %v323, 4294901760
        %2061 = vmatpush1.msra.mxu0 %v2060
        %2062 = vmatprep.subr.mxu0 0.0
        %v2063 = vand.u32 %v324, 4294901760
        %2064 = vmatpush1.msra.mxu0 %v2063
        %2065 = vmatprep.subr.mxu0 0.0
        %v2066 = vand.u32 %v325, 4294901760
        %2067 = vmatpush1.msra.mxu0 %v2066
        %2068 = vmatprep.subr.mxu0 0.0
        %v2069 = vand.u32 %v326, 4294901760
        %2070 = vmatpush1.msra.mxu0 %v2069
        %2071 = vmatprep.subr.mxu0 0.0
        %v2072 = vand.u32 %v327, 4294901760
        %2073 = vmatpush1.msra.mxu0 %v2072
        %2074 = vmatprep.subr.mxu0 0.0
        %v2075 = vand.u32 %v328, 4294901760
        %2076 = vmatpush1.msra.mxu0 %v2075
        %2077 = vmatprep.subr.mxu0 0.0
        %v2078 = vand.u32 %v329, 4294901760
        %2079 = vmatpush1.msra.mxu0 %v2078
        %2080 = vmatprep.subr.mxu0 0.0
        %v2081 = vand.u32 %v330, 4294901760
        %2082 = vmatpush1.msra.mxu0 %v2081
        %2083 = vmatprep.subr.mxu0 0.0
        %v2084 = vand.u32 %v331, 4294901760
        %2085 = vmatpush1.msra.mxu0 %v2084
        %2086 = vmatprep.subr.mxu0 0.0
        %v2087 = vand.u32 %v332, 4294901760
        %2088 = vmatpush1.msra.mxu0 %v2087
        %2089 = vmatprep.subr.mxu0 0.0
        %v2090 = vand.u32 %v333, 4294901760
        %2091 = vmatpush1.msra.mxu0 %v2090
        %2092 = vmatprep.subr.mxu0 0.0
        %v2093 = vand.u32 %v334, 4294901760
        %2094 = vmatpush1.msra.mxu0 %v2093
        %2095 = vmatprep.subr.mxu0 0.0
        %v2096 = vand.u32 %v335, 4294901760
        %2097 = vmatpush1.msra.mxu0 %v2096
        %2098 = vmatprep.subr.mxu0 0.0
        %v2099 = vand.u32 %v336, 4294901760
        %2100 = vmatpush1.msra.mxu0 %v2099
        %2101 = vmatprep.subr.mxu0 0.0
        %v2102 = vand.u32 %v337, 4294901760
        %2103 = vmatpush1.msra.mxu0 %v2102
        %2104 = vmatprep.subr.mxu0 0.0
        %v2105 = vand.u32 %v338, 4294901760
        %2106 = vmatpush1.msra.mxu0 %v2105
        %2107 = vmatprep.subr.mxu0 0.0
        %2108 = vmatpush1.msra.mxu0 0.0
        %2109 = vmatprep.subr.mxu0 0.0
        %2110 = vmatpush1.msra.mxu0 0.0
        %2111 = vmatprep.subr.mxu0 0.0
        %2112 = vmatpush1.msra.mxu0 0.0
        %2113 = vmatprep.subr.mxu0 0.0
        %2114 = vmatpush1.msra.mxu0 0.0
        %2115 = vmatprep.subr.mxu0 0.0
        %2116 = vmatpush1.msra.mxu0 0.0
        %2117 = vmatprep.subr.mxu0 0.0
        %2118 = vmatpush1.msra.mxu0 0.0
        %2119 = vmatprep.subr.mxu0 0.0
        %2120 = vmatpush1.msra.mxu0 0.0
        %2121 = vmatprep.subr.mxu0 0.0
        %2122 = vmatpush1.msra.mxu0 0.0
        %2123 = vmatprep.subr.mxu0 0.0
        %2124 = vmatpush1.msra.mxu0 0.0
        %2125 = vmatprep.subr.mxu0 0.0
        %2126 = vmatpush1.msra.mxu0 0.0
        %2127 = vmatprep.subr.mxu0 0.0
        %2128 = vmatpush1.msra.mxu0 0.0
        %2129 = vmatprep.subr.mxu0 0.0
        %2130 = vmatpush1.msra.mxu0 0.0
        %2131 = vmatprep.subr.mxu0 0.0
        %2132 = vmatpush1.msra.mxu0 0.0
        %2133 = vmatprep.subr.mxu0 0.0
        %2134 = vmatpush1.msra.mxu0 0.0
        %2135 = vmatprep.subr.mxu0 0.0
        %2136 = vmatpush1.msra.mxu0 0.0
        %2137 = vmatprep.subr.mxu0 0.0
        %2138 = vmatpush1.msra.mxu0 0.0
        %2139 = vmatprep.mubr.f32.mxu0 0.0
        %v2140 = vand.u32 %v317, 4294901760
        %v2141 = vsub.f32 %v317, %v2140
        %v2142 = vand.u32 %v2141, 4294901760
        %2143 = vmatmul.mubr.f32.gmra.mrb[0].mxu0 %v2142
        %v2144 = vpop.f32.mrb[0].mxu0
        %v2145 = vadd.f32 %v2035, %v2144
        %v2146 = vpop.f32.mrb[0].mxu0
        %2147 = vmatprep.mubr.f32.mxu0 0.0
        %v2148 = vand.u32 %v318, 4294901760
        %v2149 = vsub.f32 %v318, %v2148
        %v2150 = vand.u32 %v2149, 4294901760
        %2151 = vmatmul.mubr.f32.gmra.mrb[0].mxu0 %v2150
        %v2152 = vpop.f32.mrb[0].mxu0
        %v2153 = vadd.f32 %v2042, %v2152
        %v2154 = vpop.f32.mrb[0].mxu0
        %2155 = vmatprep.mubr.f32.mxu0 0.0
        %v2156 = vand.u32 %v319, 4294901760
        %v2157 = vsub.f32 %v319, %v2156
        %v2158 = vand.u32 %v2157, 4294901760
        %2159 = vmatmul.mubr.f32.gmra.mrb[0].mxu0 %v2158
        %v2160 = vpop.f32.mrb[0].mxu0
        %v2161 = vadd.f32 %v2049, %v2160
        %v2162 = vpop.f32.mrb[0].mxu0
        %2163 = vmatprep.mubr.f32.mxu0 0.0
        %v2164 = vand.u32 %v320, 4294901760
        %v2165 = vsub.f32 %v320, %v2164
        %v2166 = vand.u32 %v2165, 4294901760
        %2167 = vmatmul.mubr.f32.gmra.mrb[0].mxu0 %v2166
        %v2168 = vpop.f32.mrb[0].mxu0
        %v2169 = vadd.f32 %v2056, %v2168
        %v2170 = vpop.f32.mrb[0].mxu0
        %2171 = vdwg.mxu0
        %2172 = vmatprep.subr.mxu0 0.0
        %v2173 = vand.u32 %v323, 4294901760
        %v2174 = vsub.f32 %v323, %v2173
        %v2175 = vand.u32 %v2174, 4294901760
        %2176 = vmatpush1.msra.mxu0 %v2175
        %2177 = vmatprep.subr.mxu0 0.0
        %v2178 = vand.u32 %v324, 4294901760
        %v2179 = vsub.f32 %v324, %v2178
        %v2180 = vand.u32 %v2179, 4294901760
        %2181 = vmatpush1.msra.mxu0 %v2180
        %2182 = vmatprep.subr.mxu0 0.0
        %v2183 = vand.u32 %v325, 4294901760
        %v2184 = vsub.f32 %v325, %v2183
        %v2185 = vand.u32 %v2184, 4294901760
        %2186 = vmatpush1.msra.mxu0 %v2185
        %2187 = vmatprep.subr.mxu0 0.0
        %v2188 = vand.u32 %v326, 4294901760
        %v2189 = vsub.f32 %v326, %v2188
        %v2190 = vand.u32 %v2189, 4294901760
        %2191 = vmatpush1.msra.mxu0 %v2190
        %2192 = vmatprep.subr.mxu0 0.0
        %v2193 = vand.u32 %v327, 4294901760
        %v2194 = vsub.f32 %v327, %v2193
        %v2195 = vand.u32 %v2194, 4294901760
        %2196 = vmatpush1.msra.mxu0 %v2195
        %2197 = vmatprep.subr.mxu0 0.0
        %v2198 = vand.u32 %v328, 4294901760
        %v2199 = vsub.f32 %v328, %v2198
        %v2200 = vand.u32 %v2199, 4294901760
        %2201 = vmatpush1.msra.mxu0 %v2200
        %2202 = vmatprep.subr.mxu0 0.0
        %v2203 = vand.u32 %v329, 4294901760
        %v2204 = vsub.f32 %v329, %v2203
        %v2205 = vand.u32 %v2204, 4294901760
        %2206 = vmatpush1.msra.mxu0 %v2205
        %2207 = vmatprep.subr.mxu0 0.0
        %v2208 = vand.u32 %v330, 4294901760
        %v2209 = vsub.f32 %v330, %v2208
        %v2210 = vand.u32 %v2209, 4294901760
        %2211 = vmatpush1.msra.mxu0 %v2210
        %2212 = vmatprep.subr.mxu0 0.0
        %v2213 = vand.u32 %v331, 4294901760
        %v2214 = vsub.f32 %v331, %v2213
        %v2215 = vand.u32 %v2214, 4294901760
        %2216 = vmatpush1.msra.mxu0 %v2215
        %2217 = vmatprep.subr.mxu0 0.0
        %v2218 = vand.u32 %v332, 4294901760
        %v2219 = vsub.f32 %v332, %v2218
        %v2220 = vand.u32 %v2219, 4294901760
        %2221 = vmatpush1.msra.mxu0 %v2220
        %2222 = vmatprep.subr.mxu0 0.0
        %v2223 = vand.u32 %v333, 4294901760
        %v2224 = vsub.f32 %v333, %v2223
        %v2225 = vand.u32 %v2224, 4294901760
        %2226 = vmatpush1.msra.mxu0 %v2225
        %2227 = vmatprep.subr.mxu0 0.0
        %v2228 = vand.u32 %v334, 4294901760
        %v2229 = vsub.f32 %v334, %v2228
        %v2230 = vand.u32 %v2229, 4294901760
        %2231 = vmatpush1.msra.mxu0 %v2230
        %2232 = vmatprep.subr.mxu0 0.0
        %v2233 = vand.u32 %v335, 4294901760
        %v2234 = vsub.f32 %v335, %v2233
        %v2235 = vand.u32 %v2234, 4294901760
        %2236 = vmatpush1.msra.mxu0 %v2235
        %2237 = vmatprep.subr.mxu0 0.0
        %v2238 = vand.u32 %v336, 4294901760
        %v2239 = vsub.f32 %v336, %v2238
        %v2240 = vand.u32 %v2239, 4294901760
        %2241 = vmatpush1.msra.mxu0 %v2240
        %2242 = vmatprep.subr.mxu0 0.0
        %v2243 = vand.u32 %v337, 4294901760
        %v2244 = vsub.f32 %v337, %v2243
        %v2245 = vand.u32 %v2244, 4294901760
        %2246 = vmatpush1.msra.mxu0 %v2245
        %2247 = vmatprep.subr.mxu0 0.0
        %v2248 = vand.u32 %v338, 4294901760
        %v2249 = vsub.f32 %v338, %v2248
        %v2250 = vand.u32 %v2249, 4294901760
        %2251 = vmatpush1.msra.mxu0 %v2250
        %2252 = vmatprep.subr.mxu0 0.0
        %2253 = vmatpush1.msra.mxu0 0.0
        %2254 = vmatprep.subr.mxu0 0.0
        %2255 = vmatpush1.msra.mxu0 0.0
        %2256 = vmatprep.subr.mxu0 0.0
        %2257 = vmatpush1.msra.mxu0 0.0
        %2258 = vmatprep.subr.mxu0 0.0
        %2259 = vmatpush1.msra.mxu0 0.0
        %2260 = vmatprep.subr.mxu0 0.0
        %2261 = vmatpush1.msra.mxu0 0.0
        %2262 = vmatprep.subr.mxu0 0.0
        %2263 = vmatpush1.msra.mxu0 0.0
        %2264 = vmatprep.subr.mxu0 0.0
        %2265 = vmatpush1.msra.mxu0 0.0
        %2266 = vmatprep.subr.mxu0 0.0
        %2267 = vmatpush1.msra.mxu0 0.0
        %2268 = vmatprep.subr.mxu0 0.0
        %2269 = vmatpush1.msra.mxu0 0.0
        %2270 = vmatprep.subr.mxu0 0.0
        %2271 = vmatpush1.msra.mxu0 0.0
        %2272 = vmatprep.subr.mxu0 0.0
        %2273 = vmatpush1.msra.mxu0 0.0
        %2274 = vmatprep.subr.mxu0 0.0
        %2275 = vmatpush1.msra.mxu0 0.0
        %2276 = vmatprep.subr.mxu0 0.0
        %2277 = vmatpush1.msra.mxu0 0.0
        %2278 = vmatprep.subr.mxu0 0.0
        %2279 = vmatpush1.msra.mxu0 0.0
        %2280 = vmatprep.subr.mxu0 0.0
        %2281 = vmatpush1.msra.mxu0 0.0
        %2282 = vmatprep.subr.mxu0 0.0
        %2283 = vmatpush1.msra.mxu0 0.0
        %2284 = vmatprep.mubr.f32.mxu0 0.0
        %v2285 = vand.u32 %v317, 4294901760
        %2286 = vmatmul.mubr.f32.gmra.mrb[0].mxu0 %v2285
        %v2287 = vpop.f32.mrb[0].mxu0
        %v2288 = vadd.f32 %v2145, %v2287
        %v2289 = vpop.f32.mrb[0].mxu0
        %2290 = vmatprep.mubr.f32.mxu0 0.0
        %v2291 = vand.u32 %v318, 4294901760
        %2292 = vmatmul.mubr.f32.gmra.mrb[0].mxu0 %v2291
        %v2293 = vpop.f32.mrb[0].mxu0
        %v2294 = vadd.f32 %v2153, %v2293
        %v2295 = vpop.f32.mrb[0].mxu0
        %2296 = vmatprep.mubr.f32.mxu0 0.0
        %v2297 = vand.u32 %v319, 4294901760
        %2298 = vmatmul.mubr.f32.gmra.mrb[0].mxu0 %v2297
        %v2299 = vpop.f32.mrb[0].mxu0
        %v2300 = vadd.f32 %v2161, %v2299
        %v2301 = vpop.f32.mrb[0].mxu0
        %2302 = vmatprep.mubr.f32.mxu0 0.0
        %v2303 = vand.u32 %v320, 4294901760
        %2304 = vmatmul.mubr.f32.gmra.mrb[0].mxu0 %v2303
        %v2305 = vpop.f32.mrb[0].mxu0
        %v2306 = vadd.f32 %v2169, %v2305
        %v2307 = vpop.f32.mrb[0].mxu0
        %2308 = vdwg.mxu0
        %2309 = vmatprep.subr.mxu0 0.0
        %v2310 = vand.u32 %v323, 4294901760
        %2311 = vmatpush1.msra.mxu0 %v2310
        %2312 = vmatprep.subr.mxu0 0.0
        %v2313 = vand.u32 %v324, 4294901760
        %2314 = vmatpush1.msra.mxu0 %v2313
        %2315 = vmatprep.subr.mxu0 0.0
        %v2316 = vand.u32 %v325, 4294901760
        %2317 = vmatpush1.msra.mxu0 %v2316
        %2318 = vmatprep.subr.mxu0 0.0
        %v2319 = vand.u32 %v326, 4294901760
        %2320 = vmatpush1.msra.mxu0 %v2319
        %2321 = vmatprep.subr.mxu0 0.0
        %v2322 = vand.u32 %v327, 4294901760
        %2323 = vmatpush1.msra.mxu0 %v2322
        %2324 = vmatprep.subr.mxu0 0.0
        %v2325 = vand.u32 %v328, 4294901760
        %2326 = vmatpush1.msra.mxu0 %v2325
        %2327 = vmatprep.subr.mxu0 0.0
        %v2328 = vand.u32 %v329, 4294901760
        %2329 = vmatpush1.msra.mxu0 %v2328
        %2330 = vmatprep.subr.mxu0 0.0
        %v2331 = vand.u32 %v330, 4294901760
        %2332 = vmatpush1.msra.mxu0 %v2331
        %2333 = vmatprep.subr.mxu0 0.0
        %v2334 = vand.u32 %v331, 4294901760
        %2335 = vmatpush1.msra.mxu0 %v2334
        %2336 = vmatprep.subr.mxu0 0.0
        %v2337 = vand.u32 %v332, 4294901760
        %2338 = vmatpush1.msra.mxu0 %v2337
        %2339 = vmatprep.subr.mxu0 0.0
        %v2340 = vand.u32 %v333, 4294901760
        %2341 = vmatpush1.msra.mxu0 %v2340
        %2342 = vmatprep.subr.mxu0 0.0
        %v2343 = vand.u32 %v334, 4294901760
        %2344 = vmatpush1.msra.mxu0 %v2343
        %2345 = vmatprep.subr.mxu0 0.0
        %v2346 = vand.u32 %v335, 4294901760
        %2347 = vmatpush1.msra.mxu0 %v2346
        %2348 = vmatprep.subr.mxu0 0.0
        %v2349 = vand.u32 %v336, 4294901760
        %2350 = vmatpush1.msra.mxu0 %v2349
        %2351 = vmatprep.subr.mxu0 0.0
        %v2352 = vand.u32 %v337, 4294901760
        %2353 = vmatpush1.msra.mxu0 %v2352
        %2354 = vmatprep.subr.mxu0 0.0
        %v2355 = vand.u32 %v338, 4294901760
        %2356 = vmatpush1.msra.mxu0 %v2355
        %2357 = vmatprep.subr.mxu0 0.0
        %2358 = vmatpush1.msra.mxu0 0.0
        %2359 = vmatprep.subr.mxu0 0.0
        %2360 = vmatpush1.msra.mxu0 0.0
        %2361 = vmatprep.subr.mxu0 0.0
        %2362 = vmatpush1.msra.mxu0 0.0
        %2363 = vmatprep.subr.mxu0 0.0
        %2364 = vmatpush1.msra.mxu0 0.0
        %2365 = vmatprep.subr.mxu0 0.0
        %2366 = vmatpush1.msra.mxu0 0.0
        %2367 = vmatprep.subr.mxu0 0.0
        %2368 = vmatpush1.msra.mxu0 0.0
        %2369 = vmatprep.subr.mxu0 0.0
        %2370 = vmatpush1.msra.mxu0 0.0
        %2371 = vmatprep.subr.mxu0 0.0
        %2372 = vmatpush1.msra.mxu0 0.0
        %2373 = vmatprep.subr.mxu0 0.0
        %2374 = vmatpush1.msra.mxu0 0.0
        %2375 = vmatprep.subr.mxu0 0.0
        %2376 = vmatpush1.msra.mxu0 0.0
        %2377 = vmatprep.subr.mxu0 0.0
        %2378 = vmatpush1.msra.mxu0 0.0
        %2379 = vmatprep.subr.mxu0 0.0
        %2380 = vmatpush1.msra.mxu0 0.0
        %2381 = vmatprep.subr.mxu0 0.0
        %2382 = vmatpush1.msra.mxu0 0.0
        %2383 = vmatprep.subr.mxu0 0.0
        %2384 = vmatpush1.msra.mxu0 0.0
        %2385 = vmatprep.subr.mxu0 0.0
        %2386 = vmatpush1.msra.mxu0 0.0
        %2387 = vmatprep.subr.mxu0 0.0
        %2388 = vmatpush1.msra.mxu0 0.0
        %2389 = vmatprep.mubr.f32.mxu0 0.0
        %v2390 = vand.u32 %v317, 4294901760
        %2391 = vmatmul.mubr.f32.gmra.mrb[0].mxu0 %v2390
        %v2392 = vpop.f32.mrb[0].mxu0
        %v2393 = vadd.f32 %v2288, %v2392
        %v2394 = vpop.f32.mrb[0].mxu0
        %2395 = vmatprep.mubr.f32.mxu0 0.0
        %v2396 = vand.u32 %v318, 4294901760
        %2397 = vmatmul.mubr.f32.gmra.mrb[0].mxu0 %v2396
        %v2398 = vpop.f32.mrb[0].mxu0
        %v2399 = vadd.f32 %v2294, %v2398
        %v2400 = vpop.f32.mrb[0].mxu0
        %2401 = vmatprep.mubr.f32.mxu0 0.0
        %v2402 = vand.u32 %v319, 4294901760
        %2403 = vmatmul.mubr.f32.gmra.mrb[0].mxu0 %v2402
        %v2404 = vpop.f32.mrb[0].mxu0
        %v2405 = vadd.f32 %v2300, %v2404
        %v2406 = vpop.f32.mrb[0].mxu0
        %2407 = vmatprep.mubr.f32.mxu0 0.0
        %v2408 = vand.u32 %v320, 4294901760
        %2409 = vmatmul.mubr.f32.gmra.mrb[0].mxu0 %v2408
        %v2410 = vpop.f32.mrb[0].mxu0
        %v2411 = vadd.f32 %v2306, %v2410
        %v2412 = vpop.f32.mrb[0].mxu0
        %2413 = vdwg.mxu0
        %2414 = vmatprep.subr.mxu0 0.0
        %v2415 = vand.u32 %v2393, 4294901760
        %2416 = vmatpush1.msra.mxu0 %v2415
        %2417 = vmatprep.subr.mxu0 0.0
        %v2418 = vand.u32 %v2399, 4294901760
        %2419 = vmatpush1.msra.mxu0 %v2418
        %2420 = vmatprep.subr.mxu0 0.0
        %v2421 = vand.u32 %v2405, 4294901760
        %2422 = vmatpush1.msra.mxu0 %v2421
        %2423 = vmatprep.subr.mxu0 0.0
        %v2424 = vand.u32 %v2411, 4294901760
        %2425 = vmatpush1.msra.mxu0 %v2424
        %2426 = vmatprep.subr.mxu0 0.0
        %2427 = vmatpush1.msra.mxu0 0.0
        %2428 = vmatprep.subr.mxu0 0.0
        %2429 = vmatpush1.msra.mxu0 0.0
        %2430 = vmatprep.subr.mxu0 0.0
        %2431 = vmatpush1.msra.mxu0 0.0
        %2432 = vmatprep.subr.mxu0 0.0
        %2433 = vmatpush1.msra.mxu0 0.0
        %2434 = vmatprep.subr.mxu0 0.0
        %2435 = vmatpush1.msra.mxu0 0.0
        %2436 = vmatprep.subr.mxu0 0.0
        %2437 = vmatpush1.msra.mxu0 0.0
        %2438 = vmatprep.subr.mxu0 0.0
        %2439 = vmatpush1.msra.mxu0 0.0
        %2440 = vmatprep.subr.mxu0 0.0
        %2441 = vmatpush1.msra.mxu0 0.0
        %2442 = vmatprep.subr.mxu0 0.0
        %2443 = vmatpush1.msra.mxu0 0.0
        %2444 = vmatprep.subr.mxu0 0.0
        %2445 = vmatpush1.msra.mxu0 0.0
        %2446 = vmatprep.subr.mxu0 0.0
        %2447 = vmatpush1.msra.mxu0 0.0
        %2448 = vmatprep.subr.mxu0 0.0
        %2449 = vmatpush1.msra.mxu0 0.0
        %2450 = vmatprep.subr.mxu0 0.0
        %2451 = vmatpush1.msra.mxu0 0.0
        %2452 = vmatprep.subr.mxu0 0.0
        %2453 = vmatpush1.msra.mxu0 0.0
        %2454 = vmatprep.subr.mxu0 0.0
        %2455 = vmatpush1.msra.mxu0 0.0
        %2456 = vmatprep.subr.mxu0 0.0
        %2457 = vmatpush1.msra.mxu0 0.0
        %2458 = vmatprep.subr.mxu0 0.0
        %2459 = vmatpush1.msra.mxu0 0.0
        %2460 = vmatprep.subr.mxu0 0.0
        %2461 = vmatpush1.msra.mxu0 0.0
        %2462 = vmatprep.subr.mxu0 0.0
        %2463 = vmatpush1.msra.mxu0 0.0
        %2464 = vmatprep.subr.mxu0 0.0
        %2465 = vmatpush1.msra.mxu0 0.0
        %2466 = vmatprep.subr.mxu0 0.0
        %2467 = vmatpush1.msra.mxu0 0.0
        %2468 = vmatprep.subr.mxu0 0.0
        %2469 = vmatpush1.msra.mxu0 0.0
        %2470 = vmatprep.subr.mxu0 0.0
        %2471 = vmatpush1.msra.mxu0 0.0
        %2472 = vmatprep.subr.mxu0 0.0
        %2473 = vmatpush1.msra.mxu0 0.0
        %2474 = vmatprep.subr.mxu0 0.0
        %2475 = vmatpush1.msra.mxu0 0.0
        %2476 = vmatprep.subr.mxu0 0.0
        %2477 = vmatpush1.msra.mxu0 0.0
        %2478 = vmatprep.subr.mxu0 0.0
        %2479 = vmatpush1.msra.mxu0 0.0
        %2480 = vmatprep.subr.mxu0 0.0
        %2481 = vmatpush1.msra.mxu0 0.0
        %2482 = vmatprep.mubr.f32.mxu0 0.0
        %v2483 = vand.u32 %v1111, 4294901760
        %v2484 = vsub.f32 %v1111, %v2483
        %v2485 = vand.u32 %v2484, 4294901760
        %v2486 = vsub.f32 %v2484, %v2485
        %v2487 = vand.u32 %v2486, 4294901760
        %2488 = vmatmul.mubr.f32.gmra.mrb[0].mxu0 %v2487
        %v2489 = vpop.f32.mrb[0].mxu0
        %v2490 = vadd.f32 0.0, %v2489
        %v2491 = vpop.f32.mrb[0].mxu0
        %2492 = vmatprep.mubr.f32.mxu0 0.0
        %v2493 = vand.u32 %v1114, 4294901760
        %v2494 = vsub.f32 %v1114, %v2493
        %v2495 = vand.u32 %v2494, 4294901760
        %v2496 = vsub.f32 %v2494, %v2495
        %v2497 = vand.u32 %v2496, 4294901760
        %2498 = vmatmul.mubr.f32.gmra.mrb[0].mxu0 %v2497
        %v2499 = vpop.f32.mrb[0].mxu0
        %v2500 = vadd.f32 0.0, %v2499
        %v2501 = vpop.f32.mrb[0].mxu0
        %2502 = vdwg.mxu0
        %2503 = vmatprep.subr.mxu0 0.0
        %v2504 = vand.u32 %v2393, 4294901760
        %v2505 = vsub.f32 %v2393, %v2504
        %v2506 = vand.u32 %v2505, 4294901760
        %v2507 = vsub.f32 %v2505, %v2506
        %v2508 = vand.u32 %v2507, 4294901760
        %2509 = vmatpush1.msra.mxu0 %v2508
        %2510 = vmatprep.subr.mxu0 0.0
        %v2511 = vand.u32 %v2399, 4294901760
        %v2512 = vsub.f32 %v2399, %v2511
        %v2513 = vand.u32 %v2512, 4294901760
        %v2514 = vsub.f32 %v2512, %v2513
        %v2515 = vand.u32 %v2514, 4294901760
        %2516 = vmatpush1.msra.mxu0 %v2515
        %2517 = vmatprep.subr.mxu0 0.0
        %v2518 = vand.u32 %v2405, 4294901760
        %v2519 = vsub.f32 %v2405, %v2518
        %v2520 = vand.u32 %v2519, 4294901760
        %v2521 = vsub.f32 %v2519, %v2520
        %v2522 = vand.u32 %v2521, 4294901760
        %2523 = vmatpush1.msra.mxu0 %v2522
        %2524 = vmatprep.subr.mxu0 0.0
        %v2525 = vand.u32 %v2411, 4294901760
        %v2526 = vsub.f32 %v2411, %v2525
        %v2527 = vand.u32 %v2526, 4294901760
        %v2528 = vsub.f32 %v2526, %v2527
        %v2529 = vand.u32 %v2528, 4294901760
        %2530 = vmatpush1.msra.mxu0 %v2529
        %2531 = vmatprep.subr.mxu0 0.0
        %2532 = vmatpush1.msra.mxu0 0.0
        %2533 = vmatprep.subr.mxu0 0.0
        %2534 = vmatpush1.msra.mxu0 0.0
        %2535 = vmatprep.subr.mxu0 0.0
        %2536 = vmatpush1.msra.mxu0 0.0
        %2537 = vmatprep.subr.mxu0 0.0
        %2538 = vmatpush1.msra.mxu0 0.0
        %2539 = vmatprep.subr.mxu0 0.0
        %2540 = vmatpush1.msra.mxu0 0.0
        %2541 = vmatprep.subr.mxu0 0.0
        %2542 = vmatpush1.msra.mxu0 0.0
        %2543 = vmatprep.subr.mxu0 0.0
        %2544 = vmatpush1.msra.mxu0 0.0
        %2545 = vmatprep.subr.mxu0 0.0
        %2546 = vmatpush1.msra.mxu0 0.0
        %2547 = vmatprep.subr.mxu0 0.0
        %2548 = vmatpush1.msra.mxu0 0.0
        %2549 = vmatprep.subr.mxu0 0.0
        %2550 = vmatpush1.msra.mxu0 0.0
        %2551 = vmatprep.subr.mxu0 0.0
        %2552 = vmatpush1.msra.mxu0 0.0
        %2553 = vmatprep.subr.mxu0 0.0
        %2554 = vmatpush1.msra.mxu0 0.0
        %2555 = vmatprep.subr.mxu0 0.0
        %2556 = vmatpush1.msra.mxu0 0.0
        %2557 = vmatprep.subr.mxu0 0.0
        %2558 = vmatpush1.msra.mxu0 0.0
        %2559 = vmatprep.subr.mxu0 0.0
        %2560 = vmatpush1.msra.mxu0 0.0
        %2561 = vmatprep.subr.mxu0 0.0
        %2562 = vmatpush1.msra.mxu0 0.0
        %2563 = vmatprep.subr.mxu0 0.0
        %2564 = vmatpush1.msra.mxu0 0.0
        %2565 = vmatprep.subr.mxu0 0.0
        %2566 = vmatpush1.msra.mxu0 0.0
        %2567 = vmatprep.subr.mxu0 0.0
        %2568 = vmatpush1.msra.mxu0 0.0
        %2569 = vmatprep.subr.mxu0 0.0
        %2570 = vmatpush1.msra.mxu0 0.0
        %2571 = vmatprep.subr.mxu0 0.0
        %2572 = vmatpush1.msra.mxu0 0.0
        %2573 = vmatprep.subr.mxu0 0.0
        %2574 = vmatpush1.msra.mxu0 0.0
        %2575 = vmatprep.subr.mxu0 0.0
        %2576 = vmatpush1.msra.mxu0 0.0
        %2577 = vmatprep.subr.mxu0 0.0
        %2578 = vmatpush1.msra.mxu0 0.0
        %2579 = vmatprep.subr.mxu0 0.0
        %2580 = vmatpush1.msra.mxu0 0.0
        %2581 = vmatprep.subr.mxu0 0.0
        %2582 = vmatpush1.msra.mxu0 0.0
        %2583 = vmatprep.subr.mxu0 0.0
        %2584 = vmatpush1.msra.mxu0 0.0
        %2585 = vmatprep.subr.mxu0 0.0
        %2586 = vmatpush1.msra.mxu0 0.0
        %2587 = vmatprep.mubr.f32.mxu0 0.0
        %v2588 = vand.u32 %v1111, 4294901760
        %2589 = vmatmul.mubr.f32.gmra.mrb[0].mxu0 %v2588
        %v2590 = vpop.f32.mrb[0].mxu0
        %v2591 = vadd.f32 %v2490, %v2590
        %v2592 = vpop.f32.mrb[0].mxu0
        %2593 = vmatprep.mubr.f32.mxu0 0.0
        %v2594 = vand.u32 %v1114, 4294901760
        %2595 = vmatmul.mubr.f32.gmra.mrb[0].mxu0 %v2594
        %v2596 = vpop.f32.mrb[0].mxu0
        %v2597 = vadd.f32 %v2500, %v2596
        %v2598 = vpop.f32.mrb[0].mxu0
        %2599 = vdwg.mxu0
        %2600 = vmatprep.subr.mxu0 0.0
        %v2601 = vand.u32 %v2393, 4294901760
        %v2602 = vsub.f32 %v2393, %v2601
        %2603 = vmatpush1.msra.mxu0 %v2602
        %2604 = vmatprep.subr.mxu0 0.0
        %v2605 = vand.u32 %v2399, 4294901760
        %v2606 = vsub.f32 %v2399, %v2605
        %2607 = vmatpush1.msra.mxu0 %v2606
        %2608 = vmatprep.subr.mxu0 0.0
        %v2609 = vand.u32 %v2405, 4294901760
        %v2610 = vsub.f32 %v2405, %v2609
        %2611 = vmatpush1.msra.mxu0 %v2610
        %2612 = vmatprep.subr.mxu0 0.0
        %v2613 = vand.u32 %v2411, 4294901760
        %v2614 = vsub.f32 %v2411, %v2613
        %2615 = vmatpush1.msra.mxu0 %v2614
        %2616 = vmatprep.subr.mxu0 0.0
        %2617 = vmatpush1.msra.mxu0 0.0
        %2618 = vmatprep.subr.mxu0 0.0
        %2619 = vmatpush1.msra.mxu0 0.0
        %2620 = vmatprep.subr.mxu0 0.0
        %2621 = vmatpush1.msra.mxu0 0.0
        %2622 = vmatprep.subr.mxu0 0.0
        %2623 = vmatpush1.msra.mxu0 0.0
        %2624 = vmatprep.subr.mxu0 0.0
        %2625 = vmatpush1.msra.mxu0 0.0
        %2626 = vmatprep.subr.mxu0 0.0
        %2627 = vmatpush1.msra.mxu0 0.0
        %2628 = vmatprep.subr.mxu0 0.0
        %2629 = vmatpush1.msra.mxu0 0.0
        %2630 = vmatprep.subr.mxu0 0.0
        %2631 = vmatpush1.msra.mxu0 0.0
        %2632 = vmatprep.subr.mxu0 0.0
        %2633 = vmatpush1.msra.mxu0 0.0
        %2634 = vmatprep.subr.mxu0 0.0
        %2635 = vmatpush1.msra.mxu0 0.0
        %2636 = vmatprep.subr.mxu0 0.0
        %2637 = vmatpush1.msra.mxu0 0.0
        %2638 = vmatprep.subr.mxu0 0.0
        %2639 = vmatpush1.msra.mxu0 0.0
        %2640 = vmatprep.subr.mxu0 0.0
        %2641 = vmatpush1.msra.mxu0 0.0
        %2642 = vmatprep.subr.mxu0 0.0
        %2643 = vmatpush1.msra.mxu0 0.0
        %2644 = vmatprep.subr.mxu0 0.0
        %2645 = vmatpush1.msra.mxu0 0.0
        %2646 = vmatprep.subr.mxu0 0.0
        %2647 = vmatpush1.msra.mxu0 0.0
        %2648 = vmatprep.subr.mxu0 0.0
        %2649 = vmatpush1.msra.mxu0 0.0
        %2650 = vmatprep.subr.mxu0 0.0
        %2651 = vmatpush1.msra.mxu0 0.0
        %2652 = vmatprep.subr.mxu0 0.0
        %2653 = vmatpush1.msra.mxu0 0.0
        %2654 = vmatprep.subr.mxu0 0.0
        %2655 = vmatpush1.msra.mxu0 0.0
        %2656 = vmatprep.subr.mxu0 0.0
        %2657 = vmatpush1.msra.mxu0 0.0
        %2658 = vmatprep.subr.mxu0 0.0
        %2659 = vmatpush1.msra.mxu0 0.0
        %2660 = vmatprep.subr.mxu0 0.0
        %2661 = vmatpush1.msra.mxu0 0.0
        %2662 = vmatprep.subr.mxu0 0.0
        %2663 = vmatpush1.msra.mxu0 0.0
        %2664 = vmatprep.subr.mxu0 0.0
        %2665 = vmatpush1.msra.mxu0 0.0
        %2666 = vmatprep.subr.mxu0 0.0
        %2667 = vmatpush1.msra.mxu0 0.0
        %2668 = vmatprep.subr.mxu0 0.0
        %2669 = vmatpush1.msra.mxu0 0.0
        %2670 = vmatprep.subr.mxu0 0.0
        %2671 = vmatpush1.msra.mxu0 0.0
        %2672 = vmatprep.mubr.f32.mxu0 0.0
        %v2673 = vand.u32 %v1111, 4294901760
        %v2674 = vsub.f32 %v1111, %v2673
        %2675 = vmatmul.mubr.f32.gmra.mrb[0].mxu0 %v2674
        %v2676 = vpop.f32.mrb[0].mxu0
        %v2677 = vadd.f32 %v2591, %v2676
        %v2678 = vpop.f32.mrb[0].mxu0
        %2679 = vmatprep.mubr.f32.mxu0 0.0
        %v2680 = vand.u32 %v1114, 4294901760
        %v2681 = vsub.f32 %v1114, %v2680
        %2682 = vmatmul.mubr.f32.gmra.mrb[0].mxu0 %v2681
        %v2683 = vpop.f32.mrb[0].mxu0
        %v2684 = vadd.f32 %v2597, %v2683
        %v2685 = vpop.f32.mrb[0].mxu0
        %2686 = vdwg.mxu0
        %2687 = vmatprep.subr.mxu0 0.0
        %v2688 = vand.u32 %v2393, 4294901760
        %2689 = vmatpush1.msra.mxu0 %v2688
        %2690 = vmatprep.subr.mxu0 0.0
        %v2691 = vand.u32 %v2399, 4294901760
        %2692 = vmatpush1.msra.mxu0 %v2691
        %2693 = vmatprep.subr.mxu0 0.0
        %v2694 = vand.u32 %v2405, 4294901760
        %2695 = vmatpush1.msra.mxu0 %v2694
        %2696 = vmatprep.subr.mxu0 0.0
        %v2697 = vand.u32 %v2411, 4294901760
        %2698 = vmatpush1.msra.mxu0 %v2697
        %2699 = vmatprep.subr.mxu0 0.0
        %2700 = vmatpush1.msra.mxu0 0.0
        %2701 = vmatprep.subr.mxu0 0.0
        %2702 = vmatpush1.msra.mxu0 0.0
        %2703 = vmatprep.subr.mxu0 0.0
        %2704 = vmatpush1.msra.mxu0 0.0
        %2705 = vmatprep.subr.mxu0 0.0
        %2706 = vmatpush1.msra.mxu0 0.0
        %2707 = vmatprep.subr.mxu0 0.0
        %2708 = vmatpush1.msra.mxu0 0.0
        %2709 = vmatprep.subr.mxu0 0.0
        %2710 = vmatpush1.msra.mxu0 0.0
        %2711 = vmatprep.subr.mxu0 0.0
        %2712 = vmatpush1.msra.mxu0 0.0
        %2713 = vmatprep.subr.mxu0 0.0
        %2714 = vmatpush1.msra.mxu0 0.0
        %2715 = vmatprep.subr.mxu0 0.0
        %2716 = vmatpush1.msra.mxu0 0.0
        %2717 = vmatprep.subr.mxu0 0.0
        %2718 = vmatpush1.msra.mxu0 0.0
        %2719 = vmatprep.subr.mxu0 0.0
        %2720 = vmatpush1.msra.mxu0 0.0
        %2721 = vmatprep.subr.mxu0 0.0
        %2722 = vmatpush1.msra.mxu0 0.0
        %2723 = vmatprep.subr.mxu0 0.0
        %2724 = vmatpush1.msra.mxu0 0.0
        %2725 = vmatprep.subr.mxu0 0.0
        %2726 = vmatpush1.msra.mxu0 0.0
        %2727 = vmatprep.subr.mxu0 0.0
        %2728 = vmatpush1.msra.mxu0 0.0
        %2729 = vmatprep.subr.mxu0 0.0
        %2730 = vmatpush1.msra.mxu0 0.0
        %2731 = vmatprep.subr.mxu0 0.0
        %2732 = vmatpush1.msra.mxu0 0.0
        %2733 = vmatprep.subr.mxu0 0.0
        %2734 = vmatpush1.msra.mxu0 0.0
        %2735 = vmatprep.subr.mxu0 0.0
        %2736 = vmatpush1.msra.mxu0 0.0
        %2737 = vmatprep.subr.mxu0 0.0
        %2738 = vmatpush1.msra.mxu0 0.0
        %2739 = vmatprep.subr.mxu0 0.0
        %2740 = vmatpush1.msra.mxu0 0.0
        %2741 = vmatprep.subr.mxu0 0.0
        %2742 = vmatpush1.msra.mxu0 0.0
        %2743 = vmatprep.subr.mxu0 0.0
        %2744 = vmatpush1.msra.mxu0 0.0
        %2745 = vmatprep.subr.mxu0 0.0
        %2746 = vmatpush1.msra.mxu0 0.0
        %2747 = vmatprep.subr.mxu0 0.0
        %2748 = vmatpush1.msra.mxu0 0.0
        %2749 = vmatprep.subr.mxu0 0.0
        %2750 = vmatpush1.msra.mxu0 0.0
        %2751 = vmatprep.subr.mxu0 0.0
        %2752 = vmatpush1.msra.mxu0 0.0
        %2753 = vmatprep.subr.mxu0 0.0
        %2754 = vmatpush1.msra.mxu0 0.0
        %2755 = vmatprep.mubr.f32.mxu0 0.0
        %v2756 = vand.u32 %v1111, 4294901760
        %v2757 = vsub.f32 %v1111, %v2756
        %v2758 = vand.u32 %v2757, 4294901760
        %2759 = vmatmul.mubr.f32.gmra.mrb[0].mxu0 %v2758
        %v2760 = vpop.f32.mrb[0].mxu0
        %v2761 = vadd.f32 %v2677, %v2760
        %v2762 = vpop.f32.mrb[0].mxu0
        %2763 = vmatprep.mubr.f32.mxu0 0.0
        %v2764 = vand.u32 %v1114, 4294901760
        %v2765 = vsub.f32 %v1114, %v2764
        %v2766 = vand.u32 %v2765, 4294901760
        %2767 = vmatmul.mubr.f32.gmra.mrb[0].mxu0 %v2766
        %v2768 = vpop.f32.mrb[0].mxu0
        %v2769 = vadd.f32 %v2684, %v2768
        %v2770 = vpop.f32.mrb[0].mxu0
        %2771 = vdwg.mxu0
        %2772 = vmatprep.subr.mxu0 0.0
        %v2773 = vand.u32 %v2393, 4294901760
        %v2774 = vsub.f32 %v2393, %v2773
        %v2775 = vand.u32 %v2774, 4294901760
        %2776 = vmatpush1.msra.mxu0 %v2775
        %2777 = vmatprep.subr.mxu0 0.0
        %v2778 = vand.u32 %v2399, 4294901760
        %v2779 = vsub.f32 %v2399, %v2778
        %v2780 = vand.u32 %v2779, 4294901760
        %2781 = vmatpush1.msra.mxu0 %v2780
        %2782 = vmatprep.subr.mxu0 0.0
        %v2783 = vand.u32 %v2405, 4294901760
        %v2784 = vsub.f32 %v2405, %v2783
        %v2785 = vand.u32 %v2784, 4294901760
        %2786 = vmatpush1.msra.mxu0 %v2785
        %2787 = vmatprep.subr.mxu0 0.0
        %v2788 = vand.u32 %v2411, 4294901760
        %v2789 = vsub.f32 %v2411, %v2788
        %v2790 = vand.u32 %v2789, 4294901760
        %2791 = vmatpush1.msra.mxu0 %v2790
        %2792 = vmatprep.subr.mxu0 0.0
        %2793 = vmatpush1.msra.mxu0 0.0
        %2794 = vmatprep.subr.mxu0 0.0
        %2795 = vmatpush1.msra.mxu0 0.0
        %2796 = vmatprep.subr.mxu0 0.0
        %2797 = vmatpush1.msra.mxu0 0.0
        %2798 = vmatprep.subr.mxu0 0.0
        %2799 = vmatpush1.msra.mxu0 0.0
        %2800 = vmatprep.subr.mxu0 0.0
        %2801 = vmatpush1.msra.mxu0 0.0
        %2802 = vmatprep.subr.mxu0 0.0
        %2803 = vmatpush1.msra.mxu0 0.0
        %2804 = vmatprep.subr.mxu0 0.0
        %2805 = vmatpush1.msra.mxu0 0.0
        %2806 = vmatprep.subr.mxu0 0.0
        %2807 = vmatpush1.msra.mxu0 0.0
        %2808 = vmatprep.subr.mxu0 0.0
        %2809 = vmatpush1.msra.mxu0 0.0
        %2810 = vmatprep.subr.mxu0 0.0
        %2811 = vmatpush1.msra.mxu0 0.0
        %2812 = vmatprep.subr.mxu0 0.0
        %2813 = vmatpush1.msra.mxu0 0.0
        %2814 = vmatprep.subr.mxu0 0.0
        %2815 = vmatpush1.msra.mxu0 0.0
        %2816 = vmatprep.subr.mxu0 0.0
        %2817 = vmatpush1.msra.mxu0 0.0
        %2818 = vmatprep.subr.mxu0 0.0
        %2819 = vmatpush1.msra.mxu0 0.0
        %2820 = vmatprep.subr.mxu0 0.0
        %2821 = vmatpush1.msra.mxu0 0.0
        %2822 = vmatprep.subr.mxu0 0.0
        %2823 = vmatpush1.msra.mxu0 0.0
        %2824 = vmatprep.subr.mxu0 0.0
        %2825 = vmatpush1.msra.mxu0 0.0
        %2826 = vmatprep.subr.mxu0 0.0
        %2827 = vmatpush1.msra.mxu0 0.0
        %2828 = vmatprep.subr.mxu0 0.0
        %2829 = vmatpush1.msra.mxu0 0.0
        %2830 = vmatprep.subr.mxu0 0.0
        %2831 = vmatpush1.msra.mxu0 0.0
        %2832 = vmatprep.subr.mxu0 0.0
        %2833 = vmatpush1.msra.mxu0 0.0
        %2834 = vmatprep.subr.mxu0 0.0
        %2835 = vmatpush1.msra.mxu0 0.0
        %2836 = vmatprep.subr.mxu0 0.0
        %2837 = vmatpush1.msra.mxu0 0.0
        %2838 = vmatprep.subr.mxu0 0.0
        %2839 = vmatpush1.msra.mxu0 0.0
        %2840 = vmatprep.subr.mxu0 0.0
        %2841 = vmatpush1.msra.mxu0 0.0
        %2842 = vmatprep.subr.mxu0 0.0
        %2843 = vmatpush1.msra.mxu0 0.0
        %2844 = vmatprep.subr.mxu0 0.0
        %2845 = vmatpush1.msra.mxu0 0.0
        %2846 = vmatprep.subr.mxu0 0.0
        %2847 = vmatpush1.msra.mxu0 0.0
        %2848 = vmatprep.mubr.f32.mxu0 0.0
        %v2849 = vand.u32 %v1111, 4294901760
        %2850 = vmatmul.mubr.f32.gmra.mrb[0].mxu0 %v2849
        %v2851 = vpop.f32.mrb[0].mxu0
        %v2852 = vadd.f32 %v2761, %v2851
        %v2853 = vpop.f32.mrb[0].mxu0
        %2854 = vmatprep.mubr.f32.mxu0 0.0
        %v2855 = vand.u32 %v1114, 4294901760
        %2856 = vmatmul.mubr.f32.gmra.mrb[0].mxu0 %v2855
        %v2857 = vpop.f32.mrb[0].mxu0
        %v2858 = vadd.f32 %v2769, %v2857
        %v2859 = vpop.f32.mrb[0].mxu0
        %2860 = vdwg.mxu0
        %2861 = vmatprep.subr.mxu0 0.0
        %v2862 = vand.u32 %v2393, 4294901760
        %2863 = vmatpush1.msra.mxu0 %v2862
        %2864 = vmatprep.subr.mxu0 0.0
        %v2865 = vand.u32 %v2399, 4294901760
        %2866 = vmatpush1.msra.mxu0 %v2865
        %2867 = vmatprep.subr.mxu0 0.0
        %v2868 = vand.u32 %v2405, 4294901760
        %2869 = vmatpush1.msra.mxu0 %v2868
        %2870 = vmatprep.subr.mxu0 0.0
        %v2871 = vand.u32 %v2411, 4294901760
        %2872 = vmatpush1.msra.mxu0 %v2871
        %2873 = vmatprep.subr.mxu0 0.0
        %2874 = vmatpush1.msra.mxu0 0.0
        %2875 = vmatprep.subr.mxu0 0.0
        %2876 = vmatpush1.msra.mxu0 0.0
        %2877 = vmatprep.subr.mxu0 0.0
        %2878 = vmatpush1.msra.mxu0 0.0
        %2879 = vmatprep.subr.mxu0 0.0
        %2880 = vmatpush1.msra.mxu0 0.0
        %2881 = vmatprep.subr.mxu0 0.0
        %2882 = vmatpush1.msra.mxu0 0.0
        %2883 = vmatprep.subr.mxu0 0.0
        %2884 = vmatpush1.msra.mxu0 0.0
        %2885 = vmatprep.subr.mxu0 0.0
        %2886 = vmatpush1.msra.mxu0 0.0
        %2887 = vmatprep.subr.mxu0 0.0
        %2888 = vmatpush1.msra.mxu0 0.0
        %2889 = vmatprep.subr.mxu0 0.0
        %2890 = vmatpush1.msra.mxu0 0.0
        %2891 = vmatprep.subr.mxu0 0.0
        %2892 = vmatpush1.msra.mxu0 0.0
        %2893 = vmatprep.subr.mxu0 0.0
        %2894 = vmatpush1.msra.mxu0 0.0
        %2895 = vmatprep.subr.mxu0 0.0
        %2896 = vmatpush1.msra.mxu0 0.0
        %2897 = vmatprep.subr.mxu0 0.0
        %2898 = vmatpush1.msra.mxu0 0.0
        %2899 = vmatprep.subr.mxu0 0.0
        %2900 = vmatpush1.msra.mxu0 0.0
        %2901 = vmatprep.subr.mxu0 0.0
        %2902 = vmatpush1.msra.mxu0 0.0
        %2903 = vmatprep.subr.mxu0 0.0
        %2904 = vmatpush1.msra.mxu0 0.0
        %2905 = vmatprep.subr.mxu0 0.0
        %2906 = vmatpush1.msra.mxu0 0.0
        %2907 = vmatprep.subr.mxu0 0.0
        %2908 = vmatpush1.msra.mxu0 0.0
        %2909 = vmatprep.subr.mxu0 0.0
        %2910 = vmatpush1.msra.mxu0 0.0
        %2911 = vmatprep.subr.mxu0 0.0
        %2912 = vmatpush1.msra.mxu0 0.0
        %2913 = vmatprep.subr.mxu0 0.0
        %2914 = vmatpush1.msra.mxu0 0.0
        %2915 = vmatprep.subr.mxu0 0.0
        %2916 = vmatpush1.msra.mxu0 0.0
        %2917 = vmatprep.subr.mxu0 0.0
        %2918 = vmatpush1.msra.mxu0 0.0
        %2919 = vmatprep.subr.mxu0 0.0
        %2920 = vmatpush1.msra.mxu0 0.0
        %2921 = vmatprep.subr.mxu0 0.0
        %2922 = vmatpush1.msra.mxu0 0.0
        %2923 = vmatprep.subr.mxu0 0.0
        %2924 = vmatpush1.msra.mxu0 0.0
        %2925 = vmatprep.subr.mxu0 0.0
        %2926 = vmatpush1.msra.mxu0 0.0
        %2927 = vmatprep.subr.mxu0 0.0
        %2928 = vmatpush1.msra.mxu0 0.0
        %2929 = vmatprep.mubr.f32.mxu0 0.0
        %v2930 = vand.u32 %v1111, 4294901760
        %2931 = vmatmul.mubr.f32.gmra.mrb[0].mxu0 %v2930
        %v2932 = vpop.f32.mrb[0].mxu0
        %v2933 = vadd.f32 %v2852, %v2932
        %v2934 = vpop.f32.mrb[0].mxu0
        %2935 = vmatprep.mubr.f32.mxu0 0.0
        %v2936 = vand.u32 %v1114, 4294901760
        %2937 = vmatmul.mubr.f32.gmra.mrb[0].mxu0 %v2936
        %v2938 = vpop.f32.mrb[0].mxu0
        %v2939 = vadd.f32 %v2858, %v2938
        %v2940 = vpop.f32.mrb[0].mxu0
        %2941 = vdwg.mxu0
        %v2942 = vmul.f32 %v313, %v313
        %v2943 = vmul.f32 %v314, %v314
        %v2944 = vmul.f32 %v315, %v315
        %v2945 = vmul.f32 %v316, %v316
        %2946 = vmatprep.subr.mxu0 0.0
        %v2947 = vand.u32 %v323, 4294901760
        %2948 = vmatpush1.msra.mxu0 %v2947
        %2949 = vmatprep.subr.mxu0 0.0
        %v2950 = vand.u32 %v324, 4294901760
        %2951 = vmatpush1.msra.mxu0 %v2950
        %2952 = vmatprep.subr.mxu0 0.0
        %v2953 = vand.u32 %v325, 4294901760
        %2954 = vmatpush1.msra.mxu0 %v2953
        %2955 = vmatprep.subr.mxu0 0.0
        %v2956 = vand.u32 %v326, 4294901760
        %2957 = vmatpush1.msra.mxu0 %v2956
        %2958 = vmatprep.subr.mxu0 0.0
        %v2959 = vand.u32 %v327, 4294901760
        %2960 = vmatpush1.msra.mxu0 %v2959
        %2961 = vmatprep.subr.mxu0 0.0
        %v2962 = vand.u32 %v328, 4294901760
        %2963 = vmatpush1.msra.mxu0 %v2962
        %2964 = vmatprep.subr.mxu0 0.0
        %v2965 = vand.u32 %v329, 4294901760
        %2966 = vmatpush1.msra.mxu0 %v2965
        %2967 = vmatprep.subr.mxu0 0.0
        %v2968 = vand.u32 %v330, 4294901760
        %2969 = vmatpush1.msra.mxu0 %v2968
        %2970 = vmatprep.subr.mxu0 0.0
        %v2971 = vand.u32 %v331, 4294901760
        %2972 = vmatpush1.msra.mxu0 %v2971
        %2973 = vmatprep.subr.mxu0 0.0
        %v2974 = vand.u32 %v332, 4294901760
        %2975 = vmatpush1.msra.mxu0 %v2974
        %2976 = vmatprep.subr.mxu0 0.0
        %v2977 = vand.u32 %v333, 4294901760
        %2978 = vmatpush1.msra.mxu0 %v2977
        %2979 = vmatprep.subr.mxu0 0.0
        %v2980 = vand.u32 %v334, 4294901760
        %2981 = vmatpush1.msra.mxu0 %v2980
        %2982 = vmatprep.subr.mxu0 0.0
        %v2983 = vand.u32 %v335, 4294901760
        %2984 = vmatpush1.msra.mxu0 %v2983
        %2985 = vmatprep.subr.mxu0 0.0
        %v2986 = vand.u32 %v336, 4294901760
        %2987 = vmatpush1.msra.mxu0 %v2986
        %2988 = vmatprep.subr.mxu0 0.0
        %v2989 = vand.u32 %v337, 4294901760
        %2990 = vmatpush1.msra.mxu0 %v2989
        %2991 = vmatprep.subr.mxu0 0.0
        %v2992 = vand.u32 %v338, 4294901760
        %2993 = vmatpush1.msra.mxu0 %v2992
        %2994 = vmatprep.subr.mxu0 0.0
        %2995 = vmatpush1.msra.mxu0 0.0
        %2996 = vmatprep.subr.mxu0 0.0
        %2997 = vmatpush1.msra.mxu0 0.0
        %2998 = vmatprep.subr.mxu0 0.0
        %2999 = vmatpush1.msra.mxu0 0.0
        %3000 = vmatprep.subr.mxu0 0.0
        %3001 = vmatpush1.msra.mxu0 0.0
        %3002 = vmatprep.subr.mxu0 0.0
        %3003 = vmatpush1.msra.mxu0 0.0
        %3004 = vmatprep.subr.mxu0 0.0
        %3005 = vmatpush1.msra.mxu0 0.0
        %3006 = vmatprep.subr.mxu0 0.0
        %3007 = vmatpush1.msra.mxu0 0.0
        %3008 = vmatprep.subr.mxu0 0.0
        %3009 = vmatpush1.msra.mxu0 0.0
        %3010 = vmatprep.subr.mxu0 0.0
        %3011 = vmatpush1.msra.mxu0 0.0
        %3012 = vmatprep.subr.mxu0 0.0
        %3013 = vmatpush1.msra.mxu0 0.0
        %3014 = vmatprep.subr.mxu0 0.0
        %3015 = vmatpush1.msra.mxu0 0.0
        %3016 = vmatprep.subr.mxu0 0.0
        %3017 = vmatpush1.msra.mxu0 0.0
        %3018 = vmatprep.subr.mxu0 0.0
        %3019 = vmatpush1.msra.mxu0 0.0
        %3020 = vmatprep.subr.mxu0 0.0
        %3021 = vmatpush1.msra.mxu0 0.0
        %3022 = vmatprep.subr.mxu0 0.0
        %3023 = vmatpush1.msra.mxu0 0.0
        %3024 = vmatprep.subr.mxu0 0.0
        %3025 = vmatpush1.msra.mxu0 0.0
        %3026 = vmatprep.mubr.f32.mxu0 0.0
        %v3027 = vand.u32 %v2942, 4294901760
        %v3028 = vsub.f32 %v2942, %v3027
        %v3029 = vand.u32 %v3028, 4294901760
        %v3030 = vsub.f32 %v3028, %v3029
        %v3031 = vand.u32 %v3030, 4294901760
        %3032 = vmatmul.mubr.f32.gmra.mrb[0].mxu0 %v3031
        %v3033 = vpop.f32.mrb[0].mxu0
        %v3034 = vadd.f32 0.0, %v3033
        %v3035 = vpop.f32.mrb[0].mxu0
        %3036 = vmatprep.mubr.f32.mxu0 0.0
        %v3037 = vand.u32 %v2943, 4294901760
        %v3038 = vsub.f32 %v2943, %v3037
        %v3039 = vand.u32 %v3038, 4294901760
        %v3040 = vsub.f32 %v3038, %v3039
        %v3041 = vand.u32 %v3040, 4294901760
        %3042 = vmatmul.mubr.f32.gmra.mrb[0].mxu0 %v3041
        %v3043 = vpop.f32.mrb[0].mxu0
        %v3044 = vadd.f32 0.0, %v3043
        %v3045 = vpop.f32.mrb[0].mxu0
        %3046 = vmatprep.mubr.f32.mxu0 0.0
        %v3047 = vand.u32 %v2944, 4294901760
        %v3048 = vsub.f32 %v2944, %v3047
        %v3049 = vand.u32 %v3048, 4294901760
        %v3050 = vsub.f32 %v3048, %v3049
        %v3051 = vand.u32 %v3050, 4294901760
        %3052 = vmatmul.mubr.f32.gmra.mrb[0].mxu0 %v3051
        %v3053 = vpop.f32.mrb[0].mxu0
        %v3054 = vadd.f32 0.0, %v3053
        %v3055 = vpop.f32.mrb[0].mxu0
        %3056 = vmatprep.mubr.f32.mxu0 0.0
        %v3057 = vand.u32 %v2945, 4294901760
        %v3058 = vsub.f32 %v2945, %v3057
        %v3059 = vand.u32 %v3058, 4294901760
        %v3060 = vsub.f32 %v3058, %v3059
        %v3061 = vand.u32 %v3060, 4294901760
        %3062 = vmatmul.mubr.f32.gmra.mrb[0].mxu0 %v3061
        %v3063 = vpop.f32.mrb[0].mxu0
        %v3064 = vadd.f32 0.0, %v3063
        %v3065 = vpop.f32.mrb[0].mxu0
        %3066 = vdwg.mxu0
        %3067 = vmatprep.subr.mxu0 0.0
        %v3068 = vand.u32 %v323, 4294901760
        %v3069 = vsub.f32 %v323, %v3068
        %v3070 = vand.u32 %v3069, 4294901760
        %v3071 = vsub.f32 %v3069, %v3070
        %v3072 = vand.u32 %v3071, 4294901760
        %3073 = vmatpush1.msra.mxu0 %v3072
        %3074 = vmatprep.subr.mxu0 0.0
        %v3075 = vand.u32 %v324, 4294901760
        %v3076 = vsub.f32 %v324, %v3075
        %v3077 = vand.u32 %v3076, 4294901760
        %v3078 = vsub.f32 %v3076, %v3077
        %v3079 = vand.u32 %v3078, 4294901760
        %3080 = vmatpush1.msra.mxu0 %v3079
        %3081 = vmatprep.subr.mxu0 0.0
        %v3082 = vand.u32 %v325, 4294901760
        %v3083 = vsub.f32 %v325, %v3082
        %v3084 = vand.u32 %v3083, 4294901760
        %v3085 = vsub.f32 %v3083, %v3084
        %v3086 = vand.u32 %v3085, 4294901760
        %3087 = vmatpush1.msra.mxu0 %v3086
        %3088 = vmatprep.subr.mxu0 0.0
        %v3089 = vand.u32 %v326, 4294901760
        %v3090 = vsub.f32 %v326, %v3089
        %v3091 = vand.u32 %v3090, 4294901760
        %v3092 = vsub.f32 %v3090, %v3091
        %v3093 = vand.u32 %v3092, 4294901760
        %3094 = vmatpush1.msra.mxu0 %v3093
        %3095 = vmatprep.subr.mxu0 0.0
        %v3096 = vand.u32 %v327, 4294901760
        %v3097 = vsub.f32 %v327, %v3096
        %v3098 = vand.u32 %v3097, 4294901760
        %v3099 = vsub.f32 %v3097, %v3098
        %v3100 = vand.u32 %v3099, 4294901760
        %3101 = vmatpush1.msra.mxu0 %v3100
        %3102 = vmatprep.subr.mxu0 0.0
        %v3103 = vand.u32 %v328, 4294901760
        %v3104 = vsub.f32 %v328, %v3103
        %v3105 = vand.u32 %v3104, 4294901760
        %v3106 = vsub.f32 %v3104, %v3105
        %v3107 = vand.u32 %v3106, 4294901760
        %3108 = vmatpush1.msra.mxu0 %v3107
        %3109 = vmatprep.subr.mxu0 0.0
        %v3110 = vand.u32 %v329, 4294901760
        %v3111 = vsub.f32 %v329, %v3110
        %v3112 = vand.u32 %v3111, 4294901760
        %v3113 = vsub.f32 %v3111, %v3112
        %v3114 = vand.u32 %v3113, 4294901760
        %3115 = vmatpush1.msra.mxu0 %v3114
        %3116 = vmatprep.subr.mxu0 0.0
        %v3117 = vand.u32 %v330, 4294901760
        %v3118 = vsub.f32 %v330, %v3117
        %v3119 = vand.u32 %v3118, 4294901760
        %v3120 = vsub.f32 %v3118, %v3119
        %v3121 = vand.u32 %v3120, 4294901760
        %3122 = vmatpush1.msra.mxu0 %v3121
        %3123 = vmatprep.subr.mxu0 0.0
        %v3124 = vand.u32 %v331, 4294901760
        %v3125 = vsub.f32 %v331, %v3124
        %v3126 = vand.u32 %v3125, 4294901760
        %v3127 = vsub.f32 %v3125, %v3126
        %v3128 = vand.u32 %v3127, 4294901760
        %3129 = vmatpush1.msra.mxu0 %v3128
        %3130 = vmatprep.subr.mxu0 0.0
        %v3131 = vand.u32 %v332, 4294901760
        %v3132 = vsub.f32 %v332, %v3131
        %v3133 = vand.u32 %v3132, 4294901760
        %v3134 = vsub.f32 %v3132, %v3133
        %v3135 = vand.u32 %v3134, 4294901760
        %3136 = vmatpush1.msra.mxu0 %v3135
        %3137 = vmatprep.subr.mxu0 0.0
        %v3138 = vand.u32 %v333, 4294901760
        %v3139 = vsub.f32 %v333, %v3138
        %v3140 = vand.u32 %v3139, 4294901760
        %v3141 = vsub.f32 %v3139, %v3140
        %v3142 = vand.u32 %v3141, 4294901760
        %3143 = vmatpush1.msra.mxu0 %v3142
        %3144 = vmatprep.subr.mxu0 0.0
        %v3145 = vand.u32 %v334, 4294901760
        %v3146 = vsub.f32 %v334, %v3145
        %v3147 = vand.u32 %v3146, 4294901760
        %v3148 = vsub.f32 %v3146, %v3147
        %v3149 = vand.u32 %v3148, 4294901760
        %3150 = vmatpush1.msra.mxu0 %v3149
        %3151 = vmatprep.subr.mxu0 0.0
        %v3152 = vand.u32 %v335, 4294901760
        %v3153 = vsub.f32 %v335, %v3152
        %v3154 = vand.u32 %v3153, 4294901760
        %v3155 = vsub.f32 %v3153, %v3154
        %v3156 = vand.u32 %v3155, 4294901760
        %3157 = vmatpush1.msra.mxu0 %v3156
        %3158 = vmatprep.subr.mxu0 0.0
        %v3159 = vand.u32 %v336, 4294901760
        %v3160 = vsub.f32 %v336, %v3159
        %v3161 = vand.u32 %v3160, 4294901760
        %v3162 = vsub.f32 %v3160, %v3161
        %v3163 = vand.u32 %v3162, 4294901760
        %3164 = vmatpush1.msra.mxu0 %v3163
        %3165 = vmatprep.subr.mxu0 0.0
        %v3166 = vand.u32 %v337, 4294901760
        %v3167 = vsub.f32 %v337, %v3166
        %v3168 = vand.u32 %v3167, 4294901760
        %v3169 = vsub.f32 %v3167, %v3168
        %v3170 = vand.u32 %v3169, 4294901760
        %3171 = vmatpush1.msra.mxu0 %v3170
        %3172 = vmatprep.subr.mxu0 0.0
        %v3173 = vand.u32 %v338, 4294901760
        %v3174 = vsub.f32 %v338, %v3173
        %v3175 = vand.u32 %v3174, 4294901760
        %v3176 = vsub.f32 %v3174, %v3175
        %v3177 = vand.u32 %v3176, 4294901760
        %3178 = vmatpush1.msra.mxu0 %v3177
        %3179 = vmatprep.subr.mxu0 0.0
        %3180 = vmatpush1.msra.mxu0 0.0
        %3181 = vmatprep.subr.mxu0 0.0
        %3182 = vmatpush1.msra.mxu0 0.0
        %3183 = vmatprep.subr.mxu0 0.0
        %3184 = vmatpush1.msra.mxu0 0.0
        %3185 = vmatprep.subr.mxu0 0.0
        %3186 = vmatpush1.msra.mxu0 0.0
        %3187 = vmatprep.subr.mxu0 0.0
        %3188 = vmatpush1.msra.mxu0 0.0
        %3189 = vmatprep.subr.mxu0 0.0
        %3190 = vmatpush1.msra.mxu0 0.0
        %3191 = vmatprep.subr.mxu0 0.0
        %3192 = vmatpush1.msra.mxu0 0.0
        %3193 = vmatprep.subr.mxu0 0.0
        %3194 = vmatpush1.msra.mxu0 0.0
        %3195 = vmatprep.subr.mxu0 0.0
        %3196 = vmatpush1.msra.mxu0 0.0
        %3197 = vmatprep.subr.mxu0 0.0
        %3198 = vmatpush1.msra.mxu0 0.0
        %3199 = vmatprep.subr.mxu0 0.0
        %3200 = vmatpush1.msra.mxu0 0.0
        %3201 = vmatprep.subr.mxu0 0.0
        %3202 = vmatpush1.msra.mxu0 0.0
        %3203 = vmatprep.subr.mxu0 0.0
        %3204 = vmatpush1.msra.mxu0 0.0
        %3205 = vmatprep.subr.mxu0 0.0
        %3206 = vmatpush1.msra.mxu0 0.0
        %3207 = vmatprep.subr.mxu0 0.0
        %3208 = vmatpush1.msra.mxu0 0.0
        %3209 = vmatprep.subr.mxu0 0.0
        %3210 = vmatpush1.msra.mxu0 0.0
        %3211 = vmatprep.mubr.f32.mxu0 0.0
        %v3212 = vand.u32 %v2942, 4294901760
        %3213 = vmatmul.mubr.f32.gmra.mrb[0].mxu0 %v3212
        %v3214 = vpop.f32.mrb[0].mxu0
        %v3215 = vadd.f32 %v3034, %v3214
        %v3216 = vpop.f32.mrb[0].mxu0
        %3217 = vmatprep.mubr.f32.mxu0 0.0
        %v3218 = vand.u32 %v2943, 4294901760
        %3219 = vmatmul.mubr.f32.gmra.mrb[0].mxu0 %v3218
        %v3220 = vpop.f32.mrb[0].mxu0
        %v3221 = vadd.f32 %v3044, %v3220
        %v3222 = vpop.f32.mrb[0].mxu0
        %3223 = vmatprep.mubr.f32.mxu0 0.0
        %v3224 = vand.u32 %v2944, 4294901760
        %3225 = vmatmul.mubr.f32.gmra.mrb[0].mxu0 %v3224
        %v3226 = vpop.f32.mrb[0].mxu0
        %v3227 = vadd.f32 %v3054, %v3226
        %v3228 = vpop.f32.mrb[0].mxu0
        %3229 = vmatprep.mubr.f32.mxu0 0.0
        %v3230 = vand.u32 %v2945, 4294901760
        %3231 = vmatmul.mubr.f32.gmra.mrb[0].mxu0 %v3230
        %v3232 = vpop.f32.mrb[0].mxu0
        %v3233 = vadd.f32 %v3064, %v3232
        %v3234 = vpop.f32.mrb[0].mxu0
        %3235 = vdwg.mxu0
        %3236 = vmatprep.subr.mxu0 0.0
        %v3237 = vand.u32 %v323, 4294901760
        %v3238 = vsub.f32 %v323, %v3237
        %3239 = vmatpush1.msra.mxu0 %v3238
        %3240 = vmatprep.subr.mxu0 0.0
        %v3241 = vand.u32 %v324, 4294901760
        %v3242 = vsub.f32 %v324, %v3241
        %3243 = vmatpush1.msra.mxu0 %v3242
        %3244 = vmatprep.subr.mxu0 0.0
        %v3245 = vand.u32 %v325, 4294901760
        %v3246 = vsub.f32 %v325, %v3245
        %3247 = vmatpush1.msra.mxu0 %v3246
        %3248 = vmatprep.subr.mxu0 0.0
        %v3249 = vand.u32 %v326, 4294901760
        %v3250 = vsub.f32 %v326, %v3249
        %3251 = vmatpush1.msra.mxu0 %v3250
        %3252 = vmatprep.subr.mxu0 0.0
        %v3253 = vand.u32 %v327, 4294901760
        %v3254 = vsub.f32 %v327, %v3253
        %3255 = vmatpush1.msra.mxu0 %v3254
        %3256 = vmatprep.subr.mxu0 0.0
        %v3257 = vand.u32 %v328, 4294901760
        %v3258 = vsub.f32 %v328, %v3257
        %3259 = vmatpush1.msra.mxu0 %v3258
        %3260 = vmatprep.subr.mxu0 0.0
        %v3261 = vand.u32 %v329, 4294901760
        %v3262 = vsub.f32 %v329, %v3261
        %3263 = vmatpush1.msra.mxu0 %v3262
        %3264 = vmatprep.subr.mxu0 0.0
        %v3265 = vand.u32 %v330, 4294901760
        %v3266 = vsub.f32 %v330, %v3265
        %3267 = vmatpush1.msra.mxu0 %v3266
        %3268 = vmatprep.subr.mxu0 0.0
        %v3269 = vand.u32 %v331, 4294901760
        %v3270 = vsub.f32 %v331, %v3269
        %3271 = vmatpush1.msra.mxu0 %v3270
        %3272 = vmatprep.subr.mxu0 0.0
        %v3273 = vand.u32 %v332, 4294901760
        %v3274 = vsub.f32 %v332, %v3273
        %3275 = vmatpush1.msra.mxu0 %v3274
        %3276 = vmatprep.subr.mxu0 0.0
        %v3277 = vand.u32 %v333, 4294901760
        %v3278 = vsub.f32 %v333, %v3277
        %3279 = vmatpush1.msra.mxu0 %v3278
        %3280 = vmatprep.subr.mxu0 0.0
        %v3281 = vand.u32 %v334, 4294901760
        %v3282 = vsub.f32 %v334, %v3281
        %3283 = vmatpush1.msra.mxu0 %v3282
        %3284 = vmatprep.subr.mxu0 0.0
        %v3285 = vand.u32 %v335, 4294901760
        %v3286 = vsub.f32 %v335, %v3285
        %3287 = vmatpush1.msra.mxu0 %v3286
        %3288 = vmatprep.subr.mxu0 0.0
        %v3289 = vand.u32 %v336, 4294901760
        %v3290 = vsub.f32 %v336, %v3289
        %3291 = vmatpush1.msra.mxu0 %v3290
        %3292 = vmatprep.subr.mxu0 0.0
        %v3293 = vand.u32 %v337, 4294901760
        %v3294 = vsub.f32 %v337, %v3293
        %3295 = vmatpush1.msra.mxu0 %v3294
        %3296 = vmatprep.subr.mxu0 0.0
        %v3297 = vand.u32 %v338, 4294901760
        %v3298 = vsub.f32 %v338, %v3297
        %3299 = vmatpush1.msra.mxu0 %v3298
        %3300 = vmatprep.subr.mxu0 0.0
        %3301 = vmatpush1.msra.mxu0 0.0
        %3302 = vmatprep.subr.mxu0 0.0
        %3303 = vmatpush1.msra.mxu0 0.0
        %3304 = vmatprep.subr.mxu0 0.0
        %3305 = vmatpush1.msra.mxu0 0.0
        %3306 = vmatprep.subr.mxu0 0.0
        %3307 = vmatpush1.msra.mxu0 0.0
        %3308 = vmatprep.subr.mxu0 0.0
        %3309 = vmatpush1.msra.mxu0 0.0
        %3310 = vmatprep.subr.mxu0 0.0
        %3311 = vmatpush1.msra.mxu0 0.0
        %3312 = vmatprep.subr.mxu0 0.0
        %3313 = vmatpush1.msra.mxu0 0.0
        %3314 = vmatprep.subr.mxu0 0.0
        %3315 = vmatpush1.msra.mxu0 0.0
        %3316 = vmatprep.subr.mxu0 0.0
        %3317 = vmatpush1.msra.mxu0 0.0
        %3318 = vmatprep.subr.mxu0 0.0
        %3319 = vmatpush1.msra.mxu0 0.0
        %3320 = vmatprep.subr.mxu0 0.0
        %3321 = vmatpush1.msra.mxu0 0.0
        %3322 = vmatprep.subr.mxu0 0.0
        %3323 = vmatpush1.msra.mxu0 0.0
        %3324 = vmatprep.subr.mxu0 0.0
        %3325 = vmatpush1.msra.mxu0 0.0
        %3326 = vmatprep.subr.mxu0 0.0
        %3327 = vmatpush1.msra.mxu0 0.0
        %3328 = vmatprep.subr.mxu0 0.0
        %3329 = vmatpush1.msra.mxu0 0.0
        %3330 = vmatprep.subr.mxu0 0.0
        %3331 = vmatpush1.msra.mxu0 0.0
        %3332 = vmatprep.mubr.f32.mxu0 0.0
        %v3333 = vand.u32 %v2942, 4294901760
        %v3334 = vsub.f32 %v2942, %v3333
        %3335 = vmatmul.mubr.f32.gmra.mrb[0].mxu0 %v3334
        %v3336 = vpop.f32.mrb[0].mxu0
        %v3337 = vadd.f32 %v3215, %v3336
        %v3338 = vpop.f32.mrb[0].mxu0
        %3339 = vmatprep.mubr.f32.mxu0 0.0
        %v3340 = vand.u32 %v2943, 4294901760
        %v3341 = vsub.f32 %v2943, %v3340
        %3342 = vmatmul.mubr.f32.gmra.mrb[0].mxu0 %v3341
        %v3343 = vpop.f32.mrb[0].mxu0
        %v3344 = vadd.f32 %v3221, %v3343
        %v3345 = vpop.f32.mrb[0].mxu0
        %3346 = vmatprep.mubr.f32.mxu0 0.0
        %v3347 = vand.u32 %v2944, 4294901760
        %v3348 = vsub.f32 %v2944, %v3347
        %3349 = vmatmul.mubr.f32.gmra.mrb[0].mxu0 %v3348
        %v3350 = vpop.f32.mrb[0].mxu0
        %v3351 = vadd.f32 %v3227, %v3350
        %v3352 = vpop.f32.mrb[0].mxu0
        %3353 = vmatprep.mubr.f32.mxu0 0.0
        %v3354 = vand.u32 %v2945, 4294901760
        %v3355 = vsub.f32 %v2945, %v3354
        %3356 = vmatmul.mubr.f32.gmra.mrb[0].mxu0 %v3355
        %v3357 = vpop.f32.mrb[0].mxu0
        %v3358 = vadd.f32 %v3233, %v3357
        %v3359 = vpop.f32.mrb[0].mxu0
        %3360 = vdwg.mxu0
        %3361 = vmatprep.subr.mxu0 0.0
        %v3362 = vand.u32 %v323, 4294901760
        %3363 = vmatpush1.msra.mxu0 %v3362
        %3364 = vmatprep.subr.mxu0 0.0
        %v3365 = vand.u32 %v324, 4294901760
        %3366 = vmatpush1.msra.mxu0 %v3365
        %3367 = vmatprep.subr.mxu0 0.0
        %v3368 = vand.u32 %v325, 4294901760
        %3369 = vmatpush1.msra.mxu0 %v3368
        %3370 = vmatprep.subr.mxu0 0.0
        %v3371 = vand.u32 %v326, 4294901760
        %3372 = vmatpush1.msra.mxu0 %v3371
        %3373 = vmatprep.subr.mxu0 0.0
        %v3374 = vand.u32 %v327, 4294901760
        %3375 = vmatpush1.msra.mxu0 %v3374
        %3376 = vmatprep.subr.mxu0 0.0
        %v3377 = vand.u32 %v328, 4294901760
        %3378 = vmatpush1.msra.mxu0 %v3377
        %3379 = vmatprep.subr.mxu0 0.0
        %v3380 = vand.u32 %v329, 4294901760
        %3381 = vmatpush1.msra.mxu0 %v3380
        %3382 = vmatprep.subr.mxu0 0.0
        %v3383 = vand.u32 %v330, 4294901760
        %3384 = vmatpush1.msra.mxu0 %v3383
        %3385 = vmatprep.subr.mxu0 0.0
        %v3386 = vand.u32 %v331, 4294901760
        %3387 = vmatpush1.msra.mxu0 %v3386
        %3388 = vmatprep.subr.mxu0 0.0
        %v3389 = vand.u32 %v332, 4294901760
        %3390 = vmatpush1.msra.mxu0 %v3389
        %3391 = vmatprep.subr.mxu0 0.0
        %v3392 = vand.u32 %v333, 4294901760
        %3393 = vmatpush1.msra.mxu0 %v3392
        %3394 = vmatprep.subr.mxu0 0.0
        %v3395 = vand.u32 %v334, 4294901760
        %3396 = vmatpush1.msra.mxu0 %v3395
        %3397 = vmatprep.subr.mxu0 0.0
        %v3398 = vand.u32 %v335, 4294901760
        %3399 = vmatpush1.msra.mxu0 %v3398
        %3400 = vmatprep.subr.mxu0 0.0
        %v3401 = vand.u32 %v336, 4294901760
        %3402 = vmatpush1.msra.mxu0 %v3401
        %3403 = vmatprep.subr.mxu0 0.0
        %v3404 = vand.u32 %v337, 4294901760
        %3405 = vmatpush1.msra.mxu0 %v3404
        %3406 = vmatprep.subr.mxu0 0.0
        %v3407 = vand.u32 %v338, 4294901760
        %3408 = vmatpush1.msra.mxu0 %v3407
        %3409 = vmatprep.subr.mxu0 0.0
        %3410 = vmatpush1.msra.mxu0 0.0
        %3411 = vmatprep.subr.mxu0 0.0
        %3412 = vmatpush1.msra.mxu0 0.0
        %3413 = vmatprep.subr.mxu0 0.0
        %3414 = vmatpush1.msra.mxu0 0.0
        %3415 = vmatprep.subr.mxu0 0.0
        %3416 = vmatpush1.msra.mxu0 0.0
        %3417 = vmatprep.subr.mxu0 0.0
        %3418 = vmatpush1.msra.mxu0 0.0
        %3419 = vmatprep.subr.mxu0 0.0
        %3420 = vmatpush1.msra.mxu0 0.0
        %3421 = vmatprep.subr.mxu0 0.0
        %3422 = vmatpush1.msra.mxu0 0.0
        %3423 = vmatprep.subr.mxu0 0.0
        %3424 = vmatpush1.msra.mxu0 0.0
        %3425 = vmatprep.subr.mxu0 0.0
        %3426 = vmatpush1.msra.mxu0 0.0
        %3427 = vmatprep.subr.mxu0 0.0
        %3428 = vmatpush1.msra.mxu0 0.0
        %3429 = vmatprep.subr.mxu0 0.0
        %3430 = vmatpush1.msra.mxu0 0.0
        %3431 = vmatprep.subr.mxu0 0.0
        %3432 = vmatpush1.msra.mxu0 0.0
        %3433 = vmatprep.subr.mxu0 0.0
        %3434 = vmatpush1.msra.mxu0 0.0
        %3435 = vmatprep.subr.mxu0 0.0
        %3436 = vmatpush1.msra.mxu0 0.0
        %3437 = vmatprep.subr.mxu0 0.0
        %3438 = vmatpush1.msra.mxu0 0.0
        %3439 = vmatprep.subr.mxu0 0.0
        %3440 = vmatpush1.msra.mxu0 0.0
        %3441 = vmatprep.mubr.f32.mxu0 0.0
        %v3442 = vand.u32 %v2942, 4294901760
        %v3443 = vsub.f32 %v2942, %v3442
        %v3444 = vand.u32 %v3443, 4294901760
        %3445 = vmatmul.mubr.f32.gmra.mrb[0].mxu0 %v3444
        %v3446 = vpop.f32.mrb[0].mxu0
        %v3447 = vadd.f32 %v3337, %v3446
        %v3448 = vpop.f32.mrb[0].mxu0
        %3449 = vmatprep.mubr.f32.mxu0 0.0
        %v3450 = vand.u32 %v2943, 4294901760
        %v3451 = vsub.f32 %v2943, %v3450
        %v3452 = vand.u32 %v3451, 4294901760
        %3453 = vmatmul.mubr.f32.gmra.mrb[0].mxu0 %v3452
        %v3454 = vpop.f32.mrb[0].mxu0
        %v3455 = vadd.f32 %v3344, %v3454
        %v3456 = vpop.f32.mrb[0].mxu0
        %3457 = vmatprep.mubr.f32.mxu0 0.0
        %v3458 = vand.u32 %v2944, 4294901760
        %v3459 = vsub.f32 %v2944, %v3458
        %v3460 = vand.u32 %v3459, 4294901760
        %3461 = vmatmul.mubr.f32.gmra.mrb[0].mxu0 %v3460
        %v3462 = vpop.f32.mrb[0].mxu0
        %v3463 = vadd.f32 %v3351, %v3462
        %v3464 = vpop.f32.mrb[0].mxu0
        %3465 = vmatprep.mubr.f32.mxu0 0.0
        %v3466 = vand.u32 %v2945, 4294901760
        %v3467 = vsub.f32 %v2945, %v3466
        %v3468 = vand.u32 %v3467, 4294901760
        %3469 = vmatmul.mubr.f32.gmra.mrb[0].mxu0 %v3468
        %v3470 = vpop.f32.mrb[0].mxu0
        %v3471 = vadd.f32 %v3358, %v3470
        %v3472 = vpop.f32.mrb[0].mxu0
        %3473 = vdwg.mxu0
        %3474 = vmatprep.subr.mxu0 0.0
        %v3475 = vand.u32 %v323, 4294901760
        %v3476 = vsub.f32 %v323, %v3475
        %v3477 = vand.u32 %v3476, 4294901760
        %3478 = vmatpush1.msra.mxu0 %v3477
        %3479 = vmatprep.subr.mxu0 0.0
        %v3480 = vand.u32 %v324, 4294901760
        %v3481 = vsub.f32 %v324, %v3480
        %v3482 = vand.u32 %v3481, 4294901760
        %3483 = vmatpush1.msra.mxu0 %v3482
        %3484 = vmatprep.subr.mxu0 0.0
        %v3485 = vand.u32 %v325, 4294901760
        %v3486 = vsub.f32 %v325, %v3485
        %v3487 = vand.u32 %v3486, 4294901760
        %3488 = vmatpush1.msra.mxu0 %v3487
        %3489 = vmatprep.subr.mxu0 0.0
        %v3490 = vand.u32 %v326, 4294901760
        %v3491 = vsub.f32 %v326, %v3490
        %v3492 = vand.u32 %v3491, 4294901760
        %3493 = vmatpush1.msra.mxu0 %v3492
        %3494 = vmatprep.subr.mxu0 0.0
        %v3495 = vand.u32 %v327, 4294901760
        %v3496 = vsub.f32 %v327, %v3495
        %v3497 = vand.u32 %v3496, 4294901760
        %3498 = vmatpush1.msra.mxu0 %v3497
        %3499 = vmatprep.subr.mxu0 0.0
        %v3500 = vand.u32 %v328, 4294901760
        %v3501 = vsub.f32 %v328, %v3500
        %v3502 = vand.u32 %v3501, 4294901760
        %3503 = vmatpush1.msra.mxu0 %v3502
        %3504 = vmatprep.subr.mxu0 0.0
        %v3505 = vand.u32 %v329, 4294901760
        %v3506 = vsub.f32 %v329, %v3505
        %v3507 = vand.u32 %v3506, 4294901760
        %3508 = vmatpush1.msra.mxu0 %v3507
        %3509 = vmatprep.subr.mxu0 0.0
        %v3510 = vand.u32 %v330, 4294901760
        %v3511 = vsub.f32 %v330, %v3510
        %v3512 = vand.u32 %v3511, 4294901760
        %3513 = vmatpush1.msra.mxu0 %v3512
        %3514 = vmatprep.subr.mxu0 0.0
        %v3515 = vand.u32 %v331, 4294901760
        %v3516 = vsub.f32 %v331, %v3515
        %v3517 = vand.u32 %v3516, 4294901760
        %3518 = vmatpush1.msra.mxu0 %v3517
        %3519 = vmatprep.subr.mxu0 0.0
        %v3520 = vand.u32 %v332, 4294901760
        %v3521 = vsub.f32 %v332, %v3520
        %v3522 = vand.u32 %v3521, 4294901760
        %3523 = vmatpush1.msra.mxu0 %v3522
        %3524 = vmatprep.subr.mxu0 0.0
        %v3525 = vand.u32 %v333, 4294901760
        %v3526 = vsub.f32 %v333, %v3525
        %v3527 = vand.u32 %v3526, 4294901760
        %3528 = vmatpush1.msra.mxu0 %v3527
        %3529 = vmatprep.subr.mxu0 0.0
        %v3530 = vand.u32 %v334, 4294901760
        %v3531 = vsub.f32 %v334, %v3530
        %v3532 = vand.u32 %v3531, 4294901760
        %3533 = vmatpush1.msra.mxu0 %v3532
        %3534 = vmatprep.subr.mxu0 0.0
        %v3535 = vand.u32 %v335, 4294901760
        %v3536 = vsub.f32 %v335, %v3535
        %v3537 = vand.u32 %v3536, 4294901760
        %3538 = vmatpush1.msra.mxu0 %v3537
        %3539 = vmatprep.subr.mxu0 0.0
        %v3540 = vand.u32 %v336, 4294901760
        %v3541 = vsub.f32 %v336, %v3540
        %v3542 = vand.u32 %v3541, 4294901760
        %3543 = vmatpush1.msra.mxu0 %v3542
        %3544 = vmatprep.subr.mxu0 0.0
        %v3545 = vand.u32 %v337, 4294901760
        %v3546 = vsub.f32 %v337, %v3545
        %v3547 = vand.u32 %v3546, 4294901760
        %3548 = vmatpush1.msra.mxu0 %v3547
        %3549 = vmatprep.subr.mxu0 0.0
        %v3550 = vand.u32 %v338, 4294901760
        %v3551 = vsub.f32 %v338, %v3550
        %v3552 = vand.u32 %v3551, 4294901760
        %3553 = vmatpush1.msra.mxu0 %v3552
        %3554 = vmatprep.subr.mxu0 0.0
        %3555 = vmatpush1.msra.mxu0 0.0
        %3556 = vmatprep.subr.mxu0 0.0
        %3557 = vmatpush1.msra.mxu0 0.0
        %3558 = vmatprep.subr.mxu0 0.0
        %3559 = vmatpush1.msra.mxu0 0.0
        %3560 = vmatprep.subr.mxu0 0.0
        %3561 = vmatpush1.msra.mxu0 0.0
        %3562 = vmatprep.subr.mxu0 0.0
        %3563 = vmatpush1.msra.mxu0 0.0
        %3564 = vmatprep.subr.mxu0 0.0
        %3565 = vmatpush1.msra.mxu0 0.0
        %3566 = vmatprep.subr.mxu0 0.0
        %3567 = vmatpush1.msra.mxu0 0.0
        %3568 = vmatprep.subr.mxu0 0.0
        %3569 = vmatpush1.msra.mxu0 0.0
        %3570 = vmatprep.subr.mxu0 0.0
        %3571 = vmatpush1.msra.mxu0 0.0
        %3572 = vmatprep.subr.mxu0 0.0
        %3573 = vmatpush1.msra.mxu0 0.0
        %3574 = vmatprep.subr.mxu0 0.0
        %3575 = vmatpush1.msra.mxu0 0.0
        %3576 = vmatprep.subr.mxu0 0.0
        %3577 = vmatpush1.msra.mxu0 0.0
        %3578 = vmatprep.subr.mxu0 0.0
        %3579 = vmatpush1.msra.mxu0 0.0
        %3580 = vmatprep.subr.mxu0 0.0
        %3581 = vmatpush1.msra.mxu0 0.0
        %3582 = vmatprep.subr.mxu0 0.0
        %3583 = vmatpush1.msra.mxu0 0.0
        %3584 = vmatprep.subr.mxu0 0.0
        %3585 = vmatpush1.msra.mxu0 0.0
        %3586 = vmatprep.mubr.f32.mxu0 0.0
        %v3587 = vand.u32 %v2942, 4294901760
        %3588 = vmatmul.mubr.f32.gmra.mrb[0].mxu0 %v3587
        %v3589 = vpop.f32.mrb[0].mxu0
        %v3590 = vadd.f32 %v3447, %v3589
        %v3591 = vpop.f32.mrb[0].mxu0
        %3592 = vmatprep.mubr.f32.mxu0 0.0
        %v3593 = vand.u32 %v2943, 4294901760
        %3594 = vmatmul.mubr.f32.gmra.mrb[0].mxu0 %v3593
        %v3595 = vpop.f32.mrb[0].mxu0
        %v3596 = vadd.f32 %v3455, %v3595
        %v3597 = vpop.f32.mrb[0].mxu0
        %3598 = vmatprep.mubr.f32.mxu0 0.0
        %v3599 = vand.u32 %v2944, 4294901760
        %3600 = vmatmul.mubr.f32.gmra.mrb[0].mxu0 %v3599
        %v3601 = vpop.f32.mrb[0].mxu0
        %v3602 = vadd.f32 %v3463, %v3601
        %v3603 = vpop.f32.mrb[0].mxu0
        %3604 = vmatprep.mubr.f32.mxu0 0.0
        %v3605 = vand.u32 %v2945, 4294901760
        %3606 = vmatmul.mubr.f32.gmra.mrb[0].mxu0 %v3605
        %v3607 = vpop.f32.mrb[0].mxu0
        %v3608 = vadd.f32 %v3471, %v3607
        %v3609 = vpop.f32.mrb[0].mxu0
        %3610 = vdwg.mxu0
        %3611 = vmatprep.subr.mxu0 0.0
        %v3612 = vand.u32 %v323, 4294901760
        %3613 = vmatpush1.msra.mxu0 %v3612
        %3614 = vmatprep.subr.mxu0 0.0
        %v3615 = vand.u32 %v324, 4294901760
        %3616 = vmatpush1.msra.mxu0 %v3615
        %3617 = vmatprep.subr.mxu0 0.0
        %v3618 = vand.u32 %v325, 4294901760
        %3619 = vmatpush1.msra.mxu0 %v3618
        %3620 = vmatprep.subr.mxu0 0.0
        %v3621 = vand.u32 %v326, 4294901760
        %3622 = vmatpush1.msra.mxu0 %v3621
        %3623 = vmatprep.subr.mxu0 0.0
        %v3624 = vand.u32 %v327, 4294901760
        %3625 = vmatpush1.msra.mxu0 %v3624
        %3626 = vmatprep.subr.mxu0 0.0
        %v3627 = vand.u32 %v328, 4294901760
        %3628 = vmatpush1.msra.mxu0 %v3627
        %3629 = vmatprep.subr.mxu0 0.0
        %v3630 = vand.u32 %v329, 4294901760
        %3631 = vmatpush1.msra.mxu0 %v3630
        %3632 = vmatprep.subr.mxu0 0.0
        %v3633 = vand.u32 %v330, 4294901760
        %3634 = vmatpush1.msra.mxu0 %v3633
        %3635 = vmatprep.subr.mxu0 0.0
        %v3636 = vand.u32 %v331, 4294901760
        %3637 = vmatpush1.msra.mxu0 %v3636
        %3638 = vmatprep.subr.mxu0 0.0
        %v3639 = vand.u32 %v332, 4294901760
        %3640 = vmatpush1.msra.mxu0 %v3639
        %3641 = vmatprep.subr.mxu0 0.0
        %v3642 = vand.u32 %v333, 4294901760
        %3643 = vmatpush1.msra.mxu0 %v3642
        %3644 = vmatprep.subr.mxu0 0.0
        %v3645 = vand.u32 %v334, 4294901760
        %3646 = vmatpush1.msra.mxu0 %v3645
        %3647 = vmatprep.subr.mxu0 0.0
        %v3648 = vand.u32 %v335, 4294901760
        %3649 = vmatpush1.msra.mxu0 %v3648
        %3650 = vmatprep.subr.mxu0 0.0
        %v3651 = vand.u32 %v336, 4294901760
        %3652 = vmatpush1.msra.mxu0 %v3651
        %3653 = vmatprep.subr.mxu0 0.0
        %v3654 = vand.u32 %v337, 4294901760
        %3655 = vmatpush1.msra.mxu0 %v3654
        %3656 = vmatprep.subr.mxu0 0.0
        %v3657 = vand.u32 %v338, 4294901760
        %3658 = vmatpush1.msra.mxu0 %v3657
        %3659 = vmatprep.subr.mxu0 0.0
        %3660 = vmatpush1.msra.mxu0 0.0
        %3661 = vmatprep.subr.mxu0 0.0
        %3662 = vmatpush1.msra.mxu0 0.0
        %3663 = vmatprep.subr.mxu0 0.0
        %3664 = vmatpush1.msra.mxu0 0.0
        %3665 = vmatprep.subr.mxu0 0.0
        %3666 = vmatpush1.msra.mxu0 0.0
        %3667 = vmatprep.subr.mxu0 0.0
        %3668 = vmatpush1.msra.mxu0 0.0
        %3669 = vmatprep.subr.mxu0 0.0
        %3670 = vmatpush1.msra.mxu0 0.0
        %3671 = vmatprep.subr.mxu0 0.0
        %3672 = vmatpush1.msra.mxu0 0.0
        %3673 = vmatprep.subr.mxu0 0.0
        %3674 = vmatpush1.msra.mxu0 0.0
        %3675 = vmatprep.subr.mxu0 0.0
        %3676 = vmatpush1.msra.mxu0 0.0
        %3677 = vmatprep.subr.mxu0 0.0
        %3678 = vmatpush1.msra.mxu0 0.0
        %3679 = vmatprep.subr.mxu0 0.0
        %3680 = vmatpush1.msra.mxu0 0.0
        %3681 = vmatprep.subr.mxu0 0.0
        %3682 = vmatpush1.msra.mxu0 0.0
        %3683 = vmatprep.subr.mxu0 0.0
        %3684 = vmatpush1.msra.mxu0 0.0
        %3685 = vmatprep.subr.mxu0 0.0
        %3686 = vmatpush1.msra.mxu0 0.0
        %3687 = vmatprep.subr.mxu0 0.0
        %3688 = vmatpush1.msra.mxu0 0.0
        %3689 = vmatprep.subr.mxu0 0.0
        %3690 = vmatpush1.msra.mxu0 0.0
        %3691 = vmatprep.mubr.f32.mxu0 0.0
        %v3692 = vand.u32 %v2942, 4294901760
        %3693 = vmatmul.mubr.f32.gmra.mrb[0].mxu0 %v3692
        %v3694 = vpop.f32.mrb[0].mxu0
        %v3695 = vadd.f32 %v3590, %v3694
        %v3696 = vpop.f32.mrb[0].mxu0
        %3697 = vmatprep.mubr.f32.mxu0 0.0
        %v3698 = vand.u32 %v2943, 4294901760
        %3699 = vmatmul.mubr.f32.gmra.mrb[0].mxu0 %v3698
        %v3700 = vpop.f32.mrb[0].mxu0
        %v3701 = vadd.f32 %v3596, %v3700
        %v3702 = vpop.f32.mrb[0].mxu0
        %3703 = vmatprep.mubr.f32.mxu0 0.0
        %v3704 = vand.u32 %v2944, 4294901760
        %3705 = vmatmul.mubr.f32.gmra.mrb[0].mxu0 %v3704
        %v3706 = vpop.f32.mrb[0].mxu0
        %v3707 = vadd.f32 %v3602, %v3706
        %v3708 = vpop.f32.mrb[0].mxu0
        %3709 = vmatprep.mubr.f32.mxu0 0.0
        %v3710 = vand.u32 %v2945, 4294901760
        %3711 = vmatmul.mubr.f32.gmra.mrb[0].mxu0 %v3710
        %v3712 = vpop.f32.mrb[0].mxu0
        %v3713 = vadd.f32 %v3608, %v3712
        %v3714 = vpop.f32.mrb[0].mxu0
        %3715 = vdwg.mxu0
        %3716 = vmatprep.subr.mxu0 0.0
        %v3717 = vand.u32 %v3695, 4294901760
        %3718 = vmatpush1.msra.mxu0 %v3717
        %3719 = vmatprep.subr.mxu0 0.0
        %v3720 = vand.u32 %v3701, 4294901760
        %3721 = vmatpush1.msra.mxu0 %v3720
        %3722 = vmatprep.subr.mxu0 0.0
        %v3723 = vand.u32 %v3707, 4294901760
        %3724 = vmatpush1.msra.mxu0 %v3723
        %3725 = vmatprep.subr.mxu0 0.0
        %v3726 = vand.u32 %v3713, 4294901760
        %3727 = vmatpush1.msra.mxu0 %v3726
        %3728 = vmatprep.subr.mxu0 0.0
        %3729 = vmatpush1.msra.mxu0 0.0
        %3730 = vmatprep.subr.mxu0 0.0
        %3731 = vmatpush1.msra.mxu0 0.0
        %3732 = vmatprep.subr.mxu0 0.0
        %3733 = vmatpush1.msra.mxu0 0.0
        %3734 = vmatprep.subr.mxu0 0.0
        %3735 = vmatpush1.msra.mxu0 0.0
        %3736 = vmatprep.subr.mxu0 0.0
        %3737 = vmatpush1.msra.mxu0 0.0
        %3738 = vmatprep.subr.mxu0 0.0
        %3739 = vmatpush1.msra.mxu0 0.0
        %3740 = vmatprep.subr.mxu0 0.0
        %3741 = vmatpush1.msra.mxu0 0.0
        %3742 = vmatprep.subr.mxu0 0.0
        %3743 = vmatpush1.msra.mxu0 0.0
        %3744 = vmatprep.subr.mxu0 0.0
        %3745 = vmatpush1.msra.mxu0 0.0
        %3746 = vmatprep.subr.mxu0 0.0
        %3747 = vmatpush1.msra.mxu0 0.0
        %3748 = vmatprep.subr.mxu0 0.0
        %3749 = vmatpush1.msra.mxu0 0.0
        %3750 = vmatprep.subr.mxu0 0.0
        %3751 = vmatpush1.msra.mxu0 0.0
        %3752 = vmatprep.subr.mxu0 0.0
        %3753 = vmatpush1.msra.mxu0 0.0
        %3754 = vmatprep.subr.mxu0 0.0
        %3755 = vmatpush1.msra.mxu0 0.0
        %3756 = vmatprep.subr.mxu0 0.0
        %3757 = vmatpush1.msra.mxu0 0.0
        %3758 = vmatprep.subr.mxu0 0.0
        %3759 = vmatpush1.msra.mxu0 0.0
        %3760 = vmatprep.subr.mxu0 0.0
        %3761 = vmatpush1.msra.mxu0 0.0
        %3762 = vmatprep.subr.mxu0 0.0
        %3763 = vmatpush1.msra.mxu0 0.0
        %3764 = vmatprep.subr.mxu0 0.0
        %3765 = vmatpush1.msra.mxu0 0.0
        %3766 = vmatprep.subr.mxu0 0.0
        %3767 = vmatpush1.msra.mxu0 0.0
        %3768 = vmatprep.subr.mxu0 0.0
        %3769 = vmatpush1.msra.mxu0 0.0
        %3770 = vmatprep.subr.mxu0 0.0
        %3771 = vmatpush1.msra.mxu0 0.0
        %3772 = vmatprep.subr.mxu0 0.0
        %3773 = vmatpush1.msra.mxu0 0.0
        %3774 = vmatprep.subr.mxu0 0.0
        %3775 = vmatpush1.msra.mxu0 0.0
        %3776 = vmatprep.subr.mxu0 0.0
        %3777 = vmatpush1.msra.mxu0 0.0
        %3778 = vmatprep.subr.mxu0 0.0
        %3779 = vmatpush1.msra.mxu0 0.0
        %3780 = vmatprep.subr.mxu0 0.0
        %3781 = vmatpush1.msra.mxu0 0.0
        %3782 = vmatprep.subr.mxu0 0.0
        %3783 = vmatpush1.msra.mxu0 0.0
        %3784 = vmatprep.mubr.f32.mxu0 0.0
        %v3785 = vand.u32 %v1111, 4294901760
        %v3786 = vsub.f32 %v1111, %v3785
        %v3787 = vand.u32 %v3786, 4294901760
        %v3788 = vsub.f32 %v3786, %v3787
        %v3789 = vand.u32 %v3788, 4294901760
        %3790 = vmatmul.mubr.f32.gmra.mrb[0].mxu0 %v3789
        %v3791 = vpop.f32.mrb[0].mxu0
        %v3792 = vadd.f32 0.0, %v3791
        %v3793 = vpop.f32.mrb[0].mxu0
        %3794 = vmatprep.mubr.f32.mxu0 0.0
        %v3795 = vand.u32 %v1114, 4294901760
        %v3796 = vsub.f32 %v1114, %v3795
        %v3797 = vand.u32 %v3796, 4294901760
        %v3798 = vsub.f32 %v3796, %v3797
        %v3799 = vand.u32 %v3798, 4294901760
        %3800 = vmatmul.mubr.f32.gmra.mrb[0].mxu0 %v3799
        %v3801 = vpop.f32.mrb[0].mxu0
        %v3802 = vadd.f32 0.0, %v3801
        %v3803 = vpop.f32.mrb[0].mxu0
        %3804 = vdwg.mxu0
        %3805 = vmatprep.subr.mxu0 0.0
        %v3806 = vand.u32 %v3695, 4294901760
        %v3807 = vsub.f32 %v3695, %v3806
        %v3808 = vand.u32 %v3807, 4294901760
        %v3809 = vsub.f32 %v3807, %v3808
        %v3810 = vand.u32 %v3809, 4294901760
        %3811 = vmatpush1.msra.mxu0 %v3810
        %3812 = vmatprep.subr.mxu0 0.0
        %v3813 = vand.u32 %v3701, 4294901760
        %v3814 = vsub.f32 %v3701, %v3813
        %v3815 = vand.u32 %v3814, 4294901760
        %v3816 = vsub.f32 %v3814, %v3815
        %v3817 = vand.u32 %v3816, 4294901760
        %3818 = vmatpush1.msra.mxu0 %v3817
        %3819 = vmatprep.subr.mxu0 0.0
        %v3820 = vand.u32 %v3707, 4294901760
        %v3821 = vsub.f32 %v3707, %v3820
        %v3822 = vand.u32 %v3821, 4294901760
        %v3823 = vsub.f32 %v3821, %v3822
        %v3824 = vand.u32 %v3823, 4294901760
        %3825 = vmatpush1.msra.mxu0 %v3824
        %3826 = vmatprep.subr.mxu0 0.0
        %v3827 = vand.u32 %v3713, 4294901760
        %v3828 = vsub.f32 %v3713, %v3827
        %v3829 = vand.u32 %v3828, 4294901760
        %v3830 = vsub.f32 %v3828, %v3829
        %v3831 = vand.u32 %v3830, 4294901760
        %3832 = vmatpush1.msra.mxu0 %v3831
        %3833 = vmatprep.subr.mxu0 0.0
        %3834 = vmatpush1.msra.mxu0 0.0
        %3835 = vmatprep.subr.mxu0 0.0
        %3836 = vmatpush1.msra.mxu0 0.0
        %3837 = vmatprep.subr.mxu0 0.0
        %3838 = vmatpush1.msra.mxu0 0.0
        %3839 = vmatprep.subr.mxu0 0.0
        %3840 = vmatpush1.msra.mxu0 0.0
        %3841 = vmatprep.subr.mxu0 0.0
        %3842 = vmatpush1.msra.mxu0 0.0
        %3843 = vmatprep.subr.mxu0 0.0
        %3844 = vmatpush1.msra.mxu0 0.0
        %3845 = vmatprep.subr.mxu0 0.0
        %3846 = vmatpush1.msra.mxu0 0.0
        %3847 = vmatprep.subr.mxu0 0.0
        %3848 = vmatpush1.msra.mxu0 0.0
        %3849 = vmatprep.subr.mxu0 0.0
        %3850 = vmatpush1.msra.mxu0 0.0
        %3851 = vmatprep.subr.mxu0 0.0
        %3852 = vmatpush1.msra.mxu0 0.0
        %3853 = vmatprep.subr.mxu0 0.0
        %3854 = vmatpush1.msra.mxu0 0.0
        %3855 = vmatprep.subr.mxu0 0.0
        %3856 = vmatpush1.msra.mxu0 0.0
        %3857 = vmatprep.subr.mxu0 0.0
        %3858 = vmatpush1.msra.mxu0 0.0
        %3859 = vmatprep.subr.mxu0 0.0
        %3860 = vmatpush1.msra.mxu0 0.0
        %3861 = vmatprep.subr.mxu0 0.0
        %3862 = vmatpush1.msra.mxu0 0.0
        %3863 = vmatprep.subr.mxu0 0.0
        %3864 = vmatpush1.msra.mxu0 0.0
        %3865 = vmatprep.subr.mxu0 0.0
        %3866 = vmatpush1.msra.mxu0 0.0
        %3867 = vmatprep.subr.mxu0 0.0
        %3868 = vmatpush1.msra.mxu0 0.0
        %3869 = vmatprep.subr.mxu0 0.0
        %3870 = vmatpush1.msra.mxu0 0.0
        %3871 = vmatprep.subr.mxu0 0.0
        %3872 = vmatpush1.msra.mxu0 0.0
        %3873 = vmatprep.subr.mxu0 0.0
        %3874 = vmatpush1.msra.mxu0 0.0
        %3875 = vmatprep.subr.mxu0 0.0
        %3876 = vmatpush1.msra.mxu0 0.0
        %3877 = vmatprep.subr.mxu0 0.0
        %3878 = vmatpush1.msra.mxu0 0.0
        %3879 = vmatprep.subr.mxu0 0.0
        %3880 = vmatpush1.msra.mxu0 0.0
        %3881 = vmatprep.subr.mxu0 0.0
        %3882 = vmatpush1.msra.mxu0 0.0
        %3883 = vmatprep.subr.mxu0 0.0
        %3884 = vmatpush1.msra.mxu0 0.0
        %3885 = vmatprep.subr.mxu0 0.0
        %3886 = vmatpush1.msra.mxu0 0.0
        %3887 = vmatprep.subr.mxu0 0.0
        %3888 = vmatpush1.msra.mxu0 0.0
        %3889 = vmatprep.mubr.f32.mxu0 0.0
        %v3890 = vand.u32 %v1111, 4294901760
        %3891 = vmatmul.mubr.f32.gmra.mrb[0].mxu0 %v3890
        %v3892 = vpop.f32.mrb[0].mxu0
        %v3893 = vadd.f32 %v3792, %v3892
        %v3894 = vpop.f32.mrb[0].mxu0
        %3895 = vmatprep.mubr.f32.mxu0 0.0
        %v3896 = vand.u32 %v1114, 4294901760
        %3897 = vmatmul.mubr.f32.gmra.mrb[0].mxu0 %v3896
        %v3898 = vpop.f32.mrb[0].mxu0
        %v3899 = vadd.f32 %v3802, %v3898
        %v3900 = vpop.f32.mrb[0].mxu0
        %3901 = vdwg.mxu0
        %3902 = vmatprep.subr.mxu0 0.0
        %v3903 = vand.u32 %v3695, 4294901760
        %v3904 = vsub.f32 %v3695, %v3903
        %3905 = vmatpush1.msra.mxu0 %v3904
        %3906 = vmatprep.subr.mxu0 0.0
        %v3907 = vand.u32 %v3701, 4294901760
        %v3908 = vsub.f32 %v3701, %v3907
        %3909 = vmatpush1.msra.mxu0 %v3908
        %3910 = vmatprep.subr.mxu0 0.0
        %v3911 = vand.u32 %v3707, 4294901760
        %v3912 = vsub.f32 %v3707, %v3911
        %3913 = vmatpush1.msra.mxu0 %v3912
        %3914 = vmatprep.subr.mxu0 0.0
        %v3915 = vand.u32 %v3713, 4294901760
        %v3916 = vsub.f32 %v3713, %v3915
        %3917 = vmatpush1.msra.mxu0 %v3916
        %3918 = vmatprep.subr.mxu0 0.0
        %3919 = vmatpush1.msra.mxu0 0.0
        %3920 = vmatprep.subr.mxu0 0.0
        %3921 = vmatpush1.msra.mxu0 0.0
        %3922 = vmatprep.subr.mxu0 0.0
        %3923 = vmatpush1.msra.mxu0 0.0
        %3924 = vmatprep.subr.mxu0 0.0
        %3925 = vmatpush1.msra.mxu0 0.0
        %3926 = vmatprep.subr.mxu0 0.0
        %3927 = vmatpush1.msra.mxu0 0.0
        %3928 = vmatprep.subr.mxu0 0.0
        %3929 = vmatpush1.msra.mxu0 0.0
        %3930 = vmatprep.subr.mxu0 0.0
        %3931 = vmatpush1.msra.mxu0 0.0
        %3932 = vmatprep.subr.mxu0 0.0
        %3933 = vmatpush1.msra.mxu0 0.0
        %3934 = vmatprep.subr.mxu0 0.0
        %3935 = vmatpush1.msra.mxu0 0.0
        %3936 = vmatprep.subr.mxu0 0.0
        %3937 = vmatpush1.msra.mxu0 0.0
        %3938 = vmatprep.subr.mxu0 0.0
        %3939 = vmatpush1.msra.mxu0 0.0
        %3940 = vmatprep.subr.mxu0 0.0
        %3941 = vmatpush1.msra.mxu0 0.0
        %3942 = vmatprep.subr.mxu0 0.0
        %3943 = vmatpush1.msra.mxu0 0.0
        %3944 = vmatprep.subr.mxu0 0.0
        %3945 = vmatpush1.msra.mxu0 0.0
        %3946 = vmatprep.subr.mxu0 0.0
        %3947 = vmatpush1.msra.mxu0 0.0
        %3948 = vmatprep.subr.mxu0 0.0
        %3949 = vmatpush1.msra.mxu0 0.0
        %3950 = vmatprep.subr.mxu0 0.0
        %3951 = vmatpush1.msra.mxu0 0.0
        %3952 = vmatprep.subr.mxu0 0.0
        %3953 = vmatpush1.msra.mxu0 0.0
        %3954 = vmatprep.subr.mxu0 0.0
        %3955 = vmatpush1.msra.mxu0 0.0
        %3956 = vmatprep.subr.mxu0 0.0
        %3957 = vmatpush1.msra.mxu0 0.0
        %3958 = vmatprep.subr.mxu0 0.0
        %3959 = vmatpush1.msra.mxu0 0.0
        %3960 = vmatprep.subr.mxu0 0.0
        %3961 = vmatpush1.msra.mxu0 0.0
        %3962 = vmatprep.subr.mxu0 0.0
        %3963 = vmatpush1.msra.mxu0 0.0
        %3964 = vmatprep.subr.mxu0 0.0
        %3965 = vmatpush1.msra.mxu0 0.0
        %3966 = vmatprep.subr.mxu0 0.0
        %3967 = vmatpush1.msra.mxu0 0.0
        %3968 = vmatprep.subr.mxu0 0.0
        %3969 = vmatpush1.msra.mxu0 0.0
        %3970 = vmatprep.subr.mxu0 0.0
        %3971 = vmatpush1.msra.mxu0 0.0
        %3972 = vmatprep.subr.mxu0 0.0
        %3973 = vmatpush1.msra.mxu0 0.0
        %3974 = vmatprep.mubr.f32.mxu0 0.0
        %v3975 = vand.u32 %v1111, 4294901760
        %v3976 = vsub.f32 %v1111, %v3975
        %3977 = vmatmul.mubr.f32.gmra.mrb[0].mxu0 %v3976
        %v3978 = vpop.f32.mrb[0].mxu0
        %v3979 = vadd.f32 %v3893, %v3978
        %v3980 = vpop.f32.mrb[0].mxu0
        %3981 = vmatprep.mubr.f32.mxu0 0.0
        %v3982 = vand.u32 %v1114, 4294901760
        %v3983 = vsub.f32 %v1114, %v3982
        %3984 = vmatmul.mubr.f32.gmra.mrb[0].mxu0 %v3983
        %v3985 = vpop.f32.mrb[0].mxu0
        %v3986 = vadd.f32 %v3899, %v3985
        %v3987 = vpop.f32.mrb[0].mxu0
        %3988 = vdwg.mxu0
        %3989 = vmatprep.subr.mxu0 0.0
        %v3990 = vand.u32 %v3695, 4294901760
        %3991 = vmatpush1.msra.mxu0 %v3990
        %3992 = vmatprep.subr.mxu0 0.0
        %v3993 = vand.u32 %v3701, 4294901760
        %3994 = vmatpush1.msra.mxu0 %v3993
        %3995 = vmatprep.subr.mxu0 0.0
        %v3996 = vand.u32 %v3707, 4294901760
        %3997 = vmatpush1.msra.mxu0 %v3996
        %3998 = vmatprep.subr.mxu0 0.0
        %v3999 = vand.u32 %v3713, 4294901760
        %4000 = vmatpush1.msra.mxu0 %v3999
        %4001 = vmatprep.subr.mxu0 0.0
        %4002 = vmatpush1.msra.mxu0 0.0
        %4003 = vmatprep.subr.mxu0 0.0
        %4004 = vmatpush1.msra.mxu0 0.0
        %4005 = vmatprep.subr.mxu0 0.0
        %4006 = vmatpush1.msra.mxu0 0.0
        %4007 = vmatprep.subr.mxu0 0.0
        %4008 = vmatpush1.msra.mxu0 0.0
        %4009 = vmatprep.subr.mxu0 0.0
        %4010 = vmatpush1.msra.mxu0 0.0
        %4011 = vmatprep.subr.mxu0 0.0
        %4012 = vmatpush1.msra.mxu0 0.0
        %4013 = vmatprep.subr.mxu0 0.0
        %4014 = vmatpush1.msra.mxu0 0.0
        %4015 = vmatprep.subr.mxu0 0.0
        %4016 = vmatpush1.msra.mxu0 0.0
        %4017 = vmatprep.subr.mxu0 0.0
        %4018 = vmatpush1.msra.mxu0 0.0
        %4019 = vmatprep.subr.mxu0 0.0
        %4020 = vmatpush1.msra.mxu0 0.0
        %4021 = vmatprep.subr.mxu0 0.0
        %4022 = vmatpush1.msra.mxu0 0.0
        %4023 = vmatprep.subr.mxu0 0.0
        %4024 = vmatpush1.msra.mxu0 0.0
        %4025 = vmatprep.subr.mxu0 0.0
        %4026 = vmatpush1.msra.mxu0 0.0
        %4027 = vmatprep.subr.mxu0 0.0
        %4028 = vmatpush1.msra.mxu0 0.0
        %4029 = vmatprep.subr.mxu0 0.0
        %4030 = vmatpush1.msra.mxu0 0.0
        %4031 = vmatprep.subr.mxu0 0.0
        %4032 = vmatpush1.msra.mxu0 0.0
        %4033 = vmatprep.subr.mxu0 0.0
        %4034 = vmatpush1.msra.mxu0 0.0
        %4035 = vmatprep.subr.mxu0 0.0
        %4036 = vmatpush1.msra.mxu0 0.0
        %4037 = vmatprep.subr.mxu0 0.0
        %4038 = vmatpush1.msra.mxu0 0.0
        %4039 = vmatprep.subr.mxu0 0.0
        %4040 = vmatpush1.msra.mxu0 0.0
        %4041 = vmatprep.subr.mxu0 0.0
        %4042 = vmatpush1.msra.mxu0 0.0
        %4043 = vmatprep.subr.mxu0 0.0
        %4044 = vmatpush1.msra.mxu0 0.0
        %4045 = vmatprep.subr.mxu0 0.0
        %4046 = vmatpush1.msra.mxu0 0.0
        %4047 = vmatprep.subr.mxu0 0.0
        %4048 = vmatpush1.msra.mxu0 0.0
        %4049 = vmatprep.subr.mxu0 0.0
        %4050 = vmatpush1.msra.mxu0 0.0
        %4051 = vmatprep.subr.mxu0 0.0
        %4052 = vmatpush1.msra.mxu0 0.0
        %4053 = vmatprep.subr.mxu0 0.0
        %4054 = vmatpush1.msra.mxu0 0.0
        %4055 = vmatprep.subr.mxu0 0.0
        %4056 = vmatpush1.msra.mxu0 0.0
        %4057 = vmatprep.mubr.f32.mxu0 0.0
        %v4058 = vand.u32 %v1111, 4294901760
        %v4059 = vsub.f32 %v1111, %v4058
        %v4060 = vand.u32 %v4059, 4294901760
        %4061 = vmatmul.mubr.f32.gmra.mrb[0].mxu0 %v4060
        %v4062 = vpop.f32.mrb[0].mxu0
        %v4063 = vadd.f32 %v3979, %v4062
        %v4064 = vpop.f32.mrb[0].mxu0
        %4065 = vmatprep.mubr.f32.mxu0 0.0
        %v4066 = vand.u32 %v1114, 4294901760
        %v4067 = vsub.f32 %v1114, %v4066
        %v4068 = vand.u32 %v4067, 4294901760
        %4069 = vmatmul.mubr.f32.gmra.mrb[0].mxu0 %v4068
        %v4070 = vpop.f32.mrb[0].mxu0
        %v4071 = vadd.f32 %v3986, %v4070
        %v4072 = vpop.f32.mrb[0].mxu0
        %4073 = vdwg.mxu0
        %4074 = vmatprep.subr.mxu0 0.0
        %v4075 = vand.u32 %v3695, 4294901760
        %v4076 = vsub.f32 %v3695, %v4075
        %v4077 = vand.u32 %v4076, 4294901760
        %4078 = vmatpush1.msra.mxu0 %v4077
        %4079 = vmatprep.subr.mxu0 0.0
        %v4080 = vand.u32 %v3701, 4294901760
        %v4081 = vsub.f32 %v3701, %v4080
        %v4082 = vand.u32 %v4081, 4294901760
        %4083 = vmatpush1.msra.mxu0 %v4082
        %4084 = vmatprep.subr.mxu0 0.0
        %v4085 = vand.u32 %v3707, 4294901760
        %v4086 = vsub.f32 %v3707, %v4085
        %v4087 = vand.u32 %v4086, 4294901760
        %4088 = vmatpush1.msra.mxu0 %v4087
        %4089 = vmatprep.subr.mxu0 0.0
        %v4090 = vand.u32 %v3713, 4294901760
        %v4091 = vsub.f32 %v3713, %v4090
        %v4092 = vand.u32 %v4091, 4294901760
        %4093 = vmatpush1.msra.mxu0 %v4092
        %4094 = vmatprep.subr.mxu0 0.0
        %4095 = vmatpush1.msra.mxu0 0.0
        %4096 = vmatprep.subr.mxu0 0.0
        %4097 = vmatpush1.msra.mxu0 0.0
        %4098 = vmatprep.subr.mxu0 0.0
        %4099 = vmatpush1.msra.mxu0 0.0
        %4100 = vmatprep.subr.mxu0 0.0
        %4101 = vmatpush1.msra.mxu0 0.0
        %4102 = vmatprep.subr.mxu0 0.0
        %4103 = vmatpush1.msra.mxu0 0.0
        %4104 = vmatprep.subr.mxu0 0.0
        %4105 = vmatpush1.msra.mxu0 0.0
        %4106 = vmatprep.subr.mxu0 0.0
        %4107 = vmatpush1.msra.mxu0 0.0
        %4108 = vmatprep.subr.mxu0 0.0
        %4109 = vmatpush1.msra.mxu0 0.0
        %4110 = vmatprep.subr.mxu0 0.0
        %4111 = vmatpush1.msra.mxu0 0.0
        %4112 = vmatprep.subr.mxu0 0.0
        %4113 = vmatpush1.msra.mxu0 0.0
        %4114 = vmatprep.subr.mxu0 0.0
        %4115 = vmatpush1.msra.mxu0 0.0
        %4116 = vmatprep.subr.mxu0 0.0
        %4117 = vmatpush1.msra.mxu0 0.0
        %4118 = vmatprep.subr.mxu0 0.0
        %4119 = vmatpush1.msra.mxu0 0.0
        %4120 = vmatprep.subr.mxu0 0.0
        %4121 = vmatpush1.msra.mxu0 0.0
        %4122 = vmatprep.subr.mxu0 0.0
        %4123 = vmatpush1.msra.mxu0 0.0
        %4124 = vmatprep.subr.mxu0 0.0
        %4125 = vmatpush1.msra.mxu0 0.0
        %4126 = vmatprep.subr.mxu0 0.0
        %4127 = vmatpush1.msra.mxu0 0.0
        %4128 = vmatprep.subr.mxu0 0.0
        %4129 = vmatpush1.msra.mxu0 0.0
        %4130 = vmatprep.subr.mxu0 0.0
        %4131 = vmatpush1.msra.mxu0 0.0
        %4132 = vmatprep.subr.mxu0 0.0
        %4133 = vmatpush1.msra.mxu0 0.0
        %4134 = vmatprep.subr.mxu0 0.0
        %4135 = vmatpush1.msra.mxu0 0.0
        %4136 = vmatprep.subr.mxu0 0.0
        %4137 = vmatpush1.msra.mxu0 0.0
        %4138 = vmatprep.subr.mxu0 0.0
        %4139 = vmatpush1.msra.mxu0 0.0
        %4140 = vmatprep.subr.mxu0 0.0
        %4141 = vmatpush1.msra.mxu0 0.0
        %4142 = vmatprep.subr.mxu0 0.0
        %4143 = vmatpush1.msra.mxu0 0.0
        %4144 = vmatprep.subr.mxu0 0.0
        %4145 = vmatpush1.msra.mxu0 0.0
        %4146 = vmatprep.subr.mxu0 0.0
        %4147 = vmatpush1.msra.mxu0 0.0
        %4148 = vmatprep.subr.mxu0 0.0
        %4149 = vmatpush1.msra.mxu0 0.0
        %4150 = vmatprep.mubr.f32.mxu0 0.0
        %v4151 = vand.u32 %v1111, 4294901760
        %4152 = vmatmul.mubr.f32.gmra.mrb[0].mxu0 %v4151
        %v4153 = vpop.f32.mrb[0].mxu0
        %v4154 = vadd.f32 %v4063, %v4153
        %v4155 = vpop.f32.mrb[0].mxu0
        %4156 = vmatprep.mubr.f32.mxu0 0.0
        %v4157 = vand.u32 %v1114, 4294901760
        %4158 = vmatmul.mubr.f32.gmra.mrb[0].mxu0 %v4157
        %v4159 = vpop.f32.mrb[0].mxu0
        %v4160 = vadd.f32 %v4071, %v4159
        %v4161 = vpop.f32.mrb[0].mxu0
        %4162 = vdwg.mxu0
        %4163 = vmatprep.subr.mxu0 0.0
        %v4164 = vand.u32 %v3695, 4294901760
        %4165 = vmatpush1.msra.mxu0 %v4164
        %4166 = vmatprep.subr.mxu0 0.0
        %v4167 = vand.u32 %v3701, 4294901760
        %4168 = vmatpush1.msra.mxu0 %v4167
        %4169 = vmatprep.subr.mxu0 0.0
        %v4170 = vand.u32 %v3707, 4294901760
        %4171 = vmatpush1.msra.mxu0 %v4170
        %4172 = vmatprep.subr.mxu0 0.0
        %v4173 = vand.u32 %v3713, 4294901760
        %4174 = vmatpush1.msra.mxu0 %v4173
        %4175 = vmatprep.subr.mxu0 0.0
        %4176 = vmatpush1.msra.mxu0 0.0
        %4177 = vmatprep.subr.mxu0 0.0
        %4178 = vmatpush1.msra.mxu0 0.0
        %4179 = vmatprep.subr.mxu0 0.0
        %4180 = vmatpush1.msra.mxu0 0.0
        %4181 = vmatprep.subr.mxu0 0.0
        %4182 = vmatpush1.msra.mxu0 0.0
        %4183 = vmatprep.subr.mxu0 0.0
        %4184 = vmatpush1.msra.mxu0 0.0
        %4185 = vmatprep.subr.mxu0 0.0
        %4186 = vmatpush1.msra.mxu0 0.0
        %4187 = vmatprep.subr.mxu0 0.0
        %4188 = vmatpush1.msra.mxu0 0.0
        %4189 = vmatprep.subr.mxu0 0.0
        %4190 = vmatpush1.msra.mxu0 0.0
        %4191 = vmatprep.subr.mxu0 0.0
        %4192 = vmatpush1.msra.mxu0 0.0
        %4193 = vmatprep.subr.mxu0 0.0
        %4194 = vmatpush1.msra.mxu0 0.0
        %4195 = vmatprep.subr.mxu0 0.0
        %4196 = vmatpush1.msra.mxu0 0.0
        %4197 = vmatprep.subr.mxu0 0.0
        %4198 = vmatpush1.msra.mxu0 0.0
        %4199 = vmatprep.subr.mxu0 0.0
        %4200 = vmatpush1.msra.mxu0 0.0
        %4201 = vmatprep.subr.mxu0 0.0
        %4202 = vmatpush1.msra.mxu0 0.0
        %4203 = vmatprep.subr.mxu0 0.0
        %4204 = vmatpush1.msra.mxu0 0.0
        %4205 = vmatprep.subr.mxu0 0.0
        %4206 = vmatpush1.msra.mxu0 0.0
        %4207 = vmatprep.subr.mxu0 0.0
        %4208 = vmatpush1.msra.mxu0 0.0
        %4209 = vmatprep.subr.mxu0 0.0
        %4210 = vmatpush1.msra.mxu0 0.0
        %4211 = vmatprep.subr.mxu0 0.0
        %4212 = vmatpush1.msra.mxu0 0.0
        %4213 = vmatprep.subr.mxu0 0.0
        %4214 = vmatpush1.msra.mxu0 0.0
        %4215 = vmatprep.subr.mxu0 0.0
        %4216 = vmatpush1.msra.mxu0 0.0
        %4217 = vmatprep.subr.mxu0 0.0
        %4218 = vmatpush1.msra.mxu0 0.0
        %4219 = vmatprep.subr.mxu0 0.0
        %4220 = vmatpush1.msra.mxu0 0.0
        %4221 = vmatprep.subr.mxu0 0.0
        %4222 = vmatpush1.msra.mxu0 0.0
        %4223 = vmatprep.subr.mxu0 0.0
        %4224 = vmatpush1.msra.mxu0 0.0
        %4225 = vmatprep.subr.mxu0 0.0
        %4226 = vmatpush1.msra.mxu0 0.0
        %4227 = vmatprep.subr.mxu0 0.0
        %4228 = vmatpush1.msra.mxu0 0.0
        %4229 = vmatprep.subr.mxu0 0.0
        %4230 = vmatpush1.msra.mxu0 0.0
        %4231 = vmatprep.mubr.f32.mxu0 0.0
        %v4232 = vand.u32 %v1111, 4294901760
        %4233 = vmatmul.mubr.f32.gmra.mrb[0].mxu0 %v4232
        %v4234 = vpop.f32.mrb[0].mxu0
        %v4235 = vadd.f32 %v4154, %v4234
        %v4236 = vpop.f32.mrb[0].mxu0
        %4237 = vmatprep.mubr.f32.mxu0 0.0
        %v4238 = vand.u32 %v1114, 4294901760
        %4239 = vmatmul.mubr.f32.gmra.mrb[0].mxu0 %v4238
        %v4240 = vpop.f32.mrb[0].mxu0
        %v4241 = vadd.f32 %v4160, %v4240
        %v4242 = vpop.f32.mrb[0].mxu0
        %4243 = vdwg.mxu0
        %v4244 = vmul.f32 %v317, %v317
        %v4245 = vmul.f32 %v318, %v318
        %v4246 = vmul.f32 %v319, %v319
        %v4247 = vmul.f32 %v320, %v320
        %4248 = vmatprep.subr.mxu0 0.0
        %v4249 = vand.u32 %v323, 4294901760
        %4250 = vmatpush1.msra.mxu0 %v4249
        %4251 = vmatprep.subr.mxu0 0.0
        %v4252 = vand.u32 %v324, 4294901760
        %4253 = vmatpush1.msra.mxu0 %v4252
        %4254 = vmatprep.subr.mxu0 0.0
        %v4255 = vand.u32 %v325, 4294901760
        %4256 = vmatpush1.msra.mxu0 %v4255
        %4257 = vmatprep.subr.mxu0 0.0
        %v4258 = vand.u32 %v326, 4294901760
        %4259 = vmatpush1.msra.mxu0 %v4258
        %4260 = vmatprep.subr.mxu0 0.0
        %v4261 = vand.u32 %v327, 4294901760
        %4262 = vmatpush1.msra.mxu0 %v4261
        %4263 = vmatprep.subr.mxu0 0.0
        %v4264 = vand.u32 %v328, 4294901760
        %4265 = vmatpush1.msra.mxu0 %v4264
        %4266 = vmatprep.subr.mxu0 0.0
        %v4267 = vand.u32 %v329, 4294901760
        %4268 = vmatpush1.msra.mxu0 %v4267
        %4269 = vmatprep.subr.mxu0 0.0
        %v4270 = vand.u32 %v330, 4294901760
        %4271 = vmatpush1.msra.mxu0 %v4270
        %4272 = vmatprep.subr.mxu0 0.0
        %v4273 = vand.u32 %v331, 4294901760
        %4274 = vmatpush1.msra.mxu0 %v4273
        %4275 = vmatprep.subr.mxu0 0.0
        %v4276 = vand.u32 %v332, 4294901760
        %4277 = vmatpush1.msra.mxu0 %v4276
        %4278 = vmatprep.subr.mxu0 0.0
        %v4279 = vand.u32 %v333, 4294901760
        %4280 = vmatpush1.msra.mxu0 %v4279
        %4281 = vmatprep.subr.mxu0 0.0
        %v4282 = vand.u32 %v334, 4294901760
        %4283 = vmatpush1.msra.mxu0 %v4282
        %4284 = vmatprep.subr.mxu0 0.0
        %v4285 = vand.u32 %v335, 4294901760
        %4286 = vmatpush1.msra.mxu0 %v4285
        %4287 = vmatprep.subr.mxu0 0.0
        %v4288 = vand.u32 %v336, 4294901760
        %4289 = vmatpush1.msra.mxu0 %v4288
        %4290 = vmatprep.subr.mxu0 0.0
        %v4291 = vand.u32 %v337, 4294901760
        %4292 = vmatpush1.msra.mxu0 %v4291
        %4293 = vmatprep.subr.mxu0 0.0
        %v4294 = vand.u32 %v338, 4294901760
        %4295 = vmatpush1.msra.mxu0 %v4294
        %4296 = vmatprep.subr.mxu0 0.0
        %4297 = vmatpush1.msra.mxu0 0.0
        %4298 = vmatprep.subr.mxu0 0.0
        %4299 = vmatpush1.msra.mxu0 0.0
        %4300 = vmatprep.subr.mxu0 0.0
        %4301 = vmatpush1.msra.mxu0 0.0
        %4302 = vmatprep.subr.mxu0 0.0
        %4303 = vmatpush1.msra.mxu0 0.0
        %4304 = vmatprep.subr.mxu0 0.0
        %4305 = vmatpush1.msra.mxu0 0.0
        %4306 = vmatprep.subr.mxu0 0.0
        %4307 = vmatpush1.msra.mxu0 0.0
        %4308 = vmatprep.subr.mxu0 0.0
        %4309 = vmatpush1.msra.mxu0 0.0
        %4310 = vmatprep.subr.mxu0 0.0
        %4311 = vmatpush1.msra.mxu0 0.0
        %4312 = vmatprep.subr.mxu0 0.0
        %4313 = vmatpush1.msra.mxu0 0.0
        %4314 = vmatprep.subr.mxu0 0.0
        %4315 = vmatpush1.msra.mxu0 0.0
        %4316 = vmatprep.subr.mxu0 0.0
        %4317 = vmatpush1.msra.mxu0 0.0
        %4318 = vmatprep.subr.mxu0 0.0
        %4319 = vmatpush1.msra.mxu0 0.0
        %4320 = vmatprep.subr.mxu0 0.0
        %4321 = vmatpush1.msra.mxu0 0.0
        %4322 = vmatprep.subr.mxu0 0.0
        %4323 = vmatpush1.msra.mxu0 0.0
        %4324 = vmatprep.subr.mxu0 0.0
        %4325 = vmatpush1.msra.mxu0 0.0
        %4326 = vmatprep.subr.mxu0 0.0
        %4327 = vmatpush1.msra.mxu0 0.0
        %4328 = vmatprep.mubr.f32.mxu0 0.0
        %v4329 = vand.u32 %v4244, 4294901760
        %v4330 = vsub.f32 %v4244, %v4329
        %v4331 = vand.u32 %v4330, 4294901760
        %v4332 = vsub.f32 %v4330, %v4331
        %v4333 = vand.u32 %v4332, 4294901760
        %4334 = vmatmul.mubr.f32.gmra.mrb[0].mxu0 %v4333
        %v4335 = vpop.f32.mrb[0].mxu0
        %v4336 = vadd.f32 0.0, %v4335
        %v4337 = vpop.f32.mrb[0].mxu0
        %4338 = vmatprep.mubr.f32.mxu0 0.0
        %v4339 = vand.u32 %v4245, 4294901760
        %v4340 = vsub.f32 %v4245, %v4339
        %v4341 = vand.u32 %v4340, 4294901760
        %v4342 = vsub.f32 %v4340, %v4341
        %v4343 = vand.u32 %v4342, 4294901760
        %4344 = vmatmul.mubr.f32.gmra.mrb[0].mxu0 %v4343
        %v4345 = vpop.f32.mrb[0].mxu0
        %v4346 = vadd.f32 0.0, %v4345
        %v4347 = vpop.f32.mrb[0].mxu0
        %4348 = vmatprep.mubr.f32.mxu0 0.0
        %v4349 = vand.u32 %v4246, 4294901760
        %v4350 = vsub.f32 %v4246, %v4349
        %v4351 = vand.u32 %v4350, 4294901760
        %v4352 = vsub.f32 %v4350, %v4351
        %v4353 = vand.u32 %v4352, 4294901760
        %4354 = vmatmul.mubr.f32.gmra.mrb[0].mxu0 %v4353
        %v4355 = vpop.f32.mrb[0].mxu0
        %v4356 = vadd.f32 0.0, %v4355
        %v4357 = vpop.f32.mrb[0].mxu0
        %4358 = vmatprep.mubr.f32.mxu0 0.0
        %v4359 = vand.u32 %v4247, 4294901760
        %v4360 = vsub.f32 %v4247, %v4359
        %v4361 = vand.u32 %v4360, 4294901760
        %v4362 = vsub.f32 %v4360, %v4361
        %v4363 = vand.u32 %v4362, 4294901760
        %4364 = vmatmul.mubr.f32.gmra.mrb[0].mxu0 %v4363
        %v4365 = vpop.f32.mrb[0].mxu0
        %v4366 = vadd.f32 0.0, %v4365
        %v4367 = vpop.f32.mrb[0].mxu0
        %4368 = vdwg.mxu0
        %4369 = vmatprep.subr.mxu0 0.0
        %v4370 = vand.u32 %v323, 4294901760
        %v4371 = vsub.f32 %v323, %v4370
        %v4372 = vand.u32 %v4371, 4294901760
        %v4373 = vsub.f32 %v4371, %v4372
        %v4374 = vand.u32 %v4373, 4294901760
        %4375 = vmatpush1.msra.mxu0 %v4374
        %4376 = vmatprep.subr.mxu0 0.0
        %v4377 = vand.u32 %v324, 4294901760
        %v4378 = vsub.f32 %v324, %v4377
        %v4379 = vand.u32 %v4378, 4294901760
        %v4380 = vsub.f32 %v4378, %v4379
        %v4381 = vand.u32 %v4380, 4294901760
        %4382 = vmatpush1.msra.mxu0 %v4381
        %4383 = vmatprep.subr.mxu0 0.0
        %v4384 = vand.u32 %v325, 4294901760
        %v4385 = vsub.f32 %v325, %v4384
        %v4386 = vand.u32 %v4385, 4294901760
        %v4387 = vsub.f32 %v4385, %v4386
        %v4388 = vand.u32 %v4387, 4294901760
        %4389 = vmatpush1.msra.mxu0 %v4388
        %4390 = vmatprep.subr.mxu0 0.0
        %v4391 = vand.u32 %v326, 4294901760
        %v4392 = vsub.f32 %v326, %v4391
        %v4393 = vand.u32 %v4392, 4294901760
        %v4394 = vsub.f32 %v4392, %v4393
        %v4395 = vand.u32 %v4394, 4294901760
        %4396 = vmatpush1.msra.mxu0 %v4395
        %4397 = vmatprep.subr.mxu0 0.0
        %v4398 = vand.u32 %v327, 4294901760
        %v4399 = vsub.f32 %v327, %v4398
        %v4400 = vand.u32 %v4399, 4294901760
        %v4401 = vsub.f32 %v4399, %v4400
        %v4402 = vand.u32 %v4401, 4294901760
        %4403 = vmatpush1.msra.mxu0 %v4402
        %4404 = vmatprep.subr.mxu0 0.0
        %v4405 = vand.u32 %v328, 4294901760
        %v4406 = vsub.f32 %v328, %v4405
        %v4407 = vand.u32 %v4406, 4294901760
        %v4408 = vsub.f32 %v4406, %v4407
        %v4409 = vand.u32 %v4408, 4294901760
        %4410 = vmatpush1.msra.mxu0 %v4409
        %4411 = vmatprep.subr.mxu0 0.0
        %v4412 = vand.u32 %v329, 4294901760
        %v4413 = vsub.f32 %v329, %v4412
        %v4414 = vand.u32 %v4413, 4294901760
        %v4415 = vsub.f32 %v4413, %v4414
        %v4416 = vand.u32 %v4415, 4294901760
        %4417 = vmatpush1.msra.mxu0 %v4416
        %4418 = vmatprep.subr.mxu0 0.0
        %v4419 = vand.u32 %v330, 4294901760
        %v4420 = vsub.f32 %v330, %v4419
        %v4421 = vand.u32 %v4420, 4294901760
        %v4422 = vsub.f32 %v4420, %v4421
        %v4423 = vand.u32 %v4422, 4294901760
        %4424 = vmatpush1.msra.mxu0 %v4423
        %4425 = vmatprep.subr.mxu0 0.0
        %v4426 = vand.u32 %v331, 4294901760
        %v4427 = vsub.f32 %v331, %v4426
        %v4428 = vand.u32 %v4427, 4294901760
        %v4429 = vsub.f32 %v4427, %v4428
        %v4430 = vand.u32 %v4429, 4294901760
        %4431 = vmatpush1.msra.mxu0 %v4430
        %4432 = vmatprep.subr.mxu0 0.0
        %v4433 = vand.u32 %v332, 4294901760
        %v4434 = vsub.f32 %v332, %v4433
        %v4435 = vand.u32 %v4434, 4294901760
        %v4436 = vsub.f32 %v4434, %v4435
        %v4437 = vand.u32 %v4436, 4294901760
        %4438 = vmatpush1.msra.mxu0 %v4437
        %4439 = vmatprep.subr.mxu0 0.0
        %v4440 = vand.u32 %v333, 4294901760
        %v4441 = vsub.f32 %v333, %v4440
        %v4442 = vand.u32 %v4441, 4294901760
        %v4443 = vsub.f32 %v4441, %v4442
        %v4444 = vand.u32 %v4443, 4294901760
        %4445 = vmatpush1.msra.mxu0 %v4444
        %4446 = vmatprep.subr.mxu0 0.0
        %v4447 = vand.u32 %v334, 4294901760
        %v4448 = vsub.f32 %v334, %v4447
        %v4449 = vand.u32 %v4448, 4294901760
        %v4450 = vsub.f32 %v4448, %v4449
        %v4451 = vand.u32 %v4450, 4294901760
        %4452 = vmatpush1.msra.mxu0 %v4451
        %4453 = vmatprep.subr.mxu0 0.0
        %v4454 = vand.u32 %v335, 4294901760
        %v4455 = vsub.f32 %v335, %v4454
        %v4456 = vand.u32 %v4455, 4294901760
        %v4457 = vsub.f32 %v4455, %v4456
        %v4458 = vand.u32 %v4457, 4294901760
        %4459 = vmatpush1.msra.mxu0 %v4458
        %4460 = vmatprep.subr.mxu0 0.0
        %v4461 = vand.u32 %v336, 4294901760
        %v4462 = vsub.f32 %v336, %v4461
        %v4463 = vand.u32 %v4462, 4294901760
        %v4464 = vsub.f32 %v4462, %v4463
        %v4465 = vand.u32 %v4464, 4294901760
        %4466 = vmatpush1.msra.mxu0 %v4465
        %4467 = vmatprep.subr.mxu0 0.0
        %v4468 = vand.u32 %v337, 4294901760
        %v4469 = vsub.f32 %v337, %v4468
        %v4470 = vand.u32 %v4469, 4294901760
        %v4471 = vsub.f32 %v4469, %v4470
        %v4472 = vand.u32 %v4471, 4294901760
        %4473 = vmatpush1.msra.mxu0 %v4472
        %4474 = vmatprep.subr.mxu0 0.0
        %v4475 = vand.u32 %v338, 4294901760
        %v4476 = vsub.f32 %v338, %v4475
        %v4477 = vand.u32 %v4476, 4294901760
        %v4478 = vsub.f32 %v4476, %v4477
        %v4479 = vand.u32 %v4478, 4294901760
        %4480 = vmatpush1.msra.mxu0 %v4479
        %4481 = vmatprep.subr.mxu0 0.0
        %4482 = vmatpush1.msra.mxu0 0.0
        %4483 = vmatprep.subr.mxu0 0.0
        %4484 = vmatpush1.msra.mxu0 0.0
        %4485 = vmatprep.subr.mxu0 0.0
        %4486 = vmatpush1.msra.mxu0 0.0
        %4487 = vmatprep.subr.mxu0 0.0
        %4488 = vmatpush1.msra.mxu0 0.0
        %4489 = vmatprep.subr.mxu0 0.0
        %4490 = vmatpush1.msra.mxu0 0.0
        %4491 = vmatprep.subr.mxu0 0.0
        %4492 = vmatpush1.msra.mxu0 0.0
        %4493 = vmatprep.subr.mxu0 0.0
        %4494 = vmatpush1.msra.mxu0 0.0
        %4495 = vmatprep.subr.mxu0 0.0
        %4496 = vmatpush1.msra.mxu0 0.0
        %4497 = vmatprep.subr.mxu0 0.0
        %4498 = vmatpush1.msra.mxu0 0.0
        %4499 = vmatprep.subr.mxu0 0.0
        %4500 = vmatpush1.msra.mxu0 0.0
        %4501 = vmatprep.subr.mxu0 0.0
        %4502 = vmatpush1.msra.mxu0 0.0
        %4503 = vmatprep.subr.mxu0 0.0
        %4504 = vmatpush1.msra.mxu0 0.0
        %4505 = vmatprep.subr.mxu0 0.0
        %4506 = vmatpush1.msra.mxu0 0.0
        %4507 = vmatprep.subr.mxu0 0.0
        %4508 = vmatpush1.msra.mxu0 0.0
        %4509 = vmatprep.subr.mxu0 0.0
        %4510 = vmatpush1.msra.mxu0 0.0
        %4511 = vmatprep.subr.mxu0 0.0
        %4512 = vmatpush1.msra.mxu0 0.0
        %4513 = vmatprep.mubr.f32.mxu0 0.0
        %v4514 = vand.u32 %v4244, 4294901760
        %4515 = vmatmul.mubr.f32.gmra.mrb[0].mxu0 %v4514
        %v4516 = vpop.f32.mrb[0].mxu0
        %v4517 = vadd.f32 %v4336, %v4516
        %v4518 = vpop.f32.mrb[0].mxu0
        %4519 = vmatprep.mubr.f32.mxu0 0.0
        %v4520 = vand.u32 %v4245, 4294901760
        %4521 = vmatmul.mubr.f32.gmra.mrb[0].mxu0 %v4520
        %v4522 = vpop.f32.mrb[0].mxu0
        %v4523 = vadd.f32 %v4346, %v4522
        %v4524 = vpop.f32.mrb[0].mxu0
        %4525 = vmatprep.mubr.f32.mxu0 0.0
        %v4526 = vand.u32 %v4246, 4294901760
        %4527 = vmatmul.mubr.f32.gmra.mrb[0].mxu0 %v4526
        %v4528 = vpop.f32.mrb[0].mxu0
        %v4529 = vadd.f32 %v4356, %v4528
        %v4530 = vpop.f32.mrb[0].mxu0
        %4531 = vmatprep.mubr.f32.mxu0 0.0
        %v4532 = vand.u32 %v4247, 4294901760
        %4533 = vmatmul.mubr.f32.gmra.mrb[0].mxu0 %v4532
        %v4534 = vpop.f32.mrb[0].mxu0
        %v4535 = vadd.f32 %v4366, %v4534
        %v4536 = vpop.f32.mrb[0].mxu0
        %4537 = vdwg.mxu0
        %4538 = vmatprep.subr.mxu0 0.0
        %v4539 = vand.u32 %v323, 4294901760
        %v4540 = vsub.f32 %v323, %v4539
        %4541 = vmatpush1.msra.mxu0 %v4540
        %4542 = vmatprep.subr.mxu0 0.0
        %v4543 = vand.u32 %v324, 4294901760
        %v4544 = vsub.f32 %v324, %v4543
        %4545 = vmatpush1.msra.mxu0 %v4544
        %4546 = vmatprep.subr.mxu0 0.0
        %v4547 = vand.u32 %v325, 4294901760
        %v4548 = vsub.f32 %v325, %v4547
        %4549 = vmatpush1.msra.mxu0 %v4548
        %4550 = vmatprep.subr.mxu0 0.0
        %v4551 = vand.u32 %v326, 4294901760
        %v4552 = vsub.f32 %v326, %v4551
        %4553 = vmatpush1.msra.mxu0 %v4552
        %4554 = vmatprep.subr.mxu0 0.0
        %v4555 = vand.u32 %v327, 4294901760
        %v4556 = vsub.f32 %v327, %v4555
        %4557 = vmatpush1.msra.mxu0 %v4556
        %4558 = vmatprep.subr.mxu0 0.0
        %v4559 = vand.u32 %v328, 4294901760
        %v4560 = vsub.f32 %v328, %v4559
        %4561 = vmatpush1.msra.mxu0 %v4560
        %4562 = vmatprep.subr.mxu0 0.0
        %v4563 = vand.u32 %v329, 4294901760
        %v4564 = vsub.f32 %v329, %v4563
        %4565 = vmatpush1.msra.mxu0 %v4564
        %4566 = vmatprep.subr.mxu0 0.0
        %v4567 = vand.u32 %v330, 4294901760
        %v4568 = vsub.f32 %v330, %v4567
        %4569 = vmatpush1.msra.mxu0 %v4568
        %4570 = vmatprep.subr.mxu0 0.0
        %v4571 = vand.u32 %v331, 4294901760
        %v4572 = vsub.f32 %v331, %v4571
        %4573 = vmatpush1.msra.mxu0 %v4572
        %4574 = vmatprep.subr.mxu0 0.0
        %v4575 = vand.u32 %v332, 4294901760
        %v4576 = vsub.f32 %v332, %v4575
        %4577 = vmatpush1.msra.mxu0 %v4576
        %4578 = vmatprep.subr.mxu0 0.0
        %v4579 = vand.u32 %v333, 4294901760
        %v4580 = vsub.f32 %v333, %v4579
        %4581 = vmatpush1.msra.mxu0 %v4580
        %4582 = vmatprep.subr.mxu0 0.0
        %v4583 = vand.u32 %v334, 4294901760
        %v4584 = vsub.f32 %v334, %v4583
        %4585 = vmatpush1.msra.mxu0 %v4584
        %4586 = vmatprep.subr.mxu0 0.0
        %v4587 = vand.u32 %v335, 4294901760
        %v4588 = vsub.f32 %v335, %v4587
        %4589 = vmatpush1.msra.mxu0 %v4588
        %4590 = vmatprep.subr.mxu0 0.0
        %v4591 = vand.u32 %v336, 4294901760
        %v4592 = vsub.f32 %v336, %v4591
        %4593 = vmatpush1.msra.mxu0 %v4592
        %4594 = vmatprep.subr.mxu0 0.0
        %v4595 = vand.u32 %v337, 4294901760
        %v4596 = vsub.f32 %v337, %v4595
        %4597 = vmatpush1.msra.mxu0 %v4596
        %4598 = vmatprep.subr.mxu0 0.0
        %v4599 = vand.u32 %v338, 4294901760
        %v4600 = vsub.f32 %v338, %v4599
        %4601 = vmatpush1.msra.mxu0 %v4600
        %4602 = vmatprep.subr.mxu0 0.0
        %4603 = vmatpush1.msra.mxu0 0.0
        %4604 = vmatprep.subr.mxu0 0.0
        %4605 = vmatpush1.msra.mxu0 0.0
        %4606 = vmatprep.subr.mxu0 0.0
        %4607 = vmatpush1.msra.mxu0 0.0
        %4608 = vmatprep.subr.mxu0 0.0
        %4609 = vmatpush1.msra.mxu0 0.0
        %4610 = vmatprep.subr.mxu0 0.0
        %4611 = vmatpush1.msra.mxu0 0.0
        %4612 = vmatprep.subr.mxu0 0.0
        %4613 = vmatpush1.msra.mxu0 0.0
        %4614 = vmatprep.subr.mxu0 0.0
        %4615 = vmatpush1.msra.mxu0 0.0
        %4616 = vmatprep.subr.mxu0 0.0
        %4617 = vmatpush1.msra.mxu0 0.0
        %4618 = vmatprep.subr.mxu0 0.0
        %4619 = vmatpush1.msra.mxu0 0.0
        %4620 = vmatprep.subr.mxu0 0.0
        %4621 = vmatpush1.msra.mxu0 0.0
        %4622 = vmatprep.subr.mxu0 0.0
        %4623 = vmatpush1.msra.mxu0 0.0
        %4624 = vmatprep.subr.mxu0 0.0
        %4625 = vmatpush1.msra.mxu0 0.0
        %4626 = vmatprep.subr.mxu0 0.0
        %4627 = vmatpush1.msra.mxu0 0.0
        %4628 = vmatprep.subr.mxu0 0.0
        %4629 = vmatpush1.msra.mxu0 0.0
        %4630 = vmatprep.subr.mxu0 0.0
        %4631 = vmatpush1.msra.mxu0 0.0
        %4632 = vmatprep.subr.mxu0 0.0
        %4633 = vmatpush1.msra.mxu0 0.0
        %4634 = vmatprep.mubr.f32.mxu0 0.0
        %v4635 = vand.u32 %v4244, 4294901760
        %v4636 = vsub.f32 %v4244, %v4635
        %4637 = vmatmul.mubr.f32.gmra.mrb[0].mxu0 %v4636
        %v4638 = vpop.f32.mrb[0].mxu0
        %v4639 = vadd.f32 %v4517, %v4638
        %v4640 = vpop.f32.mrb[0].mxu0
        %4641 = vmatprep.mubr.f32.mxu0 0.0
        %v4642 = vand.u32 %v4245, 4294901760
        %v4643 = vsub.f32 %v4245, %v4642
        %4644 = vmatmul.mubr.f32.gmra.mrb[0].mxu0 %v4643
        %v4645 = vpop.f32.mrb[0].mxu0
        %v4646 = vadd.f32 %v4523, %v4645
        %v4647 = vpop.f32.mrb[0].mxu0
        %4648 = vmatprep.mubr.f32.mxu0 0.0
        %v4649 = vand.u32 %v4246, 4294901760
        %v4650 = vsub.f32 %v4246, %v4649
        %4651 = vmatmul.mubr.f32.gmra.mrb[0].mxu0 %v4650
        %v4652 = vpop.f32.mrb[0].mxu0
        %v4653 = vadd.f32 %v4529, %v4652
        %v4654 = vpop.f32.mrb[0].mxu0
        %4655 = vmatprep.mubr.f32.mxu0 0.0
        %v4656 = vand.u32 %v4247, 4294901760
        %v4657 = vsub.f32 %v4247, %v4656
        %4658 = vmatmul.mubr.f32.gmra.mrb[0].mxu0 %v4657
        %v4659 = vpop.f32.mrb[0].mxu0
        %v4660 = vadd.f32 %v4535, %v4659
        %v4661 = vpop.f32.mrb[0].mxu0
        %4662 = vdwg.mxu0
        %4663 = vmatprep.subr.mxu0 0.0
        %v4664 = vand.u32 %v323, 4294901760
        %4665 = vmatpush1.msra.mxu0 %v4664
        %4666 = vmatprep.subr.mxu0 0.0
        %v4667 = vand.u32 %v324, 4294901760
        %4668 = vmatpush1.msra.mxu0 %v4667
        %4669 = vmatprep.subr.mxu0 0.0
        %v4670 = vand.u32 %v325, 4294901760
        %4671 = vmatpush1.msra.mxu0 %v4670
        %4672 = vmatprep.subr.mxu0 0.0
        %v4673 = vand.u32 %v326, 4294901760
        %4674 = vmatpush1.msra.mxu0 %v4673
        %4675 = vmatprep.subr.mxu0 0.0
        %v4676 = vand.u32 %v327, 4294901760
        %4677 = vmatpush1.msra.mxu0 %v4676
        %4678 = vmatprep.subr.mxu0 0.0
        %v4679 = vand.u32 %v328, 4294901760
        %4680 = vmatpush1.msra.mxu0 %v4679
        %4681 = vmatprep.subr.mxu0 0.0
        %v4682 = vand.u32 %v329, 4294901760
        %4683 = vmatpush1.msra.mxu0 %v4682
        %4684 = vmatprep.subr.mxu0 0.0
        %v4685 = vand.u32 %v330, 4294901760
        %4686 = vmatpush1.msra.mxu0 %v4685
        %4687 = vmatprep.subr.mxu0 0.0
        %v4688 = vand.u32 %v331, 4294901760
        %4689 = vmatpush1.msra.mxu0 %v4688
        %4690 = vmatprep.subr.mxu0 0.0
        %v4691 = vand.u32 %v332, 4294901760
        %4692 = vmatpush1.msra.mxu0 %v4691
        %4693 = vmatprep.subr.mxu0 0.0
        %v4694 = vand.u32 %v333, 4294901760
        %4695 = vmatpush1.msra.mxu0 %v4694
        %4696 = vmatprep.subr.mxu0 0.0
        %v4697 = vand.u32 %v334, 4294901760
        %4698 = vmatpush1.msra.mxu0 %v4697
        %4699 = vmatprep.subr.mxu0 0.0
        %v4700 = vand.u32 %v335, 4294901760
        %4701 = vmatpush1.msra.mxu0 %v4700
        %4702 = vmatprep.subr.mxu0 0.0
        %v4703 = vand.u32 %v336, 4294901760
        %4704 = vmatpush1.msra.mxu0 %v4703
        %4705 = vmatprep.subr.mxu0 0.0
        %v4706 = vand.u32 %v337, 4294901760
        %4707 = vmatpush1.msra.mxu0 %v4706
        %4708 = vmatprep.subr.mxu0 0.0
        %v4709 = vand.u32 %v338, 4294901760
        %4710 = vmatpush1.msra.mxu0 %v4709
        %4711 = vmatprep.subr.mxu0 0.0
        %4712 = vmatpush1.msra.mxu0 0.0
        %4713 = vmatprep.subr.mxu0 0.0
        %4714 = vmatpush1.msra.mxu0 0.0
        %4715 = vmatprep.subr.mxu0 0.0
        %4716 = vmatpush1.msra.mxu0 0.0
        %4717 = vmatprep.subr.mxu0 0.0
        %4718 = vmatpush1.msra.mxu0 0.0
        %4719 = vmatprep.subr.mxu0 0.0
        %4720 = vmatpush1.msra.mxu0 0.0
        %4721 = vmatprep.subr.mxu0 0.0
        %4722 = vmatpush1.msra.mxu0 0.0
        %4723 = vmatprep.subr.mxu0 0.0
        %4724 = vmatpush1.msra.mxu0 0.0
        %4725 = vmatprep.subr.mxu0 0.0
        %4726 = vmatpush1.msra.mxu0 0.0
        %4727 = vmatprep.subr.mxu0 0.0
        %4728 = vmatpush1.msra.mxu0 0.0
        %4729 = vmatprep.subr.mxu0 0.0
        %4730 = vmatpush1.msra.mxu0 0.0
        %4731 = vmatprep.subr.mxu0 0.0
        %4732 = vmatpush1.msra.mxu0 0.0
        %4733 = vmatprep.subr.mxu0 0.0
        %4734 = vmatpush1.msra.mxu0 0.0
        %4735 = vmatprep.subr.mxu0 0.0
        %4736 = vmatpush1.msra.mxu0 0.0
        %4737 = vmatprep.subr.mxu0 0.0
        %4738 = vmatpush1.msra.mxu0 0.0
        %4739 = vmatprep.subr.mxu0 0.0
        %4740 = vmatpush1.msra.mxu0 0.0
        %4741 = vmatprep.subr.mxu0 0.0
        %4742 = vmatpush1.msra.mxu0 0.0
        %4743 = vmatprep.mubr.f32.mxu0 0.0
        %v4744 = vand.u32 %v4244, 4294901760
        %v4745 = vsub.f32 %v4244, %v4744
        %v4746 = vand.u32 %v4745, 4294901760
        %4747 = vmatmul.mubr.f32.gmra.mrb[0].mxu0 %v4746
        %v4748 = vpop.f32.mrb[0].mxu0
        %v4749 = vadd.f32 %v4639, %v4748
        %v4750 = vpop.f32.mrb[0].mxu0
        %4751 = vmatprep.mubr.f32.mxu0 0.0
        %v4752 = vand.u32 %v4245, 4294901760
        %v4753 = vsub.f32 %v4245, %v4752
        %v4754 = vand.u32 %v4753, 4294901760
        %4755 = vmatmul.mubr.f32.gmra.mrb[0].mxu0 %v4754
        %v4756 = vpop.f32.mrb[0].mxu0
        %v4757 = vadd.f32 %v4646, %v4756
        %v4758 = vpop.f32.mrb[0].mxu0
        %4759 = vmatprep.mubr.f32.mxu0 0.0
        %v4760 = vand.u32 %v4246, 4294901760
        %v4761 = vsub.f32 %v4246, %v4760
        %v4762 = vand.u32 %v4761, 4294901760
        %4763 = vmatmul.mubr.f32.gmra.mrb[0].mxu0 %v4762
        %v4764 = vpop.f32.mrb[0].mxu0
        %v4765 = vadd.f32 %v4653, %v4764
        %v4766 = vpop.f32.mrb[0].mxu0
        %4767 = vmatprep.mubr.f32.mxu0 0.0
        %v4768 = vand.u32 %v4247, 4294901760
        %v4769 = vsub.f32 %v4247, %v4768
        %v4770 = vand.u32 %v4769, 4294901760
        %4771 = vmatmul.mubr.f32.gmra.mrb[0].mxu0 %v4770
        %v4772 = vpop.f32.mrb[0].mxu0
        %v4773 = vadd.f32 %v4660, %v4772
        %v4774 = vpop.f32.mrb[0].mxu0
        %4775 = vdwg.mxu0
        %4776 = vmatprep.subr.mxu0 0.0
        %v4777 = vand.u32 %v323, 4294901760
        %v4778 = vsub.f32 %v323, %v4777
        %v4779 = vand.u32 %v4778, 4294901760
        %4780 = vmatpush1.msra.mxu0 %v4779
        %4781 = vmatprep.subr.mxu0 0.0
        %v4782 = vand.u32 %v324, 4294901760
        %v4783 = vsub.f32 %v324, %v4782
        %v4784 = vand.u32 %v4783, 4294901760
        %4785 = vmatpush1.msra.mxu0 %v4784
        %4786 = vmatprep.subr.mxu0 0.0
        %v4787 = vand.u32 %v325, 4294901760
        %v4788 = vsub.f32 %v325, %v4787
        %v4789 = vand.u32 %v4788, 4294901760
        %4790 = vmatpush1.msra.mxu0 %v4789
        %4791 = vmatprep.subr.mxu0 0.0
        %v4792 = vand.u32 %v326, 4294901760
        %v4793 = vsub.f32 %v326, %v4792
        %v4794 = vand.u32 %v4793, 4294901760
        %4795 = vmatpush1.msra.mxu0 %v4794
        %4796 = vmatprep.subr.mxu0 0.0
        %v4797 = vand.u32 %v327, 4294901760
        %v4798 = vsub.f32 %v327, %v4797
        %v4799 = vand.u32 %v4798, 4294901760
        %4800 = vmatpush1.msra.mxu0 %v4799
        %4801 = vmatprep.subr.mxu0 0.0
        %v4802 = vand.u32 %v328, 4294901760
        %v4803 = vsub.f32 %v328, %v4802
        %v4804 = vand.u32 %v4803, 4294901760
        %4805 = vmatpush1.msra.mxu0 %v4804
        %4806 = vmatprep.subr.mxu0 0.0
        %v4807 = vand.u32 %v329, 4294901760
        %v4808 = vsub.f32 %v329, %v4807
        %v4809 = vand.u32 %v4808, 4294901760
        %4810 = vmatpush1.msra.mxu0 %v4809
        %4811 = vmatprep.subr.mxu0 0.0
        %v4812 = vand.u32 %v330, 4294901760
        %v4813 = vsub.f32 %v330, %v4812
        %v4814 = vand.u32 %v4813, 4294901760
        %4815 = vmatpush1.msra.mxu0 %v4814
        %4816 = vmatprep.subr.mxu0 0.0
        %v4817 = vand.u32 %v331, 4294901760
        %v4818 = vsub.f32 %v331, %v4817
        %v4819 = vand.u32 %v4818, 4294901760
        %4820 = vmatpush1.msra.mxu0 %v4819
        %4821 = vmatprep.subr.mxu0 0.0
        %v4822 = vand.u32 %v332, 4294901760
        %v4823 = vsub.f32 %v332, %v4822
        %v4824 = vand.u32 %v4823, 4294901760
        %4825 = vmatpush1.msra.mxu0 %v4824
        %4826 = vmatprep.subr.mxu0 0.0
        %v4827 = vand.u32 %v333, 4294901760
        %v4828 = vsub.f32 %v333, %v4827
        %v4829 = vand.u32 %v4828, 4294901760
        %4830 = vmatpush1.msra.mxu0 %v4829
        %4831 = vmatprep.subr.mxu0 0.0
        %v4832 = vand.u32 %v334, 4294901760
        %v4833 = vsub.f32 %v334, %v4832
        %v4834 = vand.u32 %v4833, 4294901760
        %4835 = vmatpush1.msra.mxu0 %v4834
        %4836 = vmatprep.subr.mxu0 0.0
        %v4837 = vand.u32 %v335, 4294901760
        %v4838 = vsub.f32 %v335, %v4837
        %v4839 = vand.u32 %v4838, 4294901760
        %4840 = vmatpush1.msra.mxu0 %v4839
        %4841 = vmatprep.subr.mxu0 0.0
        %v4842 = vand.u32 %v336, 4294901760
        %v4843 = vsub.f32 %v336, %v4842
        %v4844 = vand.u32 %v4843, 4294901760
        %4845 = vmatpush1.msra.mxu0 %v4844
        %4846 = vmatprep.subr.mxu0 0.0
        %v4847 = vand.u32 %v337, 4294901760
        %v4848 = vsub.f32 %v337, %v4847
        %v4849 = vand.u32 %v4848, 4294901760
        %4850 = vmatpush1.msra.mxu0 %v4849
        %4851 = vmatprep.subr.mxu0 0.0
        %v4852 = vand.u32 %v338, 4294901760
        %v4853 = vsub.f32 %v338, %v4852
        %v4854 = vand.u32 %v4853, 4294901760
        %4855 = vmatpush1.msra.mxu0 %v4854
        %4856 = vmatprep.subr.mxu0 0.0
        %4857 = vmatpush1.msra.mxu0 0.0
        %4858 = vmatprep.subr.mxu0 0.0
        %4859 = vmatpush1.msra.mxu0 0.0
        %4860 = vmatprep.subr.mxu0 0.0
        %4861 = vmatpush1.msra.mxu0 0.0
        %4862 = vmatprep.subr.mxu0 0.0
        %4863 = vmatpush1.msra.mxu0 0.0
        %4864 = vmatprep.subr.mxu0 0.0
        %4865 = vmatpush1.msra.mxu0 0.0
        %4866 = vmatprep.subr.mxu0 0.0
        %4867 = vmatpush1.msra.mxu0 0.0
        %4868 = vmatprep.subr.mxu0 0.0
        %4869 = vmatpush1.msra.mxu0 0.0
        %4870 = vmatprep.subr.mxu0 0.0
        %4871 = vmatpush1.msra.mxu0 0.0
        %4872 = vmatprep.subr.mxu0 0.0
        %4873 = vmatpush1.msra.mxu0 0.0
        %4874 = vmatprep.subr.mxu0 0.0
        %4875 = vmatpush1.msra.mxu0 0.0
        %4876 = vmatprep.subr.mxu0 0.0
        %4877 = vmatpush1.msra.mxu0 0.0
        %4878 = vmatprep.subr.mxu0 0.0
        %4879 = vmatpush1.msra.mxu0 0.0
        %4880 = vmatprep.subr.mxu0 0.0
        %4881 = vmatpush1.msra.mxu0 0.0
        %4882 = vmatprep.subr.mxu0 0.0
        %4883 = vmatpush1.msra.mxu0 0.0
        %4884 = vmatprep.subr.mxu0 0.0
        %4885 = vmatpush1.msra.mxu0 0.0
        %4886 = vmatprep.subr.mxu0 0.0
        %4887 = vmatpush1.msra.mxu0 0.0
        %4888 = vmatprep.mubr.f32.mxu0 0.0
        %v4889 = vand.u32 %v4244, 4294901760
        %4890 = vmatmul.mubr.f32.gmra.mrb[0].mxu0 %v4889
        %v4891 = vpop.f32.mrb[0].mxu0
        %v4892 = vadd.f32 %v4749, %v4891
        %v4893 = vpop.f32.mrb[0].mxu0
        %4894 = vmatprep.mubr.f32.mxu0 0.0
        %v4895 = vand.u32 %v4245, 4294901760
        %4896 = vmatmul.mubr.f32.gmra.mrb[0].mxu0 %v4895
        %v4897 = vpop.f32.mrb[0].mxu0
        %v4898 = vadd.f32 %v4757, %v4897
        %v4899 = vpop.f32.mrb[0].mxu0
        %4900 = vmatprep.mubr.f32.mxu0 0.0
        %v4901 = vand.u32 %v4246, 4294901760
        %4902 = vmatmul.mubr.f32.gmra.mrb[0].mxu0 %v4901
        %v4903 = vpop.f32.mrb[0].mxu0
        %v4904 = vadd.f32 %v4765, %v4903
        %v4905 = vpop.f32.mrb[0].mxu0
        %4906 = vmatprep.mubr.f32.mxu0 0.0
        %v4907 = vand.u32 %v4247, 4294901760
        %4908 = vmatmul.mubr.f32.gmra.mrb[0].mxu0 %v4907
        %v4909 = vpop.f32.mrb[0].mxu0
        %v4910 = vadd.f32 %v4773, %v4909
        %v4911 = vpop.f32.mrb[0].mxu0
        %4912 = vdwg.mxu0
        %4913 = vmatprep.subr.mxu0 0.0
        %v4914 = vand.u32 %v323, 4294901760
        %4915 = vmatpush1.msra.mxu0 %v4914
        %4916 = vmatprep.subr.mxu0 0.0
        %v4917 = vand.u32 %v324, 4294901760
        %4918 = vmatpush1.msra.mxu0 %v4917
        %4919 = vmatprep.subr.mxu0 0.0
        %v4920 = vand.u32 %v325, 4294901760
        %4921 = vmatpush1.msra.mxu0 %v4920
        %4922 = vmatprep.subr.mxu0 0.0
        %v4923 = vand.u32 %v326, 4294901760
        %4924 = vmatpush1.msra.mxu0 %v4923
        %4925 = vmatprep.subr.mxu0 0.0
        %v4926 = vand.u32 %v327, 4294901760
        %4927 = vmatpush1.msra.mxu0 %v4926
        %4928 = vmatprep.subr.mxu0 0.0
        %v4929 = vand.u32 %v328, 4294901760
        %4930 = vmatpush1.msra.mxu0 %v4929
        %4931 = vmatprep.subr.mxu0 0.0
        %v4932 = vand.u32 %v329, 4294901760
        %4933 = vmatpush1.msra.mxu0 %v4932
        %4934 = vmatprep.subr.mxu0 0.0
        %v4935 = vand.u32 %v330, 4294901760
        %4936 = vmatpush1.msra.mxu0 %v4935
        %4937 = vmatprep.subr.mxu0 0.0
        %v4938 = vand.u32 %v331, 4294901760
        %4939 = vmatpush1.msra.mxu0 %v4938
        %4940 = vmatprep.subr.mxu0 0.0
        %v4941 = vand.u32 %v332, 4294901760
        %4942 = vmatpush1.msra.mxu0 %v4941
        %4943 = vmatprep.subr.mxu0 0.0
        %v4944 = vand.u32 %v333, 4294901760
        %4945 = vmatpush1.msra.mxu0 %v4944
        %4946 = vmatprep.subr.mxu0 0.0
        %v4947 = vand.u32 %v334, 4294901760
        %4948 = vmatpush1.msra.mxu0 %v4947
        %4949 = vmatprep.subr.mxu0 0.0
        %v4950 = vand.u32 %v335, 4294901760
        %4951 = vmatpush1.msra.mxu0 %v4950
        %4952 = vmatprep.subr.mxu0 0.0
        %v4953 = vand.u32 %v336, 4294901760
        %4954 = vmatpush1.msra.mxu0 %v4953
        %4955 = vmatprep.subr.mxu0 0.0
        %v4956 = vand.u32 %v337, 4294901760
        %4957 = vmatpush1.msra.mxu0 %v4956
        %4958 = vmatprep.subr.mxu0 0.0
        %v4959 = vand.u32 %v338, 4294901760
        %4960 = vmatpush1.msra.mxu0 %v4959
        %4961 = vmatprep.subr.mxu0 0.0
        %4962 = vmatpush1.msra.mxu0 0.0
        %4963 = vmatprep.subr.mxu0 0.0
        %4964 = vmatpush1.msra.mxu0 0.0
        %4965 = vmatprep.subr.mxu0 0.0
        %4966 = vmatpush1.msra.mxu0 0.0
        %4967 = vmatprep.subr.mxu0 0.0
        %4968 = vmatpush1.msra.mxu0 0.0
        %4969 = vmatprep.subr.mxu0 0.0
        %4970 = vmatpush1.msra.mxu0 0.0
        %4971 = vmatprep.subr.mxu0 0.0
        %4972 = vmatpush1.msra.mxu0 0.0
        %4973 = vmatprep.subr.mxu0 0.0
        %4974 = vmatpush1.msra.mxu0 0.0
        %4975 = vmatprep.subr.mxu0 0.0
        %4976 = vmatpush1.msra.mxu0 0.0
        %4977 = vmatprep.subr.mxu0 0.0
        %4978 = vmatpush1.msra.mxu0 0.0
        %4979 = vmatprep.subr.mxu0 0.0
        %4980 = vmatpush1.msra.mxu0 0.0
        %4981 = vmatprep.subr.mxu0 0.0
        %4982 = vmatpush1.msra.mxu0 0.0
        %4983 = vmatprep.subr.mxu0 0.0
        %4984 = vmatpush1.msra.mxu0 0.0
        %4985 = vmatprep.subr.mxu0 0.0
        %4986 = vmatpush1.msra.mxu0 0.0
        %4987 = vmatprep.subr.mxu0 0.0
        %4988 = vmatpush1.msra.mxu0 0.0
        %4989 = vmatprep.subr.mxu0 0.0
        %4990 = vmatpush1.msra.mxu0 0.0
        %4991 = vmatprep.subr.mxu0 0.0
        %4992 = vmatpush1.msra.mxu0 0.0
        %4993 = vmatprep.mubr.f32.mxu0 0.0
        %v4994 = vand.u32 %v4244, 4294901760
        %4995 = vmatmul.mubr.f32.gmra.mrb[0].mxu0 %v4994
        %v4996 = vpop.f32.mrb[0].mxu0
        %v4997 = vadd.f32 %v4892, %v4996
        %v4998 = vpop.f32.mrb[0].mxu0
        %4999 = vmatprep.mubr.f32.mxu0 0.0
        %v5000 = vand.u32 %v4245, 4294901760
        %5001 = vmatmul.mubr.f32.gmra.mrb[0].mxu0 %v5000
        %v5002 = vpop.f32.mrb[0].mxu0
        %v5003 = vadd.f32 %v4898, %v5002
        %v5004 = vpop.f32.mrb[0].mxu0
        %5005 = vmatprep.mubr.f32.mxu0 0.0
        %v5006 = vand.u32 %v4246, 4294901760
        %5007 = vmatmul.mubr.f32.gmra.mrb[0].mxu0 %v5006
        %v5008 = vpop.f32.mrb[0].mxu0
        %v5009 = vadd.f32 %v4904, %v5008
        %v5010 = vpop.f32.mrb[0].mxu0
        %5011 = vmatprep.mubr.f32.mxu0 0.0
        %v5012 = vand.u32 %v4247, 4294901760
        %5013 = vmatmul.mubr.f32.gmra.mrb[0].mxu0 %v5012
        %v5014 = vpop.f32.mrb[0].mxu0
        %v5015 = vadd.f32 %v4910, %v5014
        %v5016 = vpop.f32.mrb[0].mxu0
        %5017 = vdwg.mxu0
        %5018 = vmatprep.subr.mxu0 0.0
        %v5019 = vand.u32 %v4997, 4294901760
        %5020 = vmatpush1.msra.mxu0 %v5019
        %5021 = vmatprep.subr.mxu0 0.0
        %v5022 = vand.u32 %v5003, 4294901760
        %5023 = vmatpush1.msra.mxu0 %v5022
        %5024 = vmatprep.subr.mxu0 0.0
        %v5025 = vand.u32 %v5009, 4294901760
        %5026 = vmatpush1.msra.mxu0 %v5025
        %5027 = vmatprep.subr.mxu0 0.0
        %v5028 = vand.u32 %v5015, 4294901760
        %5029 = vmatpush1.msra.mxu0 %v5028
        %5030 = vmatprep.subr.mxu0 0.0
        %5031 = vmatpush1.msra.mxu0 0.0
        %5032 = vmatprep.subr.mxu0 0.0
        %5033 = vmatpush1.msra.mxu0 0.0
        %5034 = vmatprep.subr.mxu0 0.0
        %5035 = vmatpush1.msra.mxu0 0.0
        %5036 = vmatprep.subr.mxu0 0.0
        %5037 = vmatpush1.msra.mxu0 0.0
        %5038 = vmatprep.subr.mxu0 0.0
        %5039 = vmatpush1.msra.mxu0 0.0
        %5040 = vmatprep.subr.mxu0 0.0
        %5041 = vmatpush1.msra.mxu0 0.0
        %5042 = vmatprep.subr.mxu0 0.0
        %5043 = vmatpush1.msra.mxu0 0.0
        %5044 = vmatprep.subr.mxu0 0.0
        %5045 = vmatpush1.msra.mxu0 0.0
        %5046 = vmatprep.subr.mxu0 0.0
        %5047 = vmatpush1.msra.mxu0 0.0
        %5048 = vmatprep.subr.mxu0 0.0
        %5049 = vmatpush1.msra.mxu0 0.0
        %5050 = vmatprep.subr.mxu0 0.0
        %5051 = vmatpush1.msra.mxu0 0.0
        %5052 = vmatprep.subr.mxu0 0.0
        %5053 = vmatpush1.msra.mxu0 0.0
        %5054 = vmatprep.subr.mxu0 0.0
        %5055 = vmatpush1.msra.mxu0 0.0
        %5056 = vmatprep.subr.mxu0 0.0
        %5057 = vmatpush1.msra.mxu0 0.0
        %5058 = vmatprep.subr.mxu0 0.0
        %5059 = vmatpush1.msra.mxu0 0.0
        %5060 = vmatprep.subr.mxu0 0.0
        %5061 = vmatpush1.msra.mxu0 0.0
        %5062 = vmatprep.subr.mxu0 0.0
        %5063 = vmatpush1.msra.mxu0 0.0
        %5064 = vmatprep.subr.mxu0 0.0
        %5065 = vmatpush1.msra.mxu0 0.0
        %5066 = vmatprep.subr.mxu0 0.0
        %5067 = vmatpush1.msra.mxu0 0.0
        %5068 = vmatprep.subr.mxu0 0.0
        %5069 = vmatpush1.msra.mxu0 0.0
        %5070 = vmatprep.subr.mxu0 0.0
        %5071 = vmatpush1.msra.mxu0 0.0
        %5072 = vmatprep.subr.mxu0 0.0
        %5073 = vmatpush1.msra.mxu0 0.0
        %5074 = vmatprep.subr.mxu0 0.0
        %5075 = vmatpush1.msra.mxu0 0.0
        %5076 = vmatprep.subr.mxu0 0.0
        %5077 = vmatpush1.msra.mxu0 0.0
        %5078 = vmatprep.subr.mxu0 0.0
        %5079 = vmatpush1.msra.mxu0 0.0
        %5080 = vmatprep.subr.mxu0 0.0
        %5081 = vmatpush1.msra.mxu0 0.0
        %5082 = vmatprep.subr.mxu0 0.0
        %5083 = vmatpush1.msra.mxu0 0.0
        %5084 = vmatprep.subr.mxu0 0.0
        %5085 = vmatpush1.msra.mxu0 0.0
        %5086 = vmatprep.mubr.f32.mxu0 0.0
        %v5087 = vand.u32 %v1111, 4294901760
        %v5088 = vsub.f32 %v1111, %v5087
        %v5089 = vand.u32 %v5088, 4294901760
        %v5090 = vsub.f32 %v5088, %v5089
        %v5091 = vand.u32 %v5090, 4294901760
        %5092 = vmatmul.mubr.f32.gmra.mrb[0].mxu0 %v5091
        %v5093 = vpop.f32.mrb[0].mxu0
        %v5094 = vadd.f32 0.0, %v5093
        %v5095 = vpop.f32.mrb[0].mxu0
        %5096 = vmatprep.mubr.f32.mxu0 0.0
        %v5097 = vand.u32 %v1114, 4294901760
        %v5098 = vsub.f32 %v1114, %v5097
        %v5099 = vand.u32 %v5098, 4294901760
        %v5100 = vsub.f32 %v5098, %v5099
        %v5101 = vand.u32 %v5100, 4294901760
        %5102 = vmatmul.mubr.f32.gmra.mrb[0].mxu0 %v5101
        %v5103 = vpop.f32.mrb[0].mxu0
        %v5104 = vadd.f32 0.0, %v5103
        %v5105 = vpop.f32.mrb[0].mxu0
        %5106 = vdwg.mxu0
        %5107 = vmatprep.subr.mxu0 0.0
        %v5108 = vand.u32 %v4997, 4294901760
        %v5109 = vsub.f32 %v4997, %v5108
        %v5110 = vand.u32 %v5109, 4294901760
        %v5111 = vsub.f32 %v5109, %v5110
        %v5112 = vand.u32 %v5111, 4294901760
        %5113 = vmatpush1.msra.mxu0 %v5112
        %5114 = vmatprep.subr.mxu0 0.0
        %v5115 = vand.u32 %v5003, 4294901760
        %v5116 = vsub.f32 %v5003, %v5115
        %v5117 = vand.u32 %v5116, 4294901760
        %v5118 = vsub.f32 %v5116, %v5117
        %v5119 = vand.u32 %v5118, 4294901760
        %5120 = vmatpush1.msra.mxu0 %v5119
        %5121 = vmatprep.subr.mxu0 0.0
        %v5122 = vand.u32 %v5009, 4294901760
        %v5123 = vsub.f32 %v5009, %v5122
        %v5124 = vand.u32 %v5123, 4294901760
        %v5125 = vsub.f32 %v5123, %v5124
        %v5126 = vand.u32 %v5125, 4294901760
        %5127 = vmatpush1.msra.mxu0 %v5126
        %5128 = vmatprep.subr.mxu0 0.0
        %v5129 = vand.u32 %v5015, 4294901760
        %v5130 = vsub.f32 %v5015, %v5129
        %v5131 = vand.u32 %v5130, 4294901760
        %v5132 = vsub.f32 %v5130, %v5131
        %v5133 = vand.u32 %v5132, 4294901760
        %5134 = vmatpush1.msra.mxu0 %v5133
        %5135 = vmatprep.subr.mxu0 0.0
        %5136 = vmatpush1.msra.mxu0 0.0
        %5137 = vmatprep.subr.mxu0 0.0
        %5138 = vmatpush1.msra.mxu0 0.0
        %5139 = vmatprep.subr.mxu0 0.0
        %5140 = vmatpush1.msra.mxu0 0.0
        %5141 = vmatprep.subr.mxu0 0.0
        %5142 = vmatpush1.msra.mxu0 0.0
        %5143 = vmatprep.subr.mxu0 0.0
        %5144 = vmatpush1.msra.mxu0 0.0
        %5145 = vmatprep.subr.mxu0 0.0
        %5146 = vmatpush1.msra.mxu0 0.0
        %5147 = vmatprep.subr.mxu0 0.0
        %5148 = vmatpush1.msra.mxu0 0.0
        %5149 = vmatprep.subr.mxu0 0.0
        %5150 = vmatpush1.msra.mxu0 0.0
        %5151 = vmatprep.subr.mxu0 0.0
        %5152 = vmatpush1.msra.mxu0 0.0
        %5153 = vmatprep.subr.mxu0 0.0
        %5154 = vmatpush1.msra.mxu0 0.0
        %5155 = vmatprep.subr.mxu0 0.0
        %5156 = vmatpush1.msra.mxu0 0.0
        %5157 = vmatprep.subr.mxu0 0.0
        %5158 = vmatpush1.msra.mxu0 0.0
        %5159 = vmatprep.subr.mxu0 0.0
        %5160 = vmatpush1.msra.mxu0 0.0
        %5161 = vmatprep.subr.mxu0 0.0
        %5162 = vmatpush1.msra.mxu0 0.0
        %5163 = vmatprep.subr.mxu0 0.0
        %5164 = vmatpush1.msra.mxu0 0.0
        %5165 = vmatprep.subr.mxu0 0.0
        %5166 = vmatpush1.msra.mxu0 0.0
        %5167 = vmatprep.subr.mxu0 0.0
        %5168 = vmatpush1.msra.mxu0 0.0
        %5169 = vmatprep.subr.mxu0 0.0
        %5170 = vmatpush1.msra.mxu0 0.0
        %5171 = vmatprep.subr.mxu0 0.0
        %5172 = vmatpush1.msra.mxu0 0.0
        %5173 = vmatprep.subr.mxu0 0.0
        %5174 = vmatpush1.msra.mxu0 0.0
        %5175 = vmatprep.subr.mxu0 0.0
        %5176 = vmatpush1.msra.mxu0 0.0
        %5177 = vmatprep.subr.mxu0 0.0
        %5178 = vmatpush1.msra.mxu0 0.0
        %5179 = vmatprep.subr.mxu0 0.0
        %5180 = vmatpush1.msra.mxu0 0.0
        %5181 = vmatprep.subr.mxu0 0.0
        %5182 = vmatpush1.msra.mxu0 0.0
        %5183 = vmatprep.subr.mxu0 0.0
        %5184 = vmatpush1.msra.mxu0 0.0
        %5185 = vmatprep.subr.mxu0 0.0
        %5186 = vmatpush1.msra.mxu0 0.0
        %5187 = vmatprep.subr.mxu0 0.0
        %5188 = vmatpush1.msra.mxu0 0.0
        %5189 = vmatprep.subr.mxu0 0.0
        %5190 = vmatpush1.msra.mxu0 0.0
        %5191 = vmatprep.mubr.f32.mxu0 0.0
        %v5192 = vand.u32 %v1111, 4294901760
        %5193 = vmatmul.mubr.f32.gmra.mrb[0].mxu0 %v5192
        %v5194 = vpop.f32.mrb[0].mxu0
        %v5195 = vadd.f32 %v5094, %v5194
        %v5196 = vpop.f32.mrb[0].mxu0
        %5197 = vmatprep.mubr.f32.mxu0 0.0
        %v5198 = vand.u32 %v1114, 4294901760
        %5199 = vmatmul.mubr.f32.gmra.mrb[0].mxu0 %v5198
        %v5200 = vpop.f32.mrb[0].mxu0
        %v5201 = vadd.f32 %v5104, %v5200
        %v5202 = vpop.f32.mrb[0].mxu0
        %5203 = vdwg.mxu0
        %5204 = vmatprep.subr.mxu0 0.0
        %v5205 = vand.u32 %v4997, 4294901760
        %v5206 = vsub.f32 %v4997, %v5205
        %5207 = vmatpush1.msra.mxu0 %v5206
        %5208 = vmatprep.subr.mxu0 0.0
        %v5209 = vand.u32 %v5003, 4294901760
        %v5210 = vsub.f32 %v5003, %v5209
        %5211 = vmatpush1.msra.mxu0 %v5210
        %5212 = vmatprep.subr.mxu0 0.0
        %v5213 = vand.u32 %v5009, 4294901760
        %v5214 = vsub.f32 %v5009, %v5213
        %5215 = vmatpush1.msra.mxu0 %v5214
        %5216 = vmatprep.subr.mxu0 0.0
        %v5217 = vand.u32 %v5015, 4294901760
        %v5218 = vsub.f32 %v5015, %v5217
        %5219 = vmatpush1.msra.mxu0 %v5218
        %5220 = vmatprep.subr.mxu0 0.0
        %5221 = vmatpush1.msra.mxu0 0.0
        %5222 = vmatprep.subr.mxu0 0.0
        %5223 = vmatpush1.msra.mxu0 0.0
        %5224 = vmatprep.subr.mxu0 0.0
        %5225 = vmatpush1.msra.mxu0 0.0
        %5226 = vmatprep.subr.mxu0 0.0
        %5227 = vmatpush1.msra.mxu0 0.0
        %5228 = vmatprep.subr.mxu0 0.0
        %5229 = vmatpush1.msra.mxu0 0.0
        %5230 = vmatprep.subr.mxu0 0.0
        %5231 = vmatpush1.msra.mxu0 0.0
        %5232 = vmatprep.subr.mxu0 0.0
        %5233 = vmatpush1.msra.mxu0 0.0
        %5234 = vmatprep.subr.mxu0 0.0
        %5235 = vmatpush1.msra.mxu0 0.0
        %5236 = vmatprep.subr.mxu0 0.0
        %5237 = vmatpush1.msra.mxu0 0.0
        %5238 = vmatprep.subr.mxu0 0.0
        %5239 = vmatpush1.msra.mxu0 0.0
        %5240 = vmatprep.subr.mxu0 0.0
        %5241 = vmatpush1.msra.mxu0 0.0
        %5242 = vmatprep.subr.mxu0 0.0
        %5243 = vmatpush1.msra.mxu0 0.0
        %5244 = vmatprep.subr.mxu0 0.0
        %5245 = vmatpush1.msra.mxu0 0.0
        %5246 = vmatprep.subr.mxu0 0.0
        %5247 = vmatpush1.msra.mxu0 0.0
        %5248 = vmatprep.subr.mxu0 0.0
        %5249 = vmatpush1.msra.mxu0 0.0
        %5250 = vmatprep.subr.mxu0 0.0
        %5251 = vmatpush1.msra.mxu0 0.0
        %5252 = vmatprep.subr.mxu0 0.0
        %5253 = vmatpush1.msra.mxu0 0.0
        %5254 = vmatprep.subr.mxu0 0.0
        %5255 = vmatpush1.msra.mxu0 0.0
        %5256 = vmatprep.subr.mxu0 0.0
        %5257 = vmatpush1.msra.mxu0 0.0
        %5258 = vmatprep.subr.mxu0 0.0
        %5259 = vmatpush1.msra.mxu0 0.0
        %5260 = vmatprep.subr.mxu0 0.0
        %5261 = vmatpush1.msra.mxu0 0.0
        %5262 = vmatprep.subr.mxu0 0.0
        %5263 = vmatpush1.msra.mxu0 0.0
        %5264 = vmatprep.subr.mxu0 0.0
        %5265 = vmatpush1.msra.mxu0 0.0
        %5266 = vmatprep.subr.mxu0 0.0
        %5267 = vmatpush1.msra.mxu0 0.0
        %5268 = vmatprep.subr.mxu0 0.0
        %5269 = vmatpush1.msra.mxu0 0.0
        %5270 = vmatprep.subr.mxu0 0.0
        %5271 = vmatpush1.msra.mxu0 0.0
        %5272 = vmatprep.subr.mxu0 0.0
        %5273 = vmatpush1.msra.mxu0 0.0
        %5274 = vmatprep.subr.mxu0 0.0
        %5275 = vmatpush1.msra.mxu0 0.0
        %5276 = vmatprep.mubr.f32.mxu0 0.0
        %v5277 = vand.u32 %v1111, 4294901760
        %v5278 = vsub.f32 %v1111, %v5277
        %5279 = vmatmul.mubr.f32.gmra.mrb[0].mxu0 %v5278
        %v5280 = vpop.f32.mrb[0].mxu0
        %v5281 = vadd.f32 %v5195, %v5280
        %v5282 = vpop.f32.mrb[0].mxu0
        %5283 = vmatprep.mubr.f32.mxu0 0.0
        %v5284 = vand.u32 %v1114, 4294901760
        %v5285 = vsub.f32 %v1114, %v5284
        %5286 = vmatmul.mubr.f32.gmra.mrb[0].mxu0 %v5285
        %v5287 = vpop.f32.mrb[0].mxu0
        %v5288 = vadd.f32 %v5201, %v5287
        %v5289 = vpop.f32.mrb[0].mxu0
        %5290 = vdwg.mxu0
        %5291 = vmatprep.subr.mxu0 0.0
        %v5292 = vand.u32 %v4997, 4294901760
        %5293 = vmatpush1.msra.mxu0 %v5292
        %5294 = vmatprep.subr.mxu0 0.0
        %v5295 = vand.u32 %v5003, 4294901760
        %5296 = vmatpush1.msra.mxu0 %v5295
        %5297 = vmatprep.subr.mxu0 0.0
        %v5298 = vand.u32 %v5009, 4294901760
        %5299 = vmatpush1.msra.mxu0 %v5298
        %5300 = vmatprep.subr.mxu0 0.0
        %v5301 = vand.u32 %v5015, 4294901760
        %5302 = vmatpush1.msra.mxu0 %v5301
        %5303 = vmatprep.subr.mxu0 0.0
        %5304 = vmatpush1.msra.mxu0 0.0
        %5305 = vmatprep.subr.mxu0 0.0
        %5306 = vmatpush1.msra.mxu0 0.0
        %5307 = vmatprep.subr.mxu0 0.0
        %5308 = vmatpush1.msra.mxu0 0.0
        %5309 = vmatprep.subr.mxu0 0.0
        %5310 = vmatpush1.msra.mxu0 0.0
        %5311 = vmatprep.subr.mxu0 0.0
        %5312 = vmatpush1.msra.mxu0 0.0
        %5313 = vmatprep.subr.mxu0 0.0
        %5314 = vmatpush1.msra.mxu0 0.0
        %5315 = vmatprep.subr.mxu0 0.0
        %5316 = vmatpush1.msra.mxu0 0.0
        %5317 = vmatprep.subr.mxu0 0.0
        %5318 = vmatpush1.msra.mxu0 0.0
        %5319 = vmatprep.subr.mxu0 0.0
        %5320 = vmatpush1.msra.mxu0 0.0
        %5321 = vmatprep.subr.mxu0 0.0
        %5322 = vmatpush1.msra.mxu0 0.0
        %5323 = vmatprep.subr.mxu0 0.0
        %5324 = vmatpush1.msra.mxu0 0.0
        %5325 = vmatprep.subr.mxu0 0.0
        %5326 = vmatpush1.msra.mxu0 0.0
        %5327 = vmatprep.subr.mxu0 0.0
        %5328 = vmatpush1.msra.mxu0 0.0
        %5329 = vmatprep.subr.mxu0 0.0
        %5330 = vmatpush1.msra.mxu0 0.0
        %5331 = vmatprep.subr.mxu0 0.0
        %5332 = vmatpush1.msra.mxu0 0.0
        %5333 = vmatprep.subr.mxu0 0.0
        %5334 = vmatpush1.msra.mxu0 0.0
        %5335 = vmatprep.subr.mxu0 0.0
        %5336 = vmatpush1.msra.mxu0 0.0
        %5337 = vmatprep.subr.mxu0 0.0
        %5338 = vmatpush1.msra.mxu0 0.0
        %5339 = vmatprep.subr.mxu0 0.0
        %5340 = vmatpush1.msra.mxu0 0.0
        %5341 = vmatprep.subr.mxu0 0.0
        %5342 = vmatpush1.msra.mxu0 0.0
        %5343 = vmatprep.subr.mxu0 0.0
        %5344 = vmatpush1.msra.mxu0 0.0
        %5345 = vmatprep.subr.mxu0 0.0
        %5346 = vmatpush1.msra.mxu0 0.0
        %5347 = vmatprep.subr.mxu0 0.0
        %5348 = vmatpush1.msra.mxu0 0.0
        %5349 = vmatprep.subr.mxu0 0.0
        %5350 = vmatpush1.msra.mxu0 0.0
        %5351 = vmatprep.subr.mxu0 0.0
        %5352 = vmatpush1.msra.mxu0 0.0
        %5353 = vmatprep.subr.mxu0 0.0
        %5354 = vmatpush1.msra.mxu0 0.0
        %5355 = vmatprep.subr.mxu0 0.0
        %5356 = vmatpush1.msra.mxu0 0.0
        %5357 = vmatprep.subr.mxu0 0.0
        %5358 = vmatpush1.msra.mxu0 0.0
        %5359 = vmatprep.mubr.f32.mxu0 0.0
        %v5360 = vand.u32 %v1111, 4294901760
        %v5361 = vsub.f32 %v1111, %v5360
        %v5362 = vand.u32 %v5361, 4294901760
        %5363 = vmatmul.mubr.f32.gmra.mrb[0].mxu0 %v5362
        %v5364 = vpop.f32.mrb[0].mxu0
        %v5365 = vadd.f32 %v5281, %v5364
        %v5366 = vpop.f32.mrb[0].mxu0
        %5367 = vmatprep.mubr.f32.mxu0 0.0
        %v5368 = vand.u32 %v1114, 4294901760
        %v5369 = vsub.f32 %v1114, %v5368
        %v5370 = vand.u32 %v5369, 4294901760
        %5371 = vmatmul.mubr.f32.gmra.mrb[0].mxu0 %v5370
        %v5372 = vpop.f32.mrb[0].mxu0
        %v5373 = vadd.f32 %v5288, %v5372
        %v5374 = vpop.f32.mrb[0].mxu0
        %5375 = vdwg.mxu0
        %5376 = vmatprep.subr.mxu0 0.0
        %v5377 = vand.u32 %v4997, 4294901760
        %v5378 = vsub.f32 %v4997, %v5377
        %v5379 = vand.u32 %v5378, 4294901760
        %5380 = vmatpush1.msra.mxu0 %v5379
        %5381 = vmatprep.subr.mxu0 0.0
        %v5382 = vand.u32 %v5003, 4294901760
        %v5383 = vsub.f32 %v5003, %v5382
        %v5384 = vand.u32 %v5383, 4294901760
        %5385 = vmatpush1.msra.mxu0 %v5384
        %5386 = vmatprep.subr.mxu0 0.0
        %v5387 = vand.u32 %v5009, 4294901760
        %v5388 = vsub.f32 %v5009, %v5387
        %v5389 = vand.u32 %v5388, 4294901760
        %5390 = vmatpush1.msra.mxu0 %v5389
        %5391 = vmatprep.subr.mxu0 0.0
        %v5392 = vand.u32 %v5015, 4294901760
        %v5393 = vsub.f32 %v5015, %v5392
        %v5394 = vand.u32 %v5393, 4294901760
        %5395 = vmatpush1.msra.mxu0 %v5394
        %5396 = vmatprep.subr.mxu0 0.0
        %5397 = vmatpush1.msra.mxu0 0.0
        %5398 = vmatprep.subr.mxu0 0.0
        %5399 = vmatpush1.msra.mxu0 0.0
        %5400 = vmatprep.subr.mxu0 0.0
        %5401 = vmatpush1.msra.mxu0 0.0
        %5402 = vmatprep.subr.mxu0 0.0
        %5403 = vmatpush1.msra.mxu0 0.0
        %5404 = vmatprep.subr.mxu0 0.0
        %5405 = vmatpush1.msra.mxu0 0.0
        %5406 = vmatprep.subr.mxu0 0.0
        %5407 = vmatpush1.msra.mxu0 0.0
        %5408 = vmatprep.subr.mxu0 0.0
        %5409 = vmatpush1.msra.mxu0 0.0
        %5410 = vmatprep.subr.mxu0 0.0
        %5411 = vmatpush1.msra.mxu0 0.0
        %5412 = vmatprep.subr.mxu0 0.0
        %5413 = vmatpush1.msra.mxu0 0.0
        %5414 = vmatprep.subr.mxu0 0.0
        %5415 = vmatpush1.msra.mxu0 0.0
        %5416 = vmatprep.subr.mxu0 0.0
        %5417 = vmatpush1.msra.mxu0 0.0
        %5418 = vmatprep.subr.mxu0 0.0
        %5419 = vmatpush1.msra.mxu0 0.0
        %5420 = vmatprep.subr.mxu0 0.0
        %5421 = vmatpush1.msra.mxu0 0.0
        %5422 = vmatprep.subr.mxu0 0.0
        %5423 = vmatpush1.msra.mxu0 0.0
        %5424 = vmatprep.subr.mxu0 0.0
        %5425 = vmatpush1.msra.mxu0 0.0
        %5426 = vmatprep.subr.mxu0 0.0
        %5427 = vmatpush1.msra.mxu0 0.0
        %5428 = vmatprep.subr.mxu0 0.0
        %5429 = vmatpush1.msra.mxu0 0.0
        %5430 = vmatprep.subr.mxu0 0.0
        %5431 = vmatpush1.msra.mxu0 0.0
        %5432 = vmatprep.subr.mxu0 0.0
        %5433 = vmatpush1.msra.mxu0 0.0
        %5434 = vmatprep.subr.mxu0 0.0
        %5435 = vmatpush1.msra.mxu0 0.0
        %5436 = vmatprep.subr.mxu0 0.0
        %5437 = vmatpush1.msra.mxu0 0.0
        %5438 = vmatprep.subr.mxu0 0.0
        %5439 = vmatpush1.msra.mxu0 0.0
        %5440 = vmatprep.subr.mxu0 0.0
        %5441 = vmatpush1.msra.mxu0 0.0
        %5442 = vmatprep.subr.mxu0 0.0
        %5443 = vmatpush1.msra.mxu0 0.0
        %5444 = vmatprep.subr.mxu0 0.0
        %5445 = vmatpush1.msra.mxu0 0.0
        %5446 = vmatprep.subr.mxu0 0.0
        %5447 = vmatpush1.msra.mxu0 0.0
        %5448 = vmatprep.subr.mxu0 0.0
        %5449 = vmatpush1.msra.mxu0 0.0
        %5450 = vmatprep.subr.mxu0 0.0
        %5451 = vmatpush1.msra.mxu0 0.0
        %5452 = vmatprep.mubr.f32.mxu0 0.0
        %v5453 = vand.u32 %v1111, 4294901760
        %5454 = vmatmul.mubr.f32.gmra.mrb[0].mxu0 %v5453
        %v5455 = vpop.f32.mrb[0].mxu0
        %v5456 = vadd.f32 %v5365, %v5455
        %v5457 = vpop.f32.mrb[0].mxu0
        %5458 = vmatprep.mubr.f32.mxu0 0.0
        %v5459 = vand.u32 %v1114, 4294901760
        %5460 = vmatmul.mubr.f32.gmra.mrb[0].mxu0 %v5459
        %v5461 = vpop.f32.mrb[0].mxu0
        %v5462 = vadd.f32 %v5373, %v5461
        %v5463 = vpop.f32.mrb[0].mxu0
        %5464 = vdwg.mxu0
        %5465 = vmatprep.subr.mxu0 0.0
        %v5466 = vand.u32 %v4997, 4294901760
        %5467 = vmatpush1.msra.mxu0 %v5466
        %5468 = vmatprep.subr.mxu0 0.0
        %v5469 = vand.u32 %v5003, 4294901760
        %5470 = vmatpush1.msra.mxu0 %v5469
        %5471 = vmatprep.subr.mxu0 0.0
        %v5472 = vand.u32 %v5009, 4294901760
        %5473 = vmatpush1.msra.mxu0 %v5472
        %5474 = vmatprep.subr.mxu0 0.0
        %v5475 = vand.u32 %v5015, 4294901760
        %5476 = vmatpush1.msra.mxu0 %v5475
        %5477 = vmatprep.subr.mxu0 0.0
        %5478 = vmatpush1.msra.mxu0 0.0
        %5479 = vmatprep.subr.mxu0 0.0
        %5480 = vmatpush1.msra.mxu0 0.0
        %5481 = vmatprep.subr.mxu0 0.0
        %5482 = vmatpush1.msra.mxu0 0.0
        %5483 = vmatprep.subr.mxu0 0.0
        %5484 = vmatpush1.msra.mxu0 0.0
        %5485 = vmatprep.subr.mxu0 0.0
        %5486 = vmatpush1.msra.mxu0 0.0
        %5487 = vmatprep.subr.mxu0 0.0
        %5488 = vmatpush1.msra.mxu0 0.0
        %5489 = vmatprep.subr.mxu0 0.0
        %5490 = vmatpush1.msra.mxu0 0.0
        %5491 = vmatprep.subr.mxu0 0.0
        %5492 = vmatpush1.msra.mxu0 0.0
        %5493 = vmatprep.subr.mxu0 0.0
        %5494 = vmatpush1.msra.mxu0 0.0
        %5495 = vmatprep.subr.mxu0 0.0
        %5496 = vmatpush1.msra.mxu0 0.0
        %5497 = vmatprep.subr.mxu0 0.0
        %5498 = vmatpush1.msra.mxu0 0.0
        %5499 = vmatprep.subr.mxu0 0.0
        %5500 = vmatpush1.msra.mxu0 0.0
        %5501 = vmatprep.subr.mxu0 0.0
        %5502 = vmatpush1.msra.mxu0 0.0
        %5503 = vmatprep.subr.mxu0 0.0
        %5504 = vmatpush1.msra.mxu0 0.0
        %5505 = vmatprep.subr.mxu0 0.0
        %5506 = vmatpush1.msra.mxu0 0.0
        %5507 = vmatprep.subr.mxu0 0.0
        %5508 = vmatpush1.msra.mxu0 0.0
        %5509 = vmatprep.subr.mxu0 0.0
        %5510 = vmatpush1.msra.mxu0 0.0
        %5511 = vmatprep.subr.mxu0 0.0
        %5512 = vmatpush1.msra.mxu0 0.0
        %5513 = vmatprep.subr.mxu0 0.0
        %5514 = vmatpush1.msra.mxu0 0.0
        %5515 = vmatprep.subr.mxu0 0.0
        %5516 = vmatpush1.msra.mxu0 0.0
        %5517 = vmatprep.subr.mxu0 0.0
        %5518 = vmatpush1.msra.mxu0 0.0
        %5519 = vmatprep.subr.mxu0 0.0
        %5520 = vmatpush1.msra.mxu0 0.0
        %5521 = vmatprep.subr.mxu0 0.0
        %5522 = vmatpush1.msra.mxu0 0.0
        %5523 = vmatprep.subr.mxu0 0.0
        %5524 = vmatpush1.msra.mxu0 0.0
        %5525 = vmatprep.subr.mxu0 0.0
        %5526 = vmatpush1.msra.mxu0 0.0
        %5527 = vmatprep.subr.mxu0 0.0
        %5528 = vmatpush1.msra.mxu0 0.0
        %5529 = vmatprep.subr.mxu0 0.0
        %5530 = vmatpush1.msra.mxu0 0.0
        %5531 = vmatprep.subr.mxu0 0.0
        %5532 = vmatpush1.msra.mxu0 0.0
        %5533 = vmatprep.mubr.f32.mxu0 0.0
        %v5534 = vand.u32 %v1111, 4294901760
        %5535 = vmatmul.mubr.f32.gmra.mrb[0].mxu0 %v5534
        %v5536 = vpop.f32.mrb[0].mxu0
        %v5537 = vadd.f32 %v5456, %v5536
        %v5538 = vpop.f32.mrb[0].mxu0
        %5539 = vmatprep.mubr.f32.mxu0 0.0
        %v5540 = vand.u32 %v1114, 4294901760
        %5541 = vmatmul.mubr.f32.gmra.mrb[0].mxu0 %v5540
        %v5542 = vpop.f32.mrb[0].mxu0
        %v5543 = vadd.f32 %v5462, %v5542
        %v5544 = vpop.f32.mrb[0].mxu0
        %5545 = vdwg.mxu0
        %v5546 = vmul.f32 %v313, %v317
        %v5547 = vmul.f32 %v314, %v318
        %v5548 = vmul.f32 %v315, %v319
        %v5549 = vmul.f32 %v316, %v320
        %5550 = vmatprep.subr.mxu0 0.0
        %v5551 = vand.u32 %v323, 4294901760
        %5552 = vmatpush1.msra.mxu0 %v5551
        %5553 = vmatprep.subr.mxu0 0.0
        %v5554 = vand.u32 %v324, 4294901760
        %5555 = vmatpush1.msra.mxu0 %v5554
        %5556 = vmatprep.subr.mxu0 0.0
        %v5557 = vand.u32 %v325, 4294901760
        %5558 = vmatpush1.msra.mxu0 %v5557
        %5559 = vmatprep.subr.mxu0 0.0
        %v5560 = vand.u32 %v326, 4294901760
        %5561 = vmatpush1.msra.mxu0 %v5560
        %5562 = vmatprep.subr.mxu0 0.0
        %v5563 = vand.u32 %v327, 4294901760
        %5564 = vmatpush1.msra.mxu0 %v5563
        %5565 = vmatprep.subr.mxu0 0.0
        %v5566 = vand.u32 %v328, 4294901760
        %5567 = vmatpush1.msra.mxu0 %v5566
        %5568 = vmatprep.subr.mxu0 0.0
        %v5569 = vand.u32 %v329, 4294901760
        %5570 = vmatpush1.msra.mxu0 %v5569
        %5571 = vmatprep.subr.mxu0 0.0
        %v5572 = vand.u32 %v330, 4294901760
        %5573 = vmatpush1.msra.mxu0 %v5572
        %5574 = vmatprep.subr.mxu0 0.0
        %v5575 = vand.u32 %v331, 4294901760
        %5576 = vmatpush1.msra.mxu0 %v5575
        %5577 = vmatprep.subr.mxu0 0.0
        %v5578 = vand.u32 %v332, 4294901760
        %5579 = vmatpush1.msra.mxu0 %v5578
        %5580 = vmatprep.subr.mxu0 0.0
        %v5581 = vand.u32 %v333, 4294901760
        %5582 = vmatpush1.msra.mxu0 %v5581
        %5583 = vmatprep.subr.mxu0 0.0
        %v5584 = vand.u32 %v334, 4294901760
        %5585 = vmatpush1.msra.mxu0 %v5584
        %5586 = vmatprep.subr.mxu0 0.0
        %v5587 = vand.u32 %v335, 4294901760
        %5588 = vmatpush1.msra.mxu0 %v5587
        %5589 = vmatprep.subr.mxu0 0.0
        %v5590 = vand.u32 %v336, 4294901760
        %5591 = vmatpush1.msra.mxu0 %v5590
        %5592 = vmatprep.subr.mxu0 0.0
        %v5593 = vand.u32 %v337, 4294901760
        %5594 = vmatpush1.msra.mxu0 %v5593
        %5595 = vmatprep.subr.mxu0 0.0
        %v5596 = vand.u32 %v338, 4294901760
        %5597 = vmatpush1.msra.mxu0 %v5596
        %5598 = vmatprep.subr.mxu0 0.0
        %5599 = vmatpush1.msra.mxu0 0.0
        %5600 = vmatprep.subr.mxu0 0.0
        %5601 = vmatpush1.msra.mxu0 0.0
        %5602 = vmatprep.subr.mxu0 0.0
        %5603 = vmatpush1.msra.mxu0 0.0
        %5604 = vmatprep.subr.mxu0 0.0
        %5605 = vmatpush1.msra.mxu0 0.0
        %5606 = vmatprep.subr.mxu0 0.0
        %5607 = vmatpush1.msra.mxu0 0.0
        %5608 = vmatprep.subr.mxu0 0.0
        %5609 = vmatpush1.msra.mxu0 0.0
        %5610 = vmatprep.subr.mxu0 0.0
        %5611 = vmatpush1.msra.mxu0 0.0
        %5612 = vmatprep.subr.mxu0 0.0
        %5613 = vmatpush1.msra.mxu0 0.0
        %5614 = vmatprep.subr.mxu0 0.0
        %5615 = vmatpush1.msra.mxu0 0.0
        %5616 = vmatprep.subr.mxu0 0.0
        %5617 = vmatpush1.msra.mxu0 0.0
        %5618 = vmatprep.subr.mxu0 0.0
        %5619 = vmatpush1.msra.mxu0 0.0
        %5620 = vmatprep.subr.mxu0 0.0
        %5621 = vmatpush1.msra.mxu0 0.0
        %5622 = vmatprep.subr.mxu0 0.0
        %5623 = vmatpush1.msra.mxu0 0.0
        %5624 = vmatprep.subr.mxu0 0.0
        %5625 = vmatpush1.msra.mxu0 0.0
        %5626 = vmatprep.subr.mxu0 0.0
        %5627 = vmatpush1.msra.mxu0 0.0
        %5628 = vmatprep.subr.mxu0 0.0
        %5629 = vmatpush1.msra.mxu0 0.0
        %5630 = vmatprep.mubr.f32.mxu0 0.0
        %v5631 = vand.u32 %v5546, 4294901760
        %v5632 = vsub.f32 %v5546, %v5631
        %v5633 = vand.u32 %v5632, 4294901760
        %v5634 = vsub.f32 %v5632, %v5633
        %v5635 = vand.u32 %v5634, 4294901760
        %5636 = vmatmul.mubr.f32.gmra.mrb[0].mxu0 %v5635
        %v5637 = vpop.f32.mrb[0].mxu0
        %v5638 = vadd.f32 0.0, %v5637
        %v5639 = vpop.f32.mrb[0].mxu0
        %5640 = vmatprep.mubr.f32.mxu0 0.0
        %v5641 = vand.u32 %v5547, 4294901760
        %v5642 = vsub.f32 %v5547, %v5641
        %v5643 = vand.u32 %v5642, 4294901760
        %v5644 = vsub.f32 %v5642, %v5643
        %v5645 = vand.u32 %v5644, 4294901760
        %5646 = vmatmul.mubr.f32.gmra.mrb[0].mxu0 %v5645
        %v5647 = vpop.f32.mrb[0].mxu0
        %v5648 = vadd.f32 0.0, %v5647
        %v5649 = vpop.f32.mrb[0].mxu0
        %5650 = vmatprep.mubr.f32.mxu0 0.0
        %v5651 = vand.u32 %v5548, 4294901760
        %v5652 = vsub.f32 %v5548, %v5651
        %v5653 = vand.u32 %v5652, 4294901760
        %v5654 = vsub.f32 %v5652, %v5653
        %v5655 = vand.u32 %v5654, 4294901760
        %5656 = vmatmul.mubr.f32.gmra.mrb[0].mxu0 %v5655
        %v5657 = vpop.f32.mrb[0].mxu0
        %v5658 = vadd.f32 0.0, %v5657
        %v5659 = vpop.f32.mrb[0].mxu0
        %5660 = vmatprep.mubr.f32.mxu0 0.0
        %v5661 = vand.u32 %v5549, 4294901760
        %v5662 = vsub.f32 %v5549, %v5661
        %v5663 = vand.u32 %v5662, 4294901760
        %v5664 = vsub.f32 %v5662, %v5663
        %v5665 = vand.u32 %v5664, 4294901760
        %5666 = vmatmul.mubr.f32.gmra.mrb[0].mxu0 %v5665
        %v5667 = vpop.f32.mrb[0].mxu0
        %v5668 = vadd.f32 0.0, %v5667
        %v5669 = vpop.f32.mrb[0].mxu0
        %5670 = vdwg.mxu0
        %5671 = vmatprep.subr.mxu0 0.0
        %v5672 = vand.u32 %v323, 4294901760
        %v5673 = vsub.f32 %v323, %v5672
        %v5674 = vand.u32 %v5673, 4294901760
        %v5675 = vsub.f32 %v5673, %v5674
        %v5676 = vand.u32 %v5675, 4294901760
        %5677 = vmatpush1.msra.mxu0 %v5676
        %5678 = vmatprep.subr.mxu0 0.0
        %v5679 = vand.u32 %v324, 4294901760
        %v5680 = vsub.f32 %v324, %v5679
        %v5681 = vand.u32 %v5680, 4294901760
        %v5682 = vsub.f32 %v5680, %v5681
        %v5683 = vand.u32 %v5682, 4294901760
        %5684 = vmatpush1.msra.mxu0 %v5683
        %5685 = vmatprep.subr.mxu0 0.0
        %v5686 = vand.u32 %v325, 4294901760
        %v5687 = vsub.f32 %v325, %v5686
        %v5688 = vand.u32 %v5687, 4294901760
        %v5689 = vsub.f32 %v5687, %v5688
        %v5690 = vand.u32 %v5689, 4294901760
        %5691 = vmatpush1.msra.mxu0 %v5690
        %5692 = vmatprep.subr.mxu0 0.0
        %v5693 = vand.u32 %v326, 4294901760
        %v5694 = vsub.f32 %v326, %v5693
        %v5695 = vand.u32 %v5694, 4294901760
        %v5696 = vsub.f32 %v5694, %v5695
        %v5697 = vand.u32 %v5696, 4294901760
        %5698 = vmatpush1.msra.mxu0 %v5697
        %5699 = vmatprep.subr.mxu0 0.0
        %v5700 = vand.u32 %v327, 4294901760
        %v5701 = vsub.f32 %v327, %v5700
        %v5702 = vand.u32 %v5701, 4294901760
        %v5703 = vsub.f32 %v5701, %v5702
        %v5704 = vand.u32 %v5703, 4294901760
        %5705 = vmatpush1.msra.mxu0 %v5704
        %5706 = vmatprep.subr.mxu0 0.0
        %v5707 = vand.u32 %v328, 4294901760
        %v5708 = vsub.f32 %v328, %v5707
        %v5709 = vand.u32 %v5708, 4294901760
        %v5710 = vsub.f32 %v5708, %v5709
        %v5711 = vand.u32 %v5710, 4294901760
        %5712 = vmatpush1.msra.mxu0 %v5711
        %5713 = vmatprep.subr.mxu0 0.0
        %v5714 = vand.u32 %v329, 4294901760
        %v5715 = vsub.f32 %v329, %v5714
        %v5716 = vand.u32 %v5715, 4294901760
        %v5717 = vsub.f32 %v5715, %v5716
        %v5718 = vand.u32 %v5717, 4294901760
        %5719 = vmatpush1.msra.mxu0 %v5718
        %5720 = vmatprep.subr.mxu0 0.0
        %v5721 = vand.u32 %v330, 4294901760
        %v5722 = vsub.f32 %v330, %v5721
        %v5723 = vand.u32 %v5722, 4294901760
        %v5724 = vsub.f32 %v5722, %v5723
        %v5725 = vand.u32 %v5724, 4294901760
        %5726 = vmatpush1.msra.mxu0 %v5725
        %5727 = vmatprep.subr.mxu0 0.0
        %v5728 = vand.u32 %v331, 4294901760
        %v5729 = vsub.f32 %v331, %v5728
        %v5730 = vand.u32 %v5729, 4294901760
        %v5731 = vsub.f32 %v5729, %v5730
        %v5732 = vand.u32 %v5731, 4294901760
        %5733 = vmatpush1.msra.mxu0 %v5732
        %5734 = vmatprep.subr.mxu0 0.0
        %v5735 = vand.u32 %v332, 4294901760
        %v5736 = vsub.f32 %v332, %v5735
        %v5737 = vand.u32 %v5736, 4294901760
        %v5738 = vsub.f32 %v5736, %v5737
        %v5739 = vand.u32 %v5738, 4294901760
        %5740 = vmatpush1.msra.mxu0 %v5739
        %5741 = vmatprep.subr.mxu0 0.0
        %v5742 = vand.u32 %v333, 4294901760
        %v5743 = vsub.f32 %v333, %v5742
        %v5744 = vand.u32 %v5743, 4294901760
        %v5745 = vsub.f32 %v5743, %v5744
        %v5746 = vand.u32 %v5745, 4294901760
        %5747 = vmatpush1.msra.mxu0 %v5746
        %5748 = vmatprep.subr.mxu0 0.0
        %v5749 = vand.u32 %v334, 4294901760
        %v5750 = vsub.f32 %v334, %v5749
        %v5751 = vand.u32 %v5750, 4294901760
        %v5752 = vsub.f32 %v5750, %v5751
        %v5753 = vand.u32 %v5752, 4294901760
        %5754 = vmatpush1.msra.mxu0 %v5753
        %5755 = vmatprep.subr.mxu0 0.0
        %v5756 = vand.u32 %v335, 4294901760
        %v5757 = vsub.f32 %v335, %v5756
        %v5758 = vand.u32 %v5757, 4294901760
        %v5759 = vsub.f32 %v5757, %v5758
        %v5760 = vand.u32 %v5759, 4294901760
        %5761 = vmatpush1.msra.mxu0 %v5760
        %5762 = vmatprep.subr.mxu0 0.0
        %v5763 = vand.u32 %v336, 4294901760
        %v5764 = vsub.f32 %v336, %v5763
        %v5765 = vand.u32 %v5764, 4294901760
        %v5766 = vsub.f32 %v5764, %v5765
        %v5767 = vand.u32 %v5766, 4294901760
        %5768 = vmatpush1.msra.mxu0 %v5767
        %5769 = vmatprep.subr.mxu0 0.0
        %v5770 = vand.u32 %v337, 4294901760
        %v5771 = vsub.f32 %v337, %v5770
        %v5772 = vand.u32 %v5771, 4294901760
        %v5773 = vsub.f32 %v5771, %v5772
        %v5774 = vand.u32 %v5773, 4294901760
        %5775 = vmatpush1.msra.mxu0 %v5774
        %5776 = vmatprep.subr.mxu0 0.0
        %v5777 = vand.u32 %v338, 4294901760
        %v5778 = vsub.f32 %v338, %v5777
        %v5779 = vand.u32 %v5778, 4294901760
        %v5780 = vsub.f32 %v5778, %v5779
        %v5781 = vand.u32 %v5780, 4294901760
        %5782 = vmatpush1.msra.mxu0 %v5781
        %5783 = vmatprep.subr.mxu0 0.0
        %5784 = vmatpush1.msra.mxu0 0.0
        %5785 = vmatprep.subr.mxu0 0.0
        %5786 = vmatpush1.msra.mxu0 0.0
        %5787 = vmatprep.subr.mxu0 0.0
        %5788 = vmatpush1.msra.mxu0 0.0
        %5789 = vmatprep.subr.mxu0 0.0
        %5790 = vmatpush1.msra.mxu0 0.0
        %5791 = vmatprep.subr.mxu0 0.0
        %5792 = vmatpush1.msra.mxu0 0.0
        %5793 = vmatprep.subr.mxu0 0.0
        %5794 = vmatpush1.msra.mxu0 0.0
        %5795 = vmatprep.subr.mxu0 0.0
        %5796 = vmatpush1.msra.mxu0 0.0
        %5797 = vmatprep.subr.mxu0 0.0
        %5798 = vmatpush1.msra.mxu0 0.0
        %5799 = vmatprep.subr.mxu0 0.0
        %5800 = vmatpush1.msra.mxu0 0.0
        %5801 = vmatprep.subr.mxu0 0.0
        %5802 = vmatpush1.msra.mxu0 0.0
        %5803 = vmatprep.subr.mxu0 0.0
        %5804 = vmatpush1.msra.mxu0 0.0
        %5805 = vmatprep.subr.mxu0 0.0
        %5806 = vmatpush1.msra.mxu0 0.0
        %5807 = vmatprep.subr.mxu0 0.0
        %5808 = vmatpush1.msra.mxu0 0.0
        %5809 = vmatprep.subr.mxu0 0.0
        %5810 = vmatpush1.msra.mxu0 0.0
        %5811 = vmatprep.subr.mxu0 0.0
        %5812 = vmatpush1.msra.mxu0 0.0
        %5813 = vmatprep.subr.mxu0 0.0
        %5814 = vmatpush1.msra.mxu0 0.0
        %5815 = vmatprep.mubr.f32.mxu0 0.0
        %v5816 = vand.u32 %v5546, 4294901760
        %5817 = vmatmul.mubr.f32.gmra.mrb[0].mxu0 %v5816
        %v5818 = vpop.f32.mrb[0].mxu0
        %v5819 = vadd.f32 %v5638, %v5818
        %v5820 = vpop.f32.mrb[0].mxu0
        %5821 = vmatprep.mubr.f32.mxu0 0.0
        %v5822 = vand.u32 %v5547, 4294901760
        %5823 = vmatmul.mubr.f32.gmra.mrb[0].mxu0 %v5822
        %v5824 = vpop.f32.mrb[0].mxu0
        %v5825 = vadd.f32 %v5648, %v5824
        %v5826 = vpop.f32.mrb[0].mxu0
        %5827 = vmatprep.mubr.f32.mxu0 0.0
        %v5828 = vand.u32 %v5548, 4294901760
        %5829 = vmatmul.mubr.f32.gmra.mrb[0].mxu0 %v5828
        %v5830 = vpop.f32.mrb[0].mxu0
        %v5831 = vadd.f32 %v5658, %v5830
        %v5832 = vpop.f32.mrb[0].mxu0
        %5833 = vmatprep.mubr.f32.mxu0 0.0
        %v5834 = vand.u32 %v5549, 4294901760
        %5835 = vmatmul.mubr.f32.gmra.mrb[0].mxu0 %v5834
        %v5836 = vpop.f32.mrb[0].mxu0
        %v5837 = vadd.f32 %v5668, %v5836
        %v5838 = vpop.f32.mrb[0].mxu0
        %5839 = vdwg.mxu0
        %5840 = vmatprep.subr.mxu0 0.0
        %v5841 = vand.u32 %v323, 4294901760
        %v5842 = vsub.f32 %v323, %v5841
        %5843 = vmatpush1.msra.mxu0 %v5842
        %5844 = vmatprep.subr.mxu0 0.0
        %v5845 = vand.u32 %v324, 4294901760
        %v5846 = vsub.f32 %v324, %v5845
        %5847 = vmatpush1.msra.mxu0 %v5846
        %5848 = vmatprep.subr.mxu0 0.0
        %v5849 = vand.u32 %v325, 4294901760
        %v5850 = vsub.f32 %v325, %v5849
        %5851 = vmatpush1.msra.mxu0 %v5850
        %5852 = vmatprep.subr.mxu0 0.0
        %v5853 = vand.u32 %v326, 4294901760
        %v5854 = vsub.f32 %v326, %v5853
        %5855 = vmatpush1.msra.mxu0 %v5854
        %5856 = vmatprep.subr.mxu0 0.0
        %v5857 = vand.u32 %v327, 4294901760
        %v5858 = vsub.f32 %v327, %v5857
        %5859 = vmatpush1.msra.mxu0 %v5858
        %5860 = vmatprep.subr.mxu0 0.0
        %v5861 = vand.u32 %v328, 4294901760
        %v5862 = vsub.f32 %v328, %v5861
        %5863 = vmatpush1.msra.mxu0 %v5862
        %5864 = vmatprep.subr.mxu0 0.0
        %v5865 = vand.u32 %v329, 4294901760
        %v5866 = vsub.f32 %v329, %v5865
        %5867 = vmatpush1.msra.mxu0 %v5866
        %5868 = vmatprep.subr.mxu0 0.0
        %v5869 = vand.u32 %v330, 4294901760
        %v5870 = vsub.f32 %v330, %v5869
        %5871 = vmatpush1.msra.mxu0 %v5870
        %5872 = vmatprep.subr.mxu0 0.0
        %v5873 = vand.u32 %v331, 4294901760
        %v5874 = vsub.f32 %v331, %v5873
        %5875 = vmatpush1.msra.mxu0 %v5874
        %5876 = vmatprep.subr.mxu0 0.0
        %v5877 = vand.u32 %v332, 4294901760
        %v5878 = vsub.f32 %v332, %v5877
        %5879 = vmatpush1.msra.mxu0 %v5878
        %5880 = vmatprep.subr.mxu0 0.0
        %v5881 = vand.u32 %v333, 4294901760
        %v5882 = vsub.f32 %v333, %v5881
        %5883 = vmatpush1.msra.mxu0 %v5882
        %5884 = vmatprep.subr.mxu0 0.0
        %v5885 = vand.u32 %v334, 4294901760
        %v5886 = vsub.f32 %v334, %v5885
        %5887 = vmatpush1.msra.mxu0 %v5886
        %5888 = vmatprep.subr.mxu0 0.0
        %v5889 = vand.u32 %v335, 4294901760
        %v5890 = vsub.f32 %v335, %v5889
        %5891 = vmatpush1.msra.mxu0 %v5890
        %5892 = vmatprep.subr.mxu0 0.0
        %v5893 = vand.u32 %v336, 4294901760
        %v5894 = vsub.f32 %v336, %v5893
        %5895 = vmatpush1.msra.mxu0 %v5894
        %5896 = vmatprep.subr.mxu0 0.0
        %v5897 = vand.u32 %v337, 4294901760
        %v5898 = vsub.f32 %v337, %v5897
        %5899 = vmatpush1.msra.mxu0 %v5898
        %5900 = vmatprep.subr.mxu0 0.0
        %v5901 = vand.u32 %v338, 4294901760
        %v5902 = vsub.f32 %v338, %v5901
        %5903 = vmatpush1.msra.mxu0 %v5902
        %5904 = vmatprep.subr.mxu0 0.0
        %5905 = vmatpush1.msra.mxu0 0.0
        %5906 = vmatprep.subr.mxu0 0.0
        %5907 = vmatpush1.msra.mxu0 0.0
        %5908 = vmatprep.subr.mxu0 0.0
        %5909 = vmatpush1.msra.mxu0 0.0
        %5910 = vmatprep.subr.mxu0 0.0
        %5911 = vmatpush1.msra.mxu0 0.0
        %5912 = vmatprep.subr.mxu0 0.0
        %5913 = vmatpush1.msra.mxu0 0.0
        %5914 = vmatprep.subr.mxu0 0.0
        %5915 = vmatpush1.msra.mxu0 0.0
        %5916 = vmatprep.subr.mxu0 0.0
        %5917 = vmatpush1.msra.mxu0 0.0
        %5918 = vmatprep.subr.mxu0 0.0
        %5919 = vmatpush1.msra.mxu0 0.0
        %5920 = vmatprep.subr.mxu0 0.0
        %5921 = vmatpush1.msra.mxu0 0.0
        %5922 = vmatprep.subr.mxu0 0.0
        %5923 = vmatpush1.msra.mxu0 0.0
        %5924 = vmatprep.subr.mxu0 0.0
        %5925 = vmatpush1.msra.mxu0 0.0
        %5926 = vmatprep.subr.mxu0 0.0
        %5927 = vmatpush1.msra.mxu0 0.0
        %5928 = vmatprep.subr.mxu0 0.0
        %5929 = vmatpush1.msra.mxu0 0.0
        %5930 = vmatprep.subr.mxu0 0.0
        %5931 = vmatpush1.msra.mxu0 0.0
        %5932 = vmatprep.subr.mxu0 0.0
        %5933 = vmatpush1.msra.mxu0 0.0
        %5934 = vmatprep.subr.mxu0 0.0
        %5935 = vmatpush1.msra.mxu0 0.0
        %5936 = vmatprep.mubr.f32.mxu0 0.0
        %v5937 = vand.u32 %v5546, 4294901760
        %v5938 = vsub.f32 %v5546, %v5937
        %5939 = vmatmul.mubr.f32.gmra.mrb[0].mxu0 %v5938
        %v5940 = vpop.f32.mrb[0].mxu0
        %v5941 = vadd.f32 %v5819, %v5940
        %v5942 = vpop.f32.mrb[0].mxu0
        %5943 = vmatprep.mubr.f32.mxu0 0.0
        %v5944 = vand.u32 %v5547, 4294901760
        %v5945 = vsub.f32 %v5547, %v5944
        %5946 = vmatmul.mubr.f32.gmra.mrb[0].mxu0 %v5945
        %v5947 = vpop.f32.mrb[0].mxu0
        %v5948 = vadd.f32 %v5825, %v5947
        %v5949 = vpop.f32.mrb[0].mxu0
        %5950 = vmatprep.mubr.f32.mxu0 0.0
        %v5951 = vand.u32 %v5548, 4294901760
        %v5952 = vsub.f32 %v5548, %v5951
        %5953 = vmatmul.mubr.f32.gmra.mrb[0].mxu0 %v5952
        %v5954 = vpop.f32.mrb[0].mxu0
        %v5955 = vadd.f32 %v5831, %v5954
        %v5956 = vpop.f32.mrb[0].mxu0
        %5957 = vmatprep.mubr.f32.mxu0 0.0
        %v5958 = vand.u32 %v5549, 4294901760
        %v5959 = vsub.f32 %v5549, %v5958
        %5960 = vmatmul.mubr.f32.gmra.mrb[0].mxu0 %v5959
        %v5961 = vpop.f32.mrb[0].mxu0
        %v5962 = vadd.f32 %v5837, %v5961
        %v5963 = vpop.f32.mrb[0].mxu0
        %5964 = vdwg.mxu0
        %5965 = vmatprep.subr.mxu0 0.0
        %v5966 = vand.u32 %v323, 4294901760
        %5967 = vmatpush1.msra.mxu0 %v5966
        %5968 = vmatprep.subr.mxu0 0.0
        %v5969 = vand.u32 %v324, 4294901760
        %5970 = vmatpush1.msra.mxu0 %v5969
        %5971 = vmatprep.subr.mxu0 0.0
        %v5972 = vand.u32 %v325, 4294901760
        %5973 = vmatpush1.msra.mxu0 %v5972
        %5974 = vmatprep.subr.mxu0 0.0
        %v5975 = vand.u32 %v326, 4294901760
        %5976 = vmatpush1.msra.mxu0 %v5975
        %5977 = vmatprep.subr.mxu0 0.0
        %v5978 = vand.u32 %v327, 4294901760
        %5979 = vmatpush1.msra.mxu0 %v5978
        %5980 = vmatprep.subr.mxu0 0.0
        %v5981 = vand.u32 %v328, 4294901760
        %5982 = vmatpush1.msra.mxu0 %v5981
        %5983 = vmatprep.subr.mxu0 0.0
        %v5984 = vand.u32 %v329, 4294901760
        %5985 = vmatpush1.msra.mxu0 %v5984
        %5986 = vmatprep.subr.mxu0 0.0
        %v5987 = vand.u32 %v330, 4294901760
        %5988 = vmatpush1.msra.mxu0 %v5987
        %5989 = vmatprep.subr.mxu0 0.0
        %v5990 = vand.u32 %v331, 4294901760
        %5991 = vmatpush1.msra.mxu0 %v5990
        %5992 = vmatprep.subr.mxu0 0.0
        %v5993 = vand.u32 %v332, 4294901760
        %5994 = vmatpush1.msra.mxu0 %v5993
        %5995 = vmatprep.subr.mxu0 0.0
        %v5996 = vand.u32 %v333, 4294901760
        %5997 = vmatpush1.msra.mxu0 %v5996
        %5998 = vmatprep.subr.mxu0 0.0
        %v5999 = vand.u32 %v334, 4294901760
        %6000 = vmatpush1.msra.mxu0 %v5999
        %6001 = vmatprep.subr.mxu0 0.0
        %v6002 = vand.u32 %v335, 4294901760
        %6003 = vmatpush1.msra.mxu0 %v6002
        %6004 = vmatprep.subr.mxu0 0.0
        %v6005 = vand.u32 %v336, 4294901760
        %6006 = vmatpush1.msra.mxu0 %v6005
        %6007 = vmatprep.subr.mxu0 0.0
        %v6008 = vand.u32 %v337, 4294901760
        %6009 = vmatpush1.msra.mxu0 %v6008
        %6010 = vmatprep.subr.mxu0 0.0
        %v6011 = vand.u32 %v338, 4294901760
        %6012 = vmatpush1.msra.mxu0 %v6011
        %6013 = vmatprep.subr.mxu0 0.0
        %6014 = vmatpush1.msra.mxu0 0.0
        %6015 = vmatprep.subr.mxu0 0.0
        %6016 = vmatpush1.msra.mxu0 0.0
        %6017 = vmatprep.subr.mxu0 0.0
        %6018 = vmatpush1.msra.mxu0 0.0
        %6019 = vmatprep.subr.mxu0 0.0
        %6020 = vmatpush1.msra.mxu0 0.0
        %6021 = vmatprep.subr.mxu0 0.0
        %6022 = vmatpush1.msra.mxu0 0.0
        %6023 = vmatprep.subr.mxu0 0.0
        %6024 = vmatpush1.msra.mxu0 0.0
        %6025 = vmatprep.subr.mxu0 0.0
        %6026 = vmatpush1.msra.mxu0 0.0
        %6027 = vmatprep.subr.mxu0 0.0
        %6028 = vmatpush1.msra.mxu0 0.0
        %6029 = vmatprep.subr.mxu0 0.0
        %6030 = vmatpush1.msra.mxu0 0.0
        %6031 = vmatprep.subr.mxu0 0.0
        %6032 = vmatpush1.msra.mxu0 0.0
        %6033 = vmatprep.subr.mxu0 0.0
        %6034 = vmatpush1.msra.mxu0 0.0
        %6035 = vmatprep.subr.mxu0 0.0
        %6036 = vmatpush1.msra.mxu0 0.0
        %6037 = vmatprep.subr.mxu0 0.0
        %6038 = vmatpush1.msra.mxu0 0.0
        %6039 = vmatprep.subr.mxu0 0.0
        %6040 = vmatpush1.msra.mxu0 0.0
        %6041 = vmatprep.subr.mxu0 0.0
        %6042 = vmatpush1.msra.mxu0 0.0
        %6043 = vmatprep.subr.mxu0 0.0
        %6044 = vmatpush1.msra.mxu0 0.0
        %6045 = vmatprep.mubr.f32.mxu0 0.0
        %v6046 = vand.u32 %v5546, 4294901760
        %v6047 = vsub.f32 %v5546, %v6046
        %v6048 = vand.u32 %v6047, 4294901760
        %6049 = vmatmul.mubr.f32.gmra.mrb[0].mxu0 %v6048
        %v6050 = vpop.f32.mrb[0].mxu0
        %v6051 = vadd.f32 %v5941, %v6050
        %v6052 = vpop.f32.mrb[0].mxu0
        %6053 = vmatprep.mubr.f32.mxu0 0.0
        %v6054 = vand.u32 %v5547, 4294901760
        %v6055 = vsub.f32 %v5547, %v6054
        %v6056 = vand.u32 %v6055, 4294901760
        %6057 = vmatmul.mubr.f32.gmra.mrb[0].mxu0 %v6056
        %v6058 = vpop.f32.mrb[0].mxu0
        %v6059 = vadd.f32 %v5948, %v6058
        %v6060 = vpop.f32.mrb[0].mxu0
        %6061 = vmatprep.mubr.f32.mxu0 0.0
        %v6062 = vand.u32 %v5548, 4294901760
        %v6063 = vsub.f32 %v5548, %v6062
        %v6064 = vand.u32 %v6063, 4294901760
        %6065 = vmatmul.mubr.f32.gmra.mrb[0].mxu0 %v6064
        %v6066 = vpop.f32.mrb[0].mxu0
        %v6067 = vadd.f32 %v5955, %v6066
        %v6068 = vpop.f32.mrb[0].mxu0
        %6069 = vmatprep.mubr.f32.mxu0 0.0
        %v6070 = vand.u32 %v5549, 4294901760
        %v6071 = vsub.f32 %v5549, %v6070
        %v6072 = vand.u32 %v6071, 4294901760
        %6073 = vmatmul.mubr.f32.gmra.mrb[0].mxu0 %v6072
        %v6074 = vpop.f32.mrb[0].mxu0
        %v6075 = vadd.f32 %v5962, %v6074
        %v6076 = vpop.f32.mrb[0].mxu0
        %6077 = vdwg.mxu0
        %6078 = vmatprep.subr.mxu0 0.0
        %v6079 = vand.u32 %v323, 4294901760
        %v6080 = vsub.f32 %v323, %v6079
        %v6081 = vand.u32 %v6080, 4294901760
        %6082 = vmatpush1.msra.mxu0 %v6081
        %6083 = vmatprep.subr.mxu0 0.0
        %v6084 = vand.u32 %v324, 4294901760
        %v6085 = vsub.f32 %v324, %v6084
        %v6086 = vand.u32 %v6085, 4294901760
        %6087 = vmatpush1.msra.mxu0 %v6086
        %6088 = vmatprep.subr.mxu0 0.0
        %v6089 = vand.u32 %v325, 4294901760
        %v6090 = vsub.f32 %v325, %v6089
        %v6091 = vand.u32 %v6090, 4294901760
        %6092 = vmatpush1.msra.mxu0 %v6091
        %6093 = vmatprep.subr.mxu0 0.0
        %v6094 = vand.u32 %v326, 4294901760
        %v6095 = vsub.f32 %v326, %v6094
        %v6096 = vand.u32 %v6095, 4294901760
        %6097 = vmatpush1.msra.mxu0 %v6096
        %6098 = vmatprep.subr.mxu0 0.0
        %v6099 = vand.u32 %v327, 4294901760
        %v6100 = vsub.f32 %v327, %v6099
        %v6101 = vand.u32 %v6100, 4294901760
        %6102 = vmatpush1.msra.mxu0 %v6101
        %6103 = vmatprep.subr.mxu0 0.0
        %v6104 = vand.u32 %v328, 4294901760
        %v6105 = vsub.f32 %v328, %v6104
        %v6106 = vand.u32 %v6105, 4294901760
        %6107 = vmatpush1.msra.mxu0 %v6106
        %6108 = vmatprep.subr.mxu0 0.0
        %v6109 = vand.u32 %v329, 4294901760
        %v6110 = vsub.f32 %v329, %v6109
        %v6111 = vand.u32 %v6110, 4294901760
        %6112 = vmatpush1.msra.mxu0 %v6111
        %6113 = vmatprep.subr.mxu0 0.0
        %v6114 = vand.u32 %v330, 4294901760
        %v6115 = vsub.f32 %v330, %v6114
        %v6116 = vand.u32 %v6115, 4294901760
        %6117 = vmatpush1.msra.mxu0 %v6116
        %6118 = vmatprep.subr.mxu0 0.0
        %v6119 = vand.u32 %v331, 4294901760
        %v6120 = vsub.f32 %v331, %v6119
        %v6121 = vand.u32 %v6120, 4294901760
        %6122 = vmatpush1.msra.mxu0 %v6121
        %6123 = vmatprep.subr.mxu0 0.0
        %v6124 = vand.u32 %v332, 4294901760
        %v6125 = vsub.f32 %v332, %v6124
        %v6126 = vand.u32 %v6125, 4294901760
        %6127 = vmatpush1.msra.mxu0 %v6126
        %6128 = vmatprep.subr.mxu0 0.0
        %v6129 = vand.u32 %v333, 4294901760
        %v6130 = vsub.f32 %v333, %v6129
        %v6131 = vand.u32 %v6130, 4294901760
        %6132 = vmatpush1.msra.mxu0 %v6131
        %6133 = vmatprep.subr.mxu0 0.0
        %v6134 = vand.u32 %v334, 4294901760
        %v6135 = vsub.f32 %v334, %v6134
        %v6136 = vand.u32 %v6135, 4294901760
        %6137 = vmatpush1.msra.mxu0 %v6136
        %6138 = vmatprep.subr.mxu0 0.0
        %v6139 = vand.u32 %v335, 4294901760
        %v6140 = vsub.f32 %v335, %v6139
        %v6141 = vand.u32 %v6140, 4294901760
        %6142 = vmatpush1.msra.mxu0 %v6141
        %6143 = vmatprep.subr.mxu0 0.0
        %v6144 = vand.u32 %v336, 4294901760
        %v6145 = vsub.f32 %v336, %v6144
        %v6146 = vand.u32 %v6145, 4294901760
        %6147 = vmatpush1.msra.mxu0 %v6146
        %6148 = vmatprep.subr.mxu0 0.0
        %v6149 = vand.u32 %v337, 4294901760
        %v6150 = vsub.f32 %v337, %v6149
        %v6151 = vand.u32 %v6150, 4294901760
        %6152 = vmatpush1.msra.mxu0 %v6151
        %6153 = vmatprep.subr.mxu0 0.0
        %v6154 = vand.u32 %v338, 4294901760
        %v6155 = vsub.f32 %v338, %v6154
        %v6156 = vand.u32 %v6155, 4294901760
        %6157 = vmatpush1.msra.mxu0 %v6156
        %6158 = vmatprep.subr.mxu0 0.0
        %6159 = vmatpush1.msra.mxu0 0.0
        %6160 = vmatprep.subr.mxu0 0.0
        %6161 = vmatpush1.msra.mxu0 0.0
        %6162 = vmatprep.subr.mxu0 0.0
        %6163 = vmatpush1.msra.mxu0 0.0
        %6164 = vmatprep.subr.mxu0 0.0
        %6165 = vmatpush1.msra.mxu0 0.0
        %6166 = vmatprep.subr.mxu0 0.0
        %6167 = vmatpush1.msra.mxu0 0.0
        %6168 = vmatprep.subr.mxu0 0.0
        %6169 = vmatpush1.msra.mxu0 0.0
        %6170 = vmatprep.subr.mxu0 0.0
        %6171 = vmatpush1.msra.mxu0 0.0
        %6172 = vmatprep.subr.mxu0 0.0
        %6173 = vmatpush1.msra.mxu0 0.0
        %6174 = vmatprep.subr.mxu0 0.0
        %6175 = vmatpush1.msra.mxu0 0.0
        %6176 = vmatprep.subr.mxu0 0.0
        %6177 = vmatpush1.msra.mxu0 0.0
        %6178 = vmatprep.subr.mxu0 0.0
        %6179 = vmatpush1.msra.mxu0 0.0
        %6180 = vmatprep.subr.mxu0 0.0
        %6181 = vmatpush1.msra.mxu0 0.0
        %6182 = vmatprep.subr.mxu0 0.0
        %6183 = vmatpush1.msra.mxu0 0.0
        %6184 = vmatprep.subr.mxu0 0.0
        %6185 = vmatpush1.msra.mxu0 0.0
        %6186 = vmatprep.subr.mxu0 0.0
        %6187 = vmatpush1.msra.mxu0 0.0
        %6188 = vmatprep.subr.mxu0 0.0
        %6189 = vmatpush1.msra.mxu0 0.0
        %6190 = vmatprep.mubr.f32.mxu0 0.0
        %v6191 = vand.u32 %v5546, 4294901760
        %6192 = vmatmul.mubr.f32.gmra.mrb[0].mxu0 %v6191
        %v6193 = vpop.f32.mrb[0].mxu0
        %v6194 = vadd.f32 %v6051, %v6193
        %v6195 = vpop.f32.mrb[0].mxu0
        %6196 = vmatprep.mubr.f32.mxu0 0.0
        %v6197 = vand.u32 %v5547, 4294901760
        %6198 = vmatmul.mubr.f32.gmra.mrb[0].mxu0 %v6197
        %v6199 = vpop.f32.mrb[0].mxu0
        %v6200 = vadd.f32 %v6059, %v6199
        %v6201 = vpop.f32.mrb[0].mxu0
        %6202 = vmatprep.mubr.f32.mxu0 0.0
        %v6203 = vand.u32 %v5548, 4294901760
        %6204 = vmatmul.mubr.f32.gmra.mrb[0].mxu0 %v6203
        %v6205 = vpop.f32.mrb[0].mxu0
        %v6206 = vadd.f32 %v6067, %v6205
        %v6207 = vpop.f32.mrb[0].mxu0
        %6208 = vmatprep.mubr.f32.mxu0 0.0
        %v6209 = vand.u32 %v5549, 4294901760
        %6210 = vmatmul.mubr.f32.gmra.mrb[0].mxu0 %v6209
        %v6211 = vpop.f32.mrb[0].mxu0
        %v6212 = vadd.f32 %v6075, %v6211
        %v6213 = vpop.f32.mrb[0].mxu0
        %6214 = vdwg.mxu0
        %6215 = vmatprep.subr.mxu0 0.0
        %v6216 = vand.u32 %v323, 4294901760
        %6217 = vmatpush1.msra.mxu0 %v6216
        %6218 = vmatprep.subr.mxu0 0.0
        %v6219 = vand.u32 %v324, 4294901760
        %6220 = vmatpush1.msra.mxu0 %v6219
        %6221 = vmatprep.subr.mxu0 0.0
        %v6222 = vand.u32 %v325, 4294901760
        %6223 = vmatpush1.msra.mxu0 %v6222
        %6224 = vmatprep.subr.mxu0 0.0
        %v6225 = vand.u32 %v326, 4294901760
        %6226 = vmatpush1.msra.mxu0 %v6225
        %6227 = vmatprep.subr.mxu0 0.0
        %v6228 = vand.u32 %v327, 4294901760
        %6229 = vmatpush1.msra.mxu0 %v6228
        %6230 = vmatprep.subr.mxu0 0.0
        %v6231 = vand.u32 %v328, 4294901760
        %6232 = vmatpush1.msra.mxu0 %v6231
        %6233 = vmatprep.subr.mxu0 0.0
        %v6234 = vand.u32 %v329, 4294901760
        %6235 = vmatpush1.msra.mxu0 %v6234
        %6236 = vmatprep.subr.mxu0 0.0
        %v6237 = vand.u32 %v330, 4294901760
        %6238 = vmatpush1.msra.mxu0 %v6237
        %6239 = vmatprep.subr.mxu0 0.0
        %v6240 = vand.u32 %v331, 4294901760
        %6241 = vmatpush1.msra.mxu0 %v6240
        %6242 = vmatprep.subr.mxu0 0.0
        %v6243 = vand.u32 %v332, 4294901760
        %6244 = vmatpush1.msra.mxu0 %v6243
        %6245 = vmatprep.subr.mxu0 0.0
        %v6246 = vand.u32 %v333, 4294901760
        %6247 = vmatpush1.msra.mxu0 %v6246
        %6248 = vmatprep.subr.mxu0 0.0
        %v6249 = vand.u32 %v334, 4294901760
        %6250 = vmatpush1.msra.mxu0 %v6249
        %6251 = vmatprep.subr.mxu0 0.0
        %v6252 = vand.u32 %v335, 4294901760
        %6253 = vmatpush1.msra.mxu0 %v6252
        %6254 = vmatprep.subr.mxu0 0.0
        %v6255 = vand.u32 %v336, 4294901760
        %6256 = vmatpush1.msra.mxu0 %v6255
        %6257 = vmatprep.subr.mxu0 0.0
        %v6258 = vand.u32 %v337, 4294901760
        %6259 = vmatpush1.msra.mxu0 %v6258
        %6260 = vmatprep.subr.mxu0 0.0
        %v6261 = vand.u32 %v338, 4294901760
        %6262 = vmatpush1.msra.mxu0 %v6261
        %6263 = vmatprep.subr.mxu0 0.0
        %6264 = vmatpush1.msra.mxu0 0.0
        %6265 = vmatprep.subr.mxu0 0.0
        %6266 = vmatpush1.msra.mxu0 0.0
        %6267 = vmatprep.subr.mxu0 0.0
        %6268 = vmatpush1.msra.mxu0 0.0
        %6269 = vmatprep.subr.mxu0 0.0
        %6270 = vmatpush1.msra.mxu0 0.0
        %6271 = vmatprep.subr.mxu0 0.0
        %6272 = vmatpush1.msra.mxu0 0.0
        %6273 = vmatprep.subr.mxu0 0.0
        %6274 = vmatpush1.msra.mxu0 0.0
        %6275 = vmatprep.subr.mxu0 0.0
        %6276 = vmatpush1.msra.mxu0 0.0
        %6277 = vmatprep.subr.mxu0 0.0
        %6278 = vmatpush1.msra.mxu0 0.0
        %6279 = vmatprep.subr.mxu0 0.0
        %6280 = vmatpush1.msra.mxu0 0.0
        %6281 = vmatprep.subr.mxu0 0.0
        %6282 = vmatpush1.msra.mxu0 0.0
        %6283 = vmatprep.subr.mxu0 0.0
        %6284 = vmatpush1.msra.mxu0 0.0
        %6285 = vmatprep.subr.mxu0 0.0
        %6286 = vmatpush1.msra.mxu0 0.0
        %6287 = vmatprep.subr.mxu0 0.0
        %6288 = vmatpush1.msra.mxu0 0.0
        %6289 = vmatprep.subr.mxu0 0.0
        %6290 = vmatpush1.msra.mxu0 0.0
        %6291 = vmatprep.subr.mxu0 0.0
        %6292 = vmatpush1.msra.mxu0 0.0
        %6293 = vmatprep.subr.mxu0 0.0
        %6294 = vmatpush1.msra.mxu0 0.0
        %6295 = vmatprep.mubr.f32.mxu0 0.0
        %v6296 = vand.u32 %v5546, 4294901760
        %6297 = vmatmul.mubr.f32.gmra.mrb[0].mxu0 %v6296
        %v6298 = vpop.f32.mrb[0].mxu0
        %v6299 = vadd.f32 %v6194, %v6298
        %v6300 = vpop.f32.mrb[0].mxu0
        %6301 = vmatprep.mubr.f32.mxu0 0.0
        %v6302 = vand.u32 %v5547, 4294901760
        %6303 = vmatmul.mubr.f32.gmra.mrb[0].mxu0 %v6302
        %v6304 = vpop.f32.mrb[0].mxu0
        %v6305 = vadd.f32 %v6200, %v6304
        %v6306 = vpop.f32.mrb[0].mxu0
        %6307 = vmatprep.mubr.f32.mxu0 0.0
        %v6308 = vand.u32 %v5548, 4294901760
        %6309 = vmatmul.mubr.f32.gmra.mrb[0].mxu0 %v6308
        %v6310 = vpop.f32.mrb[0].mxu0
        %v6311 = vadd.f32 %v6206, %v6310
        %v6312 = vpop.f32.mrb[0].mxu0
        %6313 = vmatprep.mubr.f32.mxu0 0.0
        %v6314 = vand.u32 %v5549, 4294901760
        %6315 = vmatmul.mubr.f32.gmra.mrb[0].mxu0 %v6314
        %v6316 = vpop.f32.mrb[0].mxu0
        %v6317 = vadd.f32 %v6212, %v6316
        %v6318 = vpop.f32.mrb[0].mxu0
        %6319 = vdwg.mxu0
        %6320 = vmatprep.subr.mxu0 0.0
        %v6321 = vand.u32 %v6299, 4294901760
        %6322 = vmatpush1.msra.mxu0 %v6321
        %6323 = vmatprep.subr.mxu0 0.0
        %v6324 = vand.u32 %v6305, 4294901760
        %6325 = vmatpush1.msra.mxu0 %v6324
        %6326 = vmatprep.subr.mxu0 0.0
        %v6327 = vand.u32 %v6311, 4294901760
        %6328 = vmatpush1.msra.mxu0 %v6327
        %6329 = vmatprep.subr.mxu0 0.0
        %v6330 = vand.u32 %v6317, 4294901760
        %6331 = vmatpush1.msra.mxu0 %v6330
        %6332 = vmatprep.subr.mxu0 0.0
        %6333 = vmatpush1.msra.mxu0 0.0
        %6334 = vmatprep.subr.mxu0 0.0
        %6335 = vmatpush1.msra.mxu0 0.0
        %6336 = vmatprep.subr.mxu0 0.0
        %6337 = vmatpush1.msra.mxu0 0.0
        %6338 = vmatprep.subr.mxu0 0.0
        %6339 = vmatpush1.msra.mxu0 0.0
        %6340 = vmatprep.subr.mxu0 0.0
        %6341 = vmatpush1.msra.mxu0 0.0
        %6342 = vmatprep.subr.mxu0 0.0
        %6343 = vmatpush1.msra.mxu0 0.0
        %6344 = vmatprep.subr.mxu0 0.0
        %6345 = vmatpush1.msra.mxu0 0.0
        %6346 = vmatprep.subr.mxu0 0.0
        %6347 = vmatpush1.msra.mxu0 0.0
        %6348 = vmatprep.subr.mxu0 0.0
        %6349 = vmatpush1.msra.mxu0 0.0
        %6350 = vmatprep.subr.mxu0 0.0
        %6351 = vmatpush1.msra.mxu0 0.0
        %6352 = vmatprep.subr.mxu0 0.0
        %6353 = vmatpush1.msra.mxu0 0.0
        %6354 = vmatprep.subr.mxu0 0.0
        %6355 = vmatpush1.msra.mxu0 0.0
        %6356 = vmatprep.subr.mxu0 0.0
        %6357 = vmatpush1.msra.mxu0 0.0
        %6358 = vmatprep.subr.mxu0 0.0
        %6359 = vmatpush1.msra.mxu0 0.0
        %6360 = vmatprep.subr.mxu0 0.0
        %6361 = vmatpush1.msra.mxu0 0.0
        %6362 = vmatprep.subr.mxu0 0.0
        %6363 = vmatpush1.msra.mxu0 0.0
        %6364 = vmatprep.subr.mxu0 0.0
        %6365 = vmatpush1.msra.mxu0 0.0
        %6366 = vmatprep.subr.mxu0 0.0
        %6367 = vmatpush1.msra.mxu0 0.0
        %6368 = vmatprep.subr.mxu0 0.0
        %6369 = vmatpush1.msra.mxu0 0.0
        %6370 = vmatprep.subr.mxu0 0.0
        %6371 = vmatpush1.msra.mxu0 0.0
        %6372 = vmatprep.subr.mxu0 0.0
        %6373 = vmatpush1.msra.mxu0 0.0
        %6374 = vmatprep.subr.mxu0 0.0
        %6375 = vmatpush1.msra.mxu0 0.0
        %6376 = vmatprep.subr.mxu0 0.0
        %6377 = vmatpush1.msra.mxu0 0.0
        %6378 = vmatprep.subr.mxu0 0.0
        %6379 = vmatpush1.msra.mxu0 0.0
        %6380 = vmatprep.subr.mxu0 0.0
        %6381 = vmatpush1.msra.mxu0 0.0
        %6382 = vmatprep.subr.mxu0 0.0
        %6383 = vmatpush1.msra.mxu0 0.0
        %6384 = vmatprep.subr.mxu0 0.0
        %6385 = vmatpush1.msra.mxu0 0.0
        %6386 = vmatprep.subr.mxu0 0.0
        %6387 = vmatpush1.msra.mxu0 0.0
        %6388 = vmatprep.mubr.f32.mxu0 0.0
        %v6389 = vand.u32 %v1111, 4294901760
        %v6390 = vsub.f32 %v1111, %v6389
        %v6391 = vand.u32 %v6390, 4294901760
        %v6392 = vsub.f32 %v6390, %v6391
        %v6393 = vand.u32 %v6392, 4294901760
        %6394 = vmatmul.mubr.f32.gmra.mrb[0].mxu0 %v6393
        %v6395 = vpop.f32.mrb[0].mxu0
        %v6396 = vadd.f32 0.0, %v6395
        %v6397 = vpop.f32.mrb[0].mxu0
        %6398 = vmatprep.mubr.f32.mxu0 0.0
        %v6399 = vand.u32 %v1114, 4294901760
        %v6400 = vsub.f32 %v1114, %v6399
        %v6401 = vand.u32 %v6400, 4294901760
        %v6402 = vsub.f32 %v6400, %v6401
        %v6403 = vand.u32 %v6402, 4294901760
        %6404 = vmatmul.mubr.f32.gmra.mrb[0].mxu0 %v6403
        %v6405 = vpop.f32.mrb[0].mxu0
        %v6406 = vadd.f32 0.0, %v6405
        %v6407 = vpop.f32.mrb[0].mxu0
        %6408 = vdwg.mxu0
        %6409 = vmatprep.subr.mxu0 0.0
        %v6410 = vand.u32 %v6299, 4294901760
        %v6411 = vsub.f32 %v6299, %v6410
        %v6412 = vand.u32 %v6411, 4294901760
        %v6413 = vsub.f32 %v6411, %v6412
        %v6414 = vand.u32 %v6413, 4294901760
        %6415 = vmatpush1.msra.mxu0 %v6414
        %6416 = vmatprep.subr.mxu0 0.0
        %v6417 = vand.u32 %v6305, 4294901760
        %v6418 = vsub.f32 %v6305, %v6417
        %v6419 = vand.u32 %v6418, 4294901760
        %v6420 = vsub.f32 %v6418, %v6419
        %v6421 = vand.u32 %v6420, 4294901760
        %6422 = vmatpush1.msra.mxu0 %v6421
        %6423 = vmatprep.subr.mxu0 0.0
        %v6424 = vand.u32 %v6311, 4294901760
        %v6425 = vsub.f32 %v6311, %v6424
        %v6426 = vand.u32 %v6425, 4294901760
        %v6427 = vsub.f32 %v6425, %v6426
        %v6428 = vand.u32 %v6427, 4294901760
        %6429 = vmatpush1.msra.mxu0 %v6428
        %6430 = vmatprep.subr.mxu0 0.0
        %v6431 = vand.u32 %v6317, 4294901760
        %v6432 = vsub.f32 %v6317, %v6431
        %v6433 = vand.u32 %v6432, 4294901760
        %v6434 = vsub.f32 %v6432, %v6433
        %v6435 = vand.u32 %v6434, 4294901760
        %6436 = vmatpush1.msra.mxu0 %v6435
        %6437 = vmatprep.subr.mxu0 0.0
        %6438 = vmatpush1.msra.mxu0 0.0
        %6439 = vmatprep.subr.mxu0 0.0
        %6440 = vmatpush1.msra.mxu0 0.0
        %6441 = vmatprep.subr.mxu0 0.0
        %6442 = vmatpush1.msra.mxu0 0.0
        %6443 = vmatprep.subr.mxu0 0.0
        %6444 = vmatpush1.msra.mxu0 0.0
        %6445 = vmatprep.subr.mxu0 0.0
        %6446 = vmatpush1.msra.mxu0 0.0
        %6447 = vmatprep.subr.mxu0 0.0
        %6448 = vmatpush1.msra.mxu0 0.0
        %6449 = vmatprep.subr.mxu0 0.0
        %6450 = vmatpush1.msra.mxu0 0.0
        %6451 = vmatprep.subr.mxu0 0.0
        %6452 = vmatpush1.msra.mxu0 0.0
        %6453 = vmatprep.subr.mxu0 0.0
        %6454 = vmatpush1.msra.mxu0 0.0
        %6455 = vmatprep.subr.mxu0 0.0
        %6456 = vmatpush1.msra.mxu0 0.0
        %6457 = vmatprep.subr.mxu0 0.0
        %6458 = vmatpush1.msra.mxu0 0.0
        %6459 = vmatprep.subr.mxu0 0.0
        %6460 = vmatpush1.msra.mxu0 0.0
        %6461 = vmatprep.subr.mxu0 0.0
        %6462 = vmatpush1.msra.mxu0 0.0
        %6463 = vmatprep.subr.mxu0 0.0
        %6464 = vmatpush1.msra.mxu0 0.0
        %6465 = vmatprep.subr.mxu0 0.0
        %6466 = vmatpush1.msra.mxu0 0.0
        %6467 = vmatprep.subr.mxu0 0.0
        %6468 = vmatpush1.msra.mxu0 0.0
        %6469 = vmatprep.subr.mxu0 0.0
        %6470 = vmatpush1.msra.mxu0 0.0
        %6471 = vmatprep.subr.mxu0 0.0
        %6472 = vmatpush1.msra.mxu0 0.0
        %6473 = vmatprep.subr.mxu0 0.0
        %6474 = vmatpush1.msra.mxu0 0.0
        %6475 = vmatprep.subr.mxu0 0.0
        %6476 = vmatpush1.msra.mxu0 0.0
        %6477 = vmatprep.subr.mxu0 0.0
        %6478 = vmatpush1.msra.mxu0 0.0
        %6479 = vmatprep.subr.mxu0 0.0
        %6480 = vmatpush1.msra.mxu0 0.0
        %6481 = vmatprep.subr.mxu0 0.0
        %6482 = vmatpush1.msra.mxu0 0.0
        %6483 = vmatprep.subr.mxu0 0.0
        %6484 = vmatpush1.msra.mxu0 0.0
        %6485 = vmatprep.subr.mxu0 0.0
        %6486 = vmatpush1.msra.mxu0 0.0
        %6487 = vmatprep.subr.mxu0 0.0
        %6488 = vmatpush1.msra.mxu0 0.0
        %6489 = vmatprep.subr.mxu0 0.0
        %6490 = vmatpush1.msra.mxu0 0.0
        %6491 = vmatprep.subr.mxu0 0.0
        %6492 = vmatpush1.msra.mxu0 0.0
        %6493 = vmatprep.mubr.f32.mxu0 0.0
        %v6494 = vand.u32 %v1111, 4294901760
        %6495 = vmatmul.mubr.f32.gmra.mrb[0].mxu0 %v6494
        %v6496 = vpop.f32.mrb[0].mxu0
        %v6497 = vadd.f32 %v6396, %v6496
        %v6498 = vpop.f32.mrb[0].mxu0
        %6499 = vmatprep.mubr.f32.mxu0 0.0
        %v6500 = vand.u32 %v1114, 4294901760
        %6501 = vmatmul.mubr.f32.gmra.mrb[0].mxu0 %v6500
        %v6502 = vpop.f32.mrb[0].mxu0
        %v6503 = vadd.f32 %v6406, %v6502
        %v6504 = vpop.f32.mrb[0].mxu0
        %6505 = vdwg.mxu0
        %6506 = vmatprep.subr.mxu0 0.0
        %v6507 = vand.u32 %v6299, 4294901760
        %v6508 = vsub.f32 %v6299, %v6507
        %6509 = vmatpush1.msra.mxu0 %v6508
        %6510 = vmatprep.subr.mxu0 0.0
        %v6511 = vand.u32 %v6305, 4294901760
        %v6512 = vsub.f32 %v6305, %v6511
        %6513 = vmatpush1.msra.mxu0 %v6512
        %6514 = vmatprep.subr.mxu0 0.0
        %v6515 = vand.u32 %v6311, 4294901760
        %v6516 = vsub.f32 %v6311, %v6515
        %6517 = vmatpush1.msra.mxu0 %v6516
        %6518 = vmatprep.subr.mxu0 0.0
        %v6519 = vand.u32 %v6317, 4294901760
        %v6520 = vsub.f32 %v6317, %v6519
        %6521 = vmatpush1.msra.mxu0 %v6520
        %6522 = vmatprep.subr.mxu0 0.0
        %6523 = vmatpush1.msra.mxu0 0.0
        %6524 = vmatprep.subr.mxu0 0.0
        %6525 = vmatpush1.msra.mxu0 0.0
        %6526 = vmatprep.subr.mxu0 0.0
        %6527 = vmatpush1.msra.mxu0 0.0
        %6528 = vmatprep.subr.mxu0 0.0
        %6529 = vmatpush1.msra.mxu0 0.0
        %6530 = vmatprep.subr.mxu0 0.0
        %6531 = vmatpush1.msra.mxu0 0.0
        %6532 = vmatprep.subr.mxu0 0.0
        %6533 = vmatpush1.msra.mxu0 0.0
        %6534 = vmatprep.subr.mxu0 0.0
        %6535 = vmatpush1.msra.mxu0 0.0
        %6536 = vmatprep.subr.mxu0 0.0
        %6537 = vmatpush1.msra.mxu0 0.0
        %6538 = vmatprep.subr.mxu0 0.0
        %6539 = vmatpush1.msra.mxu0 0.0
        %6540 = vmatprep.subr.mxu0 0.0
        %6541 = vmatpush1.msra.mxu0 0.0
        %6542 = vmatprep.subr.mxu0 0.0
        %6543 = vmatpush1.msra.mxu0 0.0
        %6544 = vmatprep.subr.mxu0 0.0
        %6545 = vmatpush1.msra.mxu0 0.0
        %6546 = vmatprep.subr.mxu0 0.0
        %6547 = vmatpush1.msra.mxu0 0.0
        %6548 = vmatprep.subr.mxu0 0.0
        %6549 = vmatpush1.msra.mxu0 0.0
        %6550 = vmatprep.subr.mxu0 0.0
        %6551 = vmatpush1.msra.mxu0 0.0
        %6552 = vmatprep.subr.mxu0 0.0
        %6553 = vmatpush1.msra.mxu0 0.0
        %6554 = vmatprep.subr.mxu0 0.0
        %6555 = vmatpush1.msra.mxu0 0.0
        %6556 = vmatprep.subr.mxu0 0.0
        %6557 = vmatpush1.msra.mxu0 0.0
        %6558 = vmatprep.subr.mxu0 0.0
        %6559 = vmatpush1.msra.mxu0 0.0
        %6560 = vmatprep.subr.mxu0 0.0
        %6561 = vmatpush1.msra.mxu0 0.0
        %6562 = vmatprep.subr.mxu0 0.0
        %6563 = vmatpush1.msra.mxu0 0.0
        %6564 = vmatprep.subr.mxu0 0.0
        %6565 = vmatpush1.msra.mxu0 0.0
        %6566 = vmatprep.subr.mxu0 0.0
        %6567 = vmatpush1.msra.mxu0 0.0
        %6568 = vmatprep.subr.mxu0 0.0
        %6569 = vmatpush1.msra.mxu0 0.0
        %6570 = vmatprep.subr.mxu0 0.0
        %6571 = vmatpush1.msra.mxu0 0.0
        %6572 = vmatprep.subr.mxu0 0.0
        %6573 = vmatpush1.msra.mxu0 0.0
        %6574 = vmatprep.subr.mxu0 0.0
        %6575 = vmatpush1.msra.mxu0 0.0
        %6576 = vmatprep.subr.mxu0 0.0
        %6577 = vmatpush1.msra.mxu0 0.0
        %6578 = vmatprep.mubr.f32.mxu0 0.0
        %v6579 = vand.u32 %v1111, 4294901760
        %v6580 = vsub.f32 %v1111, %v6579
        %6581 = vmatmul.mubr.f32.gmra.mrb[0].mxu0 %v6580
        %v6582 = vpop.f32.mrb[0].mxu0
        %v6583 = vadd.f32 %v6497, %v6582
        %v6584 = vpop.f32.mrb[0].mxu0
        %6585 = vmatprep.mubr.f32.mxu0 0.0
        %v6586 = vand.u32 %v1114, 4294901760
        %v6587 = vsub.f32 %v1114, %v6586
        %6588 = vmatmul.mubr.f32.gmra.mrb[0].mxu0 %v6587
        %v6589 = vpop.f32.mrb[0].mxu0
        %v6590 = vadd.f32 %v6503, %v6589
        %v6591 = vpop.f32.mrb[0].mxu0
        %6592 = vdwg.mxu0
        %6593 = vmatprep.subr.mxu0 0.0
        %v6594 = vand.u32 %v6299, 4294901760
        %6595 = vmatpush1.msra.mxu0 %v6594
        %6596 = vmatprep.subr.mxu0 0.0
        %v6597 = vand.u32 %v6305, 4294901760
        %6598 = vmatpush1.msra.mxu0 %v6597
        %6599 = vmatprep.subr.mxu0 0.0
        %v6600 = vand.u32 %v6311, 4294901760
        %6601 = vmatpush1.msra.mxu0 %v6600
        %6602 = vmatprep.subr.mxu0 0.0
        %v6603 = vand.u32 %v6317, 4294901760
        %6604 = vmatpush1.msra.mxu0 %v6603
        %6605 = vmatprep.subr.mxu0 0.0
        %6606 = vmatpush1.msra.mxu0 0.0
        %6607 = vmatprep.subr.mxu0 0.0
        %6608 = vmatpush1.msra.mxu0 0.0
        %6609 = vmatprep.subr.mxu0 0.0
        %6610 = vmatpush1.msra.mxu0 0.0
        %6611 = vmatprep.subr.mxu0 0.0
        %6612 = vmatpush1.msra.mxu0 0.0
        %6613 = vmatprep.subr.mxu0 0.0
        %6614 = vmatpush1.msra.mxu0 0.0
        %6615 = vmatprep.subr.mxu0 0.0
        %6616 = vmatpush1.msra.mxu0 0.0
        %6617 = vmatprep.subr.mxu0 0.0
        %6618 = vmatpush1.msra.mxu0 0.0
        %6619 = vmatprep.subr.mxu0 0.0
        %6620 = vmatpush1.msra.mxu0 0.0
        %6621 = vmatprep.subr.mxu0 0.0
        %6622 = vmatpush1.msra.mxu0 0.0
        %6623 = vmatprep.subr.mxu0 0.0
        %6624 = vmatpush1.msra.mxu0 0.0
        %6625 = vmatprep.subr.mxu0 0.0
        %6626 = vmatpush1.msra.mxu0 0.0
        %6627 = vmatprep.subr.mxu0 0.0
        %6628 = vmatpush1.msra.mxu0 0.0
        %6629 = vmatprep.subr.mxu0 0.0
        %6630 = vmatpush1.msra.mxu0 0.0
        %6631 = vmatprep.subr.mxu0 0.0
        %6632 = vmatpush1.msra.mxu0 0.0
        %6633 = vmatprep.subr.mxu0 0.0
        %6634 = vmatpush1.msra.mxu0 0.0
        %6635 = vmatprep.subr.mxu0 0.0
        %6636 = vmatpush1.msra.mxu0 0.0
        %6637 = vmatprep.subr.mxu0 0.0
        %6638 = vmatpush1.msra.mxu0 0.0
        %6639 = vmatprep.subr.mxu0 0.0
        %6640 = vmatpush1.msra.mxu0 0.0
        %6641 = vmatprep.subr.mxu0 0.0
        %6642 = vmatpush1.msra.mxu0 0.0
        %6643 = vmatprep.subr.mxu0 0.0
        %6644 = vmatpush1.msra.mxu0 0.0
        %6645 = vmatprep.subr.mxu0 0.0
        %6646 = vmatpush1.msra.mxu0 0.0
        %6647 = vmatprep.subr.mxu0 0.0
        %6648 = vmatpush1.msra.mxu0 0.0
        %6649 = vmatprep.subr.mxu0 0.0
        %6650 = vmatpush1.msra.mxu0 0.0
        %6651 = vmatprep.subr.mxu0 0.0
        %6652 = vmatpush1.msra.mxu0 0.0
        %6653 = vmatprep.subr.mxu0 0.0
        %6654 = vmatpush1.msra.mxu0 0.0
        %6655 = vmatprep.subr.mxu0 0.0
        %6656 = vmatpush1.msra.mxu0 0.0
        %6657 = vmatprep.subr.mxu0 0.0
        %6658 = vmatpush1.msra.mxu0 0.0
        %6659 = vmatprep.subr.mxu0 0.0
        %6660 = vmatpush1.msra.mxu0 0.0
        %6661 = vmatprep.mubr.f32.mxu0 0.0
        %v6662 = vand.u32 %v1111, 4294901760
        %v6663 = vsub.f32 %v1111, %v6662
        %v6664 = vand.u32 %v6663, 4294901760
        %6665 = vmatmul.mubr.f32.gmra.mrb[0].mxu0 %v6664
        %v6666 = vpop.f32.mrb[0].mxu0
        %v6667 = vadd.f32 %v6583, %v6666
        %v6668 = vpop.f32.mrb[0].mxu0
        %6669 = vmatprep.mubr.f32.mxu0 0.0
        %v6670 = vand.u32 %v1114, 4294901760
        %v6671 = vsub.f32 %v1114, %v6670
        %v6672 = vand.u32 %v6671, 4294901760
        %6673 = vmatmul.mubr.f32.gmra.mrb[0].mxu0 %v6672
        %v6674 = vpop.f32.mrb[0].mxu0
        %v6675 = vadd.f32 %v6590, %v6674
        %v6676 = vpop.f32.mrb[0].mxu0
        %6677 = vdwg.mxu0
        %6678 = vmatprep.subr.mxu0 0.0
        %v6679 = vand.u32 %v6299, 4294901760
        %v6680 = vsub.f32 %v6299, %v6679
        %v6681 = vand.u32 %v6680, 4294901760
        %6682 = vmatpush1.msra.mxu0 %v6681
        %6683 = vmatprep.subr.mxu0 0.0
        %v6684 = vand.u32 %v6305, 4294901760
        %v6685 = vsub.f32 %v6305, %v6684
        %v6686 = vand.u32 %v6685, 4294901760
        %6687 = vmatpush1.msra.mxu0 %v6686
        %6688 = vmatprep.subr.mxu0 0.0
        %v6689 = vand.u32 %v6311, 4294901760
        %v6690 = vsub.f32 %v6311, %v6689
        %v6691 = vand.u32 %v6690, 4294901760
        %6692 = vmatpush1.msra.mxu0 %v6691
        %6693 = vmatprep.subr.mxu0 0.0
        %v6694 = vand.u32 %v6317, 4294901760
        %v6695 = vsub.f32 %v6317, %v6694
        %v6696 = vand.u32 %v6695, 4294901760
        %6697 = vmatpush1.msra.mxu0 %v6696
        %6698 = vmatprep.subr.mxu0 0.0
        %6699 = vmatpush1.msra.mxu0 0.0
        %6700 = vmatprep.subr.mxu0 0.0
        %6701 = vmatpush1.msra.mxu0 0.0
        %6702 = vmatprep.subr.mxu0 0.0
        %6703 = vmatpush1.msra.mxu0 0.0
        %6704 = vmatprep.subr.mxu0 0.0
        %6705 = vmatpush1.msra.mxu0 0.0
        %6706 = vmatprep.subr.mxu0 0.0
        %6707 = vmatpush1.msra.mxu0 0.0
        %6708 = vmatprep.subr.mxu0 0.0
        %6709 = vmatpush1.msra.mxu0 0.0
        %6710 = vmatprep.subr.mxu0 0.0
        %6711 = vmatpush1.msra.mxu0 0.0
        %6712 = vmatprep.subr.mxu0 0.0
        %6713 = vmatpush1.msra.mxu0 0.0
        %6714 = vmatprep.subr.mxu0 0.0
        %6715 = vmatpush1.msra.mxu0 0.0
        %6716 = vmatprep.subr.mxu0 0.0
        %6717 = vmatpush1.msra.mxu0 0.0
        %6718 = vmatprep.subr.mxu0 0.0
        %6719 = vmatpush1.msra.mxu0 0.0
        %6720 = vmatprep.subr.mxu0 0.0
        %6721 = vmatpush1.msra.mxu0 0.0
        %6722 = vmatprep.subr.mxu0 0.0
        %6723 = vmatpush1.msra.mxu0 0.0
        %6724 = vmatprep.subr.mxu0 0.0
        %6725 = vmatpush1.msra.mxu0 0.0
        %6726 = vmatprep.subr.mxu0 0.0
        %6727 = vmatpush1.msra.mxu0 0.0
        %6728 = vmatprep.subr.mxu0 0.0
        %6729 = vmatpush1.msra.mxu0 0.0
        %6730 = vmatprep.subr.mxu0 0.0
        %6731 = vmatpush1.msra.mxu0 0.0
        %6732 = vmatprep.subr.mxu0 0.0
        %6733 = vmatpush1.msra.mxu0 0.0
        %6734 = vmatprep.subr.mxu0 0.0
        %6735 = vmatpush1.msra.mxu0 0.0
        %6736 = vmatprep.subr.mxu0 0.0
        %6737 = vmatpush1.msra.mxu0 0.0
        %6738 = vmatprep.subr.mxu0 0.0
        %6739 = vmatpush1.msra.mxu0 0.0
        %6740 = vmatprep.subr.mxu0 0.0
        %6741 = vmatpush1.msra.mxu0 0.0
        %6742 = vmatprep.subr.mxu0 0.0
        %6743 = vmatpush1.msra.mxu0 0.0
        %6744 = vmatprep.subr.mxu0 0.0
        %6745 = vmatpush1.msra.mxu0 0.0
        %6746 = vmatprep.subr.mxu0 0.0
        %6747 = vmatpush1.msra.mxu0 0.0
        %6748 = vmatprep.subr.mxu0 0.0
        %6749 = vmatpush1.msra.mxu0 0.0
        %6750 = vmatprep.subr.mxu0 0.0
        %6751 = vmatpush1.msra.mxu0 0.0
        %6752 = vmatprep.subr.mxu0 0.0
        %6753 = vmatpush1.msra.mxu0 0.0
        %6754 = vmatprep.mubr.f32.mxu0 0.0
        %v6755 = vand.u32 %v1111, 4294901760
        %6756 = vmatmul.mubr.f32.gmra.mrb[0].mxu0 %v6755
        %v6757 = vpop.f32.mrb[0].mxu0
        %v6758 = vadd.f32 %v6667, %v6757
        %v6759 = vpop.f32.mrb[0].mxu0
        %6760 = vmatprep.mubr.f32.mxu0 0.0
        %v6761 = vand.u32 %v1114, 4294901760
        %6762 = vmatmul.mubr.f32.gmra.mrb[0].mxu0 %v6761
        %v6763 = vpop.f32.mrb[0].mxu0
        %v6764 = vadd.f32 %v6675, %v6763
        %v6765 = vpop.f32.mrb[0].mxu0
        %6766 = vdwg.mxu0
        %6767 = vmatprep.subr.mxu0 0.0
        %v6768 = vand.u32 %v6299, 4294901760
        %6769 = vmatpush1.msra.mxu0 %v6768
        %6770 = vmatprep.subr.mxu0 0.0
        %v6771 = vand.u32 %v6305, 4294901760
        %6772 = vmatpush1.msra.mxu0 %v6771
        %6773 = vmatprep.subr.mxu0 0.0
        %v6774 = vand.u32 %v6311, 4294901760
        %6775 = vmatpush1.msra.mxu0 %v6774
        %6776 = vmatprep.subr.mxu0 0.0
        %v6777 = vand.u32 %v6317, 4294901760
        %6778 = vmatpush1.msra.mxu0 %v6777
        %6779 = vmatprep.subr.mxu0 0.0
        %6780 = vmatpush1.msra.mxu0 0.0
        %6781 = vmatprep.subr.mxu0 0.0
        %6782 = vmatpush1.msra.mxu0 0.0
        %6783 = vmatprep.subr.mxu0 0.0
        %6784 = vmatpush1.msra.mxu0 0.0
        %6785 = vmatprep.subr.mxu0 0.0
        %6786 = vmatpush1.msra.mxu0 0.0
        %6787 = vmatprep.subr.mxu0 0.0
        %6788 = vmatpush1.msra.mxu0 0.0
        %6789 = vmatprep.subr.mxu0 0.0
        %6790 = vmatpush1.msra.mxu0 0.0
        %6791 = vmatprep.subr.mxu0 0.0
        %6792 = vmatpush1.msra.mxu0 0.0
        %6793 = vmatprep.subr.mxu0 0.0
        %6794 = vmatpush1.msra.mxu0 0.0
        %6795 = vmatprep.subr.mxu0 0.0
        %6796 = vmatpush1.msra.mxu0 0.0
        %6797 = vmatprep.subr.mxu0 0.0
        %6798 = vmatpush1.msra.mxu0 0.0
        %6799 = vmatprep.subr.mxu0 0.0
        %6800 = vmatpush1.msra.mxu0 0.0
        %6801 = vmatprep.subr.mxu0 0.0
        %6802 = vmatpush1.msra.mxu0 0.0
        %6803 = vmatprep.subr.mxu0 0.0
        %6804 = vmatpush1.msra.mxu0 0.0
        %6805 = vmatprep.subr.mxu0 0.0
        %6806 = vmatpush1.msra.mxu0 0.0
        %6807 = vmatprep.subr.mxu0 0.0
        %6808 = vmatpush1.msra.mxu0 0.0
        %6809 = vmatprep.subr.mxu0 0.0
        %6810 = vmatpush1.msra.mxu0 0.0
        %6811 = vmatprep.subr.mxu0 0.0
        %6812 = vmatpush1.msra.mxu0 0.0
        %6813 = vmatprep.subr.mxu0 0.0
        %6814 = vmatpush1.msra.mxu0 0.0
        %6815 = vmatprep.subr.mxu0 0.0
        %6816 = vmatpush1.msra.mxu0 0.0
        %6817 = vmatprep.subr.mxu0 0.0
        %6818 = vmatpush1.msra.mxu0 0.0
        %6819 = vmatprep.subr.mxu0 0.0
        %6820 = vmatpush1.msra.mxu0 0.0
        %6821 = vmatprep.subr.mxu0 0.0
        %6822 = vmatpush1.msra.mxu0 0.0
        %6823 = vmatprep.subr.mxu0 0.0
        %6824 = vmatpush1.msra.mxu0 0.0
        %6825 = vmatprep.subr.mxu0 0.0
        %6826 = vmatpush1.msra.mxu0 0.0
        %6827 = vmatprep.subr.mxu0 0.0
        %6828 = vmatpush1.msra.mxu0 0.0
        %6829 = vmatprep.subr.mxu0 0.0
        %6830 = vmatpush1.msra.mxu0 0.0
        %6831 = vmatprep.subr.mxu0 0.0
        %6832 = vmatpush1.msra.mxu0 0.0
        %6833 = vmatprep.subr.mxu0 0.0
        %6834 = vmatpush1.msra.mxu0 0.0
        %6835 = vmatprep.mubr.f32.mxu0 0.0
        %v6836 = vand.u32 %v1111, 4294901760
        %6837 = vmatmul.mubr.f32.gmra.mrb[0].mxu0 %v6836
        %v6838 = vpop.f32.mrb[0].mxu0
        %v6839 = vadd.f32 %v6758, %v6838
        %v6840 = vpop.f32.mrb[0].mxu0
        %6841 = vmatprep.mubr.f32.mxu0 0.0
        %v6842 = vand.u32 %v1114, 4294901760
        %6843 = vmatmul.mubr.f32.gmra.mrb[0].mxu0 %v6842
        %v6844 = vpop.f32.mrb[0].mxu0
        %v6845 = vadd.f32 %v6764, %v6844
        %v6846 = vpop.f32.mrb[0].mxu0
        %6847 = vdwg.mxu0
        %v6848 = vmul.f32 %v1635, %v1635
        %v6849 = vmul.f32 %v1641, %v1641
        %v6850 = vmul.f32 %v2933, %v2933
        %v6851 = vmul.f32 %v2939, %v2939
        %v6852 = vmul.f32 %v1635, %v2933
        %v6853 = vmul.f32 %v1641, %v2939
        %v6854 = vsub.f32 %v4235, %v6848
        %v6855 = vsub.f32 %v4241, %v6849
        %v6856 = vsub.f32 %v5537, %v6850
        %v6857 = vsub.f32 %v5543, %v6851
        %v6858 = vsub.f32 %v6839, %v6852
        %v6859 = vsub.f32 %v6845, %v6853
        %v6860 = vmul.f32 %v6852, 2.0
        %v6861 = vmul.f32 %v6853, 2.0
        %v6862 = vadd.f32 %v6860, 0.0001
        %v6863 = vadd.f32 %v6861, 0.0001
        %v6864 = vmul.f32 %v6858, 2.0
        %v6865 = vmul.f32 %v6859, 2.0
        %v6866 = vadd.f32 %v6864, 0.0009
        %v6867 = vadd.f32 %v6865, 0.0009
        %v6868 = vmul.f32 %v6862, %v6866
        %v6869 = vmul.f32 %v6863, %v6867
        %v6870 = vadd.f32 %v6848, %v6850
        %v6871 = vadd.f32 %v6849, %v6851
        %v6872 = vadd.f32 %v6870, 0.0001
        %v6873 = vadd.f32 %v6871, 0.0001
        %v6874 = vadd.f32 %v6854, %v6856
        %v6875 = vadd.f32 %v6855, %v6857
        %v6876 = vadd.f32 %v6874, 0.0009
        %v6877 = vadd.f32 %v6875, 0.0009
        %v6878 = vmul.f32 %v6872, %v6876
        %v6879 = vmul.f32 %v6873, %v6877
        %v6880 = vrcp.pop %v6878
        %v6881 = vmul.f32 %v6868, %v6880
        %v6882 = vrcp.pop %v6879
        %v6883 = vmul.f32 %v6869, %v6882
        %v6884 = vlaneseq
        %v6885 = vshrl.u32 %v6884, 7
        %v6886 = vadd.s32 %v6885, 8
        %v6887 = vlaneseq
        %v6888 = vand.u32 %v6887, 127
        %vm6889 = vcmp.lt.s32.totalorder %v6885, 16
        %vm6890 = vcmp.lt.s32.totalorder %v6886, 16
        %vm6891 = vcmp.lt.s32.totalorder %v6888, 16
        %vm6892 = vmand %vm6889, %vm6891
        %vm6893 = vmand %vm6890, %vm6891
        %v6894 = vsel %vm6892, %v6881, 0.0
        %v6895 = vsel %vm6893, %v6883, 0.0
        %v6896 = vadd.f32 %v6894, %v6895
        %6897 = vadd.xlane.f32.xlu0 %v6896
        %v6898 = vpop.xlane.xlu0 %6897
        %v6899 = vrot.slane %v6898, 4
        %v6900 = vadd.f32 %v6898, %v6899
        %v6901 = vrot.slane %v6900, 2
        %v6902 = vadd.f32 %v6900, %v6901
        %v6903 = vrot.slane %v6902, 1
        %v6904 = vadd.f32 %v6902, %v6903
        %s6905 = vtos %v6904
        %v6906 = vstv %s6905
        %vm6907 = vcmask 0
        %6908 = vst.msk [vmem:[%s312] sm:$0x1] %vm6907, %v6906
        %p6909 = scmp.lt.s32.totalorder %s26, 1
        %s6910 = scalar_select %p6909, %s26, 1
        %p6911 = scmp.lt.s32.totalorder %s27, 3
        %s6912 = scalar_select %p6911, %s27, 3
        %s6913 = smul.addr %s6910, 4
        %s6914 = sadd.s32 %s6912, %s6913
        %s6915 = scalar_lea.vmem %s4, %s6914
        // Predicated region
        $region53: #{tpu_custom_call.1} parent=35 // pred_check
          %p6916 = pneg %p152
        $region54: #{tpu_custom_call.1} parent=35 // pred_check_branch
          %6918 = sbr.rel (%p6916) target = $region56
        $region55: #{tpu_custom_call.1} parent=35 // pred_region
          _
        $region56: #{tpu_custom_call.1} parent=35 // pred_fallthru
          _
      $region36: #{tpu_custom_call.1} parent=5 // pred_fallthru
        _
      %p6919 = scmp.le.s32.totalorder 2, %s17
      // Predicated region
      $region57: #{tpu_custom_call.1} parent=5 // pred_check
        %p6920 = pneg %p6919
      $region58: #{tpu_custom_call.1} parent=5 // pred_check_branch
        %6922 = sbr.rel (%p6920) target = $region60
      $region59: #{tpu_custom_call.1} parent=5 // pred_region
        %s6923 = ssub.s32 %s17, 2
        // Predicated region
        $region61: #{tpu_custom_call.1} parent=59 // pred_check
          %p6924 = pneg %p158
        $region62: #{tpu_custom_call.1} parent=59 // pred_check_branch
          %6926 = sbr.rel (%p6924) target = $region64
        $region63: #{tpu_custom_call.1} parent=59 // pred_region
          %p6927 = scmp.lt.s32.totalorder %s28, 1
          %s6928 = scalar_select %p6927, %s28, 1
          %p6929 = scmp.lt.s32.totalorder %s29, 3
          %s6930 = scalar_select %p6929, %s29, 3
          %s6931 = smul.addr %s6928, 4
          %s6932 = sadd.s32 %s6930, %s6931
          %s6933 = scalar_lea.vmem %s4, %s6932
        $region64: #{tpu_custom_call.1} parent=59 // pred_fallthru
          _
      $region60: #{tpu_custom_call.1} parent=5 // pred_fallthru
        _
    $region6: #{tpu_custom_call.1} parent=1 // loop_footer
      %s21 = sadd.s32 1, %s17
    $region7: #{tpu_custom_call.1} parent=1 // loop_footer_branch
      %16 = sbr.rel target = $region3
    $region8: #{tpu_custom_call.1} parent=1 // loop_exit
      _
    %6934 = vsyncpa [#allocation3], 1
    %s6935 = scalar_lea.sflag [#allocation3], 1
    %6936 = vsyncpa %s6935, 1
    %6937 = vsyncpa [#allocation5], 1
    %s6938 = scalar_lea.sflag [#allocation5], 1
    %6939 = vsyncpa %s6938, 1
    %6940 = vsyncpa [#allocation8], 1

</llo_original>
